<compile_context>
chip_gen: v7x
topology: tpu7x:2x2x1
jax: 0.10.0
libtpu: 0.0.40
codegen_flags: <defaults>
</compile_context>

<pallas_src>
import functools

import jax
import jax.numpy as jnp
from jax import lax
from jax.experimental import pallas as pl
from jax.experimental.pallas import tpu as pltpu


def _round_up(x, m):
    return (x + m - 1) // m * m


def _row_normalize(x):
    # F.normalize(x, 2, -1) == x / max(||x||_2, 1e-12); rsqrt -> EUP slot.
    ss = jnp.sum(x * x, axis=-1, keepdims=True)
    return x * lax.rsqrt(jnp.maximum(ss, 1e-24))


# ---------------------------------------------------------------------------
# Kernel 1: TransE hinge relation loss, grid over triple tiles.
# ---------------------------------------------------------------------------

def _triple_loss_kernel(valid_ref,
                        e_ph_ref, e_pt_ref, e_nh_ref, e_nt_ref,
                        r_pr_ref, r_nr_ref,
                        i_ph_ref, i_pt_ref, i_nh_ref, i_nt_ref,
                        fc3w_ref, fc3b_ref,
                        loss_o, *, margin):
    # Output block index is constant across the grid axis -> loss_o is a
    # VMEM-resident accumulator (axis marked "arbitrary").
    @pl.when(pl.program_id(0) == 0)
    def _init():
        loss_o[...] = jnp.zeros_like(loss_o)

    w3 = fc3w_ref[...]            # (2048, D) bf16, resident across the grid
    b3 = fc3b_ref[...]            # (1, D)    f32

    def i_w(img_ref):             # normalize(fc3(img)) for one triple role
        y = jnp.dot(img_ref[...], w3, preferred_element_type=jnp.float32) + b3
        return _row_normalize(y)

    r_ph = _row_normalize(e_ph_ref[...])
    r_pt = _row_normalize(e_pt_ref[...])
    r_nh = _row_normalize(e_nh_ref[...])
    r_nt = _row_normalize(e_nt_ref[...])
    r_pr = _row_normalize(r_pr_ref[...])
    r_nr = _row_normalize(r_nr_ref[...])
    i_ph = i_w(i_ph_ref)
    i_pt = i_w(i_pt_ref)
    i_nh = i_w(i_nh_ref)
    i_nt = i_w(i_nt_ref)

    valid = valid_ref[...]        # (Tb, 1) 1/0 mask for batch padding

    def hinge(ph, pr, pt, nh, nr, nt):
        pos = ph + pr - pt
        neg = nh + nr - nt
        ps = jnp.sum(pos * pos, axis=1, keepdims=True)
        ns = jnp.sum(neg * neg, axis=1, keepdims=True)
        return jnp.sum(jnp.maximum(margin + ps - ns, 0.0) * valid,
                       keepdims=True)                            # (1, 1)

    loss_o[...] += (hinge(r_ph, r_pr, r_pt, r_nh, r_nr, r_nt)
                    + hinge(i_ph, r_pr, i_pt, i_nh, r_nr, i_nt))


def triple_relation_loss(ent_parts, rel_parts, img_parts, valid,
                         fc3w_bf16, fc3b, *, margin, tb):
    Bt_pad, D = ent_parts[0].shape
    n_tiles = Bt_pad // tb
    row_spec_d = pl.BlockSpec((tb, D), lambda i: (i, 0))
    row_spec_img = pl.BlockSpec((tb, 2048), lambda i: (i, 0))
    flops = 8 * Bt_pad * 2048 * D + 64 * Bt_pad * D
    bytes_acc = (4 * Bt_pad * 2048 * 2 + 6 * Bt_pad * D * 4
                 + 2048 * D * 2 + Bt_pad * 4 + 8)
    return pl.pallas_call(
        functools.partial(_triple_loss_kernel, margin=margin),
        grid=(n_tiles,),
        in_specs=[pl.BlockSpec((tb, 1), lambda i: (i, 0))]       # valid
                 + [row_spec_d] * 6                              # ent x4, rel x2
                 + [row_spec_img] * 4                            # img x4
                 + [pl.BlockSpec((2048, D), lambda i: (0, 0)),   # fc3 weight
                    pl.BlockSpec((1, D), lambda i: (0, 0))],     # fc3 bias
        out_specs=pl.BlockSpec((1, 1), lambda i: (0, 0)),
        out_shape=jax.ShapeDtypeStruct((1, 1), jnp.float32),
        compiler_params=pltpu.CompilerParams(
            # TODO(synk): emit per-tile partial losses (summed in the wrapper)
            # instead of a resident accumulator to allow "parallel" megacore
            # sharding of this axis on v7x.
            dimension_semantics=("arbitrary",),
            vmem_limit_bytes=32 * 1024 * 1024),
        cost_estimate=pl.CostEstimate(flops=int(flops), transcendentals=0,
                                      bytes_accessed=int(bytes_acc)),
    )(valid, *ent_parts, *rel_parts, *img_parts, fc3w_bf16, fc3b)


# ---------------------------------------------------------------------------
# Kernel 2: fused entity branch (reps + AttrEncoder + attention + scores).
# ---------------------------------------------------------------------------

def _entity_kernel(ent_ref, img_ref, fc1w_ref, fc1b_ref,
                   ea_ref, ev_ref, mask_ref,
                   awf_ref, abf_ref, w2bs_ref,
                   scores_o, *, Be, Ap, A, D):
    N = 2 * Be

    # --- per-modality representations -------------------------------------
    er = _row_normalize(ent_ref[...])                            # (N, D)
    ei = _row_normalize(
        jnp.dot(img_ref[...], fc1w_ref[...],
                preferred_element_type=jnp.float32) + fc1b_ref[...])

    # --- AttrEncoder: fc1 folded into fc2's top half; sigmoid(v).repeat(D)
    #     against W2's bottom half collapsed to sigmoid(v) * sum(W2[D:], 0) --
    e2d = (jnp.dot(ea_ref[...], awf_ref[...],
                   preferred_element_type=jnp.float32)
           + abf_ref[...]
           + jax.nn.sigmoid(ev_ref[...]) * w2bs_ref[...])        # (N*Ap, D)
    e3 = e2d.reshape(N, Ap, D)                                   # sublane-aligned

    # --- masked-softmax attribute attention (reference multiplies the mask
    #     into the logits; padded attribute slots are excluded exactly) -----
    rowdot = jnp.sum(e3 * ei[:, None, :], axis=-1)               # (N, Ap)
    logits = rowdot * mask_ref[...]
    if Ap > A:
        col = lax.broadcasted_iota(jnp.int32, (N, Ap), 1)
        logits = logits + jnp.where(col < A, 0.0, -1e30)
    m = jnp.max(logits, axis=1, keepdims=True)
    p = jnp.exp(logits - m)
    alpha = p / jnp.sum(p, axis=1, keepdims=True)    # exact divide (parity)
    ea_att = jnp.sum(alpha[:, :, None] * e3, axis=1)             # (N, D)

    e1r, e2r = er[:Be], er[Be:]
    e1i, e2i = ei[:Be], ei[Be:]
    e1a, e2a = ea_att[:Be], ea_att[Be:]

    # --- per-modality scores (RHS fed transposed natively) ------------------
    rs = pl.dot(e1r, e2r, trans_b=True)
    a_s = pl.dot(e1a, e2a, trans_b=True)
    i_s = pl.dot(e1i, e2i, trans_b=True)

    # --- fused score: e1_all @ e2_all.T == inv1 * (rs + is + as) * inv2^T ---
    ss1 = (jnp.sum(e1r * e1r, axis=1, keepdims=True)
           + jnp.sum(e1i * e1i, axis=1, keepdims=True)
           + jnp.sum(e1a * e1a, axis=1, keepdims=True))
    ss2 = (jnp.sum(e2r * e2r, axis=1, keepdims=True)
           + jnp.sum(e2i * e2i, axis=1, keepdims=True)
           + jnp.sum(e2a * e2a, axis=1, keepdims=True))
    inv1 = lax.rsqrt(jnp.maximum(ss1, 1e-24))                    # (Be, 1)
    inv2 = lax.rsqrt(jnp.maximum(ss2, 1e-24))                    # (Be, 1)
    scale = pl.dot(inv1, inv2, trans_b=True)                     # rank-1 outer
    all_s = (rs + i_s + a_s) * scale

    # single output slab [r | a | i | all]
    scores_o[:, 0 * Be:1 * Be] = rs
    scores_o[:, 1 * Be:2 * Be] = a_s
    scores_o[:, 2 * Be:3 * Be] = i_s
    scores_o[:, 3 * Be:4 * Be] = all_s


def entity_scores(ent_e, img_e, fc1w, fc1b, ea, ev, mask, awf, abf, w2bs,
                  *, Be, Ap, A, D):
    N = 2 * Be
    flops = (2 * N * 2048 * D + 2 * N * Ap * 768 * D
             + 2 * 3 * Be * Be * D + 8 * Be * Be)
    bytes_acc = (N * 2048 * 2 + N * Ap * 768 * 2 + 2048 * D * 2 + 768 * D * 2
                 + N * D * 4 + N * Ap * 8 + Be * 4 * Be * 4)
    return pl.pallas_call(
        functools.partial(_entity_kernel, Be=Be, Ap=Ap, A=A, D=D),
        out_shape=jax.ShapeDtypeStruct((Be, 4 * Be), jnp.float32),
        compiler_params=pltpu.CompilerParams(
            vmem_limit_bytes=32 * 1024 * 1024),
        cost_estimate=pl.CostEstimate(flops=int(flops),
                                      transcendentals=int(4 * N * Ap),
                                      bytes_accessed=int(bytes_acc)),
    )(ent_e, img_e, fc1w, fc1b, ea, ev, mask, awf, abf, w2bs)


# ---------------------------------------------------------------------------
# Parameter init (deterministic, synthetic)
# ---------------------------------------------------------------------------

def _xavier(key, shape):
    fan_in, fan_out = shape
    std = (2.0 / (fan_in + fan_out)) ** 0.5
    return std * jax.random.normal(key, shape, jnp.float32)


def init_params(key, ent_num, rel_num, attr_num, dim):
    ks = jax.random.split(key, 10)
    return dict(
        img_embed=jax.random.normal(ks[0], (ent_num, 2048), jnp.float32),
        ent_embed=_xavier(ks[1], (ent_num, dim)),
        rel_embed=_xavier(ks[2], (rel_num, dim)),
        fc1_w=_xavier(ks[3], (2048, dim)),
        fc1_b=jnp.zeros((1, dim), jnp.float32),
        fc3_w=_xavier(ks[4], (2048, dim)),
        fc3_b=jnp.zeros((1, dim), jnp.float32),
        attr_embed=jax.random.normal(ks[5], (attr_num, 768), jnp.float32),
        afc1_w=_xavier(ks[6], (768, dim)),
        afc1_b=jnp.zeros((1, dim), jnp.float32),
        afc2_w=_xavier(ks[7], (2 * dim, dim)),
        afc2_b=jnp.zeros((1, dim), jnp.float32),
        # TODO(synk): fc2 (2048->dim), fc_a, fc_a1 exist in __init__ but are
        # unused in forward(); not materialized here.
    )


# ---------------------------------------------------------------------------
# MSNEA forward
# ---------------------------------------------------------------------------

def msnea_forward(params, p_h, p_r, p_t, n_h, n_r, n_t,
                  e1, e2, e1_a, e1_v, e1_mask, e1_l,
                  e2_a, e2_v, e2_mask, e2_l, *, margin=1.0):
    P = params
    D = P['ent_embed'].shape[1]
    Bt = p_h.shape[0]
    Be = e1.shape[0]
    A = e1_a.shape[1]

    ent_tab = P['ent_embed']
    rel_tab = P['rel_embed']
    img_tab = P['img_embed']

    # ------------------ triple branch (Kernel 1) ---------------------------
    Tb = _round_up(Bt, 8) if Bt <= 256 else 256
    Bt_pad = _round_up(Bt, Tb)

    def pad_rows(x):
        pad = Bt_pad - x.shape[0]
        if pad == 0:
            return x
        return jnp.pad(x, ((0, pad), (0, 0)))

    ent_parts = [pad_rows(ent_tab[idx]) for idx in (p_h, p_t, n_h, n_t)]
    rel_parts = [pad_rows(rel_tab[idx]) for idx in (p_r, n_r)]
    img_parts = [pad_rows(img_tab[idx].astype(jnp.bfloat16))
                 for idx in (p_h, p_t, n_h, n_t)]
    valid = pad_rows(jnp.ones((Bt, 1), jnp.float32))

    loss = triple_relation_loss(
        ent_parts, rel_parts, img_parts, valid,
        P['fc3_w'].astype(jnp.bfloat16), P['fc3_b'], margin=margin, tb=Tb)

    # ------------------ entity branch (Kernel 2) ----------------------------
    N = 2 * Be
    Ap = _round_up(A, 8)
    e_idx = jnp.concatenate([e1, e2])
    ent_e = ent_tab[e_idx]                                       # (N, D)
    img_e = img_tab[e_idx].astype(jnp.bfloat16)                  # (N, 2048)

    attr_ids = jnp.pad(jnp.concatenate([e1_a, e2_a], axis=0),
                       ((0, 0), (0, Ap - A)))
    ea = P['attr_embed'][attr_ids].reshape(N * Ap, 768).astype(jnp.bfloat16)
    ev = jnp.pad(jnp.concatenate([e1_v, e2_v], axis=0).astype(jnp.float32),
                 ((0, 0), (0, Ap - A))).reshape(N * Ap, 1)
    mask = jnp.concatenate([e1_mask, e2_mask], axis=0).astype(jnp.float32)
    mask = jnp.pad(mask, ((0, 0), (0, Ap - A)))

    # Fold attr fc1 into fc2's top half at trace time (no activation between
    # them in the reference AttrEncoder); collapse sigmoid(v).repeat(D)
    # against W2's bottom half.
    w2 = P['afc2_w']
    w2_top = w2[:D]
    w2bs = jnp.sum(w2[D:], axis=0, keepdims=True)                # (1, D)
    awf = (P['afc1_w'] @ w2_top).astype(jnp.bfloat16)            # (768, D)
    abf = P['afc1_b'] @ w2_top + P['afc2_b']                     # (1, D)

    scores = entity_scores(ent_e, img_e, P['fc1_w'].astype(jnp.bfloat16),
                           P['fc1_b'], ea, ev, mask, awf, abf, w2bs,
                           Be=Be, Ap=Ap, A=A, D=D)

    r_score = scores[:, 0 * Be:1 * Be]
    a_score = scores[:, 1 * Be:2 * Be]
    i_score = scores[:, 2 * Be:3 * Be]
    all_score = scores[:, 3 * Be:4 * Be]
    # TODO(synk): at production Be, tile Kernel 2 over e1-row blocks (with e2
    # reps resident) instead of one grid-less launch.
    return loss[0, 0], r_score, a_score, i_score, all_score


# ---------------------------------------------------------------------------
# Main
# ---------------------------------------------------------------------------

if __name__ == "__main__":
    ent_num, rel_num, attr_num = 16, 8, 12
    dim = 32            # args.dim
    margin = 1.0        # args.margin
    Bt = 8              # triple batch
    Be = 8              # entity batch
    A = 6               # attributes per entity

    params = init_params(jax.random.PRNGKey(0), ent_num, rel_num, attr_num, dim)

    kk = jax.random.split(jax.random.PRNGKey(0), 16)
    p_h = jax.random.randint(kk[0], (Bt,), 0, ent_num)
    p_r = jax.random.randint(kk[1], (Bt,), 0, rel_num)
    p_t = jax.random.randint(kk[2], (Bt,), 0, ent_num)
    n_h = jax.random.randint(kk[3], (Bt,), 0, ent_num)
    n_r = jax.random.randint(kk[4], (Bt,), 0, rel_num)
    n_t = jax.random.randint(kk[5], (Bt,), 0, ent_num)
    e1 = jax.random.randint(kk[6], (Be,), 0, ent_num)
    e2 = jax.random.randint(kk[7], (Be,), 0, ent_num)
    e1_a = jax.random.randint(kk[8], (Be, A), 0, attr_num)
    e2_a = jax.random.randint(kk[9], (Be, A), 0, attr_num)
    e1_v = jax.random.normal(kk[10], (Be, A), jnp.float32)
    e2_v = jax.random.normal(kk[11], (Be, A), jnp.float32)
    e1_mask = (jax.random.uniform(kk[12], (Be, A)) > 0.3).astype(jnp.float32)
    e2_mask = (jax.random.uniform(kk[13], (Be, A)) > 0.3).astype(jnp.float32)
    e1_l = jnp.sum(e1_mask, axis=1).astype(jnp.int32)   # unused by forward
    e2_l = jnp.sum(e2_mask, axis=1).astype(jnp.int32)   # unused by forward

    fwd = jax.jit(functools.partial(msnea_forward, margin=margin))
    outs = fwd(params, p_h, p_r, p_t, n_h, n_r, n_t,
               e1, e2, e1_a, e1_v, e1_mask, e1_l,
               e2_a, e2_v, e2_mask, e2_l)
    outs = jax.block_until_ready(outs)

    rel_loss, r_s, a_s, i_s, s = outs
    assert rel_loss.shape == ()
    assert r_s.shape == (Be, Be) and a_s.shape == (Be, Be)
    assert i_s.shape == (Be, Be) and s.shape == (Be, Be)
    assert bool(jnp.isfinite(rel_loss))
    assert bool(jnp.all(jnp.isfinite(s)))
    print("KERNEL_OK")
</pallas_src>

<mosaic_0001>
module attributes {stable_mosaic.version = 11 : i64} {
  func.func @_triple_loss_kernel(%arg0: i32, %arg1: memref<8x1xf32, #tpu.memory_space<vmem>>, %arg2: memref<8x32xf32, #tpu.memory_space<vmem>>, %arg3: memref<8x32xf32, #tpu.memory_space<vmem>>, %arg4: memref<8x32xf32, #tpu.memory_space<vmem>>, %arg5: memref<8x32xf32, #tpu.memory_space<vmem>>, %arg6: memref<8x32xf32, #tpu.memory_space<vmem>>, %arg7: memref<8x32xf32, #tpu.memory_space<vmem>>, %arg8: memref<8x2048xbf16, #tpu.memory_space<vmem>>, %arg9: memref<8x2048xbf16, #tpu.memory_space<vmem>>, %arg10: memref<8x2048xbf16, #tpu.memory_space<vmem>>, %arg11: memref<8x2048xbf16, #tpu.memory_space<vmem>>, %arg12: memref<2048x32xbf16, #tpu.memory_space<vmem>>, %arg13: memref<1x32xf32, #tpu.memory_space<vmem>>, %arg14: memref<1x1xf32, #tpu.memory_space<vmem>>) attributes {dimension_semantics = [#tpu.dimension_semantics<arbitrary>], iteration_bounds = array<i64: 1>, scalar_prefetch = 0 : i64, scratch_operands = 0 : i64, tpu.core_type = #tpu.core_type<tc>, window_params = [{transform_indices = @transform_0, window_bounds = array<i64: 8, 1>}, {transform_indices = @transform_1, window_bounds = array<i64: 8, 32>}, {transform_indices = @transform_2, window_bounds = array<i64: 8, 32>}, {transform_indices = @transform_3, window_bounds = array<i64: 8, 32>}, {transform_indices = @transform_4, window_bounds = array<i64: 8, 32>}, {transform_indices = @transform_5, window_bounds = array<i64: 8, 32>}, {transform_indices = @transform_6, window_bounds = array<i64: 8, 32>}, {transform_indices = @transform_7, window_bounds = array<i64: 8, 2048>}, {transform_indices = @transform_8, window_bounds = array<i64: 8, 2048>}, {transform_indices = @transform_9, window_bounds = array<i64: 8, 2048>}, {transform_indices = @transform_10, window_bounds = array<i64: 8, 2048>}, {pipeline_mode = #tpu.pipeline_mode<synchronous>, transform_indices = @transform_11, window_bounds = array<i64: 2048, 32>}, {pipeline_mode = #tpu.pipeline_mode<synchronous>, transform_indices = @transform_12, window_bounds = array<i64: 1, 32>}, {pipeline_mode = #tpu.pipeline_mode<synchronous>, transform_indices = @transform_13, window_bounds = array<i64: 1, 1>}]} {
    %c0_i32 = arith.constant 0 : i32
    %0 = arith.cmpi eq, %arg0, %c0_i32 : i32
    %1 = arith.extui %0 : i1 to i32
    %c0_i32_0 = arith.constant 0 : i32
    %2 = arith.cmpi ne, %1, %c0_i32_0 : i32
    scf.if %2 {
      %cst_63 = arith.constant 0.000000e+00 : f32
      %154 = vector.broadcast %cst_63 : f32 to vector<1x1xf32>
      %c0_64 = arith.constant 0 : index
      %c0_65 = arith.constant 0 : index
      %155 = vector.load %arg14[%c0_64, %c0_65] : memref<1x1xf32, #tpu.memory_space<vmem>>, vector<1x1xf32>
      tpu.vector_store %arg14[%c0_64, %c0_65], %154 {strides = array<i32>} : memref<1x1xf32, #tpu.memory_space<vmem>>, vector<1x1xf32>,
    } else {
    }
    %c0 = arith.constant 0 : index
    %c0_1 = arith.constant 0 : index
    %3 = vector.load %arg12[%c0, %c0_1] : memref<2048x32xbf16, #tpu.memory_space<vmem>>, vector<2048x32xbf16>
    %c0_2 = arith.constant 0 : index
    %c0_3 = arith.constant 0 : index
    %4 = vector.load %arg13[%c0_2, %c0_3] : memref<1x32xf32, #tpu.memory_space<vmem>>, vector<1x32xf32>
    %c0_4 = arith.constant 0 : index
    %c0_5 = arith.constant 0 : index
    %5 = vector.load %arg2[%c0_4, %c0_5] : memref<8x32xf32, #tpu.memory_space<vmem>>, vector<8x32xf32>
    %6 = arith.mulf %5, %5 : vector<8x32xf32>
    %cst = arith.constant dense<0.000000e+00> : vector<8xf32>
    %7 = vector.multi_reduction <add>, %6, %cst [1] : vector<8x32xf32> to vector<8xf32>
    %8 = vector.shape_cast %7 : vector<8xf32> to vector<8x1xf32>
    %cst_6 = arith.constant 1.000000e-24 : f32
    %9 = vector.broadcast %cst_6 : f32 to vector<8x1xf32>
    %10 = arith.maximumf %8, %9 : vector<8x1xf32>
    %11 = math.rsqrt %10 : vector<8x1xf32>
    %12 = vector.broadcast %11 : vector<8x1xf32> to vector<8x32xf32>
    %13 = arith.mulf %5, %12 : vector<8x32xf32>
    %c0_7 = arith.constant 0 : index
    %c0_8 = arith.constant 0 : index
    %14 = vector.load %arg3[%c0_7, %c0_8] : memref<8x32xf32, #tpu.memory_space<vmem>>, vector<8x32xf32>
    %15 = arith.mulf %14, %14 : vector<8x32xf32>
    %cst_9 = arith.constant dense<0.000000e+00> : vector<8xf32>
    %16 = vector.multi_reduction <add>, %15, %cst_9 [1] : vector<8x32xf32> to vector<8xf32>
    %17 = vector.shape_cast %16 : vector<8xf32> to vector<8x1xf32>
    %cst_10 = arith.constant 1.000000e-24 : f32
    %18 = vector.broadcast %cst_10 : f32 to vector<8x1xf32>
    %19 = arith.maximumf %17, %18 : vector<8x1xf32>
    %20 = math.rsqrt %19 : vector<8x1xf32>
    %21 = vector.broadcast %20 : vector<8x1xf32> to vector<8x32xf32>
    %22 = arith.mulf %14, %21 : vector<8x32xf32>
    %c0_11 = arith.constant 0 : index
    %c0_12 = arith.constant 0 : index
    %23 = vector.load %arg4[%c0_11, %c0_12] : memref<8x32xf32, #tpu.memory_space<vmem>>, vector<8x32xf32>
    %24 = arith.mulf %23, %23 : vector<8x32xf32>
    %cst_13 = arith.constant dense<0.000000e+00> : vector<8xf32>
    %25 = vector.multi_reduction <add>, %24, %cst_13 [1] : vector<8x32xf32> to vector<8xf32>
    %26 = vector.shape_cast %25 : vector<8xf32> to vector<8x1xf32>
    %cst_14 = arith.constant 1.000000e-24 : f32
    %27 = vector.broadcast %cst_14 : f32 to vector<8x1xf32>
    %28 = arith.maximumf %26, %27 : vector<8x1xf32>
    %29 = math.rsqrt %28 : vector<8x1xf32>
    %30 = vector.broadcast %29 : vector<8x1xf32> to vector<8x32xf32>
    %31 = arith.mulf %23, %30 : vector<8x32xf32>
    %c0_15 = arith.constant 0 : index
    %c0_16 = arith.constant 0 : index
    %32 = vector.load %arg5[%c0_15, %c0_16] : memref<8x32xf32, #tpu.memory_space<vmem>>, vector<8x32xf32>
    %33 = arith.mulf %32, %32 : vector<8x32xf32>
    %cst_17 = arith.constant dense<0.000000e+00> : vector<8xf32>
    %34 = vector.multi_reduction <add>, %33, %cst_17 [1] : vector<8x32xf32> to vector<8xf32>
    %35 = vector.shape_cast %34 : vector<8xf32> to vector<8x1xf32>
    %cst_18 = arith.constant 1.000000e-24 : f32
    %36 = vector.broadcast %cst_18 : f32 to vector<8x1xf32>
    %37 = arith.maximumf %35, %36 : vector<8x1xf32>
    %38 = math.rsqrt %37 : vector<8x1xf32>
    %39 = vector.broadcast %38 : vector<8x1xf32> to vector<8x32xf32>
    %40 = arith.mulf %32, %39 : vector<8x32xf32>
    %c0_19 = arith.constant 0 : index
    %c0_20 = arith.constant 0 : index
    %41 = vector.load %arg6[%c0_19, %c0_20] : memref<8x32xf32, #tpu.memory_space<vmem>>, vector<8x32xf32>
    %42 = arith.mulf %41, %41 : vector<8x32xf32>
    %cst_21 = arith.constant dense<0.000000e+00> : vector<8xf32>
    %43 = vector.multi_reduction <add>, %42, %cst_21 [1] : vector<8x32xf32> to vector<8xf32>
    %44 = vector.shape_cast %43 : vector<8xf32> to vector<8x1xf32>
    %cst_22 = arith.constant 1.000000e-24 : f32
    %45 = vector.broadcast %cst_22 : f32 to vector<8x1xf32>
    %46 = arith.maximumf %44, %45 : vector<8x1xf32>
    %47 = math.rsqrt %46 : vector<8x1xf32>
    %48 = vector.broadcast %47 : vector<8x1xf32> to vector<8x32xf32>
    %49 = arith.mulf %41, %48 : vector<8x32xf32>
    %c0_23 = arith.constant 0 : index
    %c0_24 = arith.constant 0 : index
    %50 = vector.load %arg7[%c0_23, %c0_24] : memref<8x32xf32, #tpu.memory_space<vmem>>, vector<8x32xf32>
    %51 = arith.mulf %50, %50 : vector<8x32xf32>
    %cst_25 = arith.constant dense<0.000000e+00> : vector<8xf32>
    %52 = vector.multi_reduction <add>, %51, %cst_25 [1] : vector<8x32xf32> to vector<8xf32>
    %53 = vector.shape_cast %52 : vector<8xf32> to vector<8x1xf32>
    %cst_26 = arith.constant 1.000000e-24 : f32
    %54 = vector.broadcast %cst_26 : f32 to vector<8x1xf32>
    %55 = arith.maximumf %53, %54 : vector<8x1xf32>
    %56 = math.rsqrt %55 : vector<8x1xf32>
    %57 = vector.broadcast %56 : vector<8x1xf32> to vector<8x32xf32>
    %58 = arith.mulf %50, %57 : vector<8x32xf32>
    %c0_27 = arith.constant 0 : index
    %c0_28 = arith.constant 0 : index
    %59 = vector.load %arg8[%c0_27, %c0_28] : memref<8x2048xbf16, #tpu.memory_space<vmem>>, vector<8x2048xbf16>
    %cst_29 = arith.constant dense<0.000000e+00> : vector<8x32xf32>
    %60 = tpu.matmul %59, %3, %cst_29 {dimension_numbers = #tpu.dot_dimension_numbers<[1], [0], [0], [1], [0, 0, 1, 1], [], []>} : vector<8x2048xbf16>, vector<2048x32xbf16>, vector<8x32xf32> -> vector<8x32xf32>
    %61 = vector.broadcast %4 : vector<1x32xf32> to vector<8x32xf32>
    %62 = arith.addf %60, %61 : vector<8x32xf32>
    %63 = arith.mulf %62, %62 : vector<8x32xf32>
    %cst_30 = arith.constant dense<0.000000e+00> : vector<8xf32>
    %64 = vector.multi_reduction <add>, %63, %cst_30 [1] : vector<8x32xf32> to vector<8xf32>
    %65 = vector.shape_cast %64 : vector<8xf32> to vector<8x1xf32>
    %cst_31 = arith.constant 1.000000e-24 : f32
    %66 = vector.broadcast %cst_31 : f32 to vector<8x1xf32>
    %67 = arith.maximumf %65, %66 : vector<8x1xf32>
    %68 = math.rsqrt %67 : vector<8x1xf32>
    %69 = vector.broadcast %68 : vector<8x1xf32> to vector<8x32xf32>
    %70 = arith.mulf %62, %69 : vector<8x32xf32>
    %c0_32 = arith.constant 0 : index
    %c0_33 = arith.constant 0 : index
    %71 = vector.load %arg9[%c0_32, %c0_33] : memref<8x2048xbf16, #tpu.memory_space<vmem>>, vector<8x2048xbf16>
    %cst_34 = arith.constant dense<0.000000e+00> : vector<8x32xf32>
    %72 = tpu.matmul %71, %3, %cst_34 {dimension_numbers = #tpu.dot_dimension_numbers<[1], [0], [0], [1], [0, 0, 1, 1], [], []>} : vector<8x2048xbf16>, vector<2048x32xbf16>, vector<8x32xf32> -> vector<8x32xf32>
    %73 = vector.broadcast %4 : vector<1x32xf32> to vector<8x32xf32>
    %74 = arith.addf %72, %73 : vector<8x32xf32>
    %75 = arith.mulf %74, %74 : vector<8x32xf32>
    %cst_35 = arith.constant dense<0.000000e+00> : vector<8xf32>
    %76 = vector.multi_reduction <add>, %75, %cst_35 [1] : vector<8x32xf32> to vector<8xf32>
    %77 = vector.shape_cast %76 : vector<8xf32> to vector<8x1xf32>
    %cst_36 = arith.constant 1.000000e-24 : f32
    %78 = vector.broadcast %cst_36 : f32 to vector<8x1xf32>
    %79 = arith.maximumf %77, %78 : vector<8x1xf32>
    %80 = math.rsqrt %79 : vector<8x1xf32>
    %81 = vector.broadcast %80 : vector<8x1xf32> to vector<8x32xf32>
    %82 = arith.mulf %74, %81 : vector<8x32xf32>
    %c0_37 = arith.constant 0 : index
    %c0_38 = arith.constant 0 : index
    %83 = vector.load %arg10[%c0_37, %c0_38] : memref<8x2048xbf16, #tpu.memory_space<vmem>>, vector<8x2048xbf16>
    %cst_39 = arith.constant dense<0.000000e+00> : vector<8x32xf32>
    %84 = tpu.matmul %83, %3, %cst_39 {dimension_numbers = #tpu.dot_dimension_numbers<[1], [0], [0], [1], [0, 0, 1, 1], [], []>} : vector<8x2048xbf16>, vector<2048x32xbf16>, vector<8x32xf32> -> vector<8x32xf32>
    %85 = vector.broadcast %4 : vector<1x32xf32> to vector<8x32xf32>
    %86 = arith.addf %84, %85 : vector<8x32xf32>
    %87 = arith.mulf %86, %86 : vector<8x32xf32>
    %cst_40 = arith.constant dense<0.000000e+00> : vector<8xf32>
    %88 = vector.multi_reduction <add>, %87, %cst_40 [1] : vector<8x32xf32> to vector<8xf32>
    %89 = vector.shape_cast %88 : vector<8xf32> to vector<8x1xf32>
    %cst_41 = arith.constant 1.000000e-24 : f32
    %90 = vector.broadcast %cst_41 : f32 to vector<8x1xf32>
    %91 = arith.maximumf %89, %90 : vector<8x1xf32>
    %92 = math.rsqrt %91 : vector<8x1xf32>
    %93 = vector.broadcast %92 : vector<8x1xf32> to vector<8x32xf32>
    %94 = arith.mulf %86, %93 : vector<8x32xf32>
    %c0_42 = arith.constant 0 : index
    %c0_43 = arith.constant 0 : index
    %95 = vector.load %arg11[%c0_42, %c0_43] : memref<8x2048xbf16, #tpu.memory_space<vmem>>, vector<8x2048xbf16>
    %cst_44 = arith.constant dense<0.000000e+00> : vector<8x32xf32>
    %96 = tpu.matmul %95, %3, %cst_44 {dimension_numbers = #tpu.dot_dimension_numbers<[1], [0], [0], [1], [0, 0, 1, 1], [], []>} : vector<8x2048xbf16>, vector<2048x32xbf16>, vector<8x32xf32> -> vector<8x32xf32>
    %97 = vector.broadcast %4 : vector<1x32xf32> to vector<8x32xf32>
    %98 = arith.addf %96, %97 : vector<8x32xf32>
    %99 = arith.mulf %98, %98 : vector<8x32xf32>
    %cst_45 = arith.constant dense<0.000000e+00> : vector<8xf32>
    %100 = vector.multi_reduction <add>, %99, %cst_45 [1] : vector<8x32xf32> to vector<8xf32>
    %101 = vector.shape_cast %100 : vector<8xf32> to vector<8x1xf32>
    %cst_46 = arith.constant 1.000000e-24 : f32
    %102 = vector.broadcast %cst_46 : f32 to vector<8x1xf32>
    %103 = arith.maximumf %101, %102 : vector<8x1xf32>
    %104 = math.rsqrt %103 : vector<8x1xf32>
    %105 = vector.broadcast %104 : vector<8x1xf32> to vector<8x32xf32>
    %106 = arith.mulf %98, %105 : vector<8x32xf32>
    %c0_47 = arith.constant 0 : index
    %c0_48 = arith.constant 0 : index
    %107 = vector.load %arg1[%c0_47, %c0_48] : memref<8x1xf32, #tpu.memory_space<vmem>>, vector<8x1xf32>
    %c0_49 = arith.constant 0 : index
    %c0_50 = arith.constant 0 : index
    %108 = vector.load %arg14[%c0_49, %c0_50] : memref<1x1xf32, #tpu.memory_space<vmem>>, vector<1x1xf32>
    %109 = arith.addf %13, %49 : vector<8x32xf32>
    %110 = arith.subf %109, %22 : vector<8x32xf32>
    %111 = arith.addf %31, %58 : vector<8x32xf32>
    %112 = arith.subf %111, %40 : vector<8x32xf32>
    %113 = arith.mulf %110, %110 : vector<8x32xf32>
    %cst_51 = arith.constant dense<0.000000e+00> : vector<8xf32>
    %114 = vector.multi_reduction <add>, %113, %cst_51 [1] : vector<8x32xf32> to vector<8xf32>
    %115 = vector.shape_cast %114 : vector<8xf32> to vector<8x1xf32>
    %116 = arith.mulf %112, %112 : vector<8x32xf32>
    %cst_52 = arith.constant dense<0.000000e+00> : vector<8xf32>
    %117 = vector.multi_reduction <add>, %116, %cst_52 [1] : vector<8x32xf32> to vector<8xf32>
    %118 = vector.shape_cast %117 : vector<8xf32> to vector<8x1xf32>
    %cst_53 = arith.constant 1.000000e+00 : f32
    %119 = vector.broadcast %cst_53 : f32 to vector<8x1xf32>
    %120 = arith.addf %119, %115 : vector<8x1xf32>
    %121 = arith.subf %120, %118 : vector<8x1xf32>
    %cst_54 = arith.constant 0.000000e+00 : f32
    %122 = vector.broadcast %cst_54 : f32 to vector<8x1xf32>
    %123 = arith.maximumf %121, %122 : vector<8x1xf32>
    %124 = arith.mulf %123, %107 : vector<8x1xf32>
    %125 = vector.shape_cast %124 : vector<8x1xf32> to vector<1x8x1xf32>
    %cst_55 = arith.constant dense<0.000000e+00> : vector<1xf32>
    %126 = vector.multi_reduction <add>, %125, %cst_55 [1, 2] : vector<1x8x1xf32> to vector<1xf32>
    %127 = vector.shape_cast %126 : vector<1xf32> to vector<1x1x1xf32>
    %128 = vector.extract %127[0, 0, 0] : f32 from vector<1x1x1xf32>
    %129 = vector.broadcast %128 : f32 to vector<1x1xf32>
    %130 = arith.addf %70, %49 : vector<8x32xf32>
    %131 = arith.subf %130, %82 : vector<8x32xf32>
    %132 = arith.addf %94, %58 : vector<8x32xf32>
    %133 = arith.subf %132, %106 : vector<8x32xf32>
    %134 = arith.mulf %131, %131 : vector<8x32xf32>
    %cst_56 = arith.constant dense<0.000000e+00> : vector<8xf32>
    %135 = vector.multi_reduction <add>, %134, %cst_56 [1] : vector<8x32xf32> to vector<8xf32>
    %136 = vector.shape_cast %135 : vector<8xf32> to vector<8x1xf32>
    %137 = arith.mulf %133, %133 : vector<8x32xf32>
    %cst_57 = arith.constant dense<0.000000e+00> : vector<8xf32>
    %138 = vector.multi_reduction <add>, %137, %cst_57 [1] : vector<8x32xf32> to vector<8xf32>
    %139 = vector.shape_cast %138 : vector<8xf32> to vector<8x1xf32>
    %cst_58 = arith.constant 1.000000e+00 : f32
    %140 = vector.broadcast %cst_58 : f32 to vector<8x1xf32>
    %141 = arith.addf %140, %136 : vector<8x1xf32>
    %142 = arith.subf %141, %139 : vector<8x1xf32>
    %cst_59 = arith.constant 0.000000e+00 : f32
    %143 = vector.broadcast %cst_59 : f32 to vector<8x1xf32>
    %144 = arith.maximumf %142, %143 : vector<8x1xf32>
    %145 = arith.mulf %144, %107 : vector<8x1xf32>
    %146 = vector.shape_cast %145 : vector<8x1xf32> to vector<1x8x1xf32>
    %cst_60 = arith.constant dense<0.000000e+00> : vector<1xf32>
    %147 = vector.multi_reduction <add>, %146, %cst_60 [1, 2] : vector<1x8x1xf32> to vector<1xf32>
    %148 = vector.shape_cast %147 : vector<1xf32> to vector<1x1x1xf32>
    %149 = vector.extract %148[0, 0, 0] : f32 from vector<1x1x1xf32>
    %150 = vector.broadcast %149 : f32 to vector<1x1xf32>
    %151 = arith.addf %129, %150 : vector<1x1xf32>
    %152 = arith.addf %108, %151 : vector<1x1xf32>
    %c0_61 = arith.constant 0 : index
    %c0_62 = arith.constant 0 : index
    %153 = vector.load %arg14[%c0_61, %c0_62] : memref<1x1xf32, #tpu.memory_space<vmem>>, vector<1x1xf32>
    tpu.vector_store %arg14[%c0_61, %c0_62], %152 {strides = array<i32>} : memref<1x1xf32, #tpu.memory_space<vmem>>, vector<1x1xf32>,
    return
  }
  func.func @transform_0(%arg0: i32) -> (i32, i32) {
    %c0_i32 = arith.constant 0 : i32
    %c0_i32_0 = arith.constant 0 : i32
    return %arg0, %c0_i32 : i32, i32
  }
  func.func @transform_1(%arg0: i32) -> (i32, i32) {
    %c0_i32 = arith.constant 0 : i32
    %c0_i32_0 = arith.constant 0 : i32
    return %arg0, %c0_i32 : i32, i32
  }
  func.func @transform_2(%arg0: i32) -> (i32, i32) {
    %c0_i32 = arith.constant 0 : i32
    %c0_i32_0 = arith.constant 0 : i32
    return %arg0, %c0_i32 : i32, i32
  }
  func.func @transform_3(%arg0: i32) -> (i32, i32) {
    %c0_i32 = arith.constant 0 : i32
    %c0_i32_0 = arith.constant 0 : i32
    return %arg0, %c0_i32 : i32, i32
  }
  func.func @transform_4(%arg0: i32) -> (i32, i32) {
    %c0_i32 = arith.constant 0 : i32
    %c0_i32_0 = arith.constant 0 : i32
    return %arg0, %c0_i32 : i32, i32
  }
  func.func @transform_5(%arg0: i32) -> (i32, i32) {
    %c0_i32 = arith.constant 0 : i32
    %c0_i32_0 = arith.constant 0 : i32
    return %arg0, %c0_i32 : i32, i32
  }
  func.func @transform_6(%arg0: i32) -> (i32, i32) {
    %c0_i32 = arith.constant 0 : i32
    %c0_i32_0 = arith.constant 0 : i32
    return %arg0, %c0_i32 : i32, i32
  }
  func.func @transform_7(%arg0: i32) -> (i32, i32) {
    %c0_i32 = arith.constant 0 : i32
    %c0_i32_0 = arith.constant 0 : i32
    return %arg0, %c0_i32 : i32, i32
  }
  func.func @transform_8(%arg0: i32) -> (i32, i32) {
    %c0_i32 = arith.constant 0 : i32
    %c0_i32_0 = arith.constant 0 : i32
    return %arg0, %c0_i32 : i32, i32
  }
  func.func @transform_9(%arg0: i32) -> (i32, i32) {
    %c0_i32 = arith.constant 0 : i32
    %c0_i32_0 = arith.constant 0 : i32
    return %arg0, %c0_i32 : i32, i32
  }
  func.func @transform_10(%arg0: i32) -> (i32, i32) {
    %c0_i32 = arith.constant 0 : i32
    %c0_i32_0 = arith.constant 0 : i32
    return %arg0, %c0_i32 : i32, i32
  }
  func.func @transform_11(%arg0: i32) -> (i32, i32) {
    %c0_i32 = arith.constant 0 : i32
    %c0_i32_0 = arith.constant 0 : i32
    %c0_i32_1 = arith.constant 0 : i32
    return %c0_i32, %c0_i32_0 : i32, i32
  }
  func.func @transform_12(%arg0: i32) -> (i32, i32) {
    %c0_i32 = arith.constant 0 : i32
    %c0_i32_0 = arith.constant 0 : i32
    %c0_i32_1 = arith.constant 0 : i32
    return %c0_i32, %c0_i32_0 : i32, i32
  }
  func.func @transform_13(%arg0: i32) -> (i32, i32) {
    %c0_i32 = arith.constant 0 : i32
    %c0_i32_0 = arith.constant 0 : i32
    %c0_i32_1 = arith.constant 0 : i32
    return %c0_i32, %c0_i32_0 : i32, i32
  }
}

module attributes {stable_mosaic.version = 11 : i64} {
  func.func @_entity_kernel(%arg0: memref<16x32xf32, #tpu.memory_space<vmem>>, %arg1: memref<16x2048xbf16, #tpu.memory_space<vmem>>, %arg2: memref<2048x32xbf16, #tpu.memory_space<vmem>>, %arg3: memref<1x32xf32, #tpu.memory_space<vmem>>, %arg4: memref<128x768xbf16, #tpu.memory_space<vmem>>, %arg5: memref<128x1xf32, #tpu.memory_space<vmem>>, %arg6: memref<16x8xf32, #tpu.memory_space<vmem>>, %arg7: memref<768x32xbf16, #tpu.memory_space<vmem>>, %arg8: memref<1x32xf32, #tpu.memory_space<vmem>>, %arg9: memref<1x32xf32, #tpu.memory_space<vmem>>, %arg10: memref<8x32xf32, #tpu.memory_space<vmem>>) attributes {dimension_semantics = [], scalar_prefetch = 0 : i64, scratch_operands = 0 : i64, tpu.core_type = #tpu.core_type<tc>} {
    %c0 = arith.constant 0 : index
    %c0_0 = arith.constant 0 : index
    %0 = vector.load %arg0[%c0, %c0_0] : memref<16x32xf32, #tpu.memory_space<vmem>>, vector<16x32xf32>
    %1 = arith.mulf %0, %0 : vector<16x32xf32>
    %cst = arith.constant dense<0.000000e+00> : vector<16xf32>
    %2 = vector.multi_reduction <add>, %1, %cst [1] : vector<16x32xf32> to vector<16xf32>
    %3 = vector.shape_cast %2 : vector<16xf32> to vector<16x1xf32>
    %cst_1 = arith.constant 1.000000e-24 : f32
    %4 = vector.broadcast %cst_1 : f32 to vector<16x1xf32>
    %5 = arith.maximumf %3, %4 : vector<16x1xf32>
    %6 = math.rsqrt %5 : vector<16x1xf32>
    %7 = vector.broadcast %6 : vector<16x1xf32> to vector<16x32xf32>
    %8 = arith.mulf %0, %7 : vector<16x32xf32>
    %c0_2 = arith.constant 0 : index
    %c0_3 = arith.constant 0 : index
    %9 = vector.load %arg1[%c0_2, %c0_3] : memref<16x2048xbf16, #tpu.memory_space<vmem>>, vector<16x2048xbf16>
    %c0_4 = arith.constant 0 : index
    %c0_5 = arith.constant 0 : index
    %10 = vector.load %arg2[%c0_4, %c0_5] : memref<2048x32xbf16, #tpu.memory_space<vmem>>, vector<2048x32xbf16>
    %cst_6 = arith.constant dense<0.000000e+00> : vector<16x32xf32>
    %11 = tpu.matmul %9, %10, %cst_6 {dimension_numbers = #tpu.dot_dimension_numbers<[1], [0], [0], [1], [0, 0, 1, 1], [], []>} : vector<16x2048xbf16>, vector<2048x32xbf16>, vector<16x32xf32> -> vector<16x32xf32>
    %c0_7 = arith.constant 0 : index
    %c0_8 = arith.constant 0 : index
    %12 = vector.load %arg3[%c0_7, %c0_8] : memref<1x32xf32, #tpu.memory_space<vmem>>, vector<1x32xf32>
    %13 = vector.broadcast %12 : vector<1x32xf32> to vector<16x32xf32>
    %14 = arith.addf %11, %13 : vector<16x32xf32>
    %15 = arith.mulf %14, %14 : vector<16x32xf32>
    %cst_9 = arith.constant dense<0.000000e+00> : vector<16xf32>
    %16 = vector.multi_reduction <add>, %15, %cst_9 [1] : vector<16x32xf32> to vector<16xf32>
    %17 = vector.shape_cast %16 : vector<16xf32> to vector<16x1xf32>
    %cst_10 = arith.constant 1.000000e-24 : f32
    %18 = vector.broadcast %cst_10 : f32 to vector<16x1xf32>
    %19 = arith.maximumf %17, %18 : vector<16x1xf32>
    %20 = math.rsqrt %19 : vector<16x1xf32>
    %21 = vector.broadcast %20 : vector<16x1xf32> to vector<16x32xf32>
    %22 = arith.mulf %14, %21 : vector<16x32xf32>
    %c0_11 = arith.constant 0 : index
    %c0_12 = arith.constant 0 : index
    %23 = vector.load %arg4[%c0_11, %c0_12] : memref<128x768xbf16, #tpu.memory_space<vmem>>, vector<128x768xbf16>
    %c0_13 = arith.constant 0 : index
    %c0_14 = arith.constant 0 : index
    %24 = vector.load %arg7[%c0_13, %c0_14] : memref<768x32xbf16, #tpu.memory_space<vmem>>, vector<768x32xbf16>
    %cst_15 = arith.constant dense<0.000000e+00> : vector<128x32xf32>
    %25 = tpu.matmul %23, %24, %cst_15 {dimension_numbers = #tpu.dot_dimension_numbers<[1], [0], [0], [1], [0, 0, 1, 1], [], []>} : vector<128x768xbf16>, vector<768x32xbf16>, vector<128x32xf32> -> vector<128x32xf32>
    %c0_16 = arith.constant 0 : index
    %c0_17 = arith.constant 0 : index
    %26 = vector.load %arg8[%c0_16, %c0_17] : memref<1x32xf32, #tpu.memory_space<vmem>>, vector<1x32xf32>
    %27 = vector.broadcast %26 : vector<1x32xf32> to vector<128x32xf32>
    %28 = arith.addf %25, %27 : vector<128x32xf32>
    %c0_18 = arith.constant 0 : index
    %c0_19 = arith.constant 0 : index
    %29 = vector.load %arg5[%c0_18, %c0_19] : memref<128x1xf32, #tpu.memory_space<vmem>>, vector<128x1xf32>
    %30 = arith.negf %29 : vector<128x1xf32>
    %31 = math.exp %30 : vector<128x1xf32>
    %cst_20 = arith.constant 1.000000e+00 : f32
    %32 = vector.broadcast %cst_20 : f32 to vector<128x1xf32>
    %33 = arith.addf %32, %31 : vector<128x1xf32>
    %34 = arith.divf %32, %33 : vector<128x1xf32>
    %c0_21 = arith.constant 0 : index
    %c0_22 = arith.constant 0 : index
    %35 = vector.load %arg9[%c0_21, %c0_22] : memref<1x32xf32, #tpu.memory_space<vmem>>, vector<1x32xf32>
    %36 = vector.broadcast %34 : vector<128x1xf32> to vector<128x32xf32>
    %37 = vector.broadcast %35 : vector<1x32xf32> to vector<128x32xf32>
    %38 = arith.mulf %36, %37 : vector<128x32xf32>
    %39 = arith.addf %28, %38 : vector<128x32xf32>
    %40 = vector.shape_cast %39 : vector<128x32xf32> to vector<16x8x32xf32>
    %41 = vector.shape_cast %22 : vector<16x32xf32> to vector<16x1x32xf32>
    %42 = vector.broadcast %41 : vector<16x1x32xf32> to vector<16x8x32xf32>
    %43 = arith.mulf %40, %42 : vector<16x8x32xf32>
    %cst_23 = arith.constant dense<0.000000e+00> : vector<16x8xf32>
    %44 = vector.multi_reduction <add>, %43, %cst_23 [2] : vector<16x8x32xf32> to vector<16x8xf32>
    %c0_24 = arith.constant 0 : index
    %c0_25 = arith.constant 0 : index
    %45 = vector.load %arg6[%c0_24, %c0_25] : memref<16x8xf32, #tpu.memory_space<vmem>>, vector<16x8xf32>
    %46 = arith.mulf %44, %45 : vector<16x8xf32>
    %47 = tpu.iota {dimensions = array<i32: 1>} : vector<16x8xi32>
    %c6_i32 = arith.constant 6 : i32
    %48 = vector.broadcast %c6_i32 : i32 to vector<16x8xi32>
    %49 = arith.cmpi slt, %47, %48 : vector<16x8xi32>
    %cst_26 = arith.constant 0.000000e+00 : f32
    %cst_27 = arith.constant -1.000000e+30 : f32
    %50 = vector.broadcast %cst_26 : f32 to vector<16x8xf32>
    %51 = vector.broadcast %cst_27 : f32 to vector<16x8xf32>
    %52 = arith.select %49, %50, %51 : vector<16x8xi1>, vector<16x8xf32>
    %53 = arith.addf %46, %52 : vector<16x8xf32>
    %cst_28 = arith.constant dense<0xFF800000> : vector<16xf32>
    %54 = vector.multi_reduction <maximumf>, %53, %cst_28 [1] : vector<16x8xf32> to vector<16xf32>
    %55 = vector.shape_cast %54 : vector<16xf32> to vector<16x1xf32>
    %56 = vector.broadcast %55 : vector<16x1xf32> to vector<16x8xf32>
    %57 = arith.subf %53, %56 : vector<16x8xf32>
    %58 = math.exp %57 : vector<16x8xf32>
    %cst_29 = arith.constant dense<0.000000e+00> : vector<16xf32>
    %59 = vector.multi_reduction <add>, %58, %cst_29 [1] : vector<16x8xf32> to vector<16xf32>
    %60 = vector.shape_cast %59 : vector<16xf32> to vector<16x1xf32>
    %61 = vector.broadcast %60 : vector<16x1xf32> to vector<16x8xf32>
    %62 = arith.divf %58, %61 : vector<16x8xf32>
    %63 = vector.shape_cast %62 : vector<16x8xf32> to vector<16x8x1xf32>
    %64 = vector.broadcast %63 : vector<16x8x1xf32> to vector<16x8x32xf32>
    %65 = arith.mulf %64, %40 : vector<16x8x32xf32>
    %cst_30 = arith.constant dense<0.000000e+00> : vector<16x32xf32>
    %66 = vector.multi_reduction <add>, %65, %cst_30 [1] : vector<16x8x32xf32> to vector<16x32xf32>
    %67 = vector.extract_strided_slice %8 {offsets = [0, 0], sizes = [8, 32], strides = [1, 1]} : vector<16x32xf32> to vector<8x32xf32>
    %68 = vector.extract_strided_slice %8 {offsets = [8, 0], sizes = [8, 32], strides = [1, 1]} : vector<16x32xf32> to vector<8x32xf32>
    %69 = vector.extract_strided_slice %22 {offsets = [0, 0], sizes = [8, 32], strides = [1, 1]} : vector<16x32xf32> to vector<8x32xf32>
    %70 = vector.extract_strided_slice %22 {offsets = [8, 0], sizes = [8, 32], strides = [1, 1]} : vector<16x32xf32> to vector<8x32xf32>
    %71 = vector.extract_strided_slice %66 {offsets = [0, 0], sizes = [8, 32], strides = [1, 1]} : vector<16x32xf32> to vector<8x32xf32>
    %72 = vector.extract_strided_slice %66 {offsets = [8, 0], sizes = [8, 32], strides = [1, 1]} : vector<16x32xf32> to vector<8x32xf32>
    %cst_31 = arith.constant dense<0.000000e+00> : vector<8x8xf32>
    %73 = tpu.matmul %67, %68, %cst_31 {dimension_numbers = #tpu.dot_dimension_numbers<[1], [1], [0], [0], [0, 0, 1, 0], [], []>} : vector<8x32xf32>, vector<8x32xf32>, vector<8x8xf32> -> vector<8x8xf32>
    %cst_32 = arith.constant dense<0.000000e+00> : vector<8x8xf32>
    %74 = tpu.matmul %71, %72, %cst_32 {dimension_numbers = #tpu.dot_dimension_numbers<[1], [1], [0], [0], [0, 0, 1, 0], [], []>} : vector<8x32xf32>, vector<8x32xf32>, vector<8x8xf32> -> vector<8x8xf32>
    %cst_33 = arith.constant dense<0.000000e+00> : vector<8x8xf32>
    %75 = tpu.matmul %69, %70, %cst_33 {dimension_numbers = #tpu.dot_dimension_numbers<[1], [1], [0], [0], [0, 0, 1, 0], [], []>} : vector<8x32xf32>, vector<8x32xf32>, vector<8x8xf32> -> vector<8x8xf32>
    %76 = arith.mulf %67, %67 : vector<8x32xf32>
    %cst_34 = arith.constant dense<0.000000e+00> : vector<8xf32>
    %77 = vector.multi_reduction <add>, %76, %cst_34 [1] : vector<8x32xf32> to vector<8xf32>
    %78 = vector.shape_cast %77 : vector<8xf32> to vector<8x1xf32>
    %79 = arith.mulf %69, %69 : vector<8x32xf32>
    %cst_35 = arith.constant dense<0.000000e+00> : vector<8xf32>
    %80 = vector.multi_reduction <add>, %79, %cst_35 [1] : vector<8x32xf32> to vector<8xf32>
    %81 = vector.shape_cast %80 : vector<8xf32> to vector<8x1xf32>
    %82 = arith.addf %78, %81 : vector<8x1xf32>
    %83 = arith.mulf %71, %71 : vector<8x32xf32>
    %cst_36 = arith.constant dense<0.000000e+00> : vector<8xf32>
    %84 = vector.multi_reduction <add>, %83, %cst_36 [1] : vector<8x32xf32> to vector<8xf32>
    %85 = vector.shape_cast %84 : vector<8xf32> to vector<8x1xf32>
    %86 = arith.addf %82, %85 : vector<8x1xf32>
    %87 = arith.mulf %68, %68 : vector<8x32xf32>
    %cst_37 = arith.constant dense<0.000000e+00> : vector<8xf32>
    %88 = vector.multi_reduction <add>, %87, %cst_37 [1] : vector<8x32xf32> to vector<8xf32>
    %89 = vector.shape_cast %88 : vector<8xf32> to vector<8x1xf32>
    %90 = arith.mulf %70, %70 : vector<8x32xf32>
    %cst_38 = arith.constant dense<0.000000e+00> : vector<8xf32>
    %91 = vector.multi_reduction <add>, %90, %cst_38 [1] : vector<8x32xf32> to vector<8xf32>
    %92 = vector.shape_cast %91 : vector<8xf32> to vector<8x1xf32>
    %93 = arith.addf %89, %92 : vector<8x1xf32>
    %94 = arith.mulf %72, %72 : vector<8x32xf32>
    %cst_39 = arith.constant dense<0.000000e+00> : vector<8xf32>
    %95 = vector.multi_reduction <add>, %94, %cst_39 [1] : vector<8x32xf32> to vector<8xf32>
    %96 = vector.shape_cast %95 : vector<8xf32> to vector<8x1xf32>
    %97 = arith.addf %93, %96 : vector<8x1xf32>
    %cst_40 = arith.constant 1.000000e-24 : f32
    %98 = vector.broadcast %cst_40 : f32 to vector<8x1xf32>
    %99 = arith.maximumf %86, %98 : vector<8x1xf32>
    %100 = math.rsqrt %99 : vector<8x1xf32>
    %cst_41 = arith.constant 1.000000e-24 : f32
    %101 = vector.broadcast %cst_41 : f32 to vector<8x1xf32>
    %102 = arith.maximumf %97, %101 : vector<8x1xf32>
    %103 = math.rsqrt %102 : vector<8x1xf32>
    %cst_42 = arith.constant dense<0.000000e+00> : vector<8x8xf32>
    %104 = tpu.matmul %100, %103, %cst_42 {dimension_numbers = #tpu.dot_dimension_numbers<[1], [1], [0], [0], [0, 0, 1, 0], [], []>} : vector<8x1xf32>, vector<8x1xf32>, vector<8x8xf32> -> vector<8x8xf32>
    %105 = arith.addf %73, %75 : vector<8x8xf32>
    %106 = arith.addf %105, %74 : vector<8x8xf32>
    %107 = arith.mulf %106, %104 : vector<8x8xf32>
    %c0_43 = arith.constant 0 : index
    %c0_44 = arith.constant 0 : index
    %108 = vector.load %arg10[%c0_43, %c0_44] : memref<8x32xf32, #tpu.memory_space<vmem>>, vector<8x8xf32>
    tpu.vector_store %arg10[%c0_43, %c0_44], %73 {strides = array<i32>} : memref<8x32xf32, #tpu.memory_space<vmem>>, vector<8x8xf32>,
    %c0_45 = arith.constant 0 : index
    %c8 = arith.constant 8 : index
    %109 = vector.load %arg10[%c0_45, %c8] : memref<8x32xf32, #tpu.memory_space<vmem>>, vector<8x8xf32>
    tpu.vector_store %arg10[%c0_45, %c8], %74 {strides = array<i32>} : memref<8x32xf32, #tpu.memory_space<vmem>>, vector<8x8xf32>,
    %c0_46 = arith.constant 0 : index
    %c16 = arith.constant 16 : index
    %110 = vector.load %arg10[%c0_46, %c16] : memref<8x32xf32, #tpu.memory_space<vmem>>, vector<8x8xf32>
    tpu.vector_store %arg10[%c0_46, %c16], %75 {strides = array<i32>} : memref<8x32xf32, #tpu.memory_space<vmem>>, vector<8x8xf32>,
    %c0_47 = arith.constant 0 : index
    %c24 = arith.constant 24 : index
    %111 = vector.load %arg10[%c0_47, %c24] : memref<8x32xf32, #tpu.memory_space<vmem>>, vector<8x8xf32>
    tpu.vector_store %arg10[%c0_47, %c24], %107 {strides = array<i32>} : memref<8x32xf32, #tpu.memory_space<vmem>>, vector<8x8xf32>,
    return
  }
}

</mosaic_0001>

<llo_original>
// kernel: msnea_forward.2
$region0: #{msnea_forward.2}
  #allocation0 [shape = 'u32[]', space=smem, size = 0x4, offset = 0x4, fixed_abs, tag = 'smem constant byte address 0x4 - core index']
  #allocation1 [shape = 'u32[144,128]{1,0:T(1,128)}', space=vmem, size = 0x12000, scoped, tag = 'internal scratch']
  %s0 = inlined_call_operand.vmem [shape: f32[8,1], index: 0, kind: input, shape index: {}]
  %s1 = inlined_call_operand.vmem [shape: f32[8,32], index: 1, kind: input, shape index: {}]
  %s2 = inlined_call_operand.vmem [shape: f32[8,32], index: 2, kind: input, shape index: {}]
  %s3 = inlined_call_operand.vmem [shape: f32[8,32], index: 3, kind: input, shape index: {}]
  %s4 = inlined_call_operand.vmem [shape: f32[8,32], index: 4, kind: input, shape index: {}]
  %s5 = inlined_call_operand.vmem [shape: f32[8,32], index: 5, kind: input, shape index: {}]
  %s6 = inlined_call_operand.vmem [shape: f32[8,32], index: 6, kind: input, shape index: {}]
  %s7 = inlined_call_operand.vmem [shape: bf16[8,2048], index: 7, kind: input, shape index: {}]
  %s8 = inlined_call_operand.vmem [shape: bf16[8,2048], index: 8, kind: input, shape index: {}]
  %s9 = inlined_call_operand.vmem [shape: bf16[8,2048], index: 9, kind: input, shape index: {}]
  %s10 = inlined_call_operand.vmem [shape: bf16[8,2048], index: 10, kind: input, shape index: {}]
  %s11 = inlined_call_operand.vmem [shape: bf16[2048,32], index: 11, kind: input, shape index: {}]
  %s12 = inlined_call_operand.vmem [shape: f32[1,32], index: 12, kind: input, shape index: {}]
  %s13 = inlined_call_operand.hbm [shape: f32[1,1], index: 13, kind: output, shape index: {}]
  %s14 = sld [smem:[#allocation0]]
  $region66: #{msnea_forward.2} parent=0
    _
  %s16 = ssub.s32 1, %s14
  %s17 = scalar_select 0, %s16, %s14
  $region1: #{msnea_forward.2} parent=0
    #allocation2 [shape = 'u8[512]{0}', space=vmem, size = 0x400, scoped, tag = 'output window, operand 0, single buffered']
    #allocation3 [shape = 's32[1]{0}', space=sflag, size = 0x4, scoped, tag = 'scoped memory for msnea_forward.2']
    %18 = vsyncpa [#allocation3], 0
    // Predicated region
    $region2: #{msnea_forward.2} parent=1 // pred_check
      _
    $region3: #{msnea_forward.2} parent=1 // pred_check_branch
      %20 = sbr.rel (0) target = $region5
    $region4: #{msnea_forward.2} parent=1 // pred_region
      _
    $region5: #{msnea_forward.2} parent=1 // pred_fallthru
      _
    // Predicated region
    $region6: #{msnea_forward.2} parent=1 // pred_check
      _
    $region7: #{msnea_forward.2} parent=1 // pred_check_branch
      %22 = sbr.rel (0) target = $region9
    $region8: #{msnea_forward.2} parent=1 // pred_region
      _
    $region9: #{msnea_forward.2} parent=1 // pred_fallthru
      _
    // Predicated region
    $region10: #{msnea_forward.2} parent=1 // pred_check
      _
    $region11: #{msnea_forward.2} parent=1 // pred_check_branch
      %24 = sbr.rel (0) target = $region13
    $region12: #{msnea_forward.2} parent=1 // pred_region
      _
    $region13: #{msnea_forward.2} parent=1 // pred_fallthru
      _
    // Predicated region
    $region14: #{msnea_forward.2} parent=1 // pred_check
      _
    $region15: #{msnea_forward.2} parent=1 // pred_check_branch
      %26 = sbr.rel (0) target = $region17
    $region16: #{msnea_forward.2} parent=1 // pred_region
      _
    $region17: #{msnea_forward.2} parent=1 // pred_fallthru
      _
    // Predicated region
    $region18: #{msnea_forward.2} parent=1 // pred_check
      _
    $region19: #{msnea_forward.2} parent=1 // pred_check_branch
      %28 = sbr.rel (0) target = $region21
    $region20: #{msnea_forward.2} parent=1 // pred_region
      _
    $region21: #{msnea_forward.2} parent=1 // pred_fallthru
      _
    // Predicated region
    $region22: #{msnea_forward.2} parent=1 // pred_check
      _
    $region23: #{msnea_forward.2} parent=1 // pred_check_branch
      %30 = sbr.rel (0) target = $region25
    $region24: #{msnea_forward.2} parent=1 // pred_region
      _
    $region25: #{msnea_forward.2} parent=1 // pred_fallthru
      _
    // Predicated region
    $region26: #{msnea_forward.2} parent=1 // pred_check
      _
    $region27: #{msnea_forward.2} parent=1 // pred_check_branch
      %32 = sbr.rel (0) target = $region29
    $region28: #{msnea_forward.2} parent=1 // pred_region
      _
    $region29: #{msnea_forward.2} parent=1 // pred_fallthru
      _
    // Predicated region
    $region30: #{msnea_forward.2} parent=1 // pred_check
      _
    $region31: #{msnea_forward.2} parent=1 // pred_check_branch
      %34 = sbr.rel (0) target = $region33
    $region32: #{msnea_forward.2} parent=1 // pred_region
      _
    $region33: #{msnea_forward.2} parent=1 // pred_fallthru
      _
    // Predicated region
    $region34: #{msnea_forward.2} parent=1 // pred_check
      _
    $region35: #{msnea_forward.2} parent=1 // pred_check_branch
      %36 = sbr.rel (0) target = $region37
    $region36: #{msnea_forward.2} parent=1 // pred_region
      _
    $region37: #{msnea_forward.2} parent=1 // pred_fallthru
      _
    // Predicated region
    $region38: #{msnea_forward.2} parent=1 // pred_check
      _
    $region39: #{msnea_forward.2} parent=1 // pred_check_branch
      %38 = sbr.rel (0) target = $region41
    $region40: #{msnea_forward.2} parent=1 // pred_region
      _
    $region41: #{msnea_forward.2} parent=1 // pred_fallthru
      _
    // Predicated region
    $region42: #{msnea_forward.2} parent=1 // pred_check
      _
    $region43: #{msnea_forward.2} parent=1 // pred_check_branch
      %40 = sbr.rel (0) target = $region45
    $region44: #{msnea_forward.2} parent=1 // pred_region
      _
    $region45: #{msnea_forward.2} parent=1 // pred_fallthru
      _
    // Predicated region
    $region46: #{msnea_forward.2} parent=1 // pred_check
      _
    $region47: #{msnea_forward.2} parent=1 // pred_check_branch
      %42 = sbr.rel (0) target = $region49
    $region48: #{msnea_forward.2} parent=1 // pred_region
      _
    $region49: #{msnea_forward.2} parent=1 // pred_fallthru
      _
    // Predicated region
    $region50: #{msnea_forward.2} parent=1 // pred_check
      _
    $region51: #{msnea_forward.2} parent=1 // pred_check_branch
      %44 = sbr.rel (0) target = $region53
    $region52: #{msnea_forward.2} parent=1 // pred_region
      _
    $region53: #{msnea_forward.2} parent=1 // pred_fallthru
      _
    %p46 = scmp.eq.s32.totalorder 0, 0
    // Predicated region
    $region54: #{msnea_forward.2} parent=1 // pred_check
      %p47 = pneg %p46
    $region55: #{msnea_forward.2} parent=1 // pred_check_branch
      %49 = sbr.rel (%p47) target = $region57
    $region56: #{msnea_forward.2} parent=1 // pred_region
      %vm50 = vcmask 0
      %51 = vst.msk [vmem:[#allocation2] sm:$0x1] %vm50, 0.0
    $region57: #{msnea_forward.2} parent=1 // pred_fallthru
      _
    %v52 = vld [vmem:[%s11] sm:$0xf]
    %v53 = vld [vmem:[%s11 + $0x4] sm:$0xf]
    %v54 = vld [vmem:[%s11 + $0x8] sm:$0xf]
    %v55 = vld [vmem:[%s11 + $0xc] sm:$0xf]
    %v56 = vld [vmem:[%s11 + $0x10] sm:$0xf]
    %v57 = vld [vmem:[%s11 + $0x14] sm:$0xf]
    %v58 = vld [vmem:[%s11 + $0x18] sm:$0xf]
    %v59 = vld [vmem:[%s11 + $0x1c] sm:$0xf]
    %v60 = vld [vmem:[%s11 + $0x20] sm:$0xf]
    %v61 = vld [vmem:[%s11 + $0x24] sm:$0xf]
    %v62 = vld [vmem:[%s11 + $0x28] sm:$0xf]
    %v63 = vld [vmem:[%s11 + $0x2c] sm:$0xf]
    %v64 = vld [vmem:[%s11 + $0x30] sm:$0xf]
    %v65 = vld [vmem:[%s11 + $0x34] sm:$0xf]
    %v66 = vld [vmem:[%s11 + $0x38] sm:$0xf]
    %v67 = vld [vmem:[%s11 + $0x3c] sm:$0xf]
    %v68 = vld [vmem:[%s11 + $0x40] sm:$0xf]
    %v69 = vld [vmem:[%s11 + $0x44] sm:$0xf]
    %v70 = vld [vmem:[%s11 + $0x48] sm:$0xf]
    %v71 = vld [vmem:[%s11 + $0x4c] sm:$0xf]
    %v72 = vld [vmem:[%s11 + $0x50] sm:$0xf]
    %v73 = vld [vmem:[%s11 + $0x54] sm:$0xf]
    %v74 = vld [vmem:[%s11 + $0x58] sm:$0xf]
    %v75 = vld [vmem:[%s11 + $0x5c] sm:$0xf]
    %v76 = vld [vmem:[%s11 + $0x60] sm:$0xf]
    %v77 = vld [vmem:[%s11 + $0x64] sm:$0xf]
    %v78 = vld [vmem:[%s11 + $0x68] sm:$0xf]
    %v79 = vld [vmem:[%s11 + $0x6c] sm:$0xf]
    %v80 = vld [vmem:[%s11 + $0x70] sm:$0xf]
    %v81 = vld [vmem:[%s11 + $0x74] sm:$0xf]
    %v82 = vld [vmem:[%s11 + $0x78] sm:$0xf]
    %v83 = vld [vmem:[%s11 + $0x7c] sm:$0xf]
    %v84 = vld [vmem:[%s11 + $0x80] sm:$0xf]
    %v85 = vld [vmem:[%s11 + $0x84] sm:$0xf]
    %v86 = vld [vmem:[%s11 + $0x88] sm:$0xf]
    %v87 = vld [vmem:[%s11 + $0x8c] sm:$0xf]
    %v88 = vld [vmem:[%s11 + $0x90] sm:$0xf]
    %v89 = vld [vmem:[%s11 + $0x94] sm:$0xf]
    %v90 = vld [vmem:[%s11 + $0x98] sm:$0xf]
    %v91 = vld [vmem:[%s11 + $0x9c] sm:$0xf]
    %v92 = vld [vmem:[%s11 + $0xa0] sm:$0xf]
    %v93 = vld [vmem:[%s11 + $0xa4] sm:$0xf]
    %v94 = vld [vmem:[%s11 + $0xa8] sm:$0xf]
    %v95 = vld [vmem:[%s11 + $0xac] sm:$0xf]
    %v96 = vld [vmem:[%s11 + $0xb0] sm:$0xf]
    %v97 = vld [vmem:[%s11 + $0xb4] sm:$0xf]
    %v98 = vld [vmem:[%s11 + $0xb8] sm:$0xf]
    %v99 = vld [vmem:[%s11 + $0xbc] sm:$0xf]
    %v100 = vld [vmem:[%s11 + $0xc0] sm:$0xf]
    %v101 = vld [vmem:[%s11 + $0xc4] sm:$0xf]
    %v102 = vld [vmem:[%s11 + $0xc8] sm:$0xf]
    %v103 = vld [vmem:[%s11 + $0xcc] sm:$0xf]
    %v104 = vld [vmem:[%s11 + $0xd0] sm:$0xf]
    %v105 = vld [vmem:[%s11 + $0xd4] sm:$0xf]
    %v106 = vld [vmem:[%s11 + $0xd8] sm:$0xf]
    %v107 = vld [vmem:[%s11 + $0xdc] sm:$0xf]
    %v108 = vld [vmem:[%s11 + $0xe0] sm:$0xf]
    %v109 = vld [vmem:[%s11 + $0xe4] sm:$0xf]
    %v110 = vld [vmem:[%s11 + $0xe8] sm:$0xf]
    %v111 = vld [vmem:[%s11 + $0xec] sm:$0xf]
    %v112 = vld [vmem:[%s11 + $0xf0] sm:$0xf]
    %v113 = vld [vmem:[%s11 + $0xf4] sm:$0xf]
    %v114 = vld [vmem:[%s11 + $0xf8] sm:$0xf]
    %v115 = vld [vmem:[%s11 + $0xfc] sm:$0xf]
    %v116 = vld [vmem:[%s11 + $0x100] sm:$0xf]
    %v117 = vld [vmem:[%s11 + $0x104] sm:$0xf]
    %v118 = vld [vmem:[%s11 + $0x108] sm:$0xf]
    %v119 = vld [vmem:[%s11 + $0x10c] sm:$0xf]
    %v120 = vld [vmem:[%s11 + $0x110] sm:$0xf]
    %v121 = vld [vmem:[%s11 + $0x114] sm:$0xf]
    %v122 = vld [vmem:[%s11 + $0x118] sm:$0xf]
    %v123 = vld [vmem:[%s11 + $0x11c] sm:$0xf]
    %v124 = vld [vmem:[%s11 + $0x120] sm:$0xf]
    %v125 = vld [vmem:[%s11 + $0x124] sm:$0xf]
    %v126 = vld [vmem:[%s11 + $0x128] sm:$0xf]
    %v127 = vld [vmem:[%s11 + $0x12c] sm:$0xf]
    %v128 = vld [vmem:[%s11 + $0x130] sm:$0xf]
    %v129 = vld [vmem:[%s11 + $0x134] sm:$0xf]
    %v130 = vld [vmem:[%s11 + $0x138] sm:$0xf]
    %v131 = vld [vmem:[%s11 + $0x13c] sm:$0xf]
    %v132 = vld [vmem:[%s11 + $0x140] sm:$0xf]
    %v133 = vld [vmem:[%s11 + $0x144] sm:$0xf]
    %v134 = vld [vmem:[%s11 + $0x148] sm:$0xf]
    %v135 = vld [vmem:[%s11 + $0x14c] sm:$0xf]
    %v136 = vld [vmem:[%s11 + $0x150] sm:$0xf]
    %v137 = vld [vmem:[%s11 + $0x154] sm:$0xf]
    %v138 = vld [vmem:[%s11 + $0x158] sm:$0xf]
    %v139 = vld [vmem:[%s11 + $0x15c] sm:$0xf]
    %v140 = vld [vmem:[%s11 + $0x160] sm:$0xf]
    %v141 = vld [vmem:[%s11 + $0x164] sm:$0xf]
    %v142 = vld [vmem:[%s11 + $0x168] sm:$0xf]
    %v143 = vld [vmem:[%s11 + $0x16c] sm:$0xf]
    %v144 = vld [vmem:[%s11 + $0x170] sm:$0xf]
    %v145 = vld [vmem:[%s11 + $0x174] sm:$0xf]
    %v146 = vld [vmem:[%s11 + $0x178] sm:$0xf]
    %v147 = vld [vmem:[%s11 + $0x17c] sm:$0xf]
    %v148 = vld [vmem:[%s11 + $0x180] sm:$0xf]
    %v149 = vld [vmem:[%s11 + $0x184] sm:$0xf]
    %v150 = vld [vmem:[%s11 + $0x188] sm:$0xf]
    %v151 = vld [vmem:[%s11 + $0x18c] sm:$0xf]
    %v152 = vld [vmem:[%s11 + $0x190] sm:$0xf]
    %v153 = vld [vmem:[%s11 + $0x194] sm:$0xf]
    %v154 = vld [vmem:[%s11 + $0x198] sm:$0xf]
    %v155 = vld [vmem:[%s11 + $0x19c] sm:$0xf]
    %v156 = vld [vmem:[%s11 + $0x1a0] sm:$0xf]
    %v157 = vld [vmem:[%s11 + $0x1a4] sm:$0xf]
    %v158 = vld [vmem:[%s11 + $0x1a8] sm:$0xf]
    %v159 = vld [vmem:[%s11 + $0x1ac] sm:$0xf]
    %v160 = vld [vmem:[%s11 + $0x1b0] sm:$0xf]
    %v161 = vld [vmem:[%s11 + $0x1b4] sm:$0xf]
    %v162 = vld [vmem:[%s11 + $0x1b8] sm:$0xf]
    %v163 = vld [vmem:[%s11 + $0x1bc] sm:$0xf]
    %v164 = vld [vmem:[%s11 + $0x1c0] sm:$0xf]
    %v165 = vld [vmem:[%s11 + $0x1c4] sm:$0xf]
    %v166 = vld [vmem:[%s11 + $0x1c8] sm:$0xf]
    %v167 = vld [vmem:[%s11 + $0x1cc] sm:$0xf]
    %v168 = vld [vmem:[%s11 + $0x1d0] sm:$0xf]
    %v169 = vld [vmem:[%s11 + $0x1d4] sm:$0xf]
    %v170 = vld [vmem:[%s11 + $0x1d8] sm:$0xf]
    %v171 = vld [vmem:[%s11 + $0x1dc] sm:$0xf]
    %v172 = vld [vmem:[%s11 + $0x1e0] sm:$0xf]
    %v173 = vld [vmem:[%s11 + $0x1e4] sm:$0xf]
    %v174 = vld [vmem:[%s11 + $0x1e8] sm:$0xf]
    %v175 = vld [vmem:[%s11 + $0x1ec] sm:$0xf]
    %v176 = vld [vmem:[%s11 + $0x1f0] sm:$0xf]
    %v177 = vld [vmem:[%s11 + $0x1f4] sm:$0xf]
    %v178 = vld [vmem:[%s11 + $0x1f8] sm:$0xf]
    %v179 = vld [vmem:[%s11 + $0x1fc] sm:$0xf]
    %v180 = vld [vmem:[%s11 + $0x200] sm:$0xf]
    %v181 = vld [vmem:[%s11 + $0x204] sm:$0xf]
    %v182 = vld [vmem:[%s11 + $0x208] sm:$0xf]
    %v183 = vld [vmem:[%s11 + $0x20c] sm:$0xf]
    %v184 = vld [vmem:[%s11 + $0x210] sm:$0xf]
    %v185 = vld [vmem:[%s11 + $0x214] sm:$0xf]
    %v186 = vld [vmem:[%s11 + $0x218] sm:$0xf]
    %v187 = vld [vmem:[%s11 + $0x21c] sm:$0xf]
    %v188 = vld [vmem:[%s11 + $0x220] sm:$0xf]
    %v189 = vld [vmem:[%s11 + $0x224] sm:$0xf]
    %v190 = vld [vmem:[%s11 + $0x228] sm:$0xf]
    %v191 = vld [vmem:[%s11 + $0x22c] sm:$0xf]
    %v192 = vld [vmem:[%s11 + $0x230] sm:$0xf]
    %v193 = vld [vmem:[%s11 + $0x234] sm:$0xf]
    %v194 = vld [vmem:[%s11 + $0x238] sm:$0xf]
    %v195 = vld [vmem:[%s11 + $0x23c] sm:$0xf]
    %v196 = vld [vmem:[%s11 + $0x240] sm:$0xf]
    %v197 = vld [vmem:[%s11 + $0x244] sm:$0xf]
    %v198 = vld [vmem:[%s11 + $0x248] sm:$0xf]
    %v199 = vld [vmem:[%s11 + $0x24c] sm:$0xf]
    %v200 = vld [vmem:[%s11 + $0x250] sm:$0xf]
    %v201 = vld [vmem:[%s11 + $0x254] sm:$0xf]
    %v202 = vld [vmem:[%s11 + $0x258] sm:$0xf]
    %v203 = vld [vmem:[%s11 + $0x25c] sm:$0xf]
    %v204 = vld [vmem:[%s11 + $0x260] sm:$0xf]
    %v205 = vld [vmem:[%s11 + $0x264] sm:$0xf]
    %v206 = vld [vmem:[%s11 + $0x268] sm:$0xf]
    %v207 = vld [vmem:[%s11 + $0x26c] sm:$0xf]
    %v208 = vld [vmem:[%s11 + $0x270] sm:$0xf]
    %v209 = vld [vmem:[%s11 + $0x274] sm:$0xf]
    %v210 = vld [vmem:[%s11 + $0x278] sm:$0xf]
    %v211 = vld [vmem:[%s11 + $0x27c] sm:$0xf]
    %v212 = vld [vmem:[%s11 + $0x280] sm:$0xf]
    %v213 = vld [vmem:[%s11 + $0x284] sm:$0xf]
    %v214 = vld [vmem:[%s11 + $0x288] sm:$0xf]
    %v215 = vld [vmem:[%s11 + $0x28c] sm:$0xf]
    %v216 = vld [vmem:[%s11 + $0x290] sm:$0xf]
    %v217 = vld [vmem:[%s11 + $0x294] sm:$0xf]
    %v218 = vld [vmem:[%s11 + $0x298] sm:$0xf]
    %v219 = vld [vmem:[%s11 + $0x29c] sm:$0xf]
    %v220 = vld [vmem:[%s11 + $0x2a0] sm:$0xf]
    %v221 = vld [vmem:[%s11 + $0x2a4] sm:$0xf]
    %v222 = vld [vmem:[%s11 + $0x2a8] sm:$0xf]
    %v223 = vld [vmem:[%s11 + $0x2ac] sm:$0xf]
    %v224 = vld [vmem:[%s11 + $0x2b0] sm:$0xf]
    %v225 = vld [vmem:[%s11 + $0x2b4] sm:$0xf]
    %v226 = vld [vmem:[%s11 + $0x2b8] sm:$0xf]
    %v227 = vld [vmem:[%s11 + $0x2bc] sm:$0xf]
    %v228 = vld [vmem:[%s11 + $0x2c0] sm:$0xf]
    %v229 = vld [vmem:[%s11 + $0x2c4] sm:$0xf]
    %v230 = vld [vmem:[%s11 + $0x2c8] sm:$0xf]
    %v231 = vld [vmem:[%s11 + $0x2cc] sm:$0xf]
    %v232 = vld [vmem:[%s11 + $0x2d0] sm:$0xf]
    %v233 = vld [vmem:[%s11 + $0x2d4] sm:$0xf]
    %v234 = vld [vmem:[%s11 + $0x2d8] sm:$0xf]
    %v235 = vld [vmem:[%s11 + $0x2dc] sm:$0xf]
    %v236 = vld [vmem:[%s11 + $0x2e0] sm:$0xf]
    %v237 = vld [vmem:[%s11 + $0x2e4] sm:$0xf]
    %v238 = vld [vmem:[%s11 + $0x2e8] sm:$0xf]
    %v239 = vld [vmem:[%s11 + $0x2ec] sm:$0xf]
    %v240 = vld [vmem:[%s11 + $0x2f0] sm:$0xf]
    %v241 = vld [vmem:[%s11 + $0x2f4] sm:$0xf]
    %v242 = vld [vmem:[%s11 + $0x2f8] sm:$0xf]
    %v243 = vld [vmem:[%s11 + $0x2fc] sm:$0xf]
    %v244 = vld [vmem:[%s11 + $0x300] sm:$0xf]
    %v245 = vld [vmem:[%s11 + $0x304] sm:$0xf]
    %v246 = vld [vmem:[%s11 + $0x308] sm:$0xf]
    %v247 = vld [vmem:[%s11 + $0x30c] sm:$0xf]
    %v248 = vld [vmem:[%s11 + $0x310] sm:$0xf]
    %v249 = vld [vmem:[%s11 + $0x314] sm:$0xf]
    %v250 = vld [vmem:[%s11 + $0x318] sm:$0xf]
    %v251 = vld [vmem:[%s11 + $0x31c] sm:$0xf]
    %v252 = vld [vmem:[%s11 + $0x320] sm:$0xf]
    %v253 = vld [vmem:[%s11 + $0x324] sm:$0xf]
    %v254 = vld [vmem:[%s11 + $0x328] sm:$0xf]
    %v255 = vld [vmem:[%s11 + $0x32c] sm:$0xf]
    %v256 = vld [vmem:[%s11 + $0x330] sm:$0xf]
    %v257 = vld [vmem:[%s11 + $0x334] sm:$0xf]
    %v258 = vld [vmem:[%s11 + $0x338] sm:$0xf]
    %v259 = vld [vmem:[%s11 + $0x33c] sm:$0xf]
    %v260 = vld [vmem:[%s11 + $0x340] sm:$0xf]
    %v261 = vld [vmem:[%s11 + $0x344] sm:$0xf]
    %v262 = vld [vmem:[%s11 + $0x348] sm:$0xf]
    %v263 = vld [vmem:[%s11 + $0x34c] sm:$0xf]
    %v264 = vld [vmem:[%s11 + $0x350] sm:$0xf]
    %v265 = vld [vmem:[%s11 + $0x354] sm:$0xf]
    %v266 = vld [vmem:[%s11 + $0x358] sm:$0xf]
    %v267 = vld [vmem:[%s11 + $0x35c] sm:$0xf]
    %v268 = vld [vmem:[%s11 + $0x360] sm:$0xf]
    %v269 = vld [vmem:[%s11 + $0x364] sm:$0xf]
    %v270 = vld [vmem:[%s11 + $0x368] sm:$0xf]
    %v271 = vld [vmem:[%s11 + $0x36c] sm:$0xf]
    %v272 = vld [vmem:[%s11 + $0x370] sm:$0xf]
    %v273 = vld [vmem:[%s11 + $0x374] sm:$0xf]
    %v274 = vld [vmem:[%s11 + $0x378] sm:$0xf]
    %v275 = vld [vmem:[%s11 + $0x37c] sm:$0xf]
    %v276 = vld [vmem:[%s11 + $0x380] sm:$0xf]
    %v277 = vld [vmem:[%s11 + $0x384] sm:$0xf]
    %v278 = vld [vmem:[%s11 + $0x388] sm:$0xf]
    %v279 = vld [vmem:[%s11 + $0x38c] sm:$0xf]
    %v280 = vld [vmem:[%s11 + $0x390] sm:$0xf]
    %v281 = vld [vmem:[%s11 + $0x394] sm:$0xf]
    %v282 = vld [vmem:[%s11 + $0x398] sm:$0xf]
    %v283 = vld [vmem:[%s11 + $0x39c] sm:$0xf]
    %v284 = vld [vmem:[%s11 + $0x3a0] sm:$0xf]
    %v285 = vld [vmem:[%s11 + $0x3a4] sm:$0xf]
    %v286 = vld [vmem:[%s11 + $0x3a8] sm:$0xf]
    %v287 = vld [vmem:[%s11 + $0x3ac] sm:$0xf]
    %v288 = vld [vmem:[%s11 + $0x3b0] sm:$0xf]
    %v289 = vld [vmem:[%s11 + $0x3b4] sm:$0xf]
    %v290 = vld [vmem:[%s11 + $0x3b8] sm:$0xf]
    %v291 = vld [vmem:[%s11 + $0x3bc] sm:$0xf]
    %v292 = vld [vmem:[%s11 + $0x3c0] sm:$0xf]
    %v293 = vld [vmem:[%s11 + $0x3c4] sm:$0xf]
    %v294 = vld [vmem:[%s11 + $0x3c8] sm:$0xf]
    %v295 = vld [vmem:[%s11 + $0x3cc] sm:$0xf]
    %v296 = vld [vmem:[%s11 + $0x3d0] sm:$0xf]
    %v297 = vld [vmem:[%s11 + $0x3d4] sm:$0xf]
    %v298 = vld [vmem:[%s11 + $0x3d8] sm:$0xf]
    %v299 = vld [vmem:[%s11 + $0x3dc] sm:$0xf]
    %v300 = vld [vmem:[%s11 + $0x3e0] sm:$0xf]
    %v301 = vld [vmem:[%s11 + $0x3e4] sm:$0xf]
    %v302 = vld [vmem:[%s11 + $0x3e8] sm:$0xf]
    %v303 = vld [vmem:[%s11 + $0x3ec] sm:$0xf]
    %v304 = vld [vmem:[%s11 + $0x3f0] sm:$0xf]
    %v305 = vld [vmem:[%s11 + $0x3f4] sm:$0xf]
    %v306 = vld [vmem:[%s11 + $0x3f8] sm:$0xf]
    %v307 = vld [vmem:[%s11 + $0x3fc] sm:$0xf]
    %v308 = vld [vmem:[%s12] sm:$0x1]
    %v309 = vld [vmem:[%s1] sm:$0xff]
    %v310 = vmul.f32 %v309, %v309
    %vm311 = vcmask 261120
    %v312 = vsel %vm311, %v310, 0.0
    %313 = vadd.xlane.f32.xlu0 %v312
    %v314 = vpop.xlane.xlu0 %313
    %v315 = vmax.f32 %v314, 1e-24
    %v316 = vrsqrt.pop %v315
    %v317 = vmul.f32 %v309, %v316
    %v318 = vld [vmem:[%s2] sm:$0xff]
    %v319 = vmul.f32 %v318, %v318
    %v320 = vsel %vm311, %v319, 0.0
    %321 = vadd.xlane.f32.xlu0 %v320
    %v322 = vpop.xlane.xlu0 %321
    %v323 = vmax.f32 %v322, 1e-24
    %v324 = vrsqrt.pop %v323
    %v325 = vmul.f32 %v318, %v324
    %v326 = vld [vmem:[%s3] sm:$0xff]
    %v327 = vmul.f32 %v326, %v326
    %v328 = vsel %vm311, %v327, 0.0
    %329 = vadd.xlane.f32.xlu0 %v328
    %v330 = vpop.xlane.xlu0 %329
    %v331 = vmax.f32 %v330, 1e-24
    %v332 = vrsqrt.pop %v331
    %v333 = vmul.f32 %v326, %v332
    %v334 = vld [vmem:[%s4] sm:$0xff]
    %v335 = vmul.f32 %v334, %v334
    %v336 = vsel %vm311, %v335, 0.0
    %337 = vadd.xlane.f32.xlu0 %v336
    %v338 = vpop.xlane.xlu0 %337
    %v339 = vmax.f32 %v338, 1e-24
    %v340 = vrsqrt.pop %v339
    %v341 = vmul.f32 %v334, %v340
    %v342 = vld [vmem:[%s5] sm:$0xff]
    %v343 = vmul.f32 %v342, %v342
    %v344 = vsel %vm311, %v343, 0.0
    %345 = vadd.xlane.f32.xlu0 %v344
    %v346 = vpop.xlane.xlu0 %345
    %v347 = vmax.f32 %v346, 1e-24
    %v348 = vrsqrt.pop %v347
    %v349 = vmul.f32 %v342, %v348
    %v350 = vld [vmem:[%s6] sm:$0xff]
    %v351 = vmul.f32 %v350, %v350
    %v352 = vsel %vm311, %v351, 0.0
    %353 = vadd.xlane.f32.xlu0 %v352
    %v354 = vpop.xlane.xlu0 %353
    %v355 = vmax.f32 %v354, 1e-24
    %v356 = vrsqrt.pop %v355
    %v357 = vmul.f32 %v350, %v356
    %v358 = vld [vmem:[%s7] sm:$0xff]
    %v359 = vld [vmem:[%s7 + $0x8] sm:$0xff]
    %v360 = vld [vmem:[%s7 + $0x10] sm:$0xff]
    %v361 = vld [vmem:[%s7 + $0x18] sm:$0xff]
    %v362 = vld [vmem:[%s7 + $0x20] sm:$0xff]
    %v363 = vld [vmem:[%s7 + $0x28] sm:$0xff]
    %v364 = vld [vmem:[%s7 + $0x30] sm:$0xff]
    %v365 = vld [vmem:[%s7 + $0x38] sm:$0xff]
    %v367 = vlaneseq
    %v368 = vshrl.u32 %v367, 7
    %v369 = vsub.s32 0, %v368
    %v370 = vrot.slane %v308, %v369
    %v380 = vunpack.c.l.b16 %v358
    %v381 = vunpack.c.h.b16 %v358
    %v382 = vunpack.c.l.b16 %v359
    %v383 = vunpack.c.h.b16 %v359
    %v384 = vunpack.c.l.b16 %v360
    %v385 = vunpack.c.h.b16 %v360
    %v386 = vunpack.c.l.b16 %v361
    %v387 = vunpack.c.h.b16 %v361
    %v388 = vunpack.c.l.b16 %v362
    %v389 = vunpack.c.h.b16 %v362
    %v390 = vunpack.c.l.b16 %v363
    %v391 = vunpack.c.h.b16 %v363
    %v392 = vunpack.c.l.b16 %v364
    %v393 = vunpack.c.h.b16 %v364
    %v394 = vunpack.c.l.b16 %v365
    %v395 = vunpack.c.h.b16 %v365
    %v396 = vpack.c.b16 %v380, %v380
    %v397 = vpack.c.b16 %v381, %v381
    %v398 = vpack.c.b16 %v382, %v382
    %v399 = vpack.c.b16 %v383, %v383
    %v400 = vpack.c.b16 %v384, %v384
    %v401 = vpack.c.b16 %v385, %v385
    %v402 = vpack.c.b16 %v386, %v386
    %v403 = vpack.c.b16 %v387, %v387
    %v404 = vpack.c.b16 %v388, %v388
    %v405 = vpack.c.b16 %v389, %v389
    %v406 = vpack.c.b16 %v390, %v390
    %v407 = vpack.c.b16 %v391, %v391
    %v408 = vpack.c.b16 %v392, %v392
    %v409 = vpack.c.b16 %v393, %v393
    %v410 = vpack.c.b16 %v394, %v394
    %v411 = vpack.c.b16 %v395, %v395
    %v684 = vunpack.c.l.b16 %v52
    %v685 = vunpack.c.l.b16 %v53
    %v686 = vunpack.c.l.b16 %v54
    %v687 = vunpack.c.l.b16 %v55
    %v688 = vunpack.c.l.b16 %v56
    %v689 = vunpack.c.l.b16 %v57
    %v690 = vunpack.c.l.b16 %v58
    %v691 = vunpack.c.l.b16 %v59
    %v692 = vunpack.c.l.b16 %v60
    %v693 = vunpack.c.l.b16 %v61
    %v694 = vunpack.c.l.b16 %v62
    %v695 = vunpack.c.l.b16 %v63
    %v696 = vunpack.c.l.b16 %v64
    %v697 = vunpack.c.l.b16 %v65
    %v698 = vunpack.c.l.b16 %v66
    %v699 = vunpack.c.l.b16 %v67
    %v700 = vunpack.c.l.b16 %v68
    %v701 = vunpack.c.l.b16 %v69
    %v702 = vunpack.c.l.b16 %v70
    %v703 = vunpack.c.l.b16 %v71
    %v704 = vunpack.c.l.b16 %v72
    %v705 = vunpack.c.l.b16 %v73
    %v706 = vunpack.c.l.b16 %v74
    %v707 = vunpack.c.l.b16 %v75
    %v708 = vunpack.c.l.b16 %v76
    %v709 = vunpack.c.l.b16 %v77
    %v710 = vunpack.c.l.b16 %v78
    %v711 = vunpack.c.l.b16 %v79
    %v712 = vunpack.c.l.b16 %v80
    %v713 = vunpack.c.l.b16 %v81
    %v714 = vunpack.c.l.b16 %v82
    %v715 = vunpack.c.l.b16 %v83
    %v716 = vunpack.c.l.b16 %v84
    %v717 = vunpack.c.l.b16 %v85
    %v718 = vunpack.c.l.b16 %v86
    %v719 = vunpack.c.l.b16 %v87
    %v720 = vunpack.c.l.b16 %v88
    %v721 = vunpack.c.l.b16 %v89
    %v722 = vunpack.c.l.b16 %v90
    %v723 = vunpack.c.l.b16 %v91
    %v724 = vunpack.c.l.b16 %v92
    %v725 = vunpack.c.l.b16 %v93
    %v726 = vunpack.c.l.b16 %v94
    %v727 = vunpack.c.l.b16 %v95
    %v728 = vunpack.c.l.b16 %v96
    %v729 = vunpack.c.l.b16 %v97
    %v730 = vunpack.c.l.b16 %v98
    %v731 = vunpack.c.l.b16 %v99
    %v732 = vunpack.c.l.b16 %v100
    %v733 = vunpack.c.l.b16 %v101
    %v734 = vunpack.c.l.b16 %v102
    %v735 = vunpack.c.l.b16 %v103
    %v736 = vunpack.c.l.b16 %v104
    %v737 = vunpack.c.l.b16 %v105
    %v738 = vunpack.c.l.b16 %v106
    %v739 = vunpack.c.l.b16 %v107
    %v740 = vunpack.c.l.b16 %v108
    %v741 = vunpack.c.l.b16 %v109
    %v742 = vunpack.c.l.b16 %v110
    %v743 = vunpack.c.l.b16 %v111
    %v744 = vunpack.c.l.b16 %v112
    %v745 = vunpack.c.l.b16 %v113
    %v746 = vunpack.c.l.b16 %v114
    %v747 = vunpack.c.l.b16 %v115
    %v748 = vunpack.c.l.b16 %v116
    %v749 = vunpack.c.l.b16 %v117
    %v750 = vunpack.c.l.b16 %v118
    %v751 = vunpack.c.l.b16 %v119
    %v752 = vunpack.c.l.b16 %v120
    %v753 = vunpack.c.l.b16 %v121
    %v754 = vunpack.c.l.b16 %v122
    %v755 = vunpack.c.l.b16 %v123
    %v756 = vunpack.c.l.b16 %v124
    %v757 = vunpack.c.l.b16 %v125
    %v758 = vunpack.c.l.b16 %v126
    %v759 = vunpack.c.l.b16 %v127
    %v760 = vunpack.c.l.b16 %v128
    %v761 = vunpack.c.l.b16 %v129
    %v762 = vunpack.c.l.b16 %v130
    %v763 = vunpack.c.l.b16 %v131
    %v764 = vunpack.c.l.b16 %v132
    %v765 = vunpack.c.l.b16 %v133
    %v766 = vunpack.c.l.b16 %v134
    %v767 = vunpack.c.l.b16 %v135
    %v768 = vunpack.c.l.b16 %v136
    %v769 = vunpack.c.l.b16 %v137
    %v770 = vunpack.c.l.b16 %v138
    %v771 = vunpack.c.l.b16 %v139
    %v772 = vunpack.c.l.b16 %v140
    %v773 = vunpack.c.l.b16 %v141
    %v774 = vunpack.c.l.b16 %v142
    %v775 = vunpack.c.l.b16 %v143
    %v776 = vunpack.c.l.b16 %v144
    %v777 = vunpack.c.l.b16 %v145
    %v778 = vunpack.c.l.b16 %v146
    %v779 = vunpack.c.l.b16 %v147
    %v780 = vunpack.c.l.b16 %v148
    %v781 = vunpack.c.l.b16 %v149
    %v782 = vunpack.c.l.b16 %v150
    %v783 = vunpack.c.l.b16 %v151
    %v784 = vunpack.c.l.b16 %v152
    %v785 = vunpack.c.l.b16 %v153
    %v786 = vunpack.c.l.b16 %v154
    %v787 = vunpack.c.l.b16 %v155
    %v788 = vunpack.c.l.b16 %v156
    %v789 = vunpack.c.l.b16 %v157
    %v790 = vunpack.c.l.b16 %v158
    %v791 = vunpack.c.l.b16 %v159
    %v792 = vunpack.c.l.b16 %v160
    %v793 = vunpack.c.l.b16 %v161
    %v794 = vunpack.c.l.b16 %v162
    %v795 = vunpack.c.l.b16 %v163
    %v796 = vunpack.c.l.b16 %v164
    %v797 = vunpack.c.l.b16 %v165
    %v798 = vunpack.c.l.b16 %v166
    %v799 = vunpack.c.l.b16 %v167
    %v800 = vunpack.c.l.b16 %v168
    %v801 = vunpack.c.l.b16 %v169
    %v802 = vunpack.c.l.b16 %v170
    %v803 = vunpack.c.l.b16 %v171
    %v804 = vunpack.c.l.b16 %v172
    %v805 = vunpack.c.l.b16 %v173
    %v806 = vunpack.c.l.b16 %v174
    %v807 = vunpack.c.l.b16 %v175
    %v808 = vunpack.c.l.b16 %v176
    %v809 = vunpack.c.l.b16 %v177
    %v810 = vunpack.c.l.b16 %v178
    %v811 = vunpack.c.l.b16 %v179
    %v812 = vunpack.c.l.b16 %v180
    %v813 = vunpack.c.l.b16 %v181
    %v814 = vunpack.c.l.b16 %v182
    %v815 = vunpack.c.l.b16 %v183
    %v816 = vunpack.c.l.b16 %v184
    %v817 = vunpack.c.l.b16 %v185
    %v818 = vunpack.c.l.b16 %v186
    %v819 = vunpack.c.l.b16 %v187
    %v820 = vunpack.c.l.b16 %v188
    %v821 = vunpack.c.l.b16 %v189
    %v822 = vunpack.c.l.b16 %v190
    %v823 = vunpack.c.l.b16 %v191
    %v824 = vunpack.c.l.b16 %v192
    %v825 = vunpack.c.l.b16 %v193
    %v826 = vunpack.c.l.b16 %v194
    %v827 = vunpack.c.l.b16 %v195
    %v828 = vunpack.c.l.b16 %v196
    %v829 = vunpack.c.l.b16 %v197
    %v830 = vunpack.c.l.b16 %v198
    %v831 = vunpack.c.l.b16 %v199
    %v832 = vunpack.c.l.b16 %v200
    %v833 = vunpack.c.l.b16 %v201
    %v834 = vunpack.c.l.b16 %v202
    %v835 = vunpack.c.l.b16 %v203
    %v836 = vunpack.c.l.b16 %v204
    %v837 = vunpack.c.l.b16 %v205
    %v838 = vunpack.c.l.b16 %v206
    %v839 = vunpack.c.l.b16 %v207
    %v840 = vunpack.c.l.b16 %v208
    %v841 = vunpack.c.l.b16 %v209
    %v842 = vunpack.c.l.b16 %v210
    %v843 = vunpack.c.l.b16 %v211
    %v844 = vunpack.c.l.b16 %v212
    %v845 = vunpack.c.l.b16 %v213
    %v846 = vunpack.c.l.b16 %v214
    %v847 = vunpack.c.l.b16 %v215
    %v848 = vunpack.c.l.b16 %v216
    %v849 = vunpack.c.l.b16 %v217
    %v850 = vunpack.c.l.b16 %v218
    %v851 = vunpack.c.l.b16 %v219
    %v852 = vunpack.c.l.b16 %v220
    %v853 = vunpack.c.l.b16 %v221
    %v854 = vunpack.c.l.b16 %v222
    %v855 = vunpack.c.l.b16 %v223
    %v856 = vunpack.c.l.b16 %v224
    %v857 = vunpack.c.l.b16 %v225
    %v858 = vunpack.c.l.b16 %v226
    %v859 = vunpack.c.l.b16 %v227
    %v860 = vunpack.c.l.b16 %v228
    %v861 = vunpack.c.l.b16 %v229
    %v862 = vunpack.c.l.b16 %v230
    %v863 = vunpack.c.l.b16 %v231
    %v864 = vunpack.c.l.b16 %v232
    %v865 = vunpack.c.l.b16 %v233
    %v866 = vunpack.c.l.b16 %v234
    %v867 = vunpack.c.l.b16 %v235
    %v868 = vunpack.c.l.b16 %v236
    %v869 = vunpack.c.l.b16 %v237
    %v870 = vunpack.c.l.b16 %v238
    %v871 = vunpack.c.l.b16 %v239
    %v872 = vunpack.c.l.b16 %v240
    %v873 = vunpack.c.l.b16 %v241
    %v874 = vunpack.c.l.b16 %v242
    %v875 = vunpack.c.l.b16 %v243
    %v876 = vunpack.c.l.b16 %v244
    %v877 = vunpack.c.l.b16 %v245
    %v878 = vunpack.c.l.b16 %v246
    %v879 = vunpack.c.l.b16 %v247
    %v880 = vunpack.c.l.b16 %v248
    %v881 = vunpack.c.l.b16 %v249
    %v882 = vunpack.c.l.b16 %v250
    %v883 = vunpack.c.l.b16 %v251
    %v884 = vunpack.c.l.b16 %v252
    %v885 = vunpack.c.l.b16 %v253
    %v886 = vunpack.c.l.b16 %v254
    %v887 = vunpack.c.l.b16 %v255
    %v888 = vunpack.c.l.b16 %v256
    %v889 = vunpack.c.l.b16 %v257
    %v890 = vunpack.c.l.b16 %v258
    %v891 = vunpack.c.l.b16 %v259
    %v892 = vunpack.c.l.b16 %v260
    %v893 = vunpack.c.l.b16 %v261
    %v894 = vunpack.c.l.b16 %v262
    %v895 = vunpack.c.l.b16 %v263
    %v896 = vunpack.c.l.b16 %v264
    %v897 = vunpack.c.l.b16 %v265
    %v898 = vunpack.c.l.b16 %v266
    %v899 = vunpack.c.l.b16 %v267
    %v900 = vunpack.c.l.b16 %v268
    %v901 = vunpack.c.l.b16 %v269
    %v902 = vunpack.c.l.b16 %v270
    %v903 = vunpack.c.l.b16 %v271
    %v904 = vunpack.c.l.b16 %v272
    %v905 = vunpack.c.l.b16 %v273
    %v906 = vunpack.c.l.b16 %v274
    %v907 = vunpack.c.l.b16 %v275
    %v908 = vunpack.c.l.b16 %v276
    %v909 = vunpack.c.l.b16 %v277
    %v910 = vunpack.c.l.b16 %v278
    %v911 = vunpack.c.l.b16 %v279
    %v912 = vunpack.c.l.b16 %v280
    %v913 = vunpack.c.l.b16 %v281
    %v914 = vunpack.c.l.b16 %v282
    %v915 = vunpack.c.l.b16 %v283
    %v916 = vunpack.c.l.b16 %v284
    %v917 = vunpack.c.l.b16 %v285
    %v918 = vunpack.c.l.b16 %v286
    %v919 = vunpack.c.l.b16 %v287
    %v920 = vunpack.c.l.b16 %v288
    %v921 = vunpack.c.l.b16 %v289
    %v922 = vunpack.c.l.b16 %v290
    %v923 = vunpack.c.l.b16 %v291
    %v924 = vunpack.c.l.b16 %v292
    %v925 = vunpack.c.l.b16 %v293
    %v926 = vunpack.c.l.b16 %v294
    %v927 = vunpack.c.l.b16 %v295
    %v928 = vunpack.c.l.b16 %v296
    %v929 = vunpack.c.l.b16 %v297
    %v930 = vunpack.c.l.b16 %v298
    %v931 = vunpack.c.l.b16 %v299
    %v932 = vunpack.c.l.b16 %v300
    %v933 = vunpack.c.l.b16 %v301
    %v934 = vunpack.c.l.b16 %v302
    %v935 = vunpack.c.l.b16 %v303
    %v936 = vunpack.c.l.b16 %v304
    %v937 = vunpack.c.l.b16 %v305
    %v938 = vunpack.c.l.b16 %v306
    %v939 = vunpack.c.l.b16 %v307
    %v940 = vpack.c.b16 %v685, %v684
    %v941 = vpack.c.b16 %v687, %v686
    %v942 = vpack.c.b16 %v689, %v688
    %v943 = vpack.c.b16 %v691, %v690
    %v944 = vpack.c.b16 %v693, %v692
    %v945 = vpack.c.b16 %v695, %v694
    %v946 = vpack.c.b16 %v697, %v696
    %v947 = vpack.c.b16 %v699, %v698
    %v948 = vpack.c.b16 %v701, %v700
    %v949 = vpack.c.b16 %v703, %v702
    %v950 = vpack.c.b16 %v705, %v704
    %v951 = vpack.c.b16 %v707, %v706
    %v952 = vpack.c.b16 %v709, %v708
    %v953 = vpack.c.b16 %v711, %v710
    %v954 = vpack.c.b16 %v713, %v712
    %v955 = vpack.c.b16 %v715, %v714
    %v956 = vpack.c.b16 %v717, %v716
    %v957 = vpack.c.b16 %v719, %v718
    %v958 = vpack.c.b16 %v721, %v720
    %v959 = vpack.c.b16 %v723, %v722
    %v960 = vpack.c.b16 %v725, %v724
    %v961 = vpack.c.b16 %v727, %v726
    %v962 = vpack.c.b16 %v729, %v728
    %v963 = vpack.c.b16 %v731, %v730
    %v964 = vpack.c.b16 %v733, %v732
    %v965 = vpack.c.b16 %v735, %v734
    %v966 = vpack.c.b16 %v737, %v736
    %v967 = vpack.c.b16 %v739, %v738
    %v968 = vpack.c.b16 %v741, %v740
    %v969 = vpack.c.b16 %v743, %v742
    %v970 = vpack.c.b16 %v745, %v744
    %v971 = vpack.c.b16 %v747, %v746
    %v972 = vpack.c.b16 %v749, %v748
    %v973 = vpack.c.b16 %v751, %v750
    %v974 = vpack.c.b16 %v753, %v752
    %v975 = vpack.c.b16 %v755, %v754
    %v976 = vpack.c.b16 %v757, %v756
    %v977 = vpack.c.b16 %v759, %v758
    %v978 = vpack.c.b16 %v761, %v760
    %v979 = vpack.c.b16 %v763, %v762
    %v980 = vpack.c.b16 %v765, %v764
    %v981 = vpack.c.b16 %v767, %v766
    %v982 = vpack.c.b16 %v769, %v768
    %v983 = vpack.c.b16 %v771, %v770
    %v984 = vpack.c.b16 %v773, %v772
    %v985 = vpack.c.b16 %v775, %v774
    %v986 = vpack.c.b16 %v777, %v776
    %v987 = vpack.c.b16 %v779, %v778
    %v988 = vpack.c.b16 %v781, %v780
    %v989 = vpack.c.b16 %v783, %v782
    %v990 = vpack.c.b16 %v785, %v784
    %v991 = vpack.c.b16 %v787, %v786
    %v992 = vpack.c.b16 %v789, %v788
    %v993 = vpack.c.b16 %v791, %v790
    %v994 = vpack.c.b16 %v793, %v792
    %v995 = vpack.c.b16 %v795, %v794
    %v996 = vpack.c.b16 %v797, %v796
    %v997 = vpack.c.b16 %v799, %v798
    %v998 = vpack.c.b16 %v801, %v800
    %v999 = vpack.c.b16 %v803, %v802
    %v1000 = vpack.c.b16 %v805, %v804
    %v1001 = vpack.c.b16 %v807, %v806
    %v1002 = vpack.c.b16 %v809, %v808
    %v1003 = vpack.c.b16 %v811, %v810
    %v1004 = vpack.c.b16 %v813, %v812
    %v1005 = vpack.c.b16 %v815, %v814
    %v1006 = vpack.c.b16 %v817, %v816
    %v1007 = vpack.c.b16 %v819, %v818
    %v1008 = vpack.c.b16 %v821, %v820
    %v1009 = vpack.c.b16 %v823, %v822
    %v1010 = vpack.c.b16 %v825, %v824
    %v1011 = vpack.c.b16 %v827, %v826
    %v1012 = vpack.c.b16 %v829, %v828
    %v1013 = vpack.c.b16 %v831, %v830
    %v1014 = vpack.c.b16 %v833, %v832
    %v1015 = vpack.c.b16 %v835, %v834
    %v1016 = vpack.c.b16 %v837, %v836
    %v1017 = vpack.c.b16 %v839, %v838
    %v1018 = vpack.c.b16 %v841, %v840
    %v1019 = vpack.c.b16 %v843, %v842
    %v1020 = vpack.c.b16 %v845, %v844
    %v1021 = vpack.c.b16 %v847, %v846
    %v1022 = vpack.c.b16 %v849, %v848
    %v1023 = vpack.c.b16 %v851, %v850
    %v1024 = vpack.c.b16 %v853, %v852
    %v1025 = vpack.c.b16 %v855, %v854
    %v1026 = vpack.c.b16 %v857, %v856
    %v1027 = vpack.c.b16 %v859, %v858
    %v1028 = vpack.c.b16 %v861, %v860
    %v1029 = vpack.c.b16 %v863, %v862
    %v1030 = vpack.c.b16 %v865, %v864
    %v1031 = vpack.c.b16 %v867, %v866
    %v1032 = vpack.c.b16 %v869, %v868
    %v1033 = vpack.c.b16 %v871, %v870
    %v1034 = vpack.c.b16 %v873, %v872
    %v1035 = vpack.c.b16 %v875, %v874
    %v1036 = vpack.c.b16 %v877, %v876
    %v1037 = vpack.c.b16 %v879, %v878
    %v1038 = vpack.c.b16 %v881, %v880
    %v1039 = vpack.c.b16 %v883, %v882
    %v1040 = vpack.c.b16 %v885, %v884
    %v1041 = vpack.c.b16 %v887, %v886
    %v1042 = vpack.c.b16 %v889, %v888
    %v1043 = vpack.c.b16 %v891, %v890
    %v1044 = vpack.c.b16 %v893, %v892
    %v1045 = vpack.c.b16 %v895, %v894
    %v1046 = vpack.c.b16 %v897, %v896
    %v1047 = vpack.c.b16 %v899, %v898
    %v1048 = vpack.c.b16 %v901, %v900
    %v1049 = vpack.c.b16 %v903, %v902
    %v1050 = vpack.c.b16 %v905, %v904
    %v1051 = vpack.c.b16 %v907, %v906
    %v1052 = vpack.c.b16 %v909, %v908
    %v1053 = vpack.c.b16 %v911, %v910
    %v1054 = vpack.c.b16 %v913, %v912
    %v1055 = vpack.c.b16 %v915, %v914
    %v1056 = vpack.c.b16 %v917, %v916
    %v1057 = vpack.c.b16 %v919, %v918
    %v1058 = vpack.c.b16 %v921, %v920
    %v1059 = vpack.c.b16 %v923, %v922
    %v1060 = vpack.c.b16 %v925, %v924
    %v1061 = vpack.c.b16 %v927, %v926
    %v1062 = vpack.c.b16 %v929, %v928
    %v1063 = vpack.c.b16 %v931, %v930
    %v1064 = vpack.c.b16 %v933, %v932
    %v1065 = vpack.c.b16 %v935, %v934
    %v1066 = vpack.c.b16 %v937, %v936
    %v1067 = vpack.c.b16 %v939, %v938
    %1196 = vmatprep.subr.bf16.mxu0 0
    %1197 = vmatpush1.bf16.msra.mxu0 %v940
    %1198 = vmatprep.subr.bf16.mxu0 0
    %1199 = vmatpush1.bf16.msra.mxu0 %v941
    %1200 = vmatprep.subr.bf16.mxu0 0
    %1201 = vmatpush1.bf16.msra.mxu0 %v942
    %1202 = vmatprep.subr.bf16.mxu0 0
    %1203 = vmatpush1.bf16.msra.mxu0 %v943
    %1204 = vmatprep.subr.bf16.mxu0 0
    %1205 = vmatpush1.bf16.msra.mxu0 %v944
    %1206 = vmatprep.subr.bf16.mxu0 0
    %1207 = vmatpush1.bf16.msra.mxu0 %v945
    %1208 = vmatprep.subr.bf16.mxu0 0
    %1209 = vmatpush1.bf16.msra.mxu0 %v946
    %1210 = vmatprep.subr.bf16.mxu0 0
    %1211 = vmatpush1.bf16.msra.mxu0 %v947
    %1212 = vmatprep.subr.bf16.mxu0 0
    %1213 = vmatpush1.bf16.msra.mxu0 %v948
    %1214 = vmatprep.subr.bf16.mxu0 0
    %1215 = vmatpush1.bf16.msra.mxu0 %v949
    %1216 = vmatprep.subr.bf16.mxu0 0
    %1217 = vmatpush1.bf16.msra.mxu0 %v950
    %1218 = vmatprep.subr.bf16.mxu0 0
    %1219 = vmatpush1.bf16.msra.mxu0 %v951
    %1220 = vmatprep.subr.bf16.mxu0 0
    %1221 = vmatpush1.bf16.msra.mxu0 %v952
    %1222 = vmatprep.subr.bf16.mxu0 0
    %1223 = vmatpush1.bf16.msra.mxu0 %v953
    %1224 = vmatprep.subr.bf16.mxu0 0
    %1225 = vmatpush1.bf16.msra.mxu0 %v954
    %1226 = vmatprep.subr.bf16.mxu0 0
    %1227 = vmatpush1.bf16.msra.mxu0 %v955
    %1228 = vmatprep.mubr.bf16.mxu0 %v397
    %1229 = vmatmul.mubr.bf16.gmra.mrb[0].mxu0 %v396
    %v1230 = vpop.f32.mrb[0].mxu0
    %v1231 = vadd.f32 %v370, %v1230
    %v1232 = vpop.f32.mrb[0].mxu0
    %v1233 = vpop.f32.mrb[0].mxu0
    %v1234 = vpop.f32.mrb[0].mxu0
    %1235 = vdwg.mxu0
    %1236 = vmatprep.subr.bf16.mxu0 0
    %1237 = vmatpush1.bf16.msra.mxu0 %v956
    %1238 = vmatprep.subr.bf16.mxu0 0
    %1239 = vmatpush1.bf16.msra.mxu0 %v957
    %1240 = vmatprep.subr.bf16.mxu0 0
    %1241 = vmatpush1.bf16.msra.mxu0 %v958
    %1242 = vmatprep.subr.bf16.mxu0 0
    %1243 = vmatpush1.bf16.msra.mxu0 %v959
    %1244 = vmatprep.subr.bf16.mxu0 0
    %1245 = vmatpush1.bf16.msra.mxu0 %v960
    %1246 = vmatprep.subr.bf16.mxu0 0
    %1247 = vmatpush1.bf16.msra.mxu0 %v961
    %1248 = vmatprep.subr.bf16.mxu0 0
    %1249 = vmatpush1.bf16.msra.mxu0 %v962
    %1250 = vmatprep.subr.bf16.mxu0 0
    %1251 = vmatpush1.bf16.msra.mxu0 %v963
    %1252 = vmatprep.subr.bf16.mxu0 0
    %1253 = vmatpush1.bf16.msra.mxu0 %v964
    %1254 = vmatprep.subr.bf16.mxu0 0
    %1255 = vmatpush1.bf16.msra.mxu0 %v965
    %1256 = vmatprep.subr.bf16.mxu0 0
    %1257 = vmatpush1.bf16.msra.mxu0 %v966
    %1258 = vmatprep.subr.bf16.mxu0 0
    %1259 = vmatpush1.bf16.msra.mxu0 %v967
    %1260 = vmatprep.subr.bf16.mxu0 0
    %1261 = vmatpush1.bf16.msra.mxu0 %v968
    %1262 = vmatprep.subr.bf16.mxu0 0
    %1263 = vmatpush1.bf16.msra.mxu0 %v969
    %1264 = vmatprep.subr.bf16.mxu0 0
    %1265 = vmatpush1.bf16.msra.mxu0 %v970
    %1266 = vmatprep.subr.bf16.mxu0 0
    %1267 = vmatpush1.bf16.msra.mxu0 %v971
    %1268 = vmatprep.mubr.bf16.mxu0 %v399
    %1269 = vmatmul.mubr.bf16.gmra.mrb[0].mxu0 %v398
    %v1270 = vpop.f32.mrb[0].mxu0
    %v1271 = vadd.f32 %v1231, %v1270
    %v1272 = vpop.f32.mrb[0].mxu0
    %v1273 = vpop.f32.mrb[0].mxu0
    %v1274 = vpop.f32.mrb[0].mxu0
    %1275 = vdwg.mxu0
    %1276 = vmatprep.subr.bf16.mxu0 0
    %1277 = vmatpush1.bf16.msra.mxu0 %v972
    %1278 = vmatprep.subr.bf16.mxu0 0
    %1279 = vmatpush1.bf16.msra.mxu0 %v973
    %1280 = vmatprep.subr.bf16.mxu0 0
    %1281 = vmatpush1.bf16.msra.mxu0 %v974
    %1282 = vmatprep.subr.bf16.mxu0 0
    %1283 = vmatpush1.bf16.msra.mxu0 %v975
    %1284 = vmatprep.subr.bf16.mxu0 0
    %1285 = vmatpush1.bf16.msra.mxu0 %v976
    %1286 = vmatprep.subr.bf16.mxu0 0
    %1287 = vmatpush1.bf16.msra.mxu0 %v977
    %1288 = vmatprep.subr.bf16.mxu0 0
    %1289 = vmatpush1.bf16.msra.mxu0 %v978
    %1290 = vmatprep.subr.bf16.mxu0 0
    %1291 = vmatpush1.bf16.msra.mxu0 %v979
    %1292 = vmatprep.subr.bf16.mxu0 0
    %1293 = vmatpush1.bf16.msra.mxu0 %v980
    %1294 = vmatprep.subr.bf16.mxu0 0
    %1295 = vmatpush1.bf16.msra.mxu0 %v981
    %1296 = vmatprep.subr.bf16.mxu0 0
    %1297 = vmatpush1.bf16.msra.mxu0 %v982
    %1298 = vmatprep.subr.bf16.mxu0 0
    %1299 = vmatpush1.bf16.msra.mxu0 %v983
    %1300 = vmatprep.subr.bf16.mxu0 0
    %1301 = vmatpush1.bf16.msra.mxu0 %v984
    %1302 = vmatprep.subr.bf16.mxu0 0
    %1303 = vmatpush1.bf16.msra.mxu0 %v985
    %1304 = vmatprep.subr.bf16.mxu0 0
    %1305 = vmatpush1.bf16.msra.mxu0 %v986
    %1306 = vmatprep.subr.bf16.mxu0 0
    %1307 = vmatpush1.bf16.msra.mxu0 %v987
    %1308 = vmatprep.mubr.bf16.mxu0 %v401
    %1309 = vmatmul.mubr.bf16.gmra.mrb[0].mxu0 %v400
    %v1310 = vpop.f32.mrb[0].mxu0
    %v1311 = vadd.f32 %v1271, %v1310
    %v1312 = vpop.f32.mrb[0].mxu0
    %v1313 = vpop.f32.mrb[0].mxu0
    %v1314 = vpop.f32.mrb[0].mxu0
    %1315 = vdwg.mxu0
    %1316 = vmatprep.subr.bf16.mxu0 0
    %1317 = vmatpush1.bf16.msra.mxu0 %v988
    %1318 = vmatprep.subr.bf16.mxu0 0
    %1319 = vmatpush1.bf16.msra.mxu0 %v989
    %1320 = vmatprep.subr.bf16.mxu0 0
    %1321 = vmatpush1.bf16.msra.mxu0 %v990
    %1322 = vmatprep.subr.bf16.mxu0 0
    %1323 = vmatpush1.bf16.msra.mxu0 %v991
    %1324 = vmatprep.subr.bf16.mxu0 0
    %1325 = vmatpush1.bf16.msra.mxu0 %v992
    %1326 = vmatprep.subr.bf16.mxu0 0
    %1327 = vmatpush1.bf16.msra.mxu0 %v993
    %1328 = vmatprep.subr.bf16.mxu0 0
    %1329 = vmatpush1.bf16.msra.mxu0 %v994
    %1330 = vmatprep.subr.bf16.mxu0 0
    %1331 = vmatpush1.bf16.msra.mxu0 %v995
    %1332 = vmatprep.subr.bf16.mxu0 0
    %1333 = vmatpush1.bf16.msra.mxu0 %v996
    %1334 = vmatprep.subr.bf16.mxu0 0
    %1335 = vmatpush1.bf16.msra.mxu0 %v997
    %1336 = vmatprep.subr.bf16.mxu0 0
    %1337 = vmatpush1.bf16.msra.mxu0 %v998
    %1338 = vmatprep.subr.bf16.mxu0 0
    %1339 = vmatpush1.bf16.msra.mxu0 %v999
    %1340 = vmatprep.subr.bf16.mxu0 0
    %1341 = vmatpush1.bf16.msra.mxu0 %v1000
    %1342 = vmatprep.subr.bf16.mxu0 0
    %1343 = vmatpush1.bf16.msra.mxu0 %v1001
    %1344 = vmatprep.subr.bf16.mxu0 0
    %1345 = vmatpush1.bf16.msra.mxu0 %v1002
    %1346 = vmatprep.subr.bf16.mxu0 0
    %1347 = vmatpush1.bf16.msra.mxu0 %v1003
    %1348 = vmatprep.mubr.bf16.mxu0 %v403
    %1349 = vmatmul.mubr.bf16.gmra.mrb[0].mxu0 %v402
    %v1350 = vpop.f32.mrb[0].mxu0
    %v1351 = vadd.f32 %v1311, %v1350
    %v1352 = vpop.f32.mrb[0].mxu0
    %v1353 = vpop.f32.mrb[0].mxu0
    %v1354 = vpop.f32.mrb[0].mxu0
    %1355 = vdwg.mxu0
    %1356 = vmatprep.subr.bf16.mxu0 0
    %1357 = vmatpush1.bf16.msra.mxu0 %v1004
    %1358 = vmatprep.subr.bf16.mxu0 0
    %1359 = vmatpush1.bf16.msra.mxu0 %v1005
    %1360 = vmatprep.subr.bf16.mxu0 0
    %1361 = vmatpush1.bf16.msra.mxu0 %v1006
    %1362 = vmatprep.subr.bf16.mxu0 0
    %1363 = vmatpush1.bf16.msra.mxu0 %v1007
    %1364 = vmatprep.subr.bf16.mxu0 0
    %1365 = vmatpush1.bf16.msra.mxu0 %v1008
    %1366 = vmatprep.subr.bf16.mxu0 0
    %1367 = vmatpush1.bf16.msra.mxu0 %v1009
    %1368 = vmatprep.subr.bf16.mxu0 0
    %1369 = vmatpush1.bf16.msra.mxu0 %v1010
    %1370 = vmatprep.subr.bf16.mxu0 0
    %1371 = vmatpush1.bf16.msra.mxu0 %v1011
    %1372 = vmatprep.subr.bf16.mxu0 0
    %1373 = vmatpush1.bf16.msra.mxu0 %v1012
    %1374 = vmatprep.subr.bf16.mxu0 0
    %1375 = vmatpush1.bf16.msra.mxu0 %v1013
    %1376 = vmatprep.subr.bf16.mxu0 0
    %1377 = vmatpush1.bf16.msra.mxu0 %v1014
    %1378 = vmatprep.subr.bf16.mxu0 0
    %1379 = vmatpush1.bf16.msra.mxu0 %v1015
    %1380 = vmatprep.subr.bf16.mxu0 0
    %1381 = vmatpush1.bf16.msra.mxu0 %v1016
    %1382 = vmatprep.subr.bf16.mxu0 0
    %1383 = vmatpush1.bf16.msra.mxu0 %v1017
    %1384 = vmatprep.subr.bf16.mxu0 0
    %1385 = vmatpush1.bf16.msra.mxu0 %v1018
    %1386 = vmatprep.subr.bf16.mxu0 0
    %1387 = vmatpush1.bf16.msra.mxu0 %v1019
    %1388 = vmatprep.mubr.bf16.mxu0 %v405
    %1389 = vmatmul.mubr.bf16.gmra.mrb[0].mxu0 %v404
    %v1390 = vpop.f32.mrb[0].mxu0
    %v1391 = vadd.f32 %v1351, %v1390
    %v1392 = vpop.f32.mrb[0].mxu0
    %v1393 = vpop.f32.mrb[0].mxu0
    %v1394 = vpop.f32.mrb[0].mxu0
    %1395 = vdwg.mxu0
    %1396 = vmatprep.subr.bf16.mxu0 0
    %1397 = vmatpush1.bf16.msra.mxu0 %v1020
    %1398 = vmatprep.subr.bf16.mxu0 0
    %1399 = vmatpush1.bf16.msra.mxu0 %v1021
    %1400 = vmatprep.subr.bf16.mxu0 0
    %1401 = vmatpush1.bf16.msra.mxu0 %v1022
    %1402 = vmatprep.subr.bf16.mxu0 0
    %1403 = vmatpush1.bf16.msra.mxu0 %v1023
    %1404 = vmatprep.subr.bf16.mxu0 0
    %1405 = vmatpush1.bf16.msra.mxu0 %v1024
    %1406 = vmatprep.subr.bf16.mxu0 0
    %1407 = vmatpush1.bf16.msra.mxu0 %v1025
    %1408 = vmatprep.subr.bf16.mxu0 0
    %1409 = vmatpush1.bf16.msra.mxu0 %v1026
    %1410 = vmatprep.subr.bf16.mxu0 0
    %1411 = vmatpush1.bf16.msra.mxu0 %v1027
    %1412 = vmatprep.subr.bf16.mxu0 0
    %1413 = vmatpush1.bf16.msra.mxu0 %v1028
    %1414 = vmatprep.subr.bf16.mxu0 0
    %1415 = vmatpush1.bf16.msra.mxu0 %v1029
    %1416 = vmatprep.subr.bf16.mxu0 0
    %1417 = vmatpush1.bf16.msra.mxu0 %v1030
    %1418 = vmatprep.subr.bf16.mxu0 0
    %1419 = vmatpush1.bf16.msra.mxu0 %v1031
    %1420 = vmatprep.subr.bf16.mxu0 0
    %1421 = vmatpush1.bf16.msra.mxu0 %v1032
    %1422 = vmatprep.subr.bf16.mxu0 0
    %1423 = vmatpush1.bf16.msra.mxu0 %v1033
    %1424 = vmatprep.subr.bf16.mxu0 0
    %1425 = vmatpush1.bf16.msra.mxu0 %v1034
    %1426 = vmatprep.subr.bf16.mxu0 0
    %1427 = vmatpush1.bf16.msra.mxu0 %v1035
    %1428 = vmatprep.mubr.bf16.mxu0 %v407
    %1429 = vmatmul.mubr.bf16.gmra.mrb[0].mxu0 %v406
    %v1430 = vpop.f32.mrb[0].mxu0
    %v1431 = vadd.f32 %v1391, %v1430
    %v1432 = vpop.f32.mrb[0].mxu0
    %v1433 = vpop.f32.mrb[0].mxu0
    %v1434 = vpop.f32.mrb[0].mxu0
    %1435 = vdwg.mxu0
    %1436 = vmatprep.subr.bf16.mxu0 0
    %1437 = vmatpush1.bf16.msra.mxu0 %v1036
    %1438 = vmatprep.subr.bf16.mxu0 0
    %1439 = vmatpush1.bf16.msra.mxu0 %v1037
    %1440 = vmatprep.subr.bf16.mxu0 0
    %1441 = vmatpush1.bf16.msra.mxu0 %v1038
    %1442 = vmatprep.subr.bf16.mxu0 0
    %1443 = vmatpush1.bf16.msra.mxu0 %v1039
    %1444 = vmatprep.subr.bf16.mxu0 0
    %1445 = vmatpush1.bf16.msra.mxu0 %v1040
    %1446 = vmatprep.subr.bf16.mxu0 0
    %1447 = vmatpush1.bf16.msra.mxu0 %v1041
    %1448 = vmatprep.subr.bf16.mxu0 0
    %1449 = vmatpush1.bf16.msra.mxu0 %v1042
    %1450 = vmatprep.subr.bf16.mxu0 0
    %1451 = vmatpush1.bf16.msra.mxu0 %v1043
    %1452 = vmatprep.subr.bf16.mxu0 0
    %1453 = vmatpush1.bf16.msra.mxu0 %v1044
    %1454 = vmatprep.subr.bf16.mxu0 0
    %1455 = vmatpush1.bf16.msra.mxu0 %v1045
    %1456 = vmatprep.subr.bf16.mxu0 0
    %1457 = vmatpush1.bf16.msra.mxu0 %v1046
    %1458 = vmatprep.subr.bf16.mxu0 0
    %1459 = vmatpush1.bf16.msra.mxu0 %v1047
    %1460 = vmatprep.subr.bf16.mxu0 0
    %1461 = vmatpush1.bf16.msra.mxu0 %v1048
    %1462 = vmatprep.subr.bf16.mxu0 0
    %1463 = vmatpush1.bf16.msra.mxu0 %v1049
    %1464 = vmatprep.subr.bf16.mxu0 0
    %1465 = vmatpush1.bf16.msra.mxu0 %v1050
    %1466 = vmatprep.subr.bf16.mxu0 0
    %1467 = vmatpush1.bf16.msra.mxu0 %v1051
    %1468 = vmatprep.mubr.bf16.mxu0 %v409
    %1469 = vmatmul.mubr.bf16.gmra.mrb[0].mxu0 %v408
    %v1470 = vpop.f32.mrb[0].mxu0
    %v1471 = vadd.f32 %v1431, %v1470
    %v1472 = vpop.f32.mrb[0].mxu0
    %v1473 = vpop.f32.mrb[0].mxu0
    %v1474 = vpop.f32.mrb[0].mxu0
    %1475 = vdwg.mxu0
    %1476 = vmatprep.subr.bf16.mxu0 0
    %1477 = vmatpush1.bf16.msra.mxu0 %v1052
    %1478 = vmatprep.subr.bf16.mxu0 0
    %1479 = vmatpush1.bf16.msra.mxu0 %v1053
    %1480 = vmatprep.subr.bf16.mxu0 0
    %1481 = vmatpush1.bf16.msra.mxu0 %v1054
    %1482 = vmatprep.subr.bf16.mxu0 0
    %1483 = vmatpush1.bf16.msra.mxu0 %v1055
    %1484 = vmatprep.subr.bf16.mxu0 0
    %1485 = vmatpush1.bf16.msra.mxu0 %v1056
    %1486 = vmatprep.subr.bf16.mxu0 0
    %1487 = vmatpush1.bf16.msra.mxu0 %v1057
    %1488 = vmatprep.subr.bf16.mxu0 0
    %1489 = vmatpush1.bf16.msra.mxu0 %v1058
    %1490 = vmatprep.subr.bf16.mxu0 0
    %1491 = vmatpush1.bf16.msra.mxu0 %v1059
    %1492 = vmatprep.subr.bf16.mxu0 0
    %1493 = vmatpush1.bf16.msra.mxu0 %v1060
    %1494 = vmatprep.subr.bf16.mxu0 0
    %1495 = vmatpush1.bf16.msra.mxu0 %v1061
    %1496 = vmatprep.subr.bf16.mxu0 0
    %1497 = vmatpush1.bf16.msra.mxu0 %v1062
    %1498 = vmatprep.subr.bf16.mxu0 0
    %1499 = vmatpush1.bf16.msra.mxu0 %v1063
    %1500 = vmatprep.subr.bf16.mxu0 0
    %1501 = vmatpush1.bf16.msra.mxu0 %v1064
    %1502 = vmatprep.subr.bf16.mxu0 0
    %1503 = vmatpush1.bf16.msra.mxu0 %v1065
    %1504 = vmatprep.subr.bf16.mxu0 0
    %1505 = vmatpush1.bf16.msra.mxu0 %v1066
    %1506 = vmatprep.subr.bf16.mxu0 0
    %1507 = vmatpush1.bf16.msra.mxu0 %v1067
    %1508 = vmatprep.mubr.bf16.mxu0 %v411
    %1509 = vmatmul.mubr.bf16.gmra.mrb[0].mxu0 %v410
    %v1510 = vpop.f32.mrb[0].mxu0
    %v1511 = vadd.f32 %v1471, %v1510
    %v1512 = vpop.f32.mrb[0].mxu0
    %v1513 = vpop.f32.mrb[0].mxu0
    %v1514 = vpop.f32.mrb[0].mxu0
    %1515 = vdwg.mxu0
    %v1516 = vmul.f32 %v1511, %v1511
    %v1517 = vsel %vm311, %v1516, 0.0
    %1518 = vadd.xlane.f32.xlu0 %v1517
    %v1519 = vpop.xlane.xlu0 %1518
    %v1520 = vmax.f32 %v1519, 1e-24
    %v1521 = vrsqrt.pop %v1520
    %v1522 = vmul.f32 %v1511, %v1521
    %v1523 = vld [vmem:[%s8] sm:$0xff]
    %v1524 = vld [vmem:[%s8 + $0x8] sm:$0xff]
    %v1525 = vld [vmem:[%s8 + $0x10] sm:$0xff]
    %v1526 = vld [vmem:[%s8 + $0x18] sm:$0xff]
    %v1527 = vld [vmem:[%s8 + $0x20] sm:$0xff]
    %v1528 = vld [vmem:[%s8 + $0x28] sm:$0xff]
    %v1529 = vld [vmem:[%s8 + $0x30] sm:$0xff]
    %v1530 = vld [vmem:[%s8 + $0x38] sm:$0xff]
    %v1539 = vunpack.c.l.b16 %v1523
    %v1540 = vunpack.c.h.b16 %v1523
    %v1541 = vunpack.c.l.b16 %v1524
    %v1542 = vunpack.c.h.b16 %v1524
    %v1543 = vunpack.c.l.b16 %v1525
    %v1544 = vunpack.c.h.b16 %v1525
    %v1545 = vunpack.c.l.b16 %v1526
    %v1546 = vunpack.c.h.b16 %v1526
    %v1547 = vunpack.c.l.b16 %v1527
    %v1548 = vunpack.c.h.b16 %v1527
    %v1549 = vunpack.c.l.b16 %v1528
    %v1550 = vunpack.c.h.b16 %v1528
    %v1551 = vunpack.c.l.b16 %v1529
    %v1552 = vunpack.c.h.b16 %v1529
    %v1553 = vunpack.c.l.b16 %v1530
    %v1554 = vunpack.c.h.b16 %v1530
    %v1555 = vpack.c.b16 %v1539, %v1539
    %v1556 = vpack.c.b16 %v1540, %v1540
    %v1557 = vpack.c.b16 %v1541, %v1541
    %v1558 = vpack.c.b16 %v1542, %v1542
    %v1559 = vpack.c.b16 %v1543, %v1543
    %v1560 = vpack.c.b16 %v1544, %v1544
    %v1561 = vpack.c.b16 %v1545, %v1545
    %v1562 = vpack.c.b16 %v1546, %v1546
    %v1563 = vpack.c.b16 %v1547, %v1547
    %v1564 = vpack.c.b16 %v1548, %v1548
    %v1565 = vpack.c.b16 %v1549, %v1549
    %v1566 = vpack.c.b16 %v1550, %v1550
    %v1567 = vpack.c.b16 %v1551, %v1551
    %v1568 = vpack.c.b16 %v1552, %v1552
    %v1569 = vpack.c.b16 %v1553, %v1553
    %v1570 = vpack.c.b16 %v1554, %v1554
    %1587 = vmatprep.subr.bf16.mxu0 0
    %1588 = vmatpush1.bf16.msra.mxu0 %v940
    %1589 = vmatprep.subr.bf16.mxu0 0
    %1590 = vmatpush1.bf16.msra.mxu0 %v941
    %1591 = vmatprep.subr.bf16.mxu0 0
    %1592 = vmatpush1.bf16.msra.mxu0 %v942
    %1593 = vmatprep.subr.bf16.mxu0 0
    %1594 = vmatpush1.bf16.msra.mxu0 %v943
    %1595 = vmatprep.subr.bf16.mxu0 0
    %1596 = vmatpush1.bf16.msra.mxu0 %v944
    %1597 = vmatprep.subr.bf16.mxu0 0
    %1598 = vmatpush1.bf16.msra.mxu0 %v945
    %1599 = vmatprep.subr.bf16.mxu0 0
    %1600 = vmatpush1.bf16.msra.mxu0 %v946
    %1601 = vmatprep.subr.bf16.mxu0 0
    %1602 = vmatpush1.bf16.msra.mxu0 %v947
    %1603 = vmatprep.subr.bf16.mxu0 0
    %1604 = vmatpush1.bf16.msra.mxu0 %v948
    %1605 = vmatprep.subr.bf16.mxu0 0
    %1606 = vmatpush1.bf16.msra.mxu0 %v949
    %1607 = vmatprep.subr.bf16.mxu0 0
    %1608 = vmatpush1.bf16.msra.mxu0 %v950
    %1609 = vmatprep.subr.bf16.mxu0 0
    %1610 = vmatpush1.bf16.msra.mxu0 %v951
    %1611 = vmatprep.subr.bf16.mxu0 0
    %1612 = vmatpush1.bf16.msra.mxu0 %v952
    %1613 = vmatprep.subr.bf16.mxu0 0
    %1614 = vmatpush1.bf16.msra.mxu0 %v953
    %1615 = vmatprep.subr.bf16.mxu0 0
    %1616 = vmatpush1.bf16.msra.mxu0 %v954
    %1617 = vmatprep.subr.bf16.mxu0 0
    %1618 = vmatpush1.bf16.msra.mxu0 %v955
    %1619 = vmatprep.mubr.bf16.mxu0 %v1556
    %1620 = vmatmul.mubr.bf16.gmra.mrb[0].mxu0 %v1555
    %v1621 = vpop.f32.mrb[0].mxu0
    %v1622 = vadd.f32 %v370, %v1621
    %v1623 = vpop.f32.mrb[0].mxu0
    %v1624 = vpop.f32.mrb[0].mxu0
    %v1625 = vpop.f32.mrb[0].mxu0
    %1626 = vdwg.mxu0
    %1627 = vmatprep.subr.bf16.mxu0 0
    %1628 = vmatpush1.bf16.msra.mxu0 %v956
    %1629 = vmatprep.subr.bf16.mxu0 0
    %1630 = vmatpush1.bf16.msra.mxu0 %v957
    %1631 = vmatprep.subr.bf16.mxu0 0
    %1632 = vmatpush1.bf16.msra.mxu0 %v958
    %1633 = vmatprep.subr.bf16.mxu0 0
    %1634 = vmatpush1.bf16.msra.mxu0 %v959
    %1635 = vmatprep.subr.bf16.mxu0 0
    %1636 = vmatpush1.bf16.msra.mxu0 %v960
    %1637 = vmatprep.subr.bf16.mxu0 0
    %1638 = vmatpush1.bf16.msra.mxu0 %v961
    %1639 = vmatprep.subr.bf16.mxu0 0
    %1640 = vmatpush1.bf16.msra.mxu0 %v962
    %1641 = vmatprep.subr.bf16.mxu0 0
    %1642 = vmatpush1.bf16.msra.mxu0 %v963
    %1643 = vmatprep.subr.bf16.mxu0 0
    %1644 = vmatpush1.bf16.msra.mxu0 %v964
    %1645 = vmatprep.subr.bf16.mxu0 0
    %1646 = vmatpush1.bf16.msra.mxu0 %v965
    %1647 = vmatprep.subr.bf16.mxu0 0
    %1648 = vmatpush1.bf16.msra.mxu0 %v966
    %1649 = vmatprep.subr.bf16.mxu0 0
    %1650 = vmatpush1.bf16.msra.mxu0 %v967
    %1651 = vmatprep.subr.bf16.mxu0 0
    %1652 = vmatpush1.bf16.msra.mxu0 %v968
    %1653 = vmatprep.subr.bf16.mxu0 0
    %1654 = vmatpush1.bf16.msra.mxu0 %v969
    %1655 = vmatprep.subr.bf16.mxu0 0
    %1656 = vmatpush1.bf16.msra.mxu0 %v970
    %1657 = vmatprep.subr.bf16.mxu0 0
    %1658 = vmatpush1.bf16.msra.mxu0 %v971
    %1659 = vmatprep.mubr.bf16.mxu0 %v1558
    %1660 = vmatmul.mubr.bf16.gmra.mrb[0].mxu0 %v1557
    %v1661 = vpop.f32.mrb[0].mxu0
    %v1662 = vadd.f32 %v1622, %v1661
    %v1663 = vpop.f32.mrb[0].mxu0
    %v1664 = vpop.f32.mrb[0].mxu0
    %v1665 = vpop.f32.mrb[0].mxu0
    %1666 = vdwg.mxu0
    %1667 = vmatprep.subr.bf16.mxu0 0
    %1668 = vmatpush1.bf16.msra.mxu0 %v972
    %1669 = vmatprep.subr.bf16.mxu0 0
    %1670 = vmatpush1.bf16.msra.mxu0 %v973
    %1671 = vmatprep.subr.bf16.mxu0 0
    %1672 = vmatpush1.bf16.msra.mxu0 %v974
    %1673 = vmatprep.subr.bf16.mxu0 0
    %1674 = vmatpush1.bf16.msra.mxu0 %v975
    %1675 = vmatprep.subr.bf16.mxu0 0
    %1676 = vmatpush1.bf16.msra.mxu0 %v976
    %1677 = vmatprep.subr.bf16.mxu0 0
    %1678 = vmatpush1.bf16.msra.mxu0 %v977
    %1679 = vmatprep.subr.bf16.mxu0 0
    %1680 = vmatpush1.bf16.msra.mxu0 %v978
    %1681 = vmatprep.subr.bf16.mxu0 0
    %1682 = vmatpush1.bf16.msra.mxu0 %v979
    %1683 = vmatprep.subr.bf16.mxu0 0
    %1684 = vmatpush1.bf16.msra.mxu0 %v980
    %1685 = vmatprep.subr.bf16.mxu0 0
    %1686 = vmatpush1.bf16.msra.mxu0 %v981
    %1687 = vmatprep.subr.bf16.mxu0 0
    %1688 = vmatpush1.bf16.msra.mxu0 %v982
    %1689 = vmatprep.subr.bf16.mxu0 0
    %1690 = vmatpush1.bf16.msra.mxu0 %v983
    %1691 = vmatprep.subr.bf16.mxu0 0
    %1692 = vmatpush1.bf16.msra.mxu0 %v984
    %1693 = vmatprep.subr.bf16.mxu0 0
    %1694 = vmatpush1.bf16.msra.mxu0 %v985
    %1695 = vmatprep.subr.bf16.mxu0 0
    %1696 = vmatpush1.bf16.msra.mxu0 %v986
    %1697 = vmatprep.subr.bf16.mxu0 0
    %1698 = vmatpush1.bf16.msra.mxu0 %v987
    %1699 = vmatprep.mubr.bf16.mxu0 %v1560
    %1700 = vmatmul.mubr.bf16.gmra.mrb[0].mxu0 %v1559
    %v1701 = vpop.f32.mrb[0].mxu0
    %v1702 = vadd.f32 %v1662, %v1701
    %v1703 = vpop.f32.mrb[0].mxu0
    %v1704 = vpop.f32.mrb[0].mxu0
    %v1705 = vpop.f32.mrb[0].mxu0
    %1706 = vdwg.mxu0
    %1707 = vmatprep.subr.bf16.mxu0 0
    %1708 = vmatpush1.bf16.msra.mxu0 %v988
    %1709 = vmatprep.subr.bf16.mxu0 0
    %1710 = vmatpush1.bf16.msra.mxu0 %v989
    %1711 = vmatprep.subr.bf16.mxu0 0
    %1712 = vmatpush1.bf16.msra.mxu0 %v990
    %1713 = vmatprep.subr.bf16.mxu0 0
    %1714 = vmatpush1.bf16.msra.mxu0 %v991
    %1715 = vmatprep.subr.bf16.mxu0 0
    %1716 = vmatpush1.bf16.msra.mxu0 %v992
    %1717 = vmatprep.subr.bf16.mxu0 0
    %1718 = vmatpush1.bf16.msra.mxu0 %v993
    %1719 = vmatprep.subr.bf16.mxu0 0
    %1720 = vmatpush1.bf16.msra.mxu0 %v994
    %1721 = vmatprep.subr.bf16.mxu0 0
    %1722 = vmatpush1.bf16.msra.mxu0 %v995
    %1723 = vmatprep.subr.bf16.mxu0 0
    %1724 = vmatpush1.bf16.msra.mxu0 %v996
    %1725 = vmatprep.subr.bf16.mxu0 0
    %1726 = vmatpush1.bf16.msra.mxu0 %v997
    %1727 = vmatprep.subr.bf16.mxu0 0
    %1728 = vmatpush1.bf16.msra.mxu0 %v998
    %1729 = vmatprep.subr.bf16.mxu0 0
    %1730 = vmatpush1.bf16.msra.mxu0 %v999
    %1731 = vmatprep.subr.bf16.mxu0 0
    %1732 = vmatpush1.bf16.msra.mxu0 %v1000
    %1733 = vmatprep.subr.bf16.mxu0 0
    %1734 = vmatpush1.bf16.msra.mxu0 %v1001
    %1735 = vmatprep.subr.bf16.mxu0 0
    %1736 = vmatpush1.bf16.msra.mxu0 %v1002
    %1737 = vmatprep.subr.bf16.mxu0 0
    %1738 = vmatpush1.bf16.msra.mxu0 %v1003
    %1739 = vmatprep.mubr.bf16.mxu0 %v1562
    %1740 = vmatmul.mubr.bf16.gmra.mrb[0].mxu0 %v1561
    %v1741 = vpop.f32.mrb[0].mxu0
    %v1742 = vadd.f32 %v1702, %v1741
    %v1743 = vpop.f32.mrb[0].mxu0
    %v1744 = vpop.f32.mrb[0].mxu0
    %v1745 = vpop.f32.mrb[0].mxu0
    %1746 = vdwg.mxu0
    %1747 = vmatprep.subr.bf16.mxu0 0
    %1748 = vmatpush1.bf16.msra.mxu0 %v1004
    %1749 = vmatprep.subr.bf16.mxu0 0
    %1750 = vmatpush1.bf16.msra.mxu0 %v1005
    %1751 = vmatprep.subr.bf16.mxu0 0
    %1752 = vmatpush1.bf16.msra.mxu0 %v1006
    %1753 = vmatprep.subr.bf16.mxu0 0
    %1754 = vmatpush1.bf16.msra.mxu0 %v1007
    %1755 = vmatprep.subr.bf16.mxu0 0
    %1756 = vmatpush1.bf16.msra.mxu0 %v1008
    %1757 = vmatprep.subr.bf16.mxu0 0
    %1758 = vmatpush1.bf16.msra.mxu0 %v1009
    %1759 = vmatprep.subr.bf16.mxu0 0
    %1760 = vmatpush1.bf16.msra.mxu0 %v1010
    %1761 = vmatprep.subr.bf16.mxu0 0
    %1762 = vmatpush1.bf16.msra.mxu0 %v1011
    %1763 = vmatprep.subr.bf16.mxu0 0
    %1764 = vmatpush1.bf16.msra.mxu0 %v1012
    %1765 = vmatprep.subr.bf16.mxu0 0
    %1766 = vmatpush1.bf16.msra.mxu0 %v1013
    %1767 = vmatprep.subr.bf16.mxu0 0
    %1768 = vmatpush1.bf16.msra.mxu0 %v1014
    %1769 = vmatprep.subr.bf16.mxu0 0
    %1770 = vmatpush1.bf16.msra.mxu0 %v1015
    %1771 = vmatprep.subr.bf16.mxu0 0
    %1772 = vmatpush1.bf16.msra.mxu0 %v1016
    %1773 = vmatprep.subr.bf16.mxu0 0
    %1774 = vmatpush1.bf16.msra.mxu0 %v1017
    %1775 = vmatprep.subr.bf16.mxu0 0
    %1776 = vmatpush1.bf16.msra.mxu0 %v1018
    %1777 = vmatprep.subr.bf16.mxu0 0
    %1778 = vmatpush1.bf16.msra.mxu0 %v1019
    %1779 = vmatprep.mubr.bf16.mxu0 %v1564
    %1780 = vmatmul.mubr.bf16.gmra.mrb[0].mxu0 %v1563
    %v1781 = vpop.f32.mrb[0].mxu0
    %v1782 = vadd.f32 %v1742, %v1781
    %v1783 = vpop.f32.mrb[0].mxu0
    %v1784 = vpop.f32.mrb[0].mxu0
    %v1785 = vpop.f32.mrb[0].mxu0
    %1786 = vdwg.mxu0
    %1787 = vmatprep.subr.bf16.mxu0 0
    %1788 = vmatpush1.bf16.msra.mxu0 %v1020
    %1789 = vmatprep.subr.bf16.mxu0 0
    %1790 = vmatpush1.bf16.msra.mxu0 %v1021
    %1791 = vmatprep.subr.bf16.mxu0 0
    %1792 = vmatpush1.bf16.msra.mxu0 %v1022
    %1793 = vmatprep.subr.bf16.mxu0 0
    %1794 = vmatpush1.bf16.msra.mxu0 %v1023
    %1795 = vmatprep.subr.bf16.mxu0 0
    %1796 = vmatpush1.bf16.msra.mxu0 %v1024
    %1797 = vmatprep.subr.bf16.mxu0 0
    %1798 = vmatpush1.bf16.msra.mxu0 %v1025
    %1799 = vmatprep.subr.bf16.mxu0 0
    %1800 = vmatpush1.bf16.msra.mxu0 %v1026
    %1801 = vmatprep.subr.bf16.mxu0 0
    %1802 = vmatpush1.bf16.msra.mxu0 %v1027
    %1803 = vmatprep.subr.bf16.mxu0 0
    %1804 = vmatpush1.bf16.msra.mxu0 %v1028
    %1805 = vmatprep.subr.bf16.mxu0 0
    %1806 = vmatpush1.bf16.msra.mxu0 %v1029
    %1807 = vmatprep.subr.bf16.mxu0 0
    %1808 = vmatpush1.bf16.msra.mxu0 %v1030
    %1809 = vmatprep.subr.bf16.mxu0 0
    %1810 = vmatpush1.bf16.msra.mxu0 %v1031
    %1811 = vmatprep.subr.bf16.mxu0 0
    %1812 = vmatpush1.bf16.msra.mxu0 %v1032
    %1813 = vmatprep.subr.bf16.mxu0 0
    %1814 = vmatpush1.bf16.msra.mxu0 %v1033
    %1815 = vmatprep.subr.bf16.mxu0 0
    %1816 = vmatpush1.bf16.msra.mxu0 %v1034
    %1817 = vmatprep.subr.bf16.mxu0 0
    %1818 = vmatpush1.bf16.msra.mxu0 %v1035
    %1819 = vmatprep.mubr.bf16.mxu0 %v1566
    %1820 = vmatmul.mubr.bf16.gmra.mrb[0].mxu0 %v1565
    %v1821 = vpop.f32.mrb[0].mxu0
    %v1822 = vadd.f32 %v1782, %v1821
    %v1823 = vpop.f32.mrb[0].mxu0
    %v1824 = vpop.f32.mrb[0].mxu0
    %v1825 = vpop.f32.mrb[0].mxu0
    %1826 = vdwg.mxu0
    %1827 = vmatprep.subr.bf16.mxu0 0
    %1828 = vmatpush1.bf16.msra.mxu0 %v1036
    %1829 = vmatprep.subr.bf16.mxu0 0
    %1830 = vmatpush1.bf16.msra.mxu0 %v1037
    %1831 = vmatprep.subr.bf16.mxu0 0
    %1832 = vmatpush1.bf16.msra.mxu0 %v1038
    %1833 = vmatprep.subr.bf16.mxu0 0
    %1834 = vmatpush1.bf16.msra.mxu0 %v1039
    %1835 = vmatprep.subr.bf16.mxu0 0
    %1836 = vmatpush1.bf16.msra.mxu0 %v1040
    %1837 = vmatprep.subr.bf16.mxu0 0
    %1838 = vmatpush1.bf16.msra.mxu0 %v1041
    %1839 = vmatprep.subr.bf16.mxu0 0
    %1840 = vmatpush1.bf16.msra.mxu0 %v1042
    %1841 = vmatprep.subr.bf16.mxu0 0
    %1842 = vmatpush1.bf16.msra.mxu0 %v1043
    %1843 = vmatprep.subr.bf16.mxu0 0
    %1844 = vmatpush1.bf16.msra.mxu0 %v1044
    %1845 = vmatprep.subr.bf16.mxu0 0
    %1846 = vmatpush1.bf16.msra.mxu0 %v1045
    %1847 = vmatprep.subr.bf16.mxu0 0
    %1848 = vmatpush1.bf16.msra.mxu0 %v1046
    %1849 = vmatprep.subr.bf16.mxu0 0
    %1850 = vmatpush1.bf16.msra.mxu0 %v1047
    %1851 = vmatprep.subr.bf16.mxu0 0
    %1852 = vmatpush1.bf16.msra.mxu0 %v1048
    %1853 = vmatprep.subr.bf16.mxu0 0
    %1854 = vmatpush1.bf16.msra.mxu0 %v1049
    %1855 = vmatprep.subr.bf16.mxu0 0
    %1856 = vmatpush1.bf16.msra.mxu0 %v1050
    %1857 = vmatprep.subr.bf16.mxu0 0
    %1858 = vmatpush1.bf16.msra.mxu0 %v1051
    %1859 = vmatprep.mubr.bf16.mxu0 %v1568
    %1860 = vmatmul.mubr.bf16.gmra.mrb[0].mxu0 %v1567
    %v1861 = vpop.f32.mrb[0].mxu0
    %v1862 = vadd.f32 %v1822, %v1861
    %v1863 = vpop.f32.mrb[0].mxu0
    %v1864 = vpop.f32.mrb[0].mxu0
    %v1865 = vpop.f32.mrb[0].mxu0
    %1866 = vdwg.mxu0
    %1867 = vmatprep.subr.bf16.mxu0 0
    %1868 = vmatpush1.bf16.msra.mxu0 %v1052
    %1869 = vmatprep.subr.bf16.mxu0 0
    %1870 = vmatpush1.bf16.msra.mxu0 %v1053
    %1871 = vmatprep.subr.bf16.mxu0 0
    %1872 = vmatpush1.bf16.msra.mxu0 %v1054
    %1873 = vmatprep.subr.bf16.mxu0 0
    %1874 = vmatpush1.bf16.msra.mxu0 %v1055
    %1875 = vmatprep.subr.bf16.mxu0 0
    %1876 = vmatpush1.bf16.msra.mxu0 %v1056
    %1877 = vmatprep.subr.bf16.mxu0 0
    %1878 = vmatpush1.bf16.msra.mxu0 %v1057
    %1879 = vmatprep.subr.bf16.mxu0 0
    %1880 = vmatpush1.bf16.msra.mxu0 %v1058
    %1881 = vmatprep.subr.bf16.mxu0 0
    %1882 = vmatpush1.bf16.msra.mxu0 %v1059
    %1883 = vmatprep.subr.bf16.mxu0 0
    %1884 = vmatpush1.bf16.msra.mxu0 %v1060
    %1885 = vmatprep.subr.bf16.mxu0 0
    %1886 = vmatpush1.bf16.msra.mxu0 %v1061
    %1887 = vmatprep.subr.bf16.mxu0 0
    %1888 = vmatpush1.bf16.msra.mxu0 %v1062
    %1889 = vmatprep.subr.bf16.mxu0 0
    %1890 = vmatpush1.bf16.msra.mxu0 %v1063
    %1891 = vmatprep.subr.bf16.mxu0 0
    %1892 = vmatpush1.bf16.msra.mxu0 %v1064
    %1893 = vmatprep.subr.bf16.mxu0 0
    %1894 = vmatpush1.bf16.msra.mxu0 %v1065
    %1895 = vmatprep.subr.bf16.mxu0 0
    %1896 = vmatpush1.bf16.msra.mxu0 %v1066
    %1897 = vmatprep.subr.bf16.mxu0 0
    %1898 = vmatpush1.bf16.msra.mxu0 %v1067
    %1899 = vmatprep.mubr.bf16.mxu0 %v1570
    %1900 = vmatmul.mubr.bf16.gmra.mrb[0].mxu0 %v1569
    %v1901 = vpop.f32.mrb[0].mxu0
    %v1902 = vadd.f32 %v1862, %v1901
    %v1903 = vpop.f32.mrb[0].mxu0
    %v1904 = vpop.f32.mrb[0].mxu0
    %v1905 = vpop.f32.mrb[0].mxu0
    %1906 = vdwg.mxu0
    %v1907 = vmul.f32 %v1902, %v1902
    %v1908 = vsel %vm311, %v1907, 0.0
    %1909 = vadd.xlane.f32.xlu0 %v1908
    %v1910 = vpop.xlane.xlu0 %1909
    %v1911 = vmax.f32 %v1910, 1e-24
    %v1912 = vrsqrt.pop %v1911
    %v1913 = vmul.f32 %v1902, %v1912
    %v1914 = vld [vmem:[%s9] sm:$0xff]
    %v1915 = vld [vmem:[%s9 + $0x8] sm:$0xff]
    %v1916 = vld [vmem:[%s9 + $0x10] sm:$0xff]
    %v1917 = vld [vmem:[%s9 + $0x18] sm:$0xff]
    %v1918 = vld [vmem:[%s9 + $0x20] sm:$0xff]
    %v1919 = vld [vmem:[%s9 + $0x28] sm:$0xff]
    %v1920 = vld [vmem:[%s9 + $0x30] sm:$0xff]
    %v1921 = vld [vmem:[%s9 + $0x38] sm:$0xff]
    %v1930 = vunpack.c.l.b16 %v1914
    %v1931 = vunpack.c.h.b16 %v1914
    %v1932 = vunpack.c.l.b16 %v1915
    %v1933 = vunpack.c.h.b16 %v1915
    %v1934 = vunpack.c.l.b16 %v1916
    %v1935 = vunpack.c.h.b16 %v1916
    %v1936 = vunpack.c.l.b16 %v1917
    %v1937 = vunpack.c.h.b16 %v1917
    %v1938 = vunpack.c.l.b16 %v1918
    %v1939 = vunpack.c.h.b16 %v1918
    %v1940 = vunpack.c.l.b16 %v1919
    %v1941 = vunpack.c.h.b16 %v1919
    %v1942 = vunpack.c.l.b16 %v1920
    %v1943 = vunpack.c.h.b16 %v1920
    %v1944 = vunpack.c.l.b16 %v1921
    %v1945 = vunpack.c.h.b16 %v1921
    %v1946 = vpack.c.b16 %v1930, %v1930
    %v1947 = vpack.c.b16 %v1931, %v1931
    %v1948 = vpack.c.b16 %v1932, %v1932
    %v1949 = vpack.c.b16 %v1933, %v1933
    %v1950 = vpack.c.b16 %v1934, %v1934
    %v1951 = vpack.c.b16 %v1935, %v1935
    %v1952 = vpack.c.b16 %v1936, %v1936
    %v1953 = vpack.c.b16 %v1937, %v1937
    %v1954 = vpack.c.b16 %v1938, %v1938
    %v1955 = vpack.c.b16 %v1939, %v1939
    %v1956 = vpack.c.b16 %v1940, %v1940
    %v1957 = vpack.c.b16 %v1941, %v1941
    %v1958 = vpack.c.b16 %v1942, %v1942
    %v1959 = vpack.c.b16 %v1943, %v1943
    %v1960 = vpack.c.b16 %v1944, %v1944
    %v1961 = vpack.c.b16 %v1945, %v1945
    %1978 = vmatprep.subr.bf16.mxu0 0
    %1979 = vmatpush1.bf16.msra.mxu0 %v940
    %1980 = vmatprep.subr.bf16.mxu0 0
    %1981 = vmatpush1.bf16.msra.mxu0 %v941
    %1982 = vmatprep.subr.bf16.mxu0 0
    %1983 = vmatpush1.bf16.msra.mxu0 %v942
    %1984 = vmatprep.subr.bf16.mxu0 0
    %1985 = vmatpush1.bf16.msra.mxu0 %v943
    %1986 = vmatprep.subr.bf16.mxu0 0
    %1987 = vmatpush1.bf16.msra.mxu0 %v944
    %1988 = vmatprep.subr.bf16.mxu0 0
    %1989 = vmatpush1.bf16.msra.mxu0 %v945
    %1990 = vmatprep.subr.bf16.mxu0 0
    %1991 = vmatpush1.bf16.msra.mxu0 %v946
    %1992 = vmatprep.subr.bf16.mxu0 0
    %1993 = vmatpush1.bf16.msra.mxu0 %v947
    %1994 = vmatprep.subr.bf16.mxu0 0
    %1995 = vmatpush1.bf16.msra.mxu0 %v948
    %1996 = vmatprep.subr.bf16.mxu0 0
    %1997 = vmatpush1.bf16.msra.mxu0 %v949
    %1998 = vmatprep.subr.bf16.mxu0 0
    %1999 = vmatpush1.bf16.msra.mxu0 %v950
    %2000 = vmatprep.subr.bf16.mxu0 0
    %2001 = vmatpush1.bf16.msra.mxu0 %v951
    %2002 = vmatprep.subr.bf16.mxu0 0
    %2003 = vmatpush1.bf16.msra.mxu0 %v952
    %2004 = vmatprep.subr.bf16.mxu0 0
    %2005 = vmatpush1.bf16.msra.mxu0 %v953
    %2006 = vmatprep.subr.bf16.mxu0 0
    %2007 = vmatpush1.bf16.msra.mxu0 %v954
    %2008 = vmatprep.subr.bf16.mxu0 0
    %2009 = vmatpush1.bf16.msra.mxu0 %v955
    %2010 = vmatprep.mubr.bf16.mxu0 %v1947
    %2011 = vmatmul.mubr.bf16.gmra.mrb[0].mxu0 %v1946
    %v2012 = vpop.f32.mrb[0].mxu0
    %v2013 = vadd.f32 %v370, %v2012
    %v2014 = vpop.f32.mrb[0].mxu0
    %v2015 = vpop.f32.mrb[0].mxu0
    %v2016 = vpop.f32.mrb[0].mxu0
    %2017 = vdwg.mxu0
    %2018 = vmatprep.subr.bf16.mxu0 0
    %2019 = vmatpush1.bf16.msra.mxu0 %v956
    %2020 = vmatprep.subr.bf16.mxu0 0
    %2021 = vmatpush1.bf16.msra.mxu0 %v957
    %2022 = vmatprep.subr.bf16.mxu0 0
    %2023 = vmatpush1.bf16.msra.mxu0 %v958
    %2024 = vmatprep.subr.bf16.mxu0 0
    %2025 = vmatpush1.bf16.msra.mxu0 %v959
    %2026 = vmatprep.subr.bf16.mxu0 0
    %2027 = vmatpush1.bf16.msra.mxu0 %v960
    %2028 = vmatprep.subr.bf16.mxu0 0
    %2029 = vmatpush1.bf16.msra.mxu0 %v961
    %2030 = vmatprep.subr.bf16.mxu0 0
    %2031 = vmatpush1.bf16.msra.mxu0 %v962
    %2032 = vmatprep.subr.bf16.mxu0 0
    %2033 = vmatpush1.bf16.msra.mxu0 %v963
    %2034 = vmatprep.subr.bf16.mxu0 0
    %2035 = vmatpush1.bf16.msra.mxu0 %v964
    %2036 = vmatprep.subr.bf16.mxu0 0
    %2037 = vmatpush1.bf16.msra.mxu0 %v965
    %2038 = vmatprep.subr.bf16.mxu0 0
    %2039 = vmatpush1.bf16.msra.mxu0 %v966
    %2040 = vmatprep.subr.bf16.mxu0 0
    %2041 = vmatpush1.bf16.msra.mxu0 %v967
    %2042 = vmatprep.subr.bf16.mxu0 0
    %2043 = vmatpush1.bf16.msra.mxu0 %v968
    %2044 = vmatprep.subr.bf16.mxu0 0
    %2045 = vmatpush1.bf16.msra.mxu0 %v969
    %2046 = vmatprep.subr.bf16.mxu0 0
    %2047 = vmatpush1.bf16.msra.mxu0 %v970
    %2048 = vmatprep.subr.bf16.mxu0 0
    %2049 = vmatpush1.bf16.msra.mxu0 %v971
    %2050 = vmatprep.mubr.bf16.mxu0 %v1949
    %2051 = vmatmul.mubr.bf16.gmra.mrb[0].mxu0 %v1948
    %v2052 = vpop.f32.mrb[0].mxu0
    %v2053 = vadd.f32 %v2013, %v2052
    %v2054 = vpop.f32.mrb[0].mxu0
    %v2055 = vpop.f32.mrb[0].mxu0
    %v2056 = vpop.f32.mrb[0].mxu0
    %2057 = vdwg.mxu0
    %2058 = vmatprep.subr.bf16.mxu0 0
    %2059 = vmatpush1.bf16.msra.mxu0 %v972
    %2060 = vmatprep.subr.bf16.mxu0 0
    %2061 = vmatpush1.bf16.msra.mxu0 %v973
    %2062 = vmatprep.subr.bf16.mxu0 0
    %2063 = vmatpush1.bf16.msra.mxu0 %v974
    %2064 = vmatprep.subr.bf16.mxu0 0
    %2065 = vmatpush1.bf16.msra.mxu0 %v975
    %2066 = vmatprep.subr.bf16.mxu0 0
    %2067 = vmatpush1.bf16.msra.mxu0 %v976
    %2068 = vmatprep.subr.bf16.mxu0 0
    %2069 = vmatpush1.bf16.msra.mxu0 %v977
    %2070 = vmatprep.subr.bf16.mxu0 0
    %2071 = vmatpush1.bf16.msra.mxu0 %v978
    %2072 = vmatprep.subr.bf16.mxu0 0
    %2073 = vmatpush1.bf16.msra.mxu0 %v979
    %2074 = vmatprep.subr.bf16.mxu0 0
    %2075 = vmatpush1.bf16.msra.mxu0 %v980
    %2076 = vmatprep.subr.bf16.mxu0 0
    %2077 = vmatpush1.bf16.msra.mxu0 %v981
    %2078 = vmatprep.subr.bf16.mxu0 0
    %2079 = vmatpush1.bf16.msra.mxu0 %v982
    %2080 = vmatprep.subr.bf16.mxu0 0
    %2081 = vmatpush1.bf16.msra.mxu0 %v983
    %2082 = vmatprep.subr.bf16.mxu0 0
    %2083 = vmatpush1.bf16.msra.mxu0 %v984
    %2084 = vmatprep.subr.bf16.mxu0 0
    %2085 = vmatpush1.bf16.msra.mxu0 %v985
    %2086 = vmatprep.subr.bf16.mxu0 0
    %2087 = vmatpush1.bf16.msra.mxu0 %v986
    %2088 = vmatprep.subr.bf16.mxu0 0
    %2089 = vmatpush1.bf16.msra.mxu0 %v987
    %2090 = vmatprep.mubr.bf16.mxu0 %v1951
    %2091 = vmatmul.mubr.bf16.gmra.mrb[0].mxu0 %v1950
    %v2092 = vpop.f32.mrb[0].mxu0
    %v2093 = vadd.f32 %v2053, %v2092
    %v2094 = vpop.f32.mrb[0].mxu0
    %v2095 = vpop.f32.mrb[0].mxu0
    %v2096 = vpop.f32.mrb[0].mxu0
    %2097 = vdwg.mxu0
    %2098 = vmatprep.subr.bf16.mxu0 0
    %2099 = vmatpush1.bf16.msra.mxu0 %v988
    %2100 = vmatprep.subr.bf16.mxu0 0
    %2101 = vmatpush1.bf16.msra.mxu0 %v989
    %2102 = vmatprep.subr.bf16.mxu0 0
    %2103 = vmatpush1.bf16.msra.mxu0 %v990
    %2104 = vmatprep.subr.bf16.mxu0 0
    %2105 = vmatpush1.bf16.msra.mxu0 %v991
    %2106 = vmatprep.subr.bf16.mxu0 0
    %2107 = vmatpush1.bf16.msra.mxu0 %v992
    %2108 = vmatprep.subr.bf16.mxu0 0
    %2109 = vmatpush1.bf16.msra.mxu0 %v993
    %2110 = vmatprep.subr.bf16.mxu0 0
    %2111 = vmatpush1.bf16.msra.mxu0 %v994
    %2112 = vmatprep.subr.bf16.mxu0 0
    %2113 = vmatpush1.bf16.msra.mxu0 %v995
    %2114 = vmatprep.subr.bf16.mxu0 0
    %2115 = vmatpush1.bf16.msra.mxu0 %v996
    %2116 = vmatprep.subr.bf16.mxu0 0
    %2117 = vmatpush1.bf16.msra.mxu0 %v997
    %2118 = vmatprep.subr.bf16.mxu0 0
    %2119 = vmatpush1.bf16.msra.mxu0 %v998
    %2120 = vmatprep.subr.bf16.mxu0 0
    %2121 = vmatpush1.bf16.msra.mxu0 %v999
    %2122 = vmatprep.subr.bf16.mxu0 0
    %2123 = vmatpush1.bf16.msra.mxu0 %v1000
    %2124 = vmatprep.subr.bf16.mxu0 0
    %2125 = vmatpush1.bf16.msra.mxu0 %v1001
    %2126 = vmatprep.subr.bf16.mxu0 0
    %2127 = vmatpush1.bf16.msra.mxu0 %v1002
    %2128 = vmatprep.subr.bf16.mxu0 0
    %2129 = vmatpush1.bf16.msra.mxu0 %v1003
    %2130 = vmatprep.mubr.bf16.mxu0 %v1953
    %2131 = vmatmul.mubr.bf16.gmra.mrb[0].mxu0 %v1952
    %v2132 = vpop.f32.mrb[0].mxu0
    %v2133 = vadd.f32 %v2093, %v2132
    %v2134 = vpop.f32.mrb[0].mxu0
    %v2135 = vpop.f32.mrb[0].mxu0
    %v2136 = vpop.f32.mrb[0].mxu0
    %2137 = vdwg.mxu0
    %2138 = vmatprep.subr.bf16.mxu0 0
    %2139 = vmatpush1.bf16.msra.mxu0 %v1004
    %2140 = vmatprep.subr.bf16.mxu0 0
    %2141 = vmatpush1.bf16.msra.mxu0 %v1005
    %2142 = vmatprep.subr.bf16.mxu0 0
    %2143 = vmatpush1.bf16.msra.mxu0 %v1006
    %2144 = vmatprep.subr.bf16.mxu0 0
    %2145 = vmatpush1.bf16.msra.mxu0 %v1007
    %2146 = vmatprep.subr.bf16.mxu0 0
    %2147 = vmatpush1.bf16.msra.mxu0 %v1008
    %2148 = vmatprep.subr.bf16.mxu0 0
    %2149 = vmatpush1.bf16.msra.mxu0 %v1009
    %2150 = vmatprep.subr.bf16.mxu0 0
    %2151 = vmatpush1.bf16.msra.mxu0 %v1010
    %2152 = vmatprep.subr.bf16.mxu0 0
    %2153 = vmatpush1.bf16.msra.mxu0 %v1011
    %2154 = vmatprep.subr.bf16.mxu0 0
    %2155 = vmatpush1.bf16.msra.mxu0 %v1012
    %2156 = vmatprep.subr.bf16.mxu0 0
    %2157 = vmatpush1.bf16.msra.mxu0 %v1013
    %2158 = vmatprep.subr.bf16.mxu0 0
    %2159 = vmatpush1.bf16.msra.mxu0 %v1014
    %2160 = vmatprep.subr.bf16.mxu0 0
    %2161 = vmatpush1.bf16.msra.mxu0 %v1015
    %2162 = vmatprep.subr.bf16.mxu0 0
    %2163 = vmatpush1.bf16.msra.mxu0 %v1016
    %2164 = vmatprep.subr.bf16.mxu0 0
    %2165 = vmatpush1.bf16.msra.mxu0 %v1017
    %2166 = vmatprep.subr.bf16.mxu0 0
    %2167 = vmatpush1.bf16.msra.mxu0 %v1018
    %2168 = vmatprep.subr.bf16.mxu0 0
    %2169 = vmatpush1.bf16.msra.mxu0 %v1019
    %2170 = vmatprep.mubr.bf16.mxu0 %v1955
    %2171 = vmatmul.mubr.bf16.gmra.mrb[0].mxu0 %v1954
    %v2172 = vpop.f32.mrb[0].mxu0
    %v2173 = vadd.f32 %v2133, %v2172
    %v2174 = vpop.f32.mrb[0].mxu0
    %v2175 = vpop.f32.mrb[0].mxu0
    %v2176 = vpop.f32.mrb[0].mxu0
    %2177 = vdwg.mxu0
    %2178 = vmatprep.subr.bf16.mxu0 0
    %2179 = vmatpush1.bf16.msra.mxu0 %v1020
    %2180 = vmatprep.subr.bf16.mxu0 0
    %2181 = vmatpush1.bf16.msra.mxu0 %v1021
    %2182 = vmatprep.subr.bf16.mxu0 0
    %2183 = vmatpush1.bf16.msra.mxu0 %v1022
    %2184 = vmatprep.subr.bf16.mxu0 0
    %2185 = vmatpush1.bf16.msra.mxu0 %v1023
    %2186 = vmatprep.subr.bf16.mxu0 0
    %2187 = vmatpush1.bf16.msra.mxu0 %v1024
    %2188 = vmatprep.subr.bf16.mxu0 0
    %2189 = vmatpush1.bf16.msra.mxu0 %v1025
    %2190 = vmatprep.subr.bf16.mxu0 0
    %2191 = vmatpush1.bf16.msra.mxu0 %v1026
    %2192 = vmatprep.subr.bf16.mxu0 0
    %2193 = vmatpush1.bf16.msra.mxu0 %v1027
    %2194 = vmatprep.subr.bf16.mxu0 0
    %2195 = vmatpush1.bf16.msra.mxu0 %v1028
    %2196 = vmatprep.subr.bf16.mxu0 0
    %2197 = vmatpush1.bf16.msra.mxu0 %v1029
    %2198 = vmatprep.subr.bf16.mxu0 0
    %2199 = vmatpush1.bf16.msra.mxu0 %v1030
    %2200 = vmatprep.subr.bf16.mxu0 0
    %2201 = vmatpush1.bf16.msra.mxu0 %v1031
    %2202 = vmatprep.subr.bf16.mxu0 0
    %2203 = vmatpush1.bf16.msra.mxu0 %v1032
    %2204 = vmatprep.subr.bf16.mxu0 0
    %2205 = vmatpush1.bf16.msra.mxu0 %v1033
    %2206 = vmatprep.subr.bf16.mxu0 0
    %2207 = vmatpush1.bf16.msra.mxu0 %v1034
    %2208 = vmatprep.subr.bf16.mxu0 0
    %2209 = vmatpush1.bf16.msra.mxu0 %v1035
    %2210 = vmatprep.mubr.bf16.mxu0 %v1957
    %2211 = vmatmul.mubr.bf16.gmra.mrb[0].mxu0 %v1956
    %v2212 = vpop.f32.mrb[0].mxu0
    %v2213 = vadd.f32 %v2173, %v2212
    %v2214 = vpop.f32.mrb[0].mxu0
    %v2215 = vpop.f32.mrb[0].mxu0
    %v2216 = vpop.f32.mrb[0].mxu0
    %2217 = vdwg.mxu0
    %2218 = vmatprep.subr.bf16.mxu0 0
    %2219 = vmatpush1.bf16.msra.mxu0 %v1036
    %2220 = vmatprep.subr.bf16.mxu0 0
    %2221 = vmatpush1.bf16.msra.mxu0 %v1037
    %2222 = vmatprep.subr.bf16.mxu0 0
    %2223 = vmatpush1.bf16.msra.mxu0 %v1038
    %2224 = vmatprep.subr.bf16.mxu0 0
    %2225 = vmatpush1.bf16.msra.mxu0 %v1039
    %2226 = vmatprep.subr.bf16.mxu0 0
    %2227 = vmatpush1.bf16.msra.mxu0 %v1040
    %2228 = vmatprep.subr.bf16.mxu0 0
    %2229 = vmatpush1.bf16.msra.mxu0 %v1041
    %2230 = vmatprep.subr.bf16.mxu0 0
    %2231 = vmatpush1.bf16.msra.mxu0 %v1042
    %2232 = vmatprep.subr.bf16.mxu0 0
    %2233 = vmatpush1.bf16.msra.mxu0 %v1043
    %2234 = vmatprep.subr.bf16.mxu0 0
    %2235 = vmatpush1.bf16.msra.mxu0 %v1044
    %2236 = vmatprep.subr.bf16.mxu0 0
    %2237 = vmatpush1.bf16.msra.mxu0 %v1045
    %2238 = vmatprep.subr.bf16.mxu0 0
    %2239 = vmatpush1.bf16.msra.mxu0 %v1046
    %2240 = vmatprep.subr.bf16.mxu0 0
    %2241 = vmatpush1.bf16.msra.mxu0 %v1047
    %2242 = vmatprep.subr.bf16.mxu0 0
    %2243 = vmatpush1.bf16.msra.mxu0 %v1048
    %2244 = vmatprep.subr.bf16.mxu0 0
    %2245 = vmatpush1.bf16.msra.mxu0 %v1049
    %2246 = vmatprep.subr.bf16.mxu0 0
    %2247 = vmatpush1.bf16.msra.mxu0 %v1050
    %2248 = vmatprep.subr.bf16.mxu0 0
    %2249 = vmatpush1.bf16.msra.mxu0 %v1051
    %2250 = vmatprep.mubr.bf16.mxu0 %v1959
    %2251 = vmatmul.mubr.bf16.gmra.mrb[0].mxu0 %v1958
    %v2252 = vpop.f32.mrb[0].mxu0
    %v2253 = vadd.f32 %v2213, %v2252
    %v2254 = vpop.f32.mrb[0].mxu0
    %v2255 = vpop.f32.mrb[0].mxu0
    %v2256 = vpop.f32.mrb[0].mxu0
    %2257 = vdwg.mxu0
    %2258 = vmatprep.subr.bf16.mxu0 0
    %2259 = vmatpush1.bf16.msra.mxu0 %v1052
    %2260 = vmatprep.subr.bf16.mxu0 0
    %2261 = vmatpush1.bf16.msra.mxu0 %v1053
    %2262 = vmatprep.subr.bf16.mxu0 0
    %2263 = vmatpush1.bf16.msra.mxu0 %v1054
    %2264 = vmatprep.subr.bf16.mxu0 0
    %2265 = vmatpush1.bf16.msra.mxu0 %v1055
    %2266 = vmatprep.subr.bf16.mxu0 0
    %2267 = vmatpush1.bf16.msra.mxu0 %v1056
    %2268 = vmatprep.subr.bf16.mxu0 0
    %2269 = vmatpush1.bf16.msra.mxu0 %v1057
    %2270 = vmatprep.subr.bf16.mxu0 0
    %2271 = vmatpush1.bf16.msra.mxu0 %v1058
    %2272 = vmatprep.subr.bf16.mxu0 0
    %2273 = vmatpush1.bf16.msra.mxu0 %v1059
    %2274 = vmatprep.subr.bf16.mxu0 0
    %2275 = vmatpush1.bf16.msra.mxu0 %v1060
    %2276 = vmatprep.subr.bf16.mxu0 0
    %2277 = vmatpush1.bf16.msra.mxu0 %v1061
    %2278 = vmatprep.subr.bf16.mxu0 0
    %2279 = vmatpush1.bf16.msra.mxu0 %v1062
    %2280 = vmatprep.subr.bf16.mxu0 0
    %2281 = vmatpush1.bf16.msra.mxu0 %v1063
    %2282 = vmatprep.subr.bf16.mxu0 0
    %2283 = vmatpush1.bf16.msra.mxu0 %v1064
    %2284 = vmatprep.subr.bf16.mxu0 0
    %2285 = vmatpush1.bf16.msra.mxu0 %v1065
    %2286 = vmatprep.subr.bf16.mxu0 0
    %2287 = vmatpush1.bf16.msra.mxu0 %v1066
    %2288 = vmatprep.subr.bf16.mxu0 0
    %2289 = vmatpush1.bf16.msra.mxu0 %v1067
    %2290 = vmatprep.mubr.bf16.mxu0 %v1961
    %2291 = vmatmul.mubr.bf16.gmra.mrb[0].mxu0 %v1960
    %v2292 = vpop.f32.mrb[0].mxu0
    %v2293 = vadd.f32 %v2253, %v2292
    %v2294 = vpop.f32.mrb[0].mxu0
    %v2295 = vpop.f32.mrb[0].mxu0
    %v2296 = vpop.f32.mrb[0].mxu0
    %2297 = vdwg.mxu0
    %v2298 = vmul.f32 %v2293, %v2293
    %v2299 = vsel %vm311, %v2298, 0.0
    %2300 = vadd.xlane.f32.xlu0 %v2299
    %v2301 = vpop.xlane.xlu0 %2300
    %v2302 = vmax.f32 %v2301, 1e-24
    %v2303 = vrsqrt.pop %v2302
    %v2304 = vmul.f32 %v2293, %v2303
    %v2305 = vld [vmem:[%s10] sm:$0xff]
    %v2306 = vld [vmem:[%s10 + $0x8] sm:$0xff]
    %v2307 = vld [vmem:[%s10 + $0x10] sm:$0xff]
    %v2308 = vld [vmem:[%s10 + $0x18] sm:$0xff]
    %v2309 = vld [vmem:[%s10 + $0x20] sm:$0xff]
    %v2310 = vld [vmem:[%s10 + $0x28] sm:$0xff]
    %v2311 = vld [vmem:[%s10 + $0x30] sm:$0xff]
    %v2312 = vld [vmem:[%s10 + $0x38] sm:$0xff]
    %v2321 = vunpack.c.l.b16 %v2305
    %v2322 = vunpack.c.h.b16 %v2305
    %v2323 = vunpack.c.l.b16 %v2306
    %v2324 = vunpack.c.h.b16 %v2306
    %v2325 = vunpack.c.l.b16 %v2307
    %v2326 = vunpack.c.h.b16 %v2307
    %v2327 = vunpack.c.l.b16 %v2308
    %v2328 = vunpack.c.h.b16 %v2308
    %v2329 = vunpack.c.l.b16 %v2309
    %v2330 = vunpack.c.h.b16 %v2309
    %v2331 = vunpack.c.l.b16 %v2310
    %v2332 = vunpack.c.h.b16 %v2310
    %v2333 = vunpack.c.l.b16 %v2311
    %v2334 = vunpack.c.h.b16 %v2311
    %v2335 = vunpack.c.l.b16 %v2312
    %v2336 = vunpack.c.h.b16 %v2312
    %v2337 = vpack.c.b16 %v2321, %v2321
    %v2338 = vpack.c.b16 %v2322, %v2322
    %v2339 = vpack.c.b16 %v2323, %v2323
    %v2340 = vpack.c.b16 %v2324, %v2324
    %v2341 = vpack.c.b16 %v2325, %v2325
    %v2342 = vpack.c.b16 %v2326, %v2326
    %v2343 = vpack.c.b16 %v2327, %v2327
    %v2344 = vpack.c.b16 %v2328, %v2328
    %v2345 = vpack.c.b16 %v2329, %v2329
    %v2346 = vpack.c.b16 %v2330, %v2330
    %v2347 = vpack.c.b16 %v2331, %v2331
    %v2348 = vpack.c.b16 %v2332, %v2332
    %v2349 = vpack.c.b16 %v2333, %v2333
    %v2350 = vpack.c.b16 %v2334, %v2334
    %v2351 = vpack.c.b16 %v2335, %v2335
    %v2352 = vpack.c.b16 %v2336, %v2336
    %2369 = vmatprep.subr.bf16.mxu0 0
    %2370 = vmatpush1.bf16.msra.mxu0 %v940
    %2371 = vmatprep.subr.bf16.mxu0 0
    %2372 = vmatpush1.bf16.msra.mxu0 %v941
    %2373 = vmatprep.subr.bf16.mxu0 0
    %2374 = vmatpush1.bf16.msra.mxu0 %v942
    %2375 = vmatprep.subr.bf16.mxu0 0
    %2376 = vmatpush1.bf16.msra.mxu0 %v943
    %2377 = vmatprep.subr.bf16.mxu0 0
    %2378 = vmatpush1.bf16.msra.mxu0 %v944
    %2379 = vmatprep.subr.bf16.mxu0 0
    %2380 = vmatpush1.bf16.msra.mxu0 %v945
    %2381 = vmatprep.subr.bf16.mxu0 0
    %2382 = vmatpush1.bf16.msra.mxu0 %v946
    %2383 = vmatprep.subr.bf16.mxu0 0
    %2384 = vmatpush1.bf16.msra.mxu0 %v947
    %2385 = vmatprep.subr.bf16.mxu0 0
    %2386 = vmatpush1.bf16.msra.mxu0 %v948
    %2387 = vmatprep.subr.bf16.mxu0 0
    %2388 = vmatpush1.bf16.msra.mxu0 %v949
    %2389 = vmatprep.subr.bf16.mxu0 0
    %2390 = vmatpush1.bf16.msra.mxu0 %v950
    %2391 = vmatprep.subr.bf16.mxu0 0
    %2392 = vmatpush1.bf16.msra.mxu0 %v951
    %2393 = vmatprep.subr.bf16.mxu0 0
    %2394 = vmatpush1.bf16.msra.mxu0 %v952
    %2395 = vmatprep.subr.bf16.mxu0 0
    %2396 = vmatpush1.bf16.msra.mxu0 %v953
    %2397 = vmatprep.subr.bf16.mxu0 0
    %2398 = vmatpush1.bf16.msra.mxu0 %v954
    %2399 = vmatprep.subr.bf16.mxu0 0
    %2400 = vmatpush1.bf16.msra.mxu0 %v955
    %2401 = vmatprep.mubr.bf16.mxu0 %v2338
    %2402 = vmatmul.mubr.bf16.gmra.mrb[0].mxu0 %v2337
    %v2403 = vpop.f32.mrb[0].mxu0
    %v2404 = vadd.f32 %v370, %v2403
    %v2405 = vpop.f32.mrb[0].mxu0
    %v2406 = vpop.f32.mrb[0].mxu0
    %v2407 = vpop.f32.mrb[0].mxu0
    %2408 = vdwg.mxu0
    %2409 = vmatprep.subr.bf16.mxu0 0
    %2410 = vmatpush1.bf16.msra.mxu0 %v956
    %2411 = vmatprep.subr.bf16.mxu0 0
    %2412 = vmatpush1.bf16.msra.mxu0 %v957
    %2413 = vmatprep.subr.bf16.mxu0 0
    %2414 = vmatpush1.bf16.msra.mxu0 %v958
    %2415 = vmatprep.subr.bf16.mxu0 0
    %2416 = vmatpush1.bf16.msra.mxu0 %v959
    %2417 = vmatprep.subr.bf16.mxu0 0
    %2418 = vmatpush1.bf16.msra.mxu0 %v960
    %2419 = vmatprep.subr.bf16.mxu0 0
    %2420 = vmatpush1.bf16.msra.mxu0 %v961
    %2421 = vmatprep.subr.bf16.mxu0 0
    %2422 = vmatpush1.bf16.msra.mxu0 %v962
    %2423 = vmatprep.subr.bf16.mxu0 0
    %2424 = vmatpush1.bf16.msra.mxu0 %v963
    %2425 = vmatprep.subr.bf16.mxu0 0
    %2426 = vmatpush1.bf16.msra.mxu0 %v964
    %2427 = vmatprep.subr.bf16.mxu0 0
    %2428 = vmatpush1.bf16.msra.mxu0 %v965
    %2429 = vmatprep.subr.bf16.mxu0 0
    %2430 = vmatpush1.bf16.msra.mxu0 %v966
    %2431 = vmatprep.subr.bf16.mxu0 0
    %2432 = vmatpush1.bf16.msra.mxu0 %v967
    %2433 = vmatprep.subr.bf16.mxu0 0
    %2434 = vmatpush1.bf16.msra.mxu0 %v968
    %2435 = vmatprep.subr.bf16.mxu0 0
    %2436 = vmatpush1.bf16.msra.mxu0 %v969
    %2437 = vmatprep.subr.bf16.mxu0 0
    %2438 = vmatpush1.bf16.msra.mxu0 %v970
    %2439 = vmatprep.subr.bf16.mxu0 0
    %2440 = vmatpush1.bf16.msra.mxu0 %v971
    %2441 = vmatprep.mubr.bf16.mxu0 %v2340
    %2442 = vmatmul.mubr.bf16.gmra.mrb[0].mxu0 %v2339
    %v2443 = vpop.f32.mrb[0].mxu0
    %v2444 = vadd.f32 %v2404, %v2443
    %v2445 = vpop.f32.mrb[0].mxu0
    %v2446 = vpop.f32.mrb[0].mxu0
    %v2447 = vpop.f32.mrb[0].mxu0
    %2448 = vdwg.mxu0
    %2449 = vmatprep.subr.bf16.mxu0 0
    %2450 = vmatpush1.bf16.msra.mxu0 %v972
    %2451 = vmatprep.subr.bf16.mxu0 0
    %2452 = vmatpush1.bf16.msra.mxu0 %v973
    %2453 = vmatprep.subr.bf16.mxu0 0
    %2454 = vmatpush1.bf16.msra.mxu0 %v974
    %2455 = vmatprep.subr.bf16.mxu0 0
    %2456 = vmatpush1.bf16.msra.mxu0 %v975
    %2457 = vmatprep.subr.bf16.mxu0 0
    %2458 = vmatpush1.bf16.msra.mxu0 %v976
    %2459 = vmatprep.subr.bf16.mxu0 0
    %2460 = vmatpush1.bf16.msra.mxu0 %v977
    %2461 = vmatprep.subr.bf16.mxu0 0
    %2462 = vmatpush1.bf16.msra.mxu0 %v978
    %2463 = vmatprep.subr.bf16.mxu0 0
    %2464 = vmatpush1.bf16.msra.mxu0 %v979
    %2465 = vmatprep.subr.bf16.mxu0 0
    %2466 = vmatpush1.bf16.msra.mxu0 %v980
    %2467 = vmatprep.subr.bf16.mxu0 0
    %2468 = vmatpush1.bf16.msra.mxu0 %v981
    %2469 = vmatprep.subr.bf16.mxu0 0
    %2470 = vmatpush1.bf16.msra.mxu0 %v982
    %2471 = vmatprep.subr.bf16.mxu0 0
    %2472 = vmatpush1.bf16.msra.mxu0 %v983
    %2473 = vmatprep.subr.bf16.mxu0 0
    %2474 = vmatpush1.bf16.msra.mxu0 %v984
    %2475 = vmatprep.subr.bf16.mxu0 0
    %2476 = vmatpush1.bf16.msra.mxu0 %v985
    %2477 = vmatprep.subr.bf16.mxu0 0
    %2478 = vmatpush1.bf16.msra.mxu0 %v986
    %2479 = vmatprep.subr.bf16.mxu0 0
    %2480 = vmatpush1.bf16.msra.mxu0 %v987
    %2481 = vmatprep.mubr.bf16.mxu0 %v2342
    %2482 = vmatmul.mubr.bf16.gmra.mrb[0].mxu0 %v2341
    %v2483 = vpop.f32.mrb[0].mxu0
    %v2484 = vadd.f32 %v2444, %v2483
    %v2485 = vpop.f32.mrb[0].mxu0
    %v2486 = vpop.f32.mrb[0].mxu0
    %v2487 = vpop.f32.mrb[0].mxu0
    %2488 = vdwg.mxu0
    %2489 = vmatprep.subr.bf16.mxu0 0
    %2490 = vmatpush1.bf16.msra.mxu0 %v988
    %2491 = vmatprep.subr.bf16.mxu0 0
    %2492 = vmatpush1.bf16.msra.mxu0 %v989
    %2493 = vmatprep.subr.bf16.mxu0 0
    %2494 = vmatpush1.bf16.msra.mxu0 %v990
    %2495 = vmatprep.subr.bf16.mxu0 0
    %2496 = vmatpush1.bf16.msra.mxu0 %v991
    %2497 = vmatprep.subr.bf16.mxu0 0
    %2498 = vmatpush1.bf16.msra.mxu0 %v992
    %2499 = vmatprep.subr.bf16.mxu0 0
    %2500 = vmatpush1.bf16.msra.mxu0 %v993
    %2501 = vmatprep.subr.bf16.mxu0 0
    %2502 = vmatpush1.bf16.msra.mxu0 %v994
    %2503 = vmatprep.subr.bf16.mxu0 0
    %2504 = vmatpush1.bf16.msra.mxu0 %v995
    %2505 = vmatprep.subr.bf16.mxu0 0
    %2506 = vmatpush1.bf16.msra.mxu0 %v996
    %2507 = vmatprep.subr.bf16.mxu0 0
    %2508 = vmatpush1.bf16.msra.mxu0 %v997
    %2509 = vmatprep.subr.bf16.mxu0 0
    %2510 = vmatpush1.bf16.msra.mxu0 %v998
    %2511 = vmatprep.subr.bf16.mxu0 0
    %2512 = vmatpush1.bf16.msra.mxu0 %v999
    %2513 = vmatprep.subr.bf16.mxu0 0
    %2514 = vmatpush1.bf16.msra.mxu0 %v1000
    %2515 = vmatprep.subr.bf16.mxu0 0
    %2516 = vmatpush1.bf16.msra.mxu0 %v1001
    %2517 = vmatprep.subr.bf16.mxu0 0
    %2518 = vmatpush1.bf16.msra.mxu0 %v1002
    %2519 = vmatprep.subr.bf16.mxu0 0
    %2520 = vmatpush1.bf16.msra.mxu0 %v1003
    %2521 = vmatprep.mubr.bf16.mxu0 %v2344
    %2522 = vmatmul.mubr.bf16.gmra.mrb[0].mxu0 %v2343
    %v2523 = vpop.f32.mrb[0].mxu0
    %v2524 = vadd.f32 %v2484, %v2523
    %v2525 = vpop.f32.mrb[0].mxu0
    %v2526 = vpop.f32.mrb[0].mxu0
    %v2527 = vpop.f32.mrb[0].mxu0
    %2528 = vdwg.mxu0
    %2529 = vmatprep.subr.bf16.mxu0 0
    %2530 = vmatpush1.bf16.msra.mxu0 %v1004
    %2531 = vmatprep.subr.bf16.mxu0 0
    %2532 = vmatpush1.bf16.msra.mxu0 %v1005
    %2533 = vmatprep.subr.bf16.mxu0 0
    %2534 = vmatpush1.bf16.msra.mxu0 %v1006
    %2535 = vmatprep.subr.bf16.mxu0 0
    %2536 = vmatpush1.bf16.msra.mxu0 %v1007
    %2537 = vmatprep.subr.bf16.mxu0 0
    %2538 = vmatpush1.bf16.msra.mxu0 %v1008
    %2539 = vmatprep.subr.bf16.mxu0 0
    %2540 = vmatpush1.bf16.msra.mxu0 %v1009
    %2541 = vmatprep.subr.bf16.mxu0 0
    %2542 = vmatpush1.bf16.msra.mxu0 %v1010
    %2543 = vmatprep.subr.bf16.mxu0 0
    %2544 = vmatpush1.bf16.msra.mxu0 %v1011
    %2545 = vmatprep.subr.bf16.mxu0 0
    %2546 = vmatpush1.bf16.msra.mxu0 %v1012
    %2547 = vmatprep.subr.bf16.mxu0 0
    %2548 = vmatpush1.bf16.msra.mxu0 %v1013
    %2549 = vmatprep.subr.bf16.mxu0 0
    %2550 = vmatpush1.bf16.msra.mxu0 %v1014
    %2551 = vmatprep.subr.bf16.mxu0 0
    %2552 = vmatpush1.bf16.msra.mxu0 %v1015
    %2553 = vmatprep.subr.bf16.mxu0 0
    %2554 = vmatpush1.bf16.msra.mxu0 %v1016
    %2555 = vmatprep.subr.bf16.mxu0 0
    %2556 = vmatpush1.bf16.msra.mxu0 %v1017
    %2557 = vmatprep.subr.bf16.mxu0 0
    %2558 = vmatpush1.bf16.msra.mxu0 %v1018
    %2559 = vmatprep.subr.bf16.mxu0 0
    %2560 = vmatpush1.bf16.msra.mxu0 %v1019
    %2561 = vmatprep.mubr.bf16.mxu0 %v2346
    %2562 = vmatmul.mubr.bf16.gmra.mrb[0].mxu0 %v2345
    %v2563 = vpop.f32.mrb[0].mxu0
    %v2564 = vadd.f32 %v2524, %v2563
    %v2565 = vpop.f32.mrb[0].mxu0
    %v2566 = vpop.f32.mrb[0].mxu0
    %v2567 = vpop.f32.mrb[0].mxu0
    %2568 = vdwg.mxu0
    %2569 = vmatprep.subr.bf16.mxu0 0
    %2570 = vmatpush1.bf16.msra.mxu0 %v1020
    %2571 = vmatprep.subr.bf16.mxu0 0
    %2572 = vmatpush1.bf16.msra.mxu0 %v1021
    %2573 = vmatprep.subr.bf16.mxu0 0
    %2574 = vmatpush1.bf16.msra.mxu0 %v1022
    %2575 = vmatprep.subr.bf16.mxu0 0
    %2576 = vmatpush1.bf16.msra.mxu0 %v1023
    %2577 = vmatprep.subr.bf16.mxu0 0
    %2578 = vmatpush1.bf16.msra.mxu0 %v1024
    %2579 = vmatprep.subr.bf16.mxu0 0
    %2580 = vmatpush1.bf16.msra.mxu0 %v1025
    %2581 = vmatprep.subr.bf16.mxu0 0
    %2582 = vmatpush1.bf16.msra.mxu0 %v1026
    %2583 = vmatprep.subr.bf16.mxu0 0
    %2584 = vmatpush1.bf16.msra.mxu0 %v1027
    %2585 = vmatprep.subr.bf16.mxu0 0
    %2586 = vmatpush1.bf16.msra.mxu0 %v1028
    %2587 = vmatprep.subr.bf16.mxu0 0
    %2588 = vmatpush1.bf16.msra.mxu0 %v1029
    %2589 = vmatprep.subr.bf16.mxu0 0
    %2590 = vmatpush1.bf16.msra.mxu0 %v1030
    %2591 = vmatprep.subr.bf16.mxu0 0
    %2592 = vmatpush1.bf16.msra.mxu0 %v1031
    %2593 = vmatprep.subr.bf16.mxu0 0
    %2594 = vmatpush1.bf16.msra.mxu0 %v1032
    %2595 = vmatprep.subr.bf16.mxu0 0
    %2596 = vmatpush1.bf16.msra.mxu0 %v1033
    %2597 = vmatprep.subr.bf16.mxu0 0
    %2598 = vmatpush1.bf16.msra.mxu0 %v1034
    %2599 = vmatprep.subr.bf16.mxu0 0
    %2600 = vmatpush1.bf16.msra.mxu0 %v1035
    %2601 = vmatprep.mubr.bf16.mxu0 %v2348
    %2602 = vmatmul.mubr.bf16.gmra.mrb[0].mxu0 %v2347
    %v2603 = vpop.f32.mrb[0].mxu0
    %v2604 = vadd.f32 %v2564, %v2603
    %v2605 = vpop.f32.mrb[0].mxu0
    %v2606 = vpop.f32.mrb[0].mxu0
    %v2607 = vpop.f32.mrb[0].mxu0
    %2608 = vdwg.mxu0
    %2609 = vmatprep.subr.bf16.mxu0 0
    %2610 = vmatpush1.bf16.msra.mxu0 %v1036
    %2611 = vmatprep.subr.bf16.mxu0 0
    %2612 = vmatpush1.bf16.msra.mxu0 %v1037
    %2613 = vmatprep.subr.bf16.mxu0 0
    %2614 = vmatpush1.bf16.msra.mxu0 %v1038
    %2615 = vmatprep.subr.bf16.mxu0 0
    %2616 = vmatpush1.bf16.msra.mxu0 %v1039
    %2617 = vmatprep.subr.bf16.mxu0 0
    %2618 = vmatpush1.bf16.msra.mxu0 %v1040
    %2619 = vmatprep.subr.bf16.mxu0 0
    %2620 = vmatpush1.bf16.msra.mxu0 %v1041
    %2621 = vmatprep.subr.bf16.mxu0 0
    %2622 = vmatpush1.bf16.msra.mxu0 %v1042
    %2623 = vmatprep.subr.bf16.mxu0 0
    %2624 = vmatpush1.bf16.msra.mxu0 %v1043
    %2625 = vmatprep.subr.bf16.mxu0 0
    %2626 = vmatpush1.bf16.msra.mxu0 %v1044
    %2627 = vmatprep.subr.bf16.mxu0 0
    %2628 = vmatpush1.bf16.msra.mxu0 %v1045
    %2629 = vmatprep.subr.bf16.mxu0 0
    %2630 = vmatpush1.bf16.msra.mxu0 %v1046
    %2631 = vmatprep.subr.bf16.mxu0 0
    %2632 = vmatpush1.bf16.msra.mxu0 %v1047
    %2633 = vmatprep.subr.bf16.mxu0 0
    %2634 = vmatpush1.bf16.msra.mxu0 %v1048
    %2635 = vmatprep.subr.bf16.mxu0 0
    %2636 = vmatpush1.bf16.msra.mxu0 %v1049
    %2637 = vmatprep.subr.bf16.mxu0 0
    %2638 = vmatpush1.bf16.msra.mxu0 %v1050
    %2639 = vmatprep.subr.bf16.mxu0 0
    %2640 = vmatpush1.bf16.msra.mxu0 %v1051
    %2641 = vmatprep.mubr.bf16.mxu0 %v2350
    %2642 = vmatmul.mubr.bf16.gmra.mrb[0].mxu0 %v2349
    %v2643 = vpop.f32.mrb[0].mxu0
    %v2644 = vadd.f32 %v2604, %v2643
    %v2645 = vpop.f32.mrb[0].mxu0
    %v2646 = vpop.f32.mrb[0].mxu0
    %v2647 = vpop.f32.mrb[0].mxu0
    %2648 = vdwg.mxu0
    %2649 = vmatprep.subr.bf16.mxu0 0
    %2650 = vmatpush1.bf16.msra.mxu0 %v1052
    %2651 = vmatprep.subr.bf16.mxu0 0
    %2652 = vmatpush1.bf16.msra.mxu0 %v1053
    %2653 = vmatprep.subr.bf16.mxu0 0
    %2654 = vmatpush1.bf16.msra.mxu0 %v1054
    %2655 = vmatprep.subr.bf16.mxu0 0
    %2656 = vmatpush1.bf16.msra.mxu0 %v1055
    %2657 = vmatprep.subr.bf16.mxu0 0
    %2658 = vmatpush1.bf16.msra.mxu0 %v1056
    %2659 = vmatprep.subr.bf16.mxu0 0
    %2660 = vmatpush1.bf16.msra.mxu0 %v1057
    %2661 = vmatprep.subr.bf16.mxu0 0
    %2662 = vmatpush1.bf16.msra.mxu0 %v1058
    %2663 = vmatprep.subr.bf16.mxu0 0
    %2664 = vmatpush1.bf16.msra.mxu0 %v1059
    %2665 = vmatprep.subr.bf16.mxu0 0
    %2666 = vmatpush1.bf16.msra.mxu0 %v1060
    %2667 = vmatprep.subr.bf16.mxu0 0
    %2668 = vmatpush1.bf16.msra.mxu0 %v1061
    %2669 = vmatprep.subr.bf16.mxu0 0
    %2670 = vmatpush1.bf16.msra.mxu0 %v1062
    %2671 = vmatprep.subr.bf16.mxu0 0
    %2672 = vmatpush1.bf16.msra.mxu0 %v1063
    %2673 = vmatprep.subr.bf16.mxu0 0
    %2674 = vmatpush1.bf16.msra.mxu0 %v1064
    %2675 = vmatprep.subr.bf16.mxu0 0
    %2676 = vmatpush1.bf16.msra.mxu0 %v1065
    %2677 = vmatprep.subr.bf16.mxu0 0
    %2678 = vmatpush1.bf16.msra.mxu0 %v1066
    %2679 = vmatprep.subr.bf16.mxu0 0
    %2680 = vmatpush1.bf16.msra.mxu0 %v1067
    %2681 = vmatprep.mubr.bf16.mxu0 %v2352
    %2682 = vmatmul.mubr.bf16.gmra.mrb[0].mxu0 %v2351
    %v2683 = vpop.f32.mrb[0].mxu0
    %v2684 = vadd.f32 %v2644, %v2683
    %v2685 = vpop.f32.mrb[0].mxu0
    %v2686 = vpop.f32.mrb[0].mxu0
    %v2687 = vpop.f32.mrb[0].mxu0
    %2688 = vdwg.mxu0
    %v2689 = vmul.f32 %v2684, %v2684
    %v2690 = vsel %vm311, %v2689, 0.0
    %2691 = vadd.xlane.f32.xlu0 %v2690
    %v2692 = vpop.xlane.xlu0 %2691
    %v2693 = vmax.f32 %v2692, 1e-24
    %v2694 = vrsqrt.pop %v2693
    %v2695 = vmul.f32 %v2684, %v2694
    %v2696 = vld [vmem:[%s0] sm:$0xff]
    %v2697 = vld [vmem:[#allocation2] sm:$0x1]
    %v2698 = vadd.f32 %v317, %v349
    %v2699 = vsub.f32 %v2698, %v325
    %v2700 = vadd.f32 %v333, %v357
    %v2701 = vsub.f32 %v2700, %v341
    %v2702 = vmul.f32 %v2699, %v2699
    %v2703 = vsel %vm311, %v2702, 0.0
    %2704 = vadd.xlane.f32.xlu0 %v2703
    %v2705 = vpop.xlane.xlu0 %2704
    %v2706 = vmul.f32 %v2701, %v2701
    %v2707 = vsel %vm311, %v2706, 0.0
    %2708 = vadd.xlane.f32.xlu0 %v2707
    %v2709 = vpop.xlane.xlu0 %2708
    %v2710 = vadd.f32 %v2705, 1.0
    %v2711 = vsub.f32 %v2710, %v2709
    %v2712 = vmax.f32 %v2711, 0.0
    %v2713 = vmul.f32 %v2712, %v2696
    %vm2714 = vcmask 7168
    %v2715 = vsel %vm2714, %v2713, 0.0
    %2716 = vadd.xlane.f32.xlu0 %v2715
    %v2717 = vpop.xlane.xlu0 %2716
    %v2718 = vrot.slane %v2717, 4
    %v2719 = vadd.f32 %v2717, %v2718
    %v2720 = vrot.slane %v2719, 2
    %v2721 = vadd.f32 %v2719, %v2720
    %v2722 = vrot.slane %v2721, 1
    %v2723 = vadd.f32 %v2721, %v2722
    %s2724 = vtos %v2723
    %v2725 = vstv %s2724
    %v2726 = vadd.f32 %v1522, %v349
    %v2727 = vsub.f32 %v2726, %v1913
    %v2728 = vadd.f32 %v2304, %v357
    %v2729 = vsub.f32 %v2728, %v2695
    %v2730 = vmul.f32 %v2727, %v2727
    %v2731 = vsel %vm311, %v2730, 0.0
    %2732 = vadd.xlane.f32.xlu0 %v2731
    %v2733 = vpop.xlane.xlu0 %2732
    %v2734 = vmul.f32 %v2729, %v2729
    %v2735 = vsel %vm311, %v2734, 0.0
    %2736 = vadd.xlane.f32.xlu0 %v2735
    %v2737 = vpop.xlane.xlu0 %2736
    %v2738 = vadd.f32 %v2733, 1.0
    %v2739 = vsub.f32 %v2738, %v2737
    %v2740 = vmax.f32 %v2739, 0.0
    %v2741 = vmul.f32 %v2740, %v2696
    %v2742 = vsel %vm2714, %v2741, 0.0
    %2743 = vadd.xlane.f32.xlu0 %v2742
    %v2744 = vpop.xlane.xlu0 %2743
    %v2745 = vrot.slane %v2744, 4
    %v2746 = vadd.f32 %v2744, %v2745
    %v2747 = vrot.slane %v2746, 2
    %v2748 = vadd.f32 %v2746, %v2747
    %v2749 = vrot.slane %v2748, 1
    %v2750 = vadd.f32 %v2748, %v2749
    %s2751 = vtos %v2750
    %v2752 = vstv %s2751
    %v2753 = vadd.f32 %v2725, %v2752
    %v2754 = vadd.f32 %v2697, %v2753
    %vm2755 = vcmask 0
    %2756 = vst.msk [vmem:[#allocation2] sm:$0x1] %vm2755, %v2754
    // Predicated region
    $region58: #{msnea_forward.2} parent=1 // pred_check
      _
    $region59: #{msnea_forward.2} parent=1 // pred_check_branch
      %2758 = sbr.rel (0) target = $region61
    $region60: #{msnea_forward.2} parent=1 // pred_region
      %s2760 = ssub.s32 16, 16
      %2761 = vsyncadd [#allocation3], %s2760
      %s2763 = sshll.u32 [#allocation2], 4
      %s2764 = int_to_ptr.vmem [resolvable:$true] %s2763
      %2766 = dma.vmem_to_hbm [thread:$0]  %s2764, 16, %s13, [#allocation3]
    $region61: #{msnea_forward.2} parent=1 // pred_fallthru
      _
    // Predicated region
    $region62: #{msnea_forward.2} parent=1 // pred_check
      _
    $region63: #{msnea_forward.2} parent=1 // pred_check_branch
      %2768 = sbr.rel (0) target = $region65
    $region64: #{msnea_forward.2} parent=1 // pred_region
      %2769 = dma.done [#allocation3], 16
    $region65: #{msnea_forward.2} parent=1 // pred_fallthru
      _
    %2770 = vsyncpa [#allocation3], 1

// kernel: msnea_forward.3
$region0: #{msnea_forward.3}
  #allocation0 [shape = 'u32[]', space=smem, size = 0x4, offset = 0x4, fixed_abs, tag = 'smem constant byte address 0x4 - core index']
  #allocation1 [shape = 'u32[144,128]{1,0:T(1,128)}', space=vmem, size = 0x12000, scoped, tag = 'internal scratch']
  %s0 = inlined_call_operand.vmem [shape: f32[16,32], index: 0, kind: input, shape index: {}]
  %s1 = inlined_call_operand.vmem [shape: bf16[16,2048], index: 1, kind: input, shape index: {}]
  %s2 = inlined_call_operand.vmem [shape: bf16[2048,32], index: 2, kind: input, shape index: {}]
  %s3 = inlined_call_operand.vmem [shape: f32[1,32], index: 3, kind: input, shape index: {}]
  %s4 = inlined_call_operand.vmem [shape: bf16[128,768], index: 4, kind: input, shape index: {}]
  %s5 = inlined_call_operand.vmem [shape: f32[128,1], index: 5, kind: input, shape index: {}]
  %s6 = inlined_call_operand.vmem [shape: f32[16,8], index: 6, kind: input, shape index: {}]
  %s7 = inlined_call_operand.vmem [shape: bf16[768,32], index: 7, kind: input, shape index: {}]
  %s8 = inlined_call_operand.vmem [shape: f32[1,32], index: 8, kind: input, shape index: {}]
  %s9 = inlined_call_operand.vmem [shape: f32[1,32], index: 9, kind: input, shape index: {}]
  %s10 = inlined_call_operand.vmem [shape: f32[8,32], index: 10, kind: output, shape index: {}]
  %s11 = sld [smem:[#allocation0]]
  $region50: #{msnea_forward.3} parent=0
    _
  %s13 = ssub.s32 1, %s11
  %s14 = scalar_select 0, %s13, %s11
  // Predicated region
  $region2: #{msnea_forward.3} parent=0 // pred_check
    _
  $region3: #{msnea_forward.3} parent=0 // pred_check_branch
    %16 = sbr.rel (0) target = $region5
  $region4: #{msnea_forward.3} parent=0 // pred_region
    _
  $region5: #{msnea_forward.3} parent=0 // pred_fallthru
    _
  // Predicated region
  $region6: #{msnea_forward.3} parent=0 // pred_check
    _
  $region7: #{msnea_forward.3} parent=0 // pred_check_branch
    %18 = sbr.rel (0) target = $region9
  $region8: #{msnea_forward.3} parent=0 // pred_region
    _
  $region9: #{msnea_forward.3} parent=0 // pred_fallthru
    _
  // Predicated region
  $region10: #{msnea_forward.3} parent=0 // pred_check
    _
  $region11: #{msnea_forward.3} parent=0 // pred_check_branch
    %20 = sbr.rel (0) target = $region13
  $region12: #{msnea_forward.3} parent=0 // pred_region
    _
  $region13: #{msnea_forward.3} parent=0 // pred_fallthru
    _
  // Predicated region
  $region14: #{msnea_forward.3} parent=0 // pred_check
    _
  $region15: #{msnea_forward.3} parent=0 // pred_check_branch
    %22 = sbr.rel (0) target = $region17
  $region16: #{msnea_forward.3} parent=0 // pred_region
    _
  $region17: #{msnea_forward.3} parent=0 // pred_fallthru
    _
  // Predicated region
  $region18: #{msnea_forward.3} parent=0 // pred_check
    _
  $region19: #{msnea_forward.3} parent=0 // pred_check_branch
    %24 = sbr.rel (0) target = $region21
  $region20: #{msnea_forward.3} parent=0 // pred_region
    _
  $region21: #{msnea_forward.3} parent=0 // pred_fallthru
    _
  // Predicated region
  $region22: #{msnea_forward.3} parent=0 // pred_check
    _
  $region23: #{msnea_forward.3} parent=0 // pred_check_branch
    %26 = sbr.rel (0) target = $region25
  $region24: #{msnea_forward.3} parent=0 // pred_region
    _
  $region25: #{msnea_forward.3} parent=0 // pred_fallthru
    _
  // Predicated region
  $region26: #{msnea_forward.3} parent=0 // pred_check
    _
  $region27: #{msnea_forward.3} parent=0 // pred_check_branch
    %28 = sbr.rel (0) target = $region29
  $region28: #{msnea_forward.3} parent=0 // pred_region
    _
  $region29: #{msnea_forward.3} parent=0 // pred_fallthru
    _
  // Predicated region
  $region30: #{msnea_forward.3} parent=0 // pred_check
    _
  $region31: #{msnea_forward.3} parent=0 // pred_check_branch
    %30 = sbr.rel (0) target = $region33
  $region32: #{msnea_forward.3} parent=0 // pred_region
    _
  $region33: #{msnea_forward.3} parent=0 // pred_fallthru
    _
  // Predicated region
  $region34: #{msnea_forward.3} parent=0 // pred_check
    _
  $region35: #{msnea_forward.3} parent=0 // pred_check_branch
    %32 = sbr.rel (0) target = $region37
  $region36: #{msnea_forward.3} parent=0 // pred_region
    _
  $region37: #{msnea_forward.3} parent=0 // pred_fallthru
    _
  // Predicated region
  $region38: #{msnea_forward.3} parent=0 // pred_check
    _
  $region39: #{msnea_forward.3} parent=0 // pred_check_branch
    %34 = sbr.rel (0) target = $region41
  $region40: #{msnea_forward.3} parent=0 // pred_region
    _
  $region41: #{msnea_forward.3} parent=0 // pred_fallthru
    _
  %v36 = vld [vmem:[%s0] sm:$0xff]
  %v37 = vld [vmem:[%s0 + $0x8] sm:$0xff]
  %v38 = vmul.f32 %v36, %v36
  %v39 = vmul.f32 %v37, %v37
  %vm40 = vcmask 261120
  %v41 = vsel %vm40, %v38, 0.0
  %42 = vadd.xlane.f32.xlu0 %v41
  %v43 = vpop.xlane.xlu0 %42
  %v44 = vsel %vm40, %v39, 0.0
  %45 = vadd.xlane.f32.xlu0 %v44
  %v46 = vpop.xlane.xlu0 %45
  %v47 = vmax.f32 %v43, 1e-24
  %v48 = vmax.f32 %v46, 1e-24
  %v49 = vrsqrt.pop %v47
  %v50 = vrsqrt.pop %v48
  %v51 = vmul.f32 %v36, %v49
  %v52 = vmul.f32 %v37, %v50
  %v53 = vld [vmem:[%s1] sm:$0xff]
  %v54 = vld [vmem:[%s1 + $0x8] sm:$0xff]
  %v55 = vld [vmem:[%s1 + $0x10] sm:$0xff]
  %v56 = vld [vmem:[%s1 + $0x18] sm:$0xff]
  %v57 = vld [vmem:[%s1 + $0x20] sm:$0xff]
  %v58 = vld [vmem:[%s1 + $0x28] sm:$0xff]
  %v59 = vld [vmem:[%s1 + $0x30] sm:$0xff]
  %v60 = vld [vmem:[%s1 + $0x38] sm:$0xff]
  %v61 = vld [vmem:[%s1 + $0x40] sm:$0xff]
  %v62 = vld [vmem:[%s1 + $0x48] sm:$0xff]
  %v63 = vld [vmem:[%s1 + $0x50] sm:$0xff]
  %v64 = vld [vmem:[%s1 + $0x58] sm:$0xff]
  %v65 = vld [vmem:[%s1 + $0x60] sm:$0xff]
  %v66 = vld [vmem:[%s1 + $0x68] sm:$0xff]
  %v67 = vld [vmem:[%s1 + $0x70] sm:$0xff]
  %v68 = vld [vmem:[%s1 + $0x78] sm:$0xff]
  %v69 = vld [vmem:[%s2] sm:$0xf]
  %v70 = vld [vmem:[%s2 + $0x4] sm:$0xf]
  %v71 = vld [vmem:[%s2 + $0x8] sm:$0xf]
  %v72 = vld [vmem:[%s2 + $0xc] sm:$0xf]
  %v73 = vld [vmem:[%s2 + $0x10] sm:$0xf]
  %v74 = vld [vmem:[%s2 + $0x14] sm:$0xf]
  %v75 = vld [vmem:[%s2 + $0x18] sm:$0xf]
  %v76 = vld [vmem:[%s2 + $0x1c] sm:$0xf]
  %v77 = vld [vmem:[%s2 + $0x20] sm:$0xf]
  %v78 = vld [vmem:[%s2 + $0x24] sm:$0xf]
  %v79 = vld [vmem:[%s2 + $0x28] sm:$0xf]
  %v80 = vld [vmem:[%s2 + $0x2c] sm:$0xf]
  %v81 = vld [vmem:[%s2 + $0x30] sm:$0xf]
  %v82 = vld [vmem:[%s2 + $0x34] sm:$0xf]
  %v83 = vld [vmem:[%s2 + $0x38] sm:$0xf]
  %v84 = vld [vmem:[%s2 + $0x3c] sm:$0xf]
  %v85 = vld [vmem:[%s2 + $0x40] sm:$0xf]
  %v86 = vld [vmem:[%s2 + $0x44] sm:$0xf]
  %v87 = vld [vmem:[%s2 + $0x48] sm:$0xf]
  %v88 = vld [vmem:[%s2 + $0x4c] sm:$0xf]
  %v89 = vld [vmem:[%s2 + $0x50] sm:$0xf]
  %v90 = vld [vmem:[%s2 + $0x54] sm:$0xf]
  %v91 = vld [vmem:[%s2 + $0x58] sm:$0xf]
  %v92 = vld [vmem:[%s2 + $0x5c] sm:$0xf]
  %v93 = vld [vmem:[%s2 + $0x60] sm:$0xf]
  %v94 = vld [vmem:[%s2 + $0x64] sm:$0xf]
  %v95 = vld [vmem:[%s2 + $0x68] sm:$0xf]
  %v96 = vld [vmem:[%s2 + $0x6c] sm:$0xf]
  %v97 = vld [vmem:[%s2 + $0x70] sm:$0xf]
  %v98 = vld [vmem:[%s2 + $0x74] sm:$0xf]
  %v99 = vld [vmem:[%s2 + $0x78] sm:$0xf]
  %v100 = vld [vmem:[%s2 + $0x7c] sm:$0xf]
  %v101 = vld [vmem:[%s2 + $0x80] sm:$0xf]
  %v102 = vld [vmem:[%s2 + $0x84] sm:$0xf]
  %v103 = vld [vmem:[%s2 + $0x88] sm:$0xf]
  %v104 = vld [vmem:[%s2 + $0x8c] sm:$0xf]
  %v105 = vld [vmem:[%s2 + $0x90] sm:$0xf]
  %v106 = vld [vmem:[%s2 + $0x94] sm:$0xf]
  %v107 = vld [vmem:[%s2 + $0x98] sm:$0xf]
  %v108 = vld [vmem:[%s2 + $0x9c] sm:$0xf]
  %v109 = vld [vmem:[%s2 + $0xa0] sm:$0xf]
  %v110 = vld [vmem:[%s2 + $0xa4] sm:$0xf]
  %v111 = vld [vmem:[%s2 + $0xa8] sm:$0xf]
  %v112 = vld [vmem:[%s2 + $0xac] sm:$0xf]
  %v113 = vld [vmem:[%s2 + $0xb0] sm:$0xf]
  %v114 = vld [vmem:[%s2 + $0xb4] sm:$0xf]
  %v115 = vld [vmem:[%s2 + $0xb8] sm:$0xf]
  %v116 = vld [vmem:[%s2 + $0xbc] sm:$0xf]
  %v117 = vld [vmem:[%s2 + $0xc0] sm:$0xf]
  %v118 = vld [vmem:[%s2 + $0xc4] sm:$0xf]
  %v119 = vld [vmem:[%s2 + $0xc8] sm:$0xf]
  %v120 = vld [vmem:[%s2 + $0xcc] sm:$0xf]
  %v121 = vld [vmem:[%s2 + $0xd0] sm:$0xf]
  %v122 = vld [vmem:[%s2 + $0xd4] sm:$0xf]
  %v123 = vld [vmem:[%s2 + $0xd8] sm:$0xf]
  %v124 = vld [vmem:[%s2 + $0xdc] sm:$0xf]
  %v125 = vld [vmem:[%s2 + $0xe0] sm:$0xf]
  %v126 = vld [vmem:[%s2 + $0xe4] sm:$0xf]
  %v127 = vld [vmem:[%s2 + $0xe8] sm:$0xf]
  %v128 = vld [vmem:[%s2 + $0xec] sm:$0xf]
  %v129 = vld [vmem:[%s2 + $0xf0] sm:$0xf]
  %v130 = vld [vmem:[%s2 + $0xf4] sm:$0xf]
  %v131 = vld [vmem:[%s2 + $0xf8] sm:$0xf]
  %v132 = vld [vmem:[%s2 + $0xfc] sm:$0xf]
  %v133 = vld [vmem:[%s2 + $0x100] sm:$0xf]
  %v134 = vld [vmem:[%s2 + $0x104] sm:$0xf]
  %v135 = vld [vmem:[%s2 + $0x108] sm:$0xf]
  %v136 = vld [vmem:[%s2 + $0x10c] sm:$0xf]
  %v137 = vld [vmem:[%s2 + $0x110] sm:$0xf]
  %v138 = vld [vmem:[%s2 + $0x114] sm:$0xf]
  %v139 = vld [vmem:[%s2 + $0x118] sm:$0xf]
  %v140 = vld [vmem:[%s2 + $0x11c] sm:$0xf]
  %v141 = vld [vmem:[%s2 + $0x120] sm:$0xf]
  %v142 = vld [vmem:[%s2 + $0x124] sm:$0xf]
  %v143 = vld [vmem:[%s2 + $0x128] sm:$0xf]
  %v144 = vld [vmem:[%s2 + $0x12c] sm:$0xf]
  %v145 = vld [vmem:[%s2 + $0x130] sm:$0xf]
  %v146 = vld [vmem:[%s2 + $0x134] sm:$0xf]
  %v147 = vld [vmem:[%s2 + $0x138] sm:$0xf]
  %v148 = vld [vmem:[%s2 + $0x13c] sm:$0xf]
  %v149 = vld [vmem:[%s2 + $0x140] sm:$0xf]
  %v150 = vld [vmem:[%s2 + $0x144] sm:$0xf]
  %v151 = vld [vmem:[%s2 + $0x148] sm:$0xf]
  %v152 = vld [vmem:[%s2 + $0x14c] sm:$0xf]
  %v153 = vld [vmem:[%s2 + $0x150] sm:$0xf]
  %v154 = vld [vmem:[%s2 + $0x154] sm:$0xf]
  %v155 = vld [vmem:[%s2 + $0x158] sm:$0xf]
  %v156 = vld [vmem:[%s2 + $0x15c] sm:$0xf]
  %v157 = vld [vmem:[%s2 + $0x160] sm:$0xf]
  %v158 = vld [vmem:[%s2 + $0x164] sm:$0xf]
  %v159 = vld [vmem:[%s2 + $0x168] sm:$0xf]
  %v160 = vld [vmem:[%s2 + $0x16c] sm:$0xf]
  %v161 = vld [vmem:[%s2 + $0x170] sm:$0xf]
  %v162 = vld [vmem:[%s2 + $0x174] sm:$0xf]
  %v163 = vld [vmem:[%s2 + $0x178] sm:$0xf]
  %v164 = vld [vmem:[%s2 + $0x17c] sm:$0xf]
  %v165 = vld [vmem:[%s2 + $0x180] sm:$0xf]
  %v166 = vld [vmem:[%s2 + $0x184] sm:$0xf]
  %v167 = vld [vmem:[%s2 + $0x188] sm:$0xf]
  %v168 = vld [vmem:[%s2 + $0x18c] sm:$0xf]
  %v169 = vld [vmem:[%s2 + $0x190] sm:$0xf]
  %v170 = vld [vmem:[%s2 + $0x194] sm:$0xf]
  %v171 = vld [vmem:[%s2 + $0x198] sm:$0xf]
  %v172 = vld [vmem:[%s2 + $0x19c] sm:$0xf]
  %v173 = vld [vmem:[%s2 + $0x1a0] sm:$0xf]
  %v174 = vld [vmem:[%s2 + $0x1a4] sm:$0xf]
  %v175 = vld [vmem:[%s2 + $0x1a8] sm:$0xf]
  %v176 = vld [vmem:[%s2 + $0x1ac] sm:$0xf]
  %v177 = vld [vmem:[%s2 + $0x1b0] sm:$0xf]
  %v178 = vld [vmem:[%s2 + $0x1b4] sm:$0xf]
  %v179 = vld [vmem:[%s2 + $0x1b8] sm:$0xf]
  %v180 = vld [vmem:[%s2 + $0x1bc] sm:$0xf]
  %v181 = vld [vmem:[%s2 + $0x1c0] sm:$0xf]
  %v182 = vld [vmem:[%s2 + $0x1c4] sm:$0xf]
  %v183 = vld [vmem:[%s2 + $0x1c8] sm:$0xf]
  %v184 = vld [vmem:[%s2 + $0x1cc] sm:$0xf]
  %v185 = vld [vmem:[%s2 + $0x1d0] sm:$0xf]
  %v186 = vld [vmem:[%s2 + $0x1d4] sm:$0xf]
  %v187 = vld [vmem:[%s2 + $0x1d8] sm:$0xf]
  %v188 = vld [vmem:[%s2 + $0x1dc] sm:$0xf]
  %v189 = vld [vmem:[%s2 + $0x1e0] sm:$0xf]
  %v190 = vld [vmem:[%s2 + $0x1e4] sm:$0xf]
  %v191 = vld [vmem:[%s2 + $0x1e8] sm:$0xf]
  %v192 = vld [vmem:[%s2 + $0x1ec] sm:$0xf]
  %v193 = vld [vmem:[%s2 + $0x1f0] sm:$0xf]
  %v194 = vld [vmem:[%s2 + $0x1f4] sm:$0xf]
  %v195 = vld [vmem:[%s2 + $0x1f8] sm:$0xf]
  %v196 = vld [vmem:[%s2 + $0x1fc] sm:$0xf]
  %v197 = vld [vmem:[%s2 + $0x200] sm:$0xf]
  %v198 = vld [vmem:[%s2 + $0x204] sm:$0xf]
  %v199 = vld [vmem:[%s2 + $0x208] sm:$0xf]
  %v200 = vld [vmem:[%s2 + $0x20c] sm:$0xf]
  %v201 = vld [vmem:[%s2 + $0x210] sm:$0xf]
  %v202 = vld [vmem:[%s2 + $0x214] sm:$0xf]
  %v203 = vld [vmem:[%s2 + $0x218] sm:$0xf]
  %v204 = vld [vmem:[%s2 + $0x21c] sm:$0xf]
  %v205 = vld [vmem:[%s2 + $0x220] sm:$0xf]
  %v206 = vld [vmem:[%s2 + $0x224] sm:$0xf]
  %v207 = vld [vmem:[%s2 + $0x228] sm:$0xf]
  %v208 = vld [vmem:[%s2 + $0x22c] sm:$0xf]
  %v209 = vld [vmem:[%s2 + $0x230] sm:$0xf]
  %v210 = vld [vmem:[%s2 + $0x234] sm:$0xf]
  %v211 = vld [vmem:[%s2 + $0x238] sm:$0xf]
  %v212 = vld [vmem:[%s2 + $0x23c] sm:$0xf]
  %v213 = vld [vmem:[%s2 + $0x240] sm:$0xf]
  %v214 = vld [vmem:[%s2 + $0x244] sm:$0xf]
  %v215 = vld [vmem:[%s2 + $0x248] sm:$0xf]
  %v216 = vld [vmem:[%s2 + $0x24c] sm:$0xf]
  %v217 = vld [vmem:[%s2 + $0x250] sm:$0xf]
  %v218 = vld [vmem:[%s2 + $0x254] sm:$0xf]
  %v219 = vld [vmem:[%s2 + $0x258] sm:$0xf]
  %v220 = vld [vmem:[%s2 + $0x25c] sm:$0xf]
  %v221 = vld [vmem:[%s2 + $0x260] sm:$0xf]
  %v222 = vld [vmem:[%s2 + $0x264] sm:$0xf]
  %v223 = vld [vmem:[%s2 + $0x268] sm:$0xf]
  %v224 = vld [vmem:[%s2 + $0x26c] sm:$0xf]
  %v225 = vld [vmem:[%s2 + $0x270] sm:$0xf]
  %v226 = vld [vmem:[%s2 + $0x274] sm:$0xf]
  %v227 = vld [vmem:[%s2 + $0x278] sm:$0xf]
  %v228 = vld [vmem:[%s2 + $0x27c] sm:$0xf]
  %v229 = vld [vmem:[%s2 + $0x280] sm:$0xf]
  %v230 = vld [vmem:[%s2 + $0x284] sm:$0xf]
  %v231 = vld [vmem:[%s2 + $0x288] sm:$0xf]
  %v232 = vld [vmem:[%s2 + $0x28c] sm:$0xf]
  %v233 = vld [vmem:[%s2 + $0x290] sm:$0xf]
  %v234 = vld [vmem:[%s2 + $0x294] sm:$0xf]
  %v235 = vld [vmem:[%s2 + $0x298] sm:$0xf]
  %v236 = vld [vmem:[%s2 + $0x29c] sm:$0xf]
  %v237 = vld [vmem:[%s2 + $0x2a0] sm:$0xf]
  %v238 = vld [vmem:[%s2 + $0x2a4] sm:$0xf]
  %v239 = vld [vmem:[%s2 + $0x2a8] sm:$0xf]
  %v240 = vld [vmem:[%s2 + $0x2ac] sm:$0xf]
  %v241 = vld [vmem:[%s2 + $0x2b0] sm:$0xf]
  %v242 = vld [vmem:[%s2 + $0x2b4] sm:$0xf]
  %v243 = vld [vmem:[%s2 + $0x2b8] sm:$0xf]
  %v244 = vld [vmem:[%s2 + $0x2bc] sm:$0xf]
  %v245 = vld [vmem:[%s2 + $0x2c0] sm:$0xf]
  %v246 = vld [vmem:[%s2 + $0x2c4] sm:$0xf]
  %v247 = vld [vmem:[%s2 + $0x2c8] sm:$0xf]
  %v248 = vld [vmem:[%s2 + $0x2cc] sm:$0xf]
  %v249 = vld [vmem:[%s2 + $0x2d0] sm:$0xf]
  %v250 = vld [vmem:[%s2 + $0x2d4] sm:$0xf]
  %v251 = vld [vmem:[%s2 + $0x2d8] sm:$0xf]
  %v252 = vld [vmem:[%s2 + $0x2dc] sm:$0xf]
  %v253 = vld [vmem:[%s2 + $0x2e0] sm:$0xf]
  %v254 = vld [vmem:[%s2 + $0x2e4] sm:$0xf]
  %v255 = vld [vmem:[%s2 + $0x2e8] sm:$0xf]
  %v256 = vld [vmem:[%s2 + $0x2ec] sm:$0xf]
  %v257 = vld [vmem:[%s2 + $0x2f0] sm:$0xf]
  %v258 = vld [vmem:[%s2 + $0x2f4] sm:$0xf]
  %v259 = vld [vmem:[%s2 + $0x2f8] sm:$0xf]
  %v260 = vld [vmem:[%s2 + $0x2fc] sm:$0xf]
  %v261 = vld [vmem:[%s2 + $0x300] sm:$0xf]
  %v262 = vld [vmem:[%s2 + $0x304] sm:$0xf]
  %v263 = vld [vmem:[%s2 + $0x308] sm:$0xf]
  %v264 = vld [vmem:[%s2 + $0x30c] sm:$0xf]
  %v265 = vld [vmem:[%s2 + $0x310] sm:$0xf]
  %v266 = vld [vmem:[%s2 + $0x314] sm:$0xf]
  %v267 = vld [vmem:[%s2 + $0x318] sm:$0xf]
  %v268 = vld [vmem:[%s2 + $0x31c] sm:$0xf]
  %v269 = vld [vmem:[%s2 + $0x320] sm:$0xf]
  %v270 = vld [vmem:[%s2 + $0x324] sm:$0xf]
  %v271 = vld [vmem:[%s2 + $0x328] sm:$0xf]
  %v272 = vld [vmem:[%s2 + $0x32c] sm:$0xf]
  %v273 = vld [vmem:[%s2 + $0x330] sm:$0xf]
  %v274 = vld [vmem:[%s2 + $0x334] sm:$0xf]
  %v275 = vld [vmem:[%s2 + $0x338] sm:$0xf]
  %v276 = vld [vmem:[%s2 + $0x33c] sm:$0xf]
  %v277 = vld [vmem:[%s2 + $0x340] sm:$0xf]
  %v278 = vld [vmem:[%s2 + $0x344] sm:$0xf]
  %v279 = vld [vmem:[%s2 + $0x348] sm:$0xf]
  %v280 = vld [vmem:[%s2 + $0x34c] sm:$0xf]
  %v281 = vld [vmem:[%s2 + $0x350] sm:$0xf]
  %v282 = vld [vmem:[%s2 + $0x354] sm:$0xf]
  %v283 = vld [vmem:[%s2 + $0x358] sm:$0xf]
  %v284 = vld [vmem:[%s2 + $0x35c] sm:$0xf]
  %v285 = vld [vmem:[%s2 + $0x360] sm:$0xf]
  %v286 = vld [vmem:[%s2 + $0x364] sm:$0xf]
  %v287 = vld [vmem:[%s2 + $0x368] sm:$0xf]
  %v288 = vld [vmem:[%s2 + $0x36c] sm:$0xf]
  %v289 = vld [vmem:[%s2 + $0x370] sm:$0xf]
  %v290 = vld [vmem:[%s2 + $0x374] sm:$0xf]
  %v291 = vld [vmem:[%s2 + $0x378] sm:$0xf]
  %v292 = vld [vmem:[%s2 + $0x37c] sm:$0xf]
  %v293 = vld [vmem:[%s2 + $0x380] sm:$0xf]
  %v294 = vld [vmem:[%s2 + $0x384] sm:$0xf]
  %v295 = vld [vmem:[%s2 + $0x388] sm:$0xf]
  %v296 = vld [vmem:[%s2 + $0x38c] sm:$0xf]
  %v297 = vld [vmem:[%s2 + $0x390] sm:$0xf]
  %v298 = vld [vmem:[%s2 + $0x394] sm:$0xf]
  %v299 = vld [vmem:[%s2 + $0x398] sm:$0xf]
  %v300 = vld [vmem:[%s2 + $0x39c] sm:$0xf]
  %v301 = vld [vmem:[%s2 + $0x3a0] sm:$0xf]
  %v302 = vld [vmem:[%s2 + $0x3a4] sm:$0xf]
  %v303 = vld [vmem:[%s2 + $0x3a8] sm:$0xf]
  %v304 = vld [vmem:[%s2 + $0x3ac] sm:$0xf]
  %v305 = vld [vmem:[%s2 + $0x3b0] sm:$0xf]
  %v306 = vld [vmem:[%s2 + $0x3b4] sm:$0xf]
  %v307 = vld [vmem:[%s2 + $0x3b8] sm:$0xf]
  %v308 = vld [vmem:[%s2 + $0x3bc] sm:$0xf]
  %v309 = vld [vmem:[%s2 + $0x3c0] sm:$0xf]
  %v310 = vld [vmem:[%s2 + $0x3c4] sm:$0xf]
  %v311 = vld [vmem:[%s2 + $0x3c8] sm:$0xf]
  %v312 = vld [vmem:[%s2 + $0x3cc] sm:$0xf]
  %v313 = vld [vmem:[%s2 + $0x3d0] sm:$0xf]
  %v314 = vld [vmem:[%s2 + $0x3d4] sm:$0xf]
  %v315 = vld [vmem:[%s2 + $0x3d8] sm:$0xf]
  %v316 = vld [vmem:[%s2 + $0x3dc] sm:$0xf]
  %v317 = vld [vmem:[%s2 + $0x3e0] sm:$0xf]
  %v318 = vld [vmem:[%s2 + $0x3e4] sm:$0xf]
  %v319 = vld [vmem:[%s2 + $0x3e8] sm:$0xf]
  %v320 = vld [vmem:[%s2 + $0x3ec] sm:$0xf]
  %v321 = vld [vmem:[%s2 + $0x3f0] sm:$0xf]
  %v322 = vld [vmem:[%s2 + $0x3f4] sm:$0xf]
  %v323 = vld [vmem:[%s2 + $0x3f8] sm:$0xf]
  %v324 = vld [vmem:[%s2 + $0x3fc] sm:$0xf]
  %v325 = vld [vmem:[%s3] sm:$0x1]
  %v327 = vlaneseq
  %v328 = vshrl.u32 %v327, 7
  %v329 = vsub.s32 0, %v328
  %v330 = vrot.slane %v325, %v329
  %v348 = vunpack.c.l.b16 %v53
  %v349 = vunpack.c.h.b16 %v53
  %v350 = vunpack.c.l.b16 %v54
  %v351 = vunpack.c.h.b16 %v54
  %v352 = vunpack.c.l.b16 %v55
  %v353 = vunpack.c.h.b16 %v55
  %v354 = vunpack.c.l.b16 %v56
  %v355 = vunpack.c.h.b16 %v56
  %v356 = vunpack.c.l.b16 %v57
  %v357 = vunpack.c.h.b16 %v57
  %v358 = vunpack.c.l.b16 %v58
  %v359 = vunpack.c.h.b16 %v58
  %v360 = vunpack.c.l.b16 %v59
  %v361 = vunpack.c.h.b16 %v59
  %v362 = vunpack.c.l.b16 %v60
  %v363 = vunpack.c.h.b16 %v60
  %v364 = vunpack.c.l.b16 %v61
  %v365 = vunpack.c.h.b16 %v61
  %v366 = vunpack.c.l.b16 %v62
  %v367 = vunpack.c.h.b16 %v62
  %v368 = vunpack.c.l.b16 %v63
  %v369 = vunpack.c.h.b16 %v63
  %v370 = vunpack.c.l.b16 %v64
  %v371 = vunpack.c.h.b16 %v64
  %v372 = vunpack.c.l.b16 %v65
  %v373 = vunpack.c.h.b16 %v65
  %v374 = vunpack.c.l.b16 %v66
  %v375 = vunpack.c.h.b16 %v66
  %v376 = vunpack.c.l.b16 %v67
  %v377 = vunpack.c.h.b16 %v67
  %v378 = vunpack.c.l.b16 %v68
  %v379 = vunpack.c.h.b16 %v68
  %v380 = vpack.c.b16 %v364, %v348
  %v381 = vpack.c.b16 %v365, %v349
  %v382 = vpack.c.b16 %v366, %v350
  %v383 = vpack.c.b16 %v367, %v351
  %v384 = vpack.c.b16 %v368, %v352
  %v385 = vpack.c.b16 %v369, %v353
  %v386 = vpack.c.b16 %v370, %v354
  %v387 = vpack.c.b16 %v371, %v355
  %v388 = vpack.c.b16 %v372, %v356
  %v389 = vpack.c.b16 %v373, %v357
  %v390 = vpack.c.b16 %v374, %v358
  %v391 = vpack.c.b16 %v375, %v359
  %v392 = vpack.c.b16 %v376, %v360
  %v393 = vpack.c.b16 %v377, %v361
  %v394 = vpack.c.b16 %v378, %v362
  %v395 = vpack.c.b16 %v379, %v363
  %v668 = vunpack.c.l.b16 %v69
  %v669 = vunpack.c.l.b16 %v70
  %v670 = vunpack.c.l.b16 %v71
  %v671 = vunpack.c.l.b16 %v72
  %v672 = vunpack.c.l.b16 %v73
  %v673 = vunpack.c.l.b16 %v74
  %v674 = vunpack.c.l.b16 %v75
  %v675 = vunpack.c.l.b16 %v76
  %v676 = vunpack.c.l.b16 %v77
  %v677 = vunpack.c.l.b16 %v78
  %v678 = vunpack.c.l.b16 %v79
  %v679 = vunpack.c.l.b16 %v80
  %v680 = vunpack.c.l.b16 %v81
  %v681 = vunpack.c.l.b16 %v82
  %v682 = vunpack.c.l.b16 %v83
  %v683 = vunpack.c.l.b16 %v84
  %v684 = vunpack.c.l.b16 %v85
  %v685 = vunpack.c.l.b16 %v86
  %v686 = vunpack.c.l.b16 %v87
  %v687 = vunpack.c.l.b16 %v88
  %v688 = vunpack.c.l.b16 %v89
  %v689 = vunpack.c.l.b16 %v90
  %v690 = vunpack.c.l.b16 %v91
  %v691 = vunpack.c.l.b16 %v92
  %v692 = vunpack.c.l.b16 %v93
  %v693 = vunpack.c.l.b16 %v94
  %v694 = vunpack.c.l.b16 %v95
  %v695 = vunpack.c.l.b16 %v96
  %v696 = vunpack.c.l.b16 %v97
  %v697 = vunpack.c.l.b16 %v98
  %v698 = vunpack.c.l.b16 %v99
  %v699 = vunpack.c.l.b16 %v100
  %v700 = vunpack.c.l.b16 %v101
  %v701 = vunpack.c.l.b16 %v102
  %v702 = vunpack.c.l.b16 %v103
  %v703 = vunpack.c.l.b16 %v104
  %v704 = vunpack.c.l.b16 %v105
  %v705 = vunpack.c.l.b16 %v106
  %v706 = vunpack.c.l.b16 %v107
  %v707 = vunpack.c.l.b16 %v108
  %v708 = vunpack.c.l.b16 %v109
  %v709 = vunpack.c.l.b16 %v110
  %v710 = vunpack.c.l.b16 %v111
  %v711 = vunpack.c.l.b16 %v112
  %v712 = vunpack.c.l.b16 %v113
  %v713 = vunpack.c.l.b16 %v114
  %v714 = vunpack.c.l.b16 %v115
  %v715 = vunpack.c.l.b16 %v116
  %v716 = vunpack.c.l.b16 %v117
  %v717 = vunpack.c.l.b16 %v118
  %v718 = vunpack.c.l.b16 %v119
  %v719 = vunpack.c.l.b16 %v120
  %v720 = vunpack.c.l.b16 %v121
  %v721 = vunpack.c.l.b16 %v122
  %v722 = vunpack.c.l.b16 %v123
  %v723 = vunpack.c.l.b16 %v124
  %v724 = vunpack.c.l.b16 %v125
  %v725 = vunpack.c.l.b16 %v126
  %v726 = vunpack.c.l.b16 %v127
  %v727 = vunpack.c.l.b16 %v128
  %v728 = vunpack.c.l.b16 %v129
  %v729 = vunpack.c.l.b16 %v130
  %v730 = vunpack.c.l.b16 %v131
  %v731 = vunpack.c.l.b16 %v132
  %v732 = vunpack.c.l.b16 %v133
  %v733 = vunpack.c.l.b16 %v134
  %v734 = vunpack.c.l.b16 %v135
  %v735 = vunpack.c.l.b16 %v136
  %v736 = vunpack.c.l.b16 %v137
  %v737 = vunpack.c.l.b16 %v138
  %v738 = vunpack.c.l.b16 %v139
  %v739 = vunpack.c.l.b16 %v140
  %v740 = vunpack.c.l.b16 %v141
  %v741 = vunpack.c.l.b16 %v142
  %v742 = vunpack.c.l.b16 %v143
  %v743 = vunpack.c.l.b16 %v144
  %v744 = vunpack.c.l.b16 %v145
  %v745 = vunpack.c.l.b16 %v146
  %v746 = vunpack.c.l.b16 %v147
  %v747 = vunpack.c.l.b16 %v148
  %v748 = vunpack.c.l.b16 %v149
  %v749 = vunpack.c.l.b16 %v150
  %v750 = vunpack.c.l.b16 %v151
  %v751 = vunpack.c.l.b16 %v152
  %v752 = vunpack.c.l.b16 %v153
  %v753 = vunpack.c.l.b16 %v154
  %v754 = vunpack.c.l.b16 %v155
  %v755 = vunpack.c.l.b16 %v156
  %v756 = vunpack.c.l.b16 %v157
  %v757 = vunpack.c.l.b16 %v158
  %v758 = vunpack.c.l.b16 %v159
  %v759 = vunpack.c.l.b16 %v160
  %v760 = vunpack.c.l.b16 %v161
  %v761 = vunpack.c.l.b16 %v162
  %v762 = vunpack.c.l.b16 %v163
  %v763 = vunpack.c.l.b16 %v164
  %v764 = vunpack.c.l.b16 %v165
  %v765 = vunpack.c.l.b16 %v166
  %v766 = vunpack.c.l.b16 %v167
  %v767 = vunpack.c.l.b16 %v168
  %v768 = vunpack.c.l.b16 %v169
  %v769 = vunpack.c.l.b16 %v170
  %v770 = vunpack.c.l.b16 %v171
  %v771 = vunpack.c.l.b16 %v172
  %v772 = vunpack.c.l.b16 %v173
  %v773 = vunpack.c.l.b16 %v174
  %v774 = vunpack.c.l.b16 %v175
  %v775 = vunpack.c.l.b16 %v176
  %v776 = vunpack.c.l.b16 %v177
  %v777 = vunpack.c.l.b16 %v178
  %v778 = vunpack.c.l.b16 %v179
  %v779 = vunpack.c.l.b16 %v180
  %v780 = vunpack.c.l.b16 %v181
  %v781 = vunpack.c.l.b16 %v182
  %v782 = vunpack.c.l.b16 %v183
  %v783 = vunpack.c.l.b16 %v184
  %v784 = vunpack.c.l.b16 %v185
  %v785 = vunpack.c.l.b16 %v186
  %v786 = vunpack.c.l.b16 %v187
  %v787 = vunpack.c.l.b16 %v188
  %v788 = vunpack.c.l.b16 %v189
  %v789 = vunpack.c.l.b16 %v190
  %v790 = vunpack.c.l.b16 %v191
  %v791 = vunpack.c.l.b16 %v192
  %v792 = vunpack.c.l.b16 %v193
  %v793 = vunpack.c.l.b16 %v194
  %v794 = vunpack.c.l.b16 %v195
  %v795 = vunpack.c.l.b16 %v196
  %v796 = vunpack.c.l.b16 %v197
  %v797 = vunpack.c.l.b16 %v198
  %v798 = vunpack.c.l.b16 %v199
  %v799 = vunpack.c.l.b16 %v200
  %v800 = vunpack.c.l.b16 %v201
  %v801 = vunpack.c.l.b16 %v202
  %v802 = vunpack.c.l.b16 %v203
  %v803 = vunpack.c.l.b16 %v204
  %v804 = vunpack.c.l.b16 %v205
  %v805 = vunpack.c.l.b16 %v206
  %v806 = vunpack.c.l.b16 %v207
  %v807 = vunpack.c.l.b16 %v208
  %v808 = vunpack.c.l.b16 %v209
  %v809 = vunpack.c.l.b16 %v210
  %v810 = vunpack.c.l.b16 %v211
  %v811 = vunpack.c.l.b16 %v212
  %v812 = vunpack.c.l.b16 %v213
  %v813 = vunpack.c.l.b16 %v214
  %v814 = vunpack.c.l.b16 %v215
  %v815 = vunpack.c.l.b16 %v216
  %v816 = vunpack.c.l.b16 %v217
  %v817 = vunpack.c.l.b16 %v218
  %v818 = vunpack.c.l.b16 %v219
  %v819 = vunpack.c.l.b16 %v220
  %v820 = vunpack.c.l.b16 %v221
  %v821 = vunpack.c.l.b16 %v222
  %v822 = vunpack.c.l.b16 %v223
  %v823 = vunpack.c.l.b16 %v224
  %v824 = vunpack.c.l.b16 %v225
  %v825 = vunpack.c.l.b16 %v226
  %v826 = vunpack.c.l.b16 %v227
  %v827 = vunpack.c.l.b16 %v228
  %v828 = vunpack.c.l.b16 %v229
  %v829 = vunpack.c.l.b16 %v230
  %v830 = vunpack.c.l.b16 %v231
  %v831 = vunpack.c.l.b16 %v232
  %v832 = vunpack.c.l.b16 %v233
  %v833 = vunpack.c.l.b16 %v234
  %v834 = vunpack.c.l.b16 %v235
  %v835 = vunpack.c.l.b16 %v236
  %v836 = vunpack.c.l.b16 %v237
  %v837 = vunpack.c.l.b16 %v238
  %v838 = vunpack.c.l.b16 %v239
  %v839 = vunpack.c.l.b16 %v240
  %v840 = vunpack.c.l.b16 %v241
  %v841 = vunpack.c.l.b16 %v242
  %v842 = vunpack.c.l.b16 %v243
  %v843 = vunpack.c.l.b16 %v244
  %v844 = vunpack.c.l.b16 %v245
  %v845 = vunpack.c.l.b16 %v246
  %v846 = vunpack.c.l.b16 %v247
  %v847 = vunpack.c.l.b16 %v248
  %v848 = vunpack.c.l.b16 %v249
  %v849 = vunpack.c.l.b16 %v250
  %v850 = vunpack.c.l.b16 %v251
  %v851 = vunpack.c.l.b16 %v252
  %v852 = vunpack.c.l.b16 %v253
  %v853 = vunpack.c.l.b16 %v254
  %v854 = vunpack.c.l.b16 %v255
  %v855 = vunpack.c.l.b16 %v256
  %v856 = vunpack.c.l.b16 %v257
  %v857 = vunpack.c.l.b16 %v258
  %v858 = vunpack.c.l.b16 %v259
  %v859 = vunpack.c.l.b16 %v260
  %v860 = vunpack.c.l.b16 %v261
  %v861 = vunpack.c.l.b16 %v262
  %v862 = vunpack.c.l.b16 %v263
  %v863 = vunpack.c.l.b16 %v264
  %v864 = vunpack.c.l.b16 %v265
  %v865 = vunpack.c.l.b16 %v266
  %v866 = vunpack.c.l.b16 %v267
  %v867 = vunpack.c.l.b16 %v268
  %v868 = vunpack.c.l.b16 %v269
  %v869 = vunpack.c.l.b16 %v270
  %v870 = vunpack.c.l.b16 %v271
  %v871 = vunpack.c.l.b16 %v272
  %v872 = vunpack.c.l.b16 %v273
  %v873 = vunpack.c.l.b16 %v274
  %v874 = vunpack.c.l.b16 %v275
  %v875 = vunpack.c.l.b16 %v276
  %v876 = vunpack.c.l.b16 %v277
  %v877 = vunpack.c.l.b16 %v278
  %v878 = vunpack.c.l.b16 %v279
  %v879 = vunpack.c.l.b16 %v280
  %v880 = vunpack.c.l.b16 %v281
  %v881 = vunpack.c.l.b16 %v282
  %v882 = vunpack.c.l.b16 %v283
  %v883 = vunpack.c.l.b16 %v284
  %v884 = vunpack.c.l.b16 %v285
  %v885 = vunpack.c.l.b16 %v286
  %v886 = vunpack.c.l.b16 %v287
  %v887 = vunpack.c.l.b16 %v288
  %v888 = vunpack.c.l.b16 %v289
  %v889 = vunpack.c.l.b16 %v290
  %v890 = vunpack.c.l.b16 %v291
  %v891 = vunpack.c.l.b16 %v292
  %v892 = vunpack.c.l.b16 %v293
  %v893 = vunpack.c.l.b16 %v294
  %v894 = vunpack.c.l.b16 %v295
  %v895 = vunpack.c.l.b16 %v296
  %v896 = vunpack.c.l.b16 %v297
  %v897 = vunpack.c.l.b16 %v298
  %v898 = vunpack.c.l.b16 %v299
  %v899 = vunpack.c.l.b16 %v300
  %v900 = vunpack.c.l.b16 %v301
  %v901 = vunpack.c.l.b16 %v302
  %v902 = vunpack.c.l.b16 %v303
  %v903 = vunpack.c.l.b16 %v304
  %v904 = vunpack.c.l.b16 %v305
  %v905 = vunpack.c.l.b16 %v306
  %v906 = vunpack.c.l.b16 %v307
  %v907 = vunpack.c.l.b16 %v308
  %v908 = vunpack.c.l.b16 %v309
  %v909 = vunpack.c.l.b16 %v310
  %v910 = vunpack.c.l.b16 %v311
  %v911 = vunpack.c.l.b16 %v312
  %v912 = vunpack.c.l.b16 %v313
  %v913 = vunpack.c.l.b16 %v314
  %v914 = vunpack.c.l.b16 %v315
  %v915 = vunpack.c.l.b16 %v316
  %v916 = vunpack.c.l.b16 %v317
  %v917 = vunpack.c.l.b16 %v318
  %v918 = vunpack.c.l.b16 %v319
  %v919 = vunpack.c.l.b16 %v320
  %v920 = vunpack.c.l.b16 %v321
  %v921 = vunpack.c.l.b16 %v322
  %v922 = vunpack.c.l.b16 %v323
  %v923 = vunpack.c.l.b16 %v324
  %v924 = vpack.c.b16 %v669, %v668
  %v925 = vpack.c.b16 %v671, %v670
  %v926 = vpack.c.b16 %v673, %v672
  %v927 = vpack.c.b16 %v675, %v674
  %v928 = vpack.c.b16 %v677, %v676
  %v929 = vpack.c.b16 %v679, %v678
  %v930 = vpack.c.b16 %v681, %v680
  %v931 = vpack.c.b16 %v683, %v682
  %v932 = vpack.c.b16 %v685, %v684
  %v933 = vpack.c.b16 %v687, %v686
  %v934 = vpack.c.b16 %v689, %v688
  %v935 = vpack.c.b16 %v691, %v690
  %v936 = vpack.c.b16 %v693, %v692
  %v937 = vpack.c.b16 %v695, %v694
  %v938 = vpack.c.b16 %v697, %v696
  %v939 = vpack.c.b16 %v699, %v698
  %v940 = vpack.c.b16 %v701, %v700
  %v941 = vpack.c.b16 %v703, %v702
  %v942 = vpack.c.b16 %v705, %v704
  %v943 = vpack.c.b16 %v707, %v706
  %v944 = vpack.c.b16 %v709, %v708
  %v945 = vpack.c.b16 %v711, %v710
  %v946 = vpack.c.b16 %v713, %v712
  %v947 = vpack.c.b16 %v715, %v714
  %v948 = vpack.c.b16 %v717, %v716
  %v949 = vpack.c.b16 %v719, %v718
  %v950 = vpack.c.b16 %v721, %v720
  %v951 = vpack.c.b16 %v723, %v722
  %v952 = vpack.c.b16 %v725, %v724
  %v953 = vpack.c.b16 %v727, %v726
  %v954 = vpack.c.b16 %v729, %v728
  %v955 = vpack.c.b16 %v731, %v730
  %v956 = vpack.c.b16 %v733, %v732
  %v957 = vpack.c.b16 %v735, %v734
  %v958 = vpack.c.b16 %v737, %v736
  %v959 = vpack.c.b16 %v739, %v738
  %v960 = vpack.c.b16 %v741, %v740
  %v961 = vpack.c.b16 %v743, %v742
  %v962 = vpack.c.b16 %v745, %v744
  %v963 = vpack.c.b16 %v747, %v746
  %v964 = vpack.c.b16 %v749, %v748
  %v965 = vpack.c.b16 %v751, %v750
  %v966 = vpack.c.b16 %v753, %v752
  %v967 = vpack.c.b16 %v755, %v754
  %v968 = vpack.c.b16 %v757, %v756
  %v969 = vpack.c.b16 %v759, %v758
  %v970 = vpack.c.b16 %v761, %v760
  %v971 = vpack.c.b16 %v763, %v762
  %v972 = vpack.c.b16 %v765, %v764
  %v973 = vpack.c.b16 %v767, %v766
  %v974 = vpack.c.b16 %v769, %v768
  %v975 = vpack.c.b16 %v771, %v770
  %v976 = vpack.c.b16 %v773, %v772
  %v977 = vpack.c.b16 %v775, %v774
  %v978 = vpack.c.b16 %v777, %v776
  %v979 = vpack.c.b16 %v779, %v778
  %v980 = vpack.c.b16 %v781, %v780
  %v981 = vpack.c.b16 %v783, %v782
  %v982 = vpack.c.b16 %v785, %v784
  %v983 = vpack.c.b16 %v787, %v786
  %v984 = vpack.c.b16 %v789, %v788
  %v985 = vpack.c.b16 %v791, %v790
  %v986 = vpack.c.b16 %v793, %v792
  %v987 = vpack.c.b16 %v795, %v794
  %v988 = vpack.c.b16 %v797, %v796
  %v989 = vpack.c.b16 %v799, %v798
  %v990 = vpack.c.b16 %v801, %v800
  %v991 = vpack.c.b16 %v803, %v802
  %v992 = vpack.c.b16 %v805, %v804
  %v993 = vpack.c.b16 %v807, %v806
  %v994 = vpack.c.b16 %v809, %v808
  %v995 = vpack.c.b16 %v811, %v810
  %v996 = vpack.c.b16 %v813, %v812
  %v997 = vpack.c.b16 %v815, %v814
  %v998 = vpack.c.b16 %v817, %v816
  %v999 = vpack.c.b16 %v819, %v818
  %v1000 = vpack.c.b16 %v821, %v820
  %v1001 = vpack.c.b16 %v823, %v822
  %v1002 = vpack.c.b16 %v825, %v824
  %v1003 = vpack.c.b16 %v827, %v826
  %v1004 = vpack.c.b16 %v829, %v828
  %v1005 = vpack.c.b16 %v831, %v830
  %v1006 = vpack.c.b16 %v833, %v832
  %v1007 = vpack.c.b16 %v835, %v834
  %v1008 = vpack.c.b16 %v837, %v836
  %v1009 = vpack.c.b16 %v839, %v838
  %v1010 = vpack.c.b16 %v841, %v840
  %v1011 = vpack.c.b16 %v843, %v842
  %v1012 = vpack.c.b16 %v845, %v844
  %v1013 = vpack.c.b16 %v847, %v846
  %v1014 = vpack.c.b16 %v849, %v848
  %v1015 = vpack.c.b16 %v851, %v850
  %v1016 = vpack.c.b16 %v853, %v852
  %v1017 = vpack.c.b16 %v855, %v854
  %v1018 = vpack.c.b16 %v857, %v856
  %v1019 = vpack.c.b16 %v859, %v858
  %v1020 = vpack.c.b16 %v861, %v860
  %v1021 = vpack.c.b16 %v863, %v862
  %v1022 = vpack.c.b16 %v865, %v864
  %v1023 = vpack.c.b16 %v867, %v866
  %v1024 = vpack.c.b16 %v869, %v868
  %v1025 = vpack.c.b16 %v871, %v870
  %v1026 = vpack.c.b16 %v873, %v872
  %v1027 = vpack.c.b16 %v875, %v874
  %v1028 = vpack.c.b16 %v877, %v876
  %v1029 = vpack.c.b16 %v879, %v878
  %v1030 = vpack.c.b16 %v881, %v880
  %v1031 = vpack.c.b16 %v883, %v882
  %v1032 = vpack.c.b16 %v885, %v884
  %v1033 = vpack.c.b16 %v887, %v886
  %v1034 = vpack.c.b16 %v889, %v888
  %v1035 = vpack.c.b16 %v891, %v890
  %v1036 = vpack.c.b16 %v893, %v892
  %v1037 = vpack.c.b16 %v895, %v894
  %v1038 = vpack.c.b16 %v897, %v896
  %v1039 = vpack.c.b16 %v899, %v898
  %v1040 = vpack.c.b16 %v901, %v900
  %v1041 = vpack.c.b16 %v903, %v902
  %v1042 = vpack.c.b16 %v905, %v904
  %v1043 = vpack.c.b16 %v907, %v906
  %v1044 = vpack.c.b16 %v909, %v908
  %v1045 = vpack.c.b16 %v911, %v910
  %v1046 = vpack.c.b16 %v913, %v912
  %v1047 = vpack.c.b16 %v915, %v914
  %v1048 = vpack.c.b16 %v917, %v916
  %v1049 = vpack.c.b16 %v919, %v918
  %v1050 = vpack.c.b16 %v921, %v920
  %v1051 = vpack.c.b16 %v923, %v922
  %1180 = vmatprep.subr.bf16.mxu0 0
  %1181 = vmatpush1.bf16.msra.mxu0 %v924
  %1182 = vmatprep.subr.bf16.mxu0 0
  %1183 = vmatpush1.bf16.msra.mxu0 %v925
  %1184 = vmatprep.subr.bf16.mxu0 0
  %1185 = vmatpush1.bf16.msra.mxu0 %v926
  %1186 = vmatprep.subr.bf16.mxu0 0
  %1187 = vmatpush1.bf16.msra.mxu0 %v927
  %1188 = vmatprep.subr.bf16.mxu0 0
  %1189 = vmatpush1.bf16.msra.mxu0 %v928
  %1190 = vmatprep.subr.bf16.mxu0 0
  %1191 = vmatpush1.bf16.msra.mxu0 %v929
  %1192 = vmatprep.subr.bf16.mxu0 0
  %1193 = vmatpush1.bf16.msra.mxu0 %v930
  %1194 = vmatprep.subr.bf16.mxu0 0
  %1195 = vmatpush1.bf16.msra.mxu0 %v931
  %1196 = vmatprep.subr.bf16.mxu0 0
  %1197 = vmatpush1.bf16.msra.mxu0 %v932
  %1198 = vmatprep.subr.bf16.mxu0 0
  %1199 = vmatpush1.bf16.msra.mxu0 %v933
  %1200 = vmatprep.subr.bf16.mxu0 0
  %1201 = vmatpush1.bf16.msra.mxu0 %v934
  %1202 = vmatprep.subr.bf16.mxu0 0
  %1203 = vmatpush1.bf16.msra.mxu0 %v935
  %1204 = vmatprep.subr.bf16.mxu0 0
  %1205 = vmatpush1.bf16.msra.mxu0 %v936
  %1206 = vmatprep.subr.bf16.mxu0 0
  %1207 = vmatpush1.bf16.msra.mxu0 %v937
  %1208 = vmatprep.subr.bf16.mxu0 0
  %1209 = vmatpush1.bf16.msra.mxu0 %v938
  %1210 = vmatprep.subr.bf16.mxu0 0
  %1211 = vmatpush1.bf16.msra.mxu0 %v939
  %1212 = vmatprep.mubr.bf16.mxu0 %v381
  %1213 = vmatmul.mubr.bf16.gmra.mrb[0].mxu0 %v380
  %v1214 = vpop.f32.mrb[0].mxu0
  %v1215 = vadd.f32 %v330, %v1214
  %v1216 = vpop.f32.mrb[0].mxu0
  %v1217 = vpop.f32.mrb[0].mxu0
  %v1218 = vadd.f32 %v330, %v1217
  %v1219 = vpop.f32.mrb[0].mxu0
  %1220 = vdwg.mxu0
  %1221 = vmatprep.subr.bf16.mxu0 0
  %1222 = vmatpush1.bf16.msra.mxu0 %v940
  %1223 = vmatprep.subr.bf16.mxu0 0
  %1224 = vmatpush1.bf16.msra.mxu0 %v941
  %1225 = vmatprep.subr.bf16.mxu0 0
  %1226 = vmatpush1.bf16.msra.mxu0 %v942
  %1227 = vmatprep.subr.bf16.mxu0 0
  %1228 = vmatpush1.bf16.msra.mxu0 %v943
  %1229 = vmatprep.subr.bf16.mxu0 0
  %1230 = vmatpush1.bf16.msra.mxu0 %v944
  %1231 = vmatprep.subr.bf16.mxu0 0
  %1232 = vmatpush1.bf16.msra.mxu0 %v945
  %1233 = vmatprep.subr.bf16.mxu0 0
  %1234 = vmatpush1.bf16.msra.mxu0 %v946
  %1235 = vmatprep.subr.bf16.mxu0 0
  %1236 = vmatpush1.bf16.msra.mxu0 %v947
  %1237 = vmatprep.subr.bf16.mxu0 0
  %1238 = vmatpush1.bf16.msra.mxu0 %v948
  %1239 = vmatprep.subr.bf16.mxu0 0
  %1240 = vmatpush1.bf16.msra.mxu0 %v949
  %1241 = vmatprep.subr.bf16.mxu0 0
  %1242 = vmatpush1.bf16.msra.mxu0 %v950
  %1243 = vmatprep.subr.bf16.mxu0 0
  %1244 = vmatpush1.bf16.msra.mxu0 %v951
  %1245 = vmatprep.subr.bf16.mxu0 0
  %1246 = vmatpush1.bf16.msra.mxu0 %v952
  %1247 = vmatprep.subr.bf16.mxu0 0
  %1248 = vmatpush1.bf16.msra.mxu0 %v953
  %1249 = vmatprep.subr.bf16.mxu0 0
  %1250 = vmatpush1.bf16.msra.mxu0 %v954
  %1251 = vmatprep.subr.bf16.mxu0 0
  %1252 = vmatpush1.bf16.msra.mxu0 %v955
  %1253 = vmatprep.mubr.bf16.mxu0 %v383
  %1254 = vmatmul.mubr.bf16.gmra.mrb[0].mxu0 %v382
  %v1255 = vpop.f32.mrb[0].mxu0
  %v1256 = vadd.f32 %v1215, %v1255
  %v1257 = vpop.f32.mrb[0].mxu0
  %v1258 = vpop.f32.mrb[0].mxu0
  %v1259 = vadd.f32 %v1218, %v1258
  %v1260 = vpop.f32.mrb[0].mxu0
  %1261 = vdwg.mxu0
  %1262 = vmatprep.subr.bf16.mxu0 0
  %1263 = vmatpush1.bf16.msra.mxu0 %v956
  %1264 = vmatprep.subr.bf16.mxu0 0
  %1265 = vmatpush1.bf16.msra.mxu0 %v957
  %1266 = vmatprep.subr.bf16.mxu0 0
  %1267 = vmatpush1.bf16.msra.mxu0 %v958
  %1268 = vmatprep.subr.bf16.mxu0 0
  %1269 = vmatpush1.bf16.msra.mxu0 %v959
  %1270 = vmatprep.subr.bf16.mxu0 0
  %1271 = vmatpush1.bf16.msra.mxu0 %v960
  %1272 = vmatprep.subr.bf16.mxu0 0
  %1273 = vmatpush1.bf16.msra.mxu0 %v961
  %1274 = vmatprep.subr.bf16.mxu0 0
  %1275 = vmatpush1.bf16.msra.mxu0 %v962
  %1276 = vmatprep.subr.bf16.mxu0 0
  %1277 = vmatpush1.bf16.msra.mxu0 %v963
  %1278 = vmatprep.subr.bf16.mxu0 0
  %1279 = vmatpush1.bf16.msra.mxu0 %v964
  %1280 = vmatprep.subr.bf16.mxu0 0
  %1281 = vmatpush1.bf16.msra.mxu0 %v965
  %1282 = vmatprep.subr.bf16.mxu0 0
  %1283 = vmatpush1.bf16.msra.mxu0 %v966
  %1284 = vmatprep.subr.bf16.mxu0 0
  %1285 = vmatpush1.bf16.msra.mxu0 %v967
  %1286 = vmatprep.subr.bf16.mxu0 0
  %1287 = vmatpush1.bf16.msra.mxu0 %v968
  %1288 = vmatprep.subr.bf16.mxu0 0
  %1289 = vmatpush1.bf16.msra.mxu0 %v969
  %1290 = vmatprep.subr.bf16.mxu0 0
  %1291 = vmatpush1.bf16.msra.mxu0 %v970
  %1292 = vmatprep.subr.bf16.mxu0 0
  %1293 = vmatpush1.bf16.msra.mxu0 %v971
  %1294 = vmatprep.mubr.bf16.mxu0 %v385
  %1295 = vmatmul.mubr.bf16.gmra.mrb[0].mxu0 %v384
  %v1296 = vpop.f32.mrb[0].mxu0
  %v1297 = vadd.f32 %v1256, %v1296
  %v1298 = vpop.f32.mrb[0].mxu0
  %v1299 = vpop.f32.mrb[0].mxu0
  %v1300 = vadd.f32 %v1259, %v1299
  %v1301 = vpop.f32.mrb[0].mxu0
  %1302 = vdwg.mxu0
  %1303 = vmatprep.subr.bf16.mxu0 0
  %1304 = vmatpush1.bf16.msra.mxu0 %v972
  %1305 = vmatprep.subr.bf16.mxu0 0
  %1306 = vmatpush1.bf16.msra.mxu0 %v973
  %1307 = vmatprep.subr.bf16.mxu0 0
  %1308 = vmatpush1.bf16.msra.mxu0 %v974
  %1309 = vmatprep.subr.bf16.mxu0 0
  %1310 = vmatpush1.bf16.msra.mxu0 %v975
  %1311 = vmatprep.subr.bf16.mxu0 0
  %1312 = vmatpush1.bf16.msra.mxu0 %v976
  %1313 = vmatprep.subr.bf16.mxu0 0
  %1314 = vmatpush1.bf16.msra.mxu0 %v977
  %1315 = vmatprep.subr.bf16.mxu0 0
  %1316 = vmatpush1.bf16.msra.mxu0 %v978
  %1317 = vmatprep.subr.bf16.mxu0 0
  %1318 = vmatpush1.bf16.msra.mxu0 %v979
  %1319 = vmatprep.subr.bf16.mxu0 0
  %1320 = vmatpush1.bf16.msra.mxu0 %v980
  %1321 = vmatprep.subr.bf16.mxu0 0
  %1322 = vmatpush1.bf16.msra.mxu0 %v981
  %1323 = vmatprep.subr.bf16.mxu0 0
  %1324 = vmatpush1.bf16.msra.mxu0 %v982
  %1325 = vmatprep.subr.bf16.mxu0 0
  %1326 = vmatpush1.bf16.msra.mxu0 %v983
  %1327 = vmatprep.subr.bf16.mxu0 0
  %1328 = vmatpush1.bf16.msra.mxu0 %v984
  %1329 = vmatprep.subr.bf16.mxu0 0
  %1330 = vmatpush1.bf16.msra.mxu0 %v985
  %1331 = vmatprep.subr.bf16.mxu0 0
  %1332 = vmatpush1.bf16.msra.mxu0 %v986
  %1333 = vmatprep.subr.bf16.mxu0 0
  %1334 = vmatpush1.bf16.msra.mxu0 %v987
  %1335 = vmatprep.mubr.bf16.mxu0 %v387
  %1336 = vmatmul.mubr.bf16.gmra.mrb[0].mxu0 %v386
  %v1337 = vpop.f32.mrb[0].mxu0
  %v1338 = vadd.f32 %v1297, %v1337
  %v1339 = vpop.f32.mrb[0].mxu0
  %v1340 = vpop.f32.mrb[0].mxu0
  %v1341 = vadd.f32 %v1300, %v1340
  %v1342 = vpop.f32.mrb[0].mxu0
  %1343 = vdwg.mxu0
  %1344 = vmatprep.subr.bf16.mxu0 0
  %1345 = vmatpush1.bf16.msra.mxu0 %v988
  %1346 = vmatprep.subr.bf16.mxu0 0
  %1347 = vmatpush1.bf16.msra.mxu0 %v989
  %1348 = vmatprep.subr.bf16.mxu0 0
  %1349 = vmatpush1.bf16.msra.mxu0 %v990
  %1350 = vmatprep.subr.bf16.mxu0 0
  %1351 = vmatpush1.bf16.msra.mxu0 %v991
  %1352 = vmatprep.subr.bf16.mxu0 0
  %1353 = vmatpush1.bf16.msra.mxu0 %v992
  %1354 = vmatprep.subr.bf16.mxu0 0
  %1355 = vmatpush1.bf16.msra.mxu0 %v993
  %1356 = vmatprep.subr.bf16.mxu0 0
  %1357 = vmatpush1.bf16.msra.mxu0 %v994
  %1358 = vmatprep.subr.bf16.mxu0 0
  %1359 = vmatpush1.bf16.msra.mxu0 %v995
  %1360 = vmatprep.subr.bf16.mxu0 0
  %1361 = vmatpush1.bf16.msra.mxu0 %v996
  %1362 = vmatprep.subr.bf16.mxu0 0
  %1363 = vmatpush1.bf16.msra.mxu0 %v997
  %1364 = vmatprep.subr.bf16.mxu0 0
  %1365 = vmatpush1.bf16.msra.mxu0 %v998
  %1366 = vmatprep.subr.bf16.mxu0 0
  %1367 = vmatpush1.bf16.msra.mxu0 %v999
  %1368 = vmatprep.subr.bf16.mxu0 0
  %1369 = vmatpush1.bf16.msra.mxu0 %v1000
  %1370 = vmatprep.subr.bf16.mxu0 0
  %1371 = vmatpush1.bf16.msra.mxu0 %v1001
  %1372 = vmatprep.subr.bf16.mxu0 0
  %1373 = vmatpush1.bf16.msra.mxu0 %v1002
  %1374 = vmatprep.subr.bf16.mxu0 0
  %1375 = vmatpush1.bf16.msra.mxu0 %v1003
  %1376 = vmatprep.mubr.bf16.mxu0 %v389
  %1377 = vmatmul.mubr.bf16.gmra.mrb[0].mxu0 %v388
  %v1378 = vpop.f32.mrb[0].mxu0
  %v1379 = vadd.f32 %v1338, %v1378
  %v1380 = vpop.f32.mrb[0].mxu0
  %v1381 = vpop.f32.mrb[0].mxu0
  %v1382 = vadd.f32 %v1341, %v1381
  %v1383 = vpop.f32.mrb[0].mxu0
  %1384 = vdwg.mxu0
  %1385 = vmatprep.subr.bf16.mxu0 0
  %1386 = vmatpush1.bf16.msra.mxu0 %v1004
  %1387 = vmatprep.subr.bf16.mxu0 0
  %1388 = vmatpush1.bf16.msra.mxu0 %v1005
  %1389 = vmatprep.subr.bf16.mxu0 0
  %1390 = vmatpush1.bf16.msra.mxu0 %v1006
  %1391 = vmatprep.subr.bf16.mxu0 0
  %1392 = vmatpush1.bf16.msra.mxu0 %v1007
  %1393 = vmatprep.subr.bf16.mxu0 0
  %1394 = vmatpush1.bf16.msra.mxu0 %v1008
  %1395 = vmatprep.subr.bf16.mxu0 0
  %1396 = vmatpush1.bf16.msra.mxu0 %v1009
  %1397 = vmatprep.subr.bf16.mxu0 0
  %1398 = vmatpush1.bf16.msra.mxu0 %v1010
  %1399 = vmatprep.subr.bf16.mxu0 0
  %1400 = vmatpush1.bf16.msra.mxu0 %v1011
  %1401 = vmatprep.subr.bf16.mxu0 0
  %1402 = vmatpush1.bf16.msra.mxu0 %v1012
  %1403 = vmatprep.subr.bf16.mxu0 0
  %1404 = vmatpush1.bf16.msra.mxu0 %v1013
  %1405 = vmatprep.subr.bf16.mxu0 0
  %1406 = vmatpush1.bf16.msra.mxu0 %v1014
  %1407 = vmatprep.subr.bf16.mxu0 0
  %1408 = vmatpush1.bf16.msra.mxu0 %v1015
  %1409 = vmatprep.subr.bf16.mxu0 0
  %1410 = vmatpush1.bf16.msra.mxu0 %v1016
  %1411 = vmatprep.subr.bf16.mxu0 0
  %1412 = vmatpush1.bf16.msra.mxu0 %v1017
  %1413 = vmatprep.subr.bf16.mxu0 0
  %1414 = vmatpush1.bf16.msra.mxu0 %v1018
  %1415 = vmatprep.subr.bf16.mxu0 0
  %1416 = vmatpush1.bf16.msra.mxu0 %v1019
  %1417 = vmatprep.mubr.bf16.mxu0 %v391
  %1418 = vmatmul.mubr.bf16.gmra.mrb[0].mxu0 %v390
  %v1419 = vpop.f32.mrb[0].mxu0
  %v1420 = vadd.f32 %v1379, %v1419
  %v1421 = vpop.f32.mrb[0].mxu0
  %v1422 = vpop.f32.mrb[0].mxu0
  %v1423 = vadd.f32 %v1382, %v1422
  %v1424 = vpop.f32.mrb[0].mxu0
  %1425 = vdwg.mxu0
  %1426 = vmatprep.subr.bf16.mxu0 0
  %1427 = vmatpush1.bf16.msra.mxu0 %v1020
  %1428 = vmatprep.subr.bf16.mxu0 0
  %1429 = vmatpush1.bf16.msra.mxu0 %v1021
  %1430 = vmatprep.subr.bf16.mxu0 0
  %1431 = vmatpush1.bf16.msra.mxu0 %v1022
  %1432 = vmatprep.subr.bf16.mxu0 0
  %1433 = vmatpush1.bf16.msra.mxu0 %v1023
  %1434 = vmatprep.subr.bf16.mxu0 0
  %1435 = vmatpush1.bf16.msra.mxu0 %v1024
  %1436 = vmatprep.subr.bf16.mxu0 0
  %1437 = vmatpush1.bf16.msra.mxu0 %v1025
  %1438 = vmatprep.subr.bf16.mxu0 0
  %1439 = vmatpush1.bf16.msra.mxu0 %v1026
  %1440 = vmatprep.subr.bf16.mxu0 0
  %1441 = vmatpush1.bf16.msra.mxu0 %v1027
  %1442 = vmatprep.subr.bf16.mxu0 0
  %1443 = vmatpush1.bf16.msra.mxu0 %v1028
  %1444 = vmatprep.subr.bf16.mxu0 0
  %1445 = vmatpush1.bf16.msra.mxu0 %v1029
  %1446 = vmatprep.subr.bf16.mxu0 0
  %1447 = vmatpush1.bf16.msra.mxu0 %v1030
  %1448 = vmatprep.subr.bf16.mxu0 0
  %1449 = vmatpush1.bf16.msra.mxu0 %v1031
  %1450 = vmatprep.subr.bf16.mxu0 0
  %1451 = vmatpush1.bf16.msra.mxu0 %v1032
  %1452 = vmatprep.subr.bf16.mxu0 0
  %1453 = vmatpush1.bf16.msra.mxu0 %v1033
  %1454 = vmatprep.subr.bf16.mxu0 0
  %1455 = vmatpush1.bf16.msra.mxu0 %v1034
  %1456 = vmatprep.subr.bf16.mxu0 0
  %1457 = vmatpush1.bf16.msra.mxu0 %v1035
  %1458 = vmatprep.mubr.bf16.mxu0 %v393
  %1459 = vmatmul.mubr.bf16.gmra.mrb[0].mxu0 %v392
  %v1460 = vpop.f32.mrb[0].mxu0
  %v1461 = vadd.f32 %v1420, %v1460
  %v1462 = vpop.f32.mrb[0].mxu0
  %v1463 = vpop.f32.mrb[0].mxu0
  %v1464 = vadd.f32 %v1423, %v1463
  %v1465 = vpop.f32.mrb[0].mxu0
  %1466 = vdwg.mxu0
  %1467 = vmatprep.subr.bf16.mxu0 0
  %1468 = vmatpush1.bf16.msra.mxu0 %v1036
  %1469 = vmatprep.subr.bf16.mxu0 0
  %1470 = vmatpush1.bf16.msra.mxu0 %v1037
  %1471 = vmatprep.subr.bf16.mxu0 0
  %1472 = vmatpush1.bf16.msra.mxu0 %v1038
  %1473 = vmatprep.subr.bf16.mxu0 0
  %1474 = vmatpush1.bf16.msra.mxu0 %v1039
  %1475 = vmatprep.subr.bf16.mxu0 0
  %1476 = vmatpush1.bf16.msra.mxu0 %v1040
  %1477 = vmatprep.subr.bf16.mxu0 0
  %1478 = vmatpush1.bf16.msra.mxu0 %v1041
  %1479 = vmatprep.subr.bf16.mxu0 0
  %1480 = vmatpush1.bf16.msra.mxu0 %v1042
  %1481 = vmatprep.subr.bf16.mxu0 0
  %1482 = vmatpush1.bf16.msra.mxu0 %v1043
  %1483 = vmatprep.subr.bf16.mxu0 0
  %1484 = vmatpush1.bf16.msra.mxu0 %v1044
  %1485 = vmatprep.subr.bf16.mxu0 0
  %1486 = vmatpush1.bf16.msra.mxu0 %v1045
  %1487 = vmatprep.subr.bf16.mxu0 0
  %1488 = vmatpush1.bf16.msra.mxu0 %v1046
  %1489 = vmatprep.subr.bf16.mxu0 0
  %1490 = vmatpush1.bf16.msra.mxu0 %v1047
  %1491 = vmatprep.subr.bf16.mxu0 0
  %1492 = vmatpush1.bf16.msra.mxu0 %v1048
  %1493 = vmatprep.subr.bf16.mxu0 0
  %1494 = vmatpush1.bf16.msra.mxu0 %v1049
  %1495 = vmatprep.subr.bf16.mxu0 0
  %1496 = vmatpush1.bf16.msra.mxu0 %v1050
  %1497 = vmatprep.subr.bf16.mxu0 0
  %1498 = vmatpush1.bf16.msra.mxu0 %v1051
  %1499 = vmatprep.mubr.bf16.mxu0 %v395
  %1500 = vmatmul.mubr.bf16.gmra.mrb[0].mxu0 %v394
  %v1501 = vpop.f32.mrb[0].mxu0
  %v1502 = vadd.f32 %v1461, %v1501
  %v1503 = vpop.f32.mrb[0].mxu0
  %v1504 = vpop.f32.mrb[0].mxu0
  %v1505 = vadd.f32 %v1464, %v1504
  %v1506 = vpop.f32.mrb[0].mxu0
  %1507 = vdwg.mxu0
  %v1508 = vmul.f32 %v1502, %v1502
  %v1509 = vmul.f32 %v1505, %v1505
  %v1510 = vsel %vm40, %v1508, 0.0
  %1511 = vadd.xlane.f32.xlu0 %v1510
  %v1512 = vpop.xlane.xlu0 %1511
  %v1513 = vsel %vm40, %v1509, 0.0
  %1514 = vadd.xlane.f32.xlu0 %v1513
  %v1515 = vpop.xlane.xlu0 %1514
  %v1516 = vmax.f32 %v1512, 1e-24
  %v1517 = vmax.f32 %v1515, 1e-24
  %v1518 = vrsqrt.pop %v1516
  %v1519 = vrsqrt.pop %v1517
  %v1520 = vmul.f32 %v1502, %v1518
  %v1521 = vmul.f32 %v1505, %v1519
  %v1522 = vld [vmem:[%s4] sm:$0xff]
  %v1523 = vld [vmem:[%s4 + $0x8] sm:$0xff]
  %v1524 = vld [vmem:[%s4 + $0x10] sm:$0xff]
  %v1525 = vld [vmem:[%s4 + $0x18] sm:$0xff]
  %v1526 = vld [vmem:[%s4 + $0x20] sm:$0xff]
  %v1527 = vld [vmem:[%s4 + $0x28] sm:$0xff]
  %v1528 = vld [vmem:[%s4 + $0x30] sm:$0xff]
  %v1529 = vld [vmem:[%s4 + $0x38] sm:$0xff]
  %v1530 = vld [vmem:[%s4 + $0x40] sm:$0xff]
  %v1531 = vld [vmem:[%s4 + $0x48] sm:$0xff]
  %v1532 = vld [vmem:[%s4 + $0x50] sm:$0xff]
  %v1533 = vld [vmem:[%s4 + $0x58] sm:$0xff]
  %v1534 = vld [vmem:[%s4 + $0x60] sm:$0xff]
  %v1535 = vld [vmem:[%s4 + $0x68] sm:$0xff]
  %v1536 = vld [vmem:[%s4 + $0x70] sm:$0xff]
  %v1537 = vld [vmem:[%s4 + $0x78] sm:$0xff]
  %v1538 = vld [vmem:[%s4 + $0x80] sm:$0xff]
  %v1539 = vld [vmem:[%s4 + $0x88] sm:$0xff]
  %v1540 = vld [vmem:[%s4 + $0x90] sm:$0xff]
  %v1541 = vld [vmem:[%s4 + $0x98] sm:$0xff]
  %v1542 = vld [vmem:[%s4 + $0xa0] sm:$0xff]
  %v1543 = vld [vmem:[%s4 + $0xa8] sm:$0xff]
  %v1544 = vld [vmem:[%s4 + $0xb0] sm:$0xff]
  %v1545 = vld [vmem:[%s4 + $0xb8] sm:$0xff]
  %v1546 = vld [vmem:[%s4 + $0xc0] sm:$0xff]
  %v1547 = vld [vmem:[%s4 + $0xc8] sm:$0xff]
  %v1548 = vld [vmem:[%s4 + $0xd0] sm:$0xff]
  %v1549 = vld [vmem:[%s4 + $0xd8] sm:$0xff]
  %v1550 = vld [vmem:[%s4 + $0xe0] sm:$0xff]
  %v1551 = vld [vmem:[%s4 + $0xe8] sm:$0xff]
  %v1552 = vld [vmem:[%s4 + $0xf0] sm:$0xff]
  %v1553 = vld [vmem:[%s4 + $0xf8] sm:$0xff]
  %v1554 = vld [vmem:[%s4 + $0x100] sm:$0xff]
  %v1555 = vld [vmem:[%s4 + $0x108] sm:$0xff]
  %v1556 = vld [vmem:[%s4 + $0x110] sm:$0xff]
  %v1557 = vld [vmem:[%s4 + $0x118] sm:$0xff]
  %v1558 = vld [vmem:[%s4 + $0x120] sm:$0xff]
  %v1559 = vld [vmem:[%s4 + $0x128] sm:$0xff]
  %v1560 = vld [vmem:[%s4 + $0x130] sm:$0xff]
  %v1561 = vld [vmem:[%s4 + $0x138] sm:$0xff]
  %v1562 = vld [vmem:[%s4 + $0x140] sm:$0xff]
  %v1563 = vld [vmem:[%s4 + $0x148] sm:$0xff]
  %v1564 = vld [vmem:[%s4 + $0x150] sm:$0xff]
  %v1565 = vld [vmem:[%s4 + $0x158] sm:$0xff]
  %v1566 = vld [vmem:[%s4 + $0x160] sm:$0xff]
  %v1567 = vld [vmem:[%s4 + $0x168] sm:$0xff]
  %v1568 = vld [vmem:[%s4 + $0x170] sm:$0xff]
  %v1569 = vld [vmem:[%s4 + $0x178] sm:$0xff]
  %v1570 = vld [vmem:[%s7] sm:$0xf]
  %v1571 = vld [vmem:[%s7 + $0x4] sm:$0xf]
  %v1572 = vld [vmem:[%s7 + $0x8] sm:$0xf]
  %v1573 = vld [vmem:[%s7 + $0xc] sm:$0xf]
  %v1574 = vld [vmem:[%s7 + $0x10] sm:$0xf]
  %v1575 = vld [vmem:[%s7 + $0x14] sm:$0xf]
  %v1576 = vld [vmem:[%s7 + $0x18] sm:$0xf]
  %v1577 = vld [vmem:[%s7 + $0x1c] sm:$0xf]
  %v1578 = vld [vmem:[%s7 + $0x20] sm:$0xf]
  %v1579 = vld [vmem:[%s7 + $0x24] sm:$0xf]
  %v1580 = vld [vmem:[%s7 + $0x28] sm:$0xf]
  %v1581 = vld [vmem:[%s7 + $0x2c] sm:$0xf]
  %v1582 = vld [vmem:[%s7 + $0x30] sm:$0xf]
  %v1583 = vld [vmem:[%s7 + $0x34] sm:$0xf]
  %v1584 = vld [vmem:[%s7 + $0x38] sm:$0xf]
  %v1585 = vld [vmem:[%s7 + $0x3c] sm:$0xf]
  %v1586 = vld [vmem:[%s7 + $0x40] sm:$0xf]
  %v1587 = vld [vmem:[%s7 + $0x44] sm:$0xf]
  %v1588 = vld [vmem:[%s7 + $0x48] sm:$0xf]
  %v1589 = vld [vmem:[%s7 + $0x4c] sm:$0xf]
  %v1590 = vld [vmem:[%s7 + $0x50] sm:$0xf]
  %v1591 = vld [vmem:[%s7 + $0x54] sm:$0xf]
  %v1592 = vld [vmem:[%s7 + $0x58] sm:$0xf]
  %v1593 = vld [vmem:[%s7 + $0x5c] sm:$0xf]
  %v1594 = vld [vmem:[%s7 + $0x60] sm:$0xf]
  %v1595 = vld [vmem:[%s7 + $0x64] sm:$0xf]
  %v1596 = vld [vmem:[%s7 + $0x68] sm:$0xf]
  %v1597 = vld [vmem:[%s7 + $0x6c] sm:$0xf]
  %v1598 = vld [vmem:[%s7 + $0x70] sm:$0xf]
  %v1599 = vld [vmem:[%s7 + $0x74] sm:$0xf]
  %v1600 = vld [vmem:[%s7 + $0x78] sm:$0xf]
  %v1601 = vld [vmem:[%s7 + $0x7c] sm:$0xf]
  %v1602 = vld [vmem:[%s7 + $0x80] sm:$0xf]
  %v1603 = vld [vmem:[%s7 + $0x84] sm:$0xf]
  %v1604 = vld [vmem:[%s7 + $0x88] sm:$0xf]
  %v1605 = vld [vmem:[%s7 + $0x8c] sm:$0xf]
  %v1606 = vld [vmem:[%s7 + $0x90] sm:$0xf]
  %v1607 = vld [vmem:[%s7 + $0x94] sm:$0xf]
  %v1608 = vld [vmem:[%s7 + $0x98] sm:$0xf]
  %v1609 = vld [vmem:[%s7 + $0x9c] sm:$0xf]
  %v1610 = vld [vmem:[%s7 + $0xa0] sm:$0xf]
  %v1611 = vld [vmem:[%s7 + $0xa4] sm:$0xf]
  %v1612 = vld [vmem:[%s7 + $0xa8] sm:$0xf]
  %v1613 = vld [vmem:[%s7 + $0xac] sm:$0xf]
  %v1614 = vld [vmem:[%s7 + $0xb0] sm:$0xf]
  %v1615 = vld [vmem:[%s7 + $0xb4] sm:$0xf]
  %v1616 = vld [vmem:[%s7 + $0xb8] sm:$0xf]
  %v1617 = vld [vmem:[%s7 + $0xbc] sm:$0xf]
  %v1618 = vld [vmem:[%s7 + $0xc0] sm:$0xf]
  %v1619 = vld [vmem:[%s7 + $0xc4] sm:$0xf]
  %v1620 = vld [vmem:[%s7 + $0xc8] sm:$0xf]
  %v1621 = vld [vmem:[%s7 + $0xcc] sm:$0xf]
  %v1622 = vld [vmem:[%s7 + $0xd0] sm:$0xf]
  %v1623 = vld [vmem:[%s7 + $0xd4] sm:$0xf]
  %v1624 = vld [vmem:[%s7 + $0xd8] sm:$0xf]
  %v1625 = vld [vmem:[%s7 + $0xdc] sm:$0xf]
  %v1626 = vld [vmem:[%s7 + $0xe0] sm:$0xf]
  %v1627 = vld [vmem:[%s7 + $0xe4] sm:$0xf]
  %v1628 = vld [vmem:[%s7 + $0xe8] sm:$0xf]
  %v1629 = vld [vmem:[%s7 + $0xec] sm:$0xf]
  %v1630 = vld [vmem:[%s7 + $0xf0] sm:$0xf]
  %v1631 = vld [vmem:[%s7 + $0xf4] sm:$0xf]
  %v1632 = vld [vmem:[%s7 + $0xf8] sm:$0xf]
  %v1633 = vld [vmem:[%s7 + $0xfc] sm:$0xf]
  %v1634 = vld [vmem:[%s7 + $0x100] sm:$0xf]
  %v1635 = vld [vmem:[%s7 + $0x104] sm:$0xf]
  %v1636 = vld [vmem:[%s7 + $0x108] sm:$0xf]
  %v1637 = vld [vmem:[%s7 + $0x10c] sm:$0xf]
  %v1638 = vld [vmem:[%s7 + $0x110] sm:$0xf]
  %v1639 = vld [vmem:[%s7 + $0x114] sm:$0xf]
  %v1640 = vld [vmem:[%s7 + $0x118] sm:$0xf]
  %v1641 = vld [vmem:[%s7 + $0x11c] sm:$0xf]
  %v1642 = vld [vmem:[%s7 + $0x120] sm:$0xf]
  %v1643 = vld [vmem:[%s7 + $0x124] sm:$0xf]
  %v1644 = vld [vmem:[%s7 + $0x128] sm:$0xf]
  %v1645 = vld [vmem:[%s7 + $0x12c] sm:$0xf]
  %v1646 = vld [vmem:[%s7 + $0x130] sm:$0xf]
  %v1647 = vld [vmem:[%s7 + $0x134] sm:$0xf]
  %v1648 = vld [vmem:[%s7 + $0x138] sm:$0xf]
  %v1649 = vld [vmem:[%s7 + $0x13c] sm:$0xf]
  %v1650 = vld [vmem:[%s7 + $0x140] sm:$0xf]
  %v1651 = vld [vmem:[%s7 + $0x144] sm:$0xf]
  %v1652 = vld [vmem:[%s7 + $0x148] sm:$0xf]
  %v1653 = vld [vmem:[%s7 + $0x14c] sm:$0xf]
  %v1654 = vld [vmem:[%s7 + $0x150] sm:$0xf]
  %v1655 = vld [vmem:[%s7 + $0x154] sm:$0xf]
  %v1656 = vld [vmem:[%s7 + $0x158] sm:$0xf]
  %v1657 = vld [vmem:[%s7 + $0x15c] sm:$0xf]
  %v1658 = vld [vmem:[%s7 + $0x160] sm:$0xf]
  %v1659 = vld [vmem:[%s7 + $0x164] sm:$0xf]
  %v1660 = vld [vmem:[%s7 + $0x168] sm:$0xf]
  %v1661 = vld [vmem:[%s7 + $0x16c] sm:$0xf]
  %v1662 = vld [vmem:[%s7 + $0x170] sm:$0xf]
  %v1663 = vld [vmem:[%s7 + $0x174] sm:$0xf]
  %v1664 = vld [vmem:[%s7 + $0x178] sm:$0xf]
  %v1665 = vld [vmem:[%s7 + $0x17c] sm:$0xf]
  %v1666 = vld [vmem:[%s8] sm:$0x1]
  %v1668 = vlaneseq
  %v1669 = vshrl.u32 %v1668, 7
  %v1670 = vsub.s32 0, %v1669
  %v1671 = vrot.slane %v1666, %v1670
  %v1721 = vunpack.c.l.b16 %v1522
  %v1722 = vunpack.c.h.b16 %v1522
  %v1723 = vunpack.c.l.b16 %v1523
  %v1724 = vunpack.c.h.b16 %v1523
  %v1725 = vunpack.c.l.b16 %v1524
  %v1726 = vunpack.c.h.b16 %v1524
  %v1727 = vunpack.c.l.b16 %v1525
  %v1728 = vunpack.c.h.b16 %v1525
  %v1729 = vunpack.c.l.b16 %v1526
  %v1730 = vunpack.c.h.b16 %v1526
  %v1731 = vunpack.c.l.b16 %v1527
  %v1732 = vunpack.c.h.b16 %v1527
  %v1733 = vunpack.c.l.b16 %v1528
  %v1734 = vunpack.c.h.b16 %v1528
  %v1735 = vunpack.c.l.b16 %v1529
  %v1736 = vunpack.c.h.b16 %v1529
  %v1737 = vunpack.c.l.b16 %v1530
  %v1738 = vunpack.c.h.b16 %v1530
  %v1739 = vunpack.c.l.b16 %v1531
  %v1740 = vunpack.c.h.b16 %v1531
  %v1741 = vunpack.c.l.b16 %v1532
  %v1742 = vunpack.c.h.b16 %v1532
  %v1743 = vunpack.c.l.b16 %v1533
  %v1744 = vunpack.c.h.b16 %v1533
  %v1745 = vunpack.c.l.b16 %v1534
  %v1746 = vunpack.c.h.b16 %v1534
  %v1747 = vunpack.c.l.b16 %v1535
  %v1748 = vunpack.c.h.b16 %v1535
  %v1749 = vunpack.c.l.b16 %v1536
  %v1750 = vunpack.c.h.b16 %v1536
  %v1751 = vunpack.c.l.b16 %v1537
  %v1752 = vunpack.c.h.b16 %v1537
  %v1753 = vunpack.c.l.b16 %v1538
  %v1754 = vunpack.c.h.b16 %v1538
  %v1755 = vunpack.c.l.b16 %v1539
  %v1756 = vunpack.c.h.b16 %v1539
  %v1757 = vunpack.c.l.b16 %v1540
  %v1758 = vunpack.c.h.b16 %v1540
  %v1759 = vunpack.c.l.b16 %v1541
  %v1760 = vunpack.c.h.b16 %v1541
  %v1761 = vunpack.c.l.b16 %v1542
  %v1762 = vunpack.c.h.b16 %v1542
  %v1763 = vunpack.c.l.b16 %v1543
  %v1764 = vunpack.c.h.b16 %v1543
  %v1765 = vunpack.c.l.b16 %v1544
  %v1766 = vunpack.c.h.b16 %v1544
  %v1767 = vunpack.c.l.b16 %v1545
  %v1768 = vunpack.c.h.b16 %v1545
  %v1769 = vunpack.c.l.b16 %v1546
  %v1770 = vunpack.c.h.b16 %v1546
  %v1771 = vunpack.c.l.b16 %v1547
  %v1772 = vunpack.c.h.b16 %v1547
  %v1773 = vunpack.c.l.b16 %v1548
  %v1774 = vunpack.c.h.b16 %v1548
  %v1775 = vunpack.c.l.b16 %v1549
  %v1776 = vunpack.c.h.b16 %v1549
  %v1777 = vunpack.c.l.b16 %v1550
  %v1778 = vunpack.c.h.b16 %v1550
  %v1779 = vunpack.c.l.b16 %v1551
  %v1780 = vunpack.c.h.b16 %v1551
  %v1781 = vunpack.c.l.b16 %v1552
  %v1782 = vunpack.c.h.b16 %v1552
  %v1783 = vunpack.c.l.b16 %v1553
  %v1784 = vunpack.c.h.b16 %v1553
  %v1785 = vunpack.c.l.b16 %v1554
  %v1786 = vunpack.c.h.b16 %v1554
  %v1787 = vunpack.c.l.b16 %v1555
  %v1788 = vunpack.c.h.b16 %v1555
  %v1789 = vunpack.c.l.b16 %v1556
  %v1790 = vunpack.c.h.b16 %v1556
  %v1791 = vunpack.c.l.b16 %v1557
  %v1792 = vunpack.c.h.b16 %v1557
  %v1793 = vunpack.c.l.b16 %v1558
  %v1794 = vunpack.c.h.b16 %v1558
  %v1795 = vunpack.c.l.b16 %v1559
  %v1796 = vunpack.c.h.b16 %v1559
  %v1797 = vunpack.c.l.b16 %v1560
  %v1798 = vunpack.c.h.b16 %v1560
  %v1799 = vunpack.c.l.b16 %v1561
  %v1800 = vunpack.c.h.b16 %v1561
  %v1801 = vunpack.c.l.b16 %v1562
  %v1802 = vunpack.c.h.b16 %v1562
  %v1803 = vunpack.c.l.b16 %v1563
  %v1804 = vunpack.c.h.b16 %v1563
  %v1805 = vunpack.c.l.b16 %v1564
  %v1806 = vunpack.c.h.b16 %v1564
  %v1807 = vunpack.c.l.b16 %v1565
  %v1808 = vunpack.c.h.b16 %v1565
  %v1809 = vunpack.c.l.b16 %v1566
  %v1810 = vunpack.c.h.b16 %v1566
  %v1811 = vunpack.c.l.b16 %v1567
  %v1812 = vunpack.c.h.b16 %v1567
  %v1813 = vunpack.c.l.b16 %v1568
  %v1814 = vunpack.c.h.b16 %v1568
  %v1815 = vunpack.c.l.b16 %v1569
  %v1816 = vunpack.c.h.b16 %v1569
  %v1817 = vpack.c.b16 %v1727, %v1721
  %v1818 = vpack.c.b16 %v1728, %v1722
  %v1819 = vpack.c.b16 %v1729, %v1723
  %v1820 = vpack.c.b16 %v1730, %v1724
  %v1821 = vpack.c.b16 %v1731, %v1725
  %v1822 = vpack.c.b16 %v1732, %v1726
  %v1823 = vpack.c.b16 %v1739, %v1733
  %v1824 = vpack.c.b16 %v1740, %v1734
  %v1825 = vpack.c.b16 %v1741, %v1735
  %v1826 = vpack.c.b16 %v1742, %v1736
  %v1827 = vpack.c.b16 %v1743, %v1737
  %v1828 = vpack.c.b16 %v1744, %v1738
  %v1829 = vpack.c.b16 %v1751, %v1745
  %v1830 = vpack.c.b16 %v1752, %v1746
  %v1831 = vpack.c.b16 %v1753, %v1747
  %v1832 = vpack.c.b16 %v1754, %v1748
  %v1833 = vpack.c.b16 %v1755, %v1749
  %v1834 = vpack.c.b16 %v1756, %v1750
  %v1835 = vpack.c.b16 %v1763, %v1757
  %v1836 = vpack.c.b16 %v1764, %v1758
  %v1837 = vpack.c.b16 %v1765, %v1759
  %v1838 = vpack.c.b16 %v1766, %v1760
  %v1839 = vpack.c.b16 %v1767, %v1761
  %v1840 = vpack.c.b16 %v1768, %v1762
  %v1841 = vpack.c.b16 %v1775, %v1769
  %v1842 = vpack.c.b16 %v1776, %v1770
  %v1843 = vpack.c.b16 %v1777, %v1771
  %v1844 = vpack.c.b16 %v1778, %v1772
  %v1845 = vpack.c.b16 %v1779, %v1773
  %v1846 = vpack.c.b16 %v1780, %v1774
  %v1847 = vpack.c.b16 %v1787, %v1781
  %v1848 = vpack.c.b16 %v1788, %v1782
  %v1849 = vpack.c.b16 %v1789, %v1783
  %v1850 = vpack.c.b16 %v1790, %v1784
  %v1851 = vpack.c.b16 %v1791, %v1785
  %v1852 = vpack.c.b16 %v1792, %v1786
  %v1853 = vpack.c.b16 %v1799, %v1793
  %v1854 = vpack.c.b16 %v1800, %v1794
  %v1855 = vpack.c.b16 %v1801, %v1795
  %v1856 = vpack.c.b16 %v1802, %v1796
  %v1857 = vpack.c.b16 %v1803, %v1797
  %v1858 = vpack.c.b16 %v1804, %v1798
  %v1859 = vpack.c.b16 %v1811, %v1805
  %v1860 = vpack.c.b16 %v1812, %v1806
  %v1861 = vpack.c.b16 %v1813, %v1807
  %v1862 = vpack.c.b16 %v1814, %v1808
  %v1863 = vpack.c.b16 %v1815, %v1809
  %v1864 = vpack.c.b16 %v1816, %v1810
  %v2009 = vunpack.c.l.b16 %v1570
  %v2010 = vunpack.c.l.b16 %v1571
  %v2011 = vunpack.c.l.b16 %v1572
  %v2012 = vunpack.c.l.b16 %v1573
  %v2013 = vunpack.c.l.b16 %v1574
  %v2014 = vunpack.c.l.b16 %v1575
  %v2015 = vunpack.c.l.b16 %v1576
  %v2016 = vunpack.c.l.b16 %v1577
  %v2017 = vunpack.c.l.b16 %v1578
  %v2018 = vunpack.c.l.b16 %v1579
  %v2019 = vunpack.c.l.b16 %v1580
  %v2020 = vunpack.c.l.b16 %v1581
  %v2021 = vunpack.c.l.b16 %v1582
  %v2022 = vunpack.c.l.b16 %v1583
  %v2023 = vunpack.c.l.b16 %v1584
  %v2024 = vunpack.c.l.b16 %v1585
  %v2025 = vunpack.c.l.b16 %v1586
  %v2026 = vunpack.c.l.b16 %v1587
  %v2027 = vunpack.c.l.b16 %v1588
  %v2028 = vunpack.c.l.b16 %v1589
  %v2029 = vunpack.c.l.b16 %v1590
  %v2030 = vunpack.c.l.b16 %v1591
  %v2031 = vunpack.c.l.b16 %v1592
  %v2032 = vunpack.c.l.b16 %v1593
  %v2033 = vunpack.c.l.b16 %v1594
  %v2034 = vunpack.c.l.b16 %v1595
  %v2035 = vunpack.c.l.b16 %v1596
  %v2036 = vunpack.c.l.b16 %v1597
  %v2037 = vunpack.c.l.b16 %v1598
  %v2038 = vunpack.c.l.b16 %v1599
  %v2039 = vunpack.c.l.b16 %v1600
  %v2040 = vunpack.c.l.b16 %v1601
  %v2041 = vunpack.c.l.b16 %v1602
  %v2042 = vunpack.c.l.b16 %v1603
  %v2043 = vunpack.c.l.b16 %v1604
  %v2044 = vunpack.c.l.b16 %v1605
  %v2045 = vunpack.c.l.b16 %v1606
  %v2046 = vunpack.c.l.b16 %v1607
  %v2047 = vunpack.c.l.b16 %v1608
  %v2048 = vunpack.c.l.b16 %v1609
  %v2049 = vunpack.c.l.b16 %v1610
  %v2050 = vunpack.c.l.b16 %v1611
  %v2051 = vunpack.c.l.b16 %v1612
  %v2052 = vunpack.c.l.b16 %v1613
  %v2053 = vunpack.c.l.b16 %v1614
  %v2054 = vunpack.c.l.b16 %v1615
  %v2055 = vunpack.c.l.b16 %v1616
  %v2056 = vunpack.c.l.b16 %v1617
  %v2057 = vunpack.c.l.b16 %v1618
  %v2058 = vunpack.c.l.b16 %v1619
  %v2059 = vunpack.c.l.b16 %v1620
  %v2060 = vunpack.c.l.b16 %v1621
  %v2061 = vunpack.c.l.b16 %v1622
  %v2062 = vunpack.c.l.b16 %v1623
  %v2063 = vunpack.c.l.b16 %v1624
  %v2064 = vunpack.c.l.b16 %v1625
  %v2065 = vunpack.c.l.b16 %v1626
  %v2066 = vunpack.c.l.b16 %v1627
  %v2067 = vunpack.c.l.b16 %v1628
  %v2068 = vunpack.c.l.b16 %v1629
  %v2069 = vunpack.c.l.b16 %v1630
  %v2070 = vunpack.c.l.b16 %v1631
  %v2071 = vunpack.c.l.b16 %v1632
  %v2072 = vunpack.c.l.b16 %v1633
  %v2073 = vunpack.c.l.b16 %v1634
  %v2074 = vunpack.c.l.b16 %v1635
  %v2075 = vunpack.c.l.b16 %v1636
  %v2076 = vunpack.c.l.b16 %v1637
  %v2077 = vunpack.c.l.b16 %v1638
  %v2078 = vunpack.c.l.b16 %v1639
  %v2079 = vunpack.c.l.b16 %v1640
  %v2080 = vunpack.c.l.b16 %v1641
  %v2081 = vunpack.c.l.b16 %v1642
  %v2082 = vunpack.c.l.b16 %v1643
  %v2083 = vunpack.c.l.b16 %v1644
  %v2084 = vunpack.c.l.b16 %v1645
  %v2085 = vunpack.c.l.b16 %v1646
  %v2086 = vunpack.c.l.b16 %v1647
  %v2087 = vunpack.c.l.b16 %v1648
  %v2088 = vunpack.c.l.b16 %v1649
  %v2089 = vunpack.c.l.b16 %v1650
  %v2090 = vunpack.c.l.b16 %v1651
  %v2091 = vunpack.c.l.b16 %v1652
  %v2092 = vunpack.c.l.b16 %v1653
  %v2093 = vunpack.c.l.b16 %v1654
  %v2094 = vunpack.c.l.b16 %v1655
  %v2095 = vunpack.c.l.b16 %v1656
  %v2096 = vunpack.c.l.b16 %v1657
  %v2097 = vunpack.c.l.b16 %v1658
  %v2098 = vunpack.c.l.b16 %v1659
  %v2099 = vunpack.c.l.b16 %v1660
  %v2100 = vunpack.c.l.b16 %v1661
  %v2101 = vunpack.c.l.b16 %v1662
  %v2102 = vunpack.c.l.b16 %v1663
  %v2103 = vunpack.c.l.b16 %v1664
  %v2104 = vunpack.c.l.b16 %v1665
  %v2105 = vpack.c.b16 %v2010, %v2009
  %v2106 = vpack.c.b16 %v2012, %v2011
  %v2107 = vpack.c.b16 %v2014, %v2013
  %v2108 = vpack.c.b16 %v2016, %v2015
  %v2109 = vpack.c.b16 %v2018, %v2017
  %v2110 = vpack.c.b16 %v2020, %v2019
  %v2111 = vpack.c.b16 %v2022, %v2021
  %v2112 = vpack.c.b16 %v2024, %v2023
  %v2113 = vpack.c.b16 %v2026, %v2025
  %v2114 = vpack.c.b16 %v2028, %v2027
  %v2115 = vpack.c.b16 %v2030, %v2029
  %v2116 = vpack.c.b16 %v2032, %v2031
  %v2117 = vpack.c.b16 %v2034, %v2033
  %v2118 = vpack.c.b16 %v2036, %v2035
  %v2119 = vpack.c.b16 %v2038, %v2037
  %v2120 = vpack.c.b16 %v2040, %v2039
  %v2121 = vpack.c.b16 %v2042, %v2041
  %v2122 = vpack.c.b16 %v2044, %v2043
  %v2123 = vpack.c.b16 %v2046, %v2045
  %v2124 = vpack.c.b16 %v2048, %v2047
  %v2125 = vpack.c.b16 %v2050, %v2049
  %v2126 = vpack.c.b16 %v2052, %v2051
  %v2127 = vpack.c.b16 %v2054, %v2053
  %v2128 = vpack.c.b16 %v2056, %v2055
  %v2129 = vpack.c.b16 %v2058, %v2057
  %v2130 = vpack.c.b16 %v2060, %v2059
  %v2131 = vpack.c.b16 %v2062, %v2061
  %v2132 = vpack.c.b16 %v2064, %v2063
  %v2133 = vpack.c.b16 %v2066, %v2065
  %v2134 = vpack.c.b16 %v2068, %v2067
  %v2135 = vpack.c.b16 %v2070, %v2069
  %v2136 = vpack.c.b16 %v2072, %v2071
  %v2137 = vpack.c.b16 %v2074, %v2073
  %v2138 = vpack.c.b16 %v2076, %v2075
  %v2139 = vpack.c.b16 %v2078, %v2077
  %v2140 = vpack.c.b16 %v2080, %v2079
  %v2141 = vpack.c.b16 %v2082, %v2081
  %v2142 = vpack.c.b16 %v2084, %v2083
  %v2143 = vpack.c.b16 %v2086, %v2085
  %v2144 = vpack.c.b16 %v2088, %v2087
  %v2145 = vpack.c.b16 %v2090, %v2089
  %v2146 = vpack.c.b16 %v2092, %v2091
  %v2147 = vpack.c.b16 %v2094, %v2093
  %v2148 = vpack.c.b16 %v2096, %v2095
  %v2149 = vpack.c.b16 %v2098, %v2097
  %v2150 = vpack.c.b16 %v2100, %v2099
  %v2151 = vpack.c.b16 %v2102, %v2101
  %v2152 = vpack.c.b16 %v2104, %v2103
  %2201 = vmatprep.subr.bf16.mxu0 0
  %2202 = vmatpush1.bf16.msra.mxu0 %v2105
  %2203 = vmatprep.subr.bf16.mxu0 0
  %2204 = vmatpush1.bf16.msra.mxu0 %v2106
  %2205 = vmatprep.subr.bf16.mxu0 0
  %2206 = vmatpush1.bf16.msra.mxu0 %v2107
  %2207 = vmatprep.subr.bf16.mxu0 0
  %2208 = vmatpush1.bf16.msra.mxu0 %v2108
  %2209 = vmatprep.subr.bf16.mxu0 0
  %2210 = vmatpush1.bf16.msra.mxu0 %v2109
  %2211 = vmatprep.subr.bf16.mxu0 0
  %2212 = vmatpush1.bf16.msra.mxu0 %v2110
  %2213 = vmatprep.subr.bf16.mxu0 0
  %2214 = vmatpush1.bf16.msra.mxu0 %v2111
  %2215 = vmatprep.subr.bf16.mxu0 0
  %2216 = vmatpush1.bf16.msra.mxu0 %v2112
  %2217 = vmatprep.subr.bf16.mxu0 0
  %2218 = vmatpush1.bf16.msra.mxu0 %v2113
  %2219 = vmatprep.subr.bf16.mxu0 0
  %2220 = vmatpush1.bf16.msra.mxu0 %v2114
  %2221 = vmatprep.subr.bf16.mxu0 0
  %2222 = vmatpush1.bf16.msra.mxu0 %v2115
  %2223 = vmatprep.subr.bf16.mxu0 0
  %2224 = vmatpush1.bf16.msra.mxu0 %v2116
  %2225 = vmatprep.subr.bf16.mxu0 0
  %2226 = vmatpush1.bf16.msra.mxu0 %v2117
  %2227 = vmatprep.subr.bf16.mxu0 0
  %2228 = vmatpush1.bf16.msra.mxu0 %v2118
  %2229 = vmatprep.subr.bf16.mxu0 0
  %2230 = vmatpush1.bf16.msra.mxu0 %v2119
  %2231 = vmatprep.subr.bf16.mxu0 0
  %2232 = vmatpush1.bf16.msra.mxu0 %v2120
  %2233 = vmatprep.mubr.bf16.mxu0 %v1818
  %2234 = vmatmul.mubr.bf16.gmra.mrb[0].mxu0 %v1817
  %v2235 = vpop.f32.mrb[0].mxu0
  %v2236 = vadd.f32 %v1671, %v2235
  %v2237 = vpop.f32.mrb[0].mxu0
  %v2238 = vpop.f32.mrb[0].mxu0
  %v2239 = vadd.f32 %v1671, %v2238
  %v2240 = vpop.f32.mrb[0].mxu0
  %2241 = vmatprep.mubr.bf16.mxu0 %v1824
  %2242 = vmatmul.mubr.bf16.gmra.mrb[0].mxu0 %v1823
  %v2243 = vpop.f32.mrb[0].mxu0
  %v2244 = vadd.f32 %v1671, %v2243
  %v2245 = vpop.f32.mrb[0].mxu0
  %v2246 = vpop.f32.mrb[0].mxu0
  %v2247 = vadd.f32 %v1671, %v2246
  %v2248 = vpop.f32.mrb[0].mxu0
  %2249 = vmatprep.mubr.bf16.mxu0 %v1830
  %2250 = vmatmul.mubr.bf16.gmra.mrb[0].mxu0 %v1829
  %v2251 = vpop.f32.mrb[0].mxu0
  %v2252 = vadd.f32 %v1671, %v2251
  %v2253 = vpop.f32.mrb[0].mxu0
  %v2254 = vpop.f32.mrb[0].mxu0
  %v2255 = vadd.f32 %v1671, %v2254
  %v2256 = vpop.f32.mrb[0].mxu0
  %2257 = vmatprep.mubr.bf16.mxu0 %v1836
  %2258 = vmatmul.mubr.bf16.gmra.mrb[0].mxu0 %v1835
  %v2259 = vpop.f32.mrb[0].mxu0
  %v2260 = vadd.f32 %v1671, %v2259
  %v2261 = vpop.f32.mrb[0].mxu0
  %v2262 = vpop.f32.mrb[0].mxu0
  %v2263 = vadd.f32 %v1671, %v2262
  %v2264 = vpop.f32.mrb[0].mxu0
  %2265 = vmatprep.mubr.bf16.mxu0 %v1842
  %2266 = vmatmul.mubr.bf16.gmra.mrb[0].mxu0 %v1841
  %v2267 = vpop.f32.mrb[0].mxu0
  %v2268 = vadd.f32 %v1671, %v2267
  %v2269 = vpop.f32.mrb[0].mxu0
  %v2270 = vpop.f32.mrb[0].mxu0
  %v2271 = vadd.f32 %v1671, %v2270
  %v2272 = vpop.f32.mrb[0].mxu0
  %2273 = vmatprep.mubr.bf16.mxu0 %v1848
  %2274 = vmatmul.mubr.bf16.gmra.mrb[0].mxu0 %v1847
  %v2275 = vpop.f32.mrb[0].mxu0
  %v2276 = vadd.f32 %v1671, %v2275
  %v2277 = vpop.f32.mrb[0].mxu0
  %v2278 = vpop.f32.mrb[0].mxu0
  %v2279 = vadd.f32 %v1671, %v2278
  %v2280 = vpop.f32.mrb[0].mxu0
  %2281 = vmatprep.mubr.bf16.mxu0 %v1854
  %2282 = vmatmul.mubr.bf16.gmra.mrb[0].mxu0 %v1853
  %v2283 = vpop.f32.mrb[0].mxu0
  %v2284 = vadd.f32 %v1671, %v2283
  %v2285 = vpop.f32.mrb[0].mxu0
  %v2286 = vpop.f32.mrb[0].mxu0
  %v2287 = vadd.f32 %v1671, %v2286
  %v2288 = vpop.f32.mrb[0].mxu0
  %2289 = vmatprep.mubr.bf16.mxu0 %v1860
  %2290 = vmatmul.mubr.bf16.gmra.mrb[0].mxu0 %v1859
  %v2291 = vpop.f32.mrb[0].mxu0
  %v2292 = vadd.f32 %v1671, %v2291
  %v2293 = vpop.f32.mrb[0].mxu0
  %v2294 = vpop.f32.mrb[0].mxu0
  %v2295 = vadd.f32 %v1671, %v2294
  %v2296 = vpop.f32.mrb[0].mxu0
  %2297 = vdwg.mxu0
  %2298 = vmatprep.subr.bf16.mxu0 0
  %2299 = vmatpush1.bf16.msra.mxu0 %v2121
  %2300 = vmatprep.subr.bf16.mxu0 0
  %2301 = vmatpush1.bf16.msra.mxu0 %v2122
  %2302 = vmatprep.subr.bf16.mxu0 0
  %2303 = vmatpush1.bf16.msra.mxu0 %v2123
  %2304 = vmatprep.subr.bf16.mxu0 0
  %2305 = vmatpush1.bf16.msra.mxu0 %v2124
  %2306 = vmatprep.subr.bf16.mxu0 0
  %2307 = vmatpush1.bf16.msra.mxu0 %v2125
  %2308 = vmatprep.subr.bf16.mxu0 0
  %2309 = vmatpush1.bf16.msra.mxu0 %v2126
  %2310 = vmatprep.subr.bf16.mxu0 0
  %2311 = vmatpush1.bf16.msra.mxu0 %v2127
  %2312 = vmatprep.subr.bf16.mxu0 0
  %2313 = vmatpush1.bf16.msra.mxu0 %v2128
  %2314 = vmatprep.subr.bf16.mxu0 0
  %2315 = vmatpush1.bf16.msra.mxu0 %v2129
  %2316 = vmatprep.subr.bf16.mxu0 0
  %2317 = vmatpush1.bf16.msra.mxu0 %v2130
  %2318 = vmatprep.subr.bf16.mxu0 0
  %2319 = vmatpush1.bf16.msra.mxu0 %v2131
  %2320 = vmatprep.subr.bf16.mxu0 0
  %2321 = vmatpush1.bf16.msra.mxu0 %v2132
  %2322 = vmatprep.subr.bf16.mxu0 0
  %2323 = vmatpush1.bf16.msra.mxu0 %v2133
  %2324 = vmatprep.subr.bf16.mxu0 0
  %2325 = vmatpush1.bf16.msra.mxu0 %v2134
  %2326 = vmatprep.subr.bf16.mxu0 0
  %2327 = vmatpush1.bf16.msra.mxu0 %v2135
  %2328 = vmatprep.subr.bf16.mxu0 0
  %2329 = vmatpush1.bf16.msra.mxu0 %v2136
  %2330 = vmatprep.mubr.bf16.mxu0 %v1820
  %2331 = vmatmul.mubr.bf16.gmra.mrb[0].mxu0 %v1819
  %v2332 = vpop.f32.mrb[0].mxu0
  %v2333 = vadd.f32 %v2236, %v2332
  %v2334 = vpop.f32.mrb[0].mxu0
  %v2335 = vpop.f32.mrb[0].mxu0
  %v2336 = vadd.f32 %v2239, %v2335
  %v2337 = vpop.f32.mrb[0].mxu0
  %2338 = vmatprep.mubr.bf16.mxu0 %v1826
  %2339 = vmatmul.mubr.bf16.gmra.mrb[0].mxu0 %v1825
  %v2340 = vpop.f32.mrb[0].mxu0
  %v2341 = vadd.f32 %v2244, %v2340
  %v2342 = vpop.f32.mrb[0].mxu0
  %v2343 = vpop.f32.mrb[0].mxu0
  %v2344 = vadd.f32 %v2247, %v2343
  %v2345 = vpop.f32.mrb[0].mxu0
  %2346 = vmatprep.mubr.bf16.mxu0 %v1832
  %2347 = vmatmul.mubr.bf16.gmra.mrb[0].mxu0 %v1831
  %v2348 = vpop.f32.mrb[0].mxu0
  %v2349 = vadd.f32 %v2252, %v2348
  %v2350 = vpop.f32.mrb[0].mxu0
  %v2351 = vpop.f32.mrb[0].mxu0
  %v2352 = vadd.f32 %v2255, %v2351
  %v2353 = vpop.f32.mrb[0].mxu0
  %2354 = vmatprep.mubr.bf16.mxu0 %v1838
  %2355 = vmatmul.mubr.bf16.gmra.mrb[0].mxu0 %v1837
  %v2356 = vpop.f32.mrb[0].mxu0
  %v2357 = vadd.f32 %v2260, %v2356
  %v2358 = vpop.f32.mrb[0].mxu0
  %v2359 = vpop.f32.mrb[0].mxu0
  %v2360 = vadd.f32 %v2263, %v2359
  %v2361 = vpop.f32.mrb[0].mxu0
  %2362 = vmatprep.mubr.bf16.mxu0 %v1844
  %2363 = vmatmul.mubr.bf16.gmra.mrb[0].mxu0 %v1843
  %v2364 = vpop.f32.mrb[0].mxu0
  %v2365 = vadd.f32 %v2268, %v2364
  %v2366 = vpop.f32.mrb[0].mxu0
  %v2367 = vpop.f32.mrb[0].mxu0
  %v2368 = vadd.f32 %v2271, %v2367
  %v2369 = vpop.f32.mrb[0].mxu0
  %2370 = vmatprep.mubr.bf16.mxu0 %v1850
  %2371 = vmatmul.mubr.bf16.gmra.mrb[0].mxu0 %v1849
  %v2372 = vpop.f32.mrb[0].mxu0
  %v2373 = vadd.f32 %v2276, %v2372
  %v2374 = vpop.f32.mrb[0].mxu0
  %v2375 = vpop.f32.mrb[0].mxu0
  %v2376 = vadd.f32 %v2279, %v2375
  %v2377 = vpop.f32.mrb[0].mxu0
  %2378 = vmatprep.mubr.bf16.mxu0 %v1856
  %2379 = vmatmul.mubr.bf16.gmra.mrb[0].mxu0 %v1855
  %v2380 = vpop.f32.mrb[0].mxu0
  %v2381 = vadd.f32 %v2284, %v2380
  %v2382 = vpop.f32.mrb[0].mxu0
  %v2383 = vpop.f32.mrb[0].mxu0
  %v2384 = vadd.f32 %v2287, %v2383
  %v2385 = vpop.f32.mrb[0].mxu0
  %2386 = vmatprep.mubr.bf16.mxu0 %v1862
  %2387 = vmatmul.mubr.bf16.gmra.mrb[0].mxu0 %v1861
  %v2388 = vpop.f32.mrb[0].mxu0
  %v2389 = vadd.f32 %v2292, %v2388
  %v2390 = vpop.f32.mrb[0].mxu0
  %v2391 = vpop.f32.mrb[0].mxu0
  %v2392 = vadd.f32 %v2295, %v2391
  %v2393 = vpop.f32.mrb[0].mxu0
  %2394 = vdwg.mxu0
  %2395 = vmatprep.subr.bf16.mxu0 0
  %2396 = vmatpush1.bf16.msra.mxu0 %v2137
  %2397 = vmatprep.subr.bf16.mxu0 0
  %2398 = vmatpush1.bf16.msra.mxu0 %v2138
  %2399 = vmatprep.subr.bf16.mxu0 0
  %2400 = vmatpush1.bf16.msra.mxu0 %v2139
  %2401 = vmatprep.subr.bf16.mxu0 0
  %2402 = vmatpush1.bf16.msra.mxu0 %v2140
  %2403 = vmatprep.subr.bf16.mxu0 0
  %2404 = vmatpush1.bf16.msra.mxu0 %v2141
  %2405 = vmatprep.subr.bf16.mxu0 0
  %2406 = vmatpush1.bf16.msra.mxu0 %v2142
  %2407 = vmatprep.subr.bf16.mxu0 0
  %2408 = vmatpush1.bf16.msra.mxu0 %v2143
  %2409 = vmatprep.subr.bf16.mxu0 0
  %2410 = vmatpush1.bf16.msra.mxu0 %v2144
  %2411 = vmatprep.subr.bf16.mxu0 0
  %2412 = vmatpush1.bf16.msra.mxu0 %v2145
  %2413 = vmatprep.subr.bf16.mxu0 0
  %2414 = vmatpush1.bf16.msra.mxu0 %v2146
  %2415 = vmatprep.subr.bf16.mxu0 0
  %2416 = vmatpush1.bf16.msra.mxu0 %v2147
  %2417 = vmatprep.subr.bf16.mxu0 0
  %2418 = vmatpush1.bf16.msra.mxu0 %v2148
  %2419 = vmatprep.subr.bf16.mxu0 0
  %2420 = vmatpush1.bf16.msra.mxu0 %v2149
  %2421 = vmatprep.subr.bf16.mxu0 0
  %2422 = vmatpush1.bf16.msra.mxu0 %v2150
  %2423 = vmatprep.subr.bf16.mxu0 0
  %2424 = vmatpush1.bf16.msra.mxu0 %v2151
  %2425 = vmatprep.subr.bf16.mxu0 0
  %2426 = vmatpush1.bf16.msra.mxu0 %v2152
  %2427 = vmatprep.mubr.bf16.mxu0 %v1822
  %2428 = vmatmul.mubr.bf16.gmra.mrb[0].mxu0 %v1821
  %v2429 = vpop.f32.mrb[0].mxu0
  %v2430 = vadd.f32 %v2333, %v2429
  %v2431 = vpop.f32.mrb[0].mxu0
  %v2432 = vpop.f32.mrb[0].mxu0
  %v2433 = vadd.f32 %v2336, %v2432
  %v2434 = vpop.f32.mrb[0].mxu0
  %2435 = vmatprep.mubr.bf16.mxu0 %v1828
  %2436 = vmatmul.mubr.bf16.gmra.mrb[0].mxu0 %v1827
  %v2437 = vpop.f32.mrb[0].mxu0
  %v2438 = vadd.f32 %v2341, %v2437
  %v2439 = vpop.f32.mrb[0].mxu0
  %v2440 = vpop.f32.mrb[0].mxu0
  %v2441 = vadd.f32 %v2344, %v2440
  %v2442 = vpop.f32.mrb[0].mxu0
  %2443 = vmatprep.mubr.bf16.mxu0 %v1834
  %2444 = vmatmul.mubr.bf16.gmra.mrb[0].mxu0 %v1833
  %v2445 = vpop.f32.mrb[0].mxu0
  %v2446 = vadd.f32 %v2349, %v2445
  %v2447 = vpop.f32.mrb[0].mxu0
  %v2448 = vpop.f32.mrb[0].mxu0
  %v2449 = vadd.f32 %v2352, %v2448
  %v2450 = vpop.f32.mrb[0].mxu0
  %2451 = vmatprep.mubr.bf16.mxu0 %v1840
  %2452 = vmatmul.mubr.bf16.gmra.mrb[0].mxu0 %v1839
  %v2453 = vpop.f32.mrb[0].mxu0
  %v2454 = vadd.f32 %v2357, %v2453
  %v2455 = vpop.f32.mrb[0].mxu0
  %v2456 = vpop.f32.mrb[0].mxu0
  %v2457 = vadd.f32 %v2360, %v2456
  %v2458 = vpop.f32.mrb[0].mxu0
  %2459 = vmatprep.mubr.bf16.mxu0 %v1846
  %2460 = vmatmul.mubr.bf16.gmra.mrb[0].mxu0 %v1845
  %v2461 = vpop.f32.mrb[0].mxu0
  %v2462 = vadd.f32 %v2365, %v2461
  %v2463 = vpop.f32.mrb[0].mxu0
  %v2464 = vpop.f32.mrb[0].mxu0
  %v2465 = vadd.f32 %v2368, %v2464
  %v2466 = vpop.f32.mrb[0].mxu0
  %2467 = vmatprep.mubr.bf16.mxu0 %v1852
  %2468 = vmatmul.mubr.bf16.gmra.mrb[0].mxu0 %v1851
  %v2469 = vpop.f32.mrb[0].mxu0
  %v2470 = vadd.f32 %v2373, %v2469
  %v2471 = vpop.f32.mrb[0].mxu0
  %v2472 = vpop.f32.mrb[0].mxu0
  %v2473 = vadd.f32 %v2376, %v2472
  %v2474 = vpop.f32.mrb[0].mxu0
  %2475 = vmatprep.mubr.bf16.mxu0 %v1858
  %2476 = vmatmul.mubr.bf16.gmra.mrb[0].mxu0 %v1857
  %v2477 = vpop.f32.mrb[0].mxu0
  %v2478 = vadd.f32 %v2381, %v2477
  %v2479 = vpop.f32.mrb[0].mxu0
  %v2480 = vpop.f32.mrb[0].mxu0
  %v2481 = vadd.f32 %v2384, %v2480
  %v2482 = vpop.f32.mrb[0].mxu0
  %2483 = vmatprep.mubr.bf16.mxu0 %v1864
  %2484 = vmatmul.mubr.bf16.gmra.mrb[0].mxu0 %v1863
  %v2485 = vpop.f32.mrb[0].mxu0
  %v2486 = vadd.f32 %v2389, %v2485
  %v2487 = vpop.f32.mrb[0].mxu0
  %v2488 = vpop.f32.mrb[0].mxu0
  %v2489 = vadd.f32 %v2392, %v2488
  %v2490 = vpop.f32.mrb[0].mxu0
  %2491 = vdwg.mxu0
  %v2492 = vld [vmem:[%s5] sm:$0xff]
  %v2493 = vld [vmem:[%s5 + $0x8] sm:$0xff]
  %v2494 = vld [vmem:[%s5 + $0x10] sm:$0xff]
  %v2495 = vld [vmem:[%s5 + $0x18] sm:$0xff]
  %v2496 = vld [vmem:[%s5 + $0x20] sm:$0xff]
  %v2497 = vld [vmem:[%s5 + $0x28] sm:$0xff]
  %v2498 = vld [vmem:[%s5 + $0x30] sm:$0xff]
  %v2499 = vld [vmem:[%s5 + $0x38] sm:$0xff]
  %v2500 = vld [vmem:[%s5 + $0x40] sm:$0xff]
  %v2501 = vld [vmem:[%s5 + $0x48] sm:$0xff]
  %v2502 = vld [vmem:[%s5 + $0x50] sm:$0xff]
  %v2503 = vld [vmem:[%s5 + $0x58] sm:$0xff]
  %v2504 = vld [vmem:[%s5 + $0x60] sm:$0xff]
  %v2505 = vld [vmem:[%s5 + $0x68] sm:$0xff]
  %v2506 = vld [vmem:[%s5 + $0x70] sm:$0xff]
  %v2507 = vld [vmem:[%s5 + $0x78] sm:$0xff]
  %v2508 = vxor.u32 %v2492, 2147483648
  %v2509 = vxor.u32 %v2493, 2147483648
  %v2510 = vxor.u32 %v2494, 2147483648
  %v2511 = vxor.u32 %v2495, 2147483648
  %v2512 = vxor.u32 %v2496, 2147483648
  %v2513 = vxor.u32 %v2497, 2147483648
  %v2514 = vxor.u32 %v2498, 2147483648
  %v2515 = vxor.u32 %v2499, 2147483648
  %v2516 = vxor.u32 %v2500, 2147483648
  %v2517 = vxor.u32 %v2501, 2147483648
  %v2518 = vxor.u32 %v2502, 2147483648
  %v2519 = vxor.u32 %v2503, 2147483648
  %v2520 = vxor.u32 %v2504, 2147483648
  %v2521 = vxor.u32 %v2505, 2147483648
  %v2522 = vxor.u32 %v2506, 2147483648
  %v2523 = vxor.u32 %v2507, 2147483648
  %v2524 = vmul.f32 %v2508, 1.442695
  %v2525 = vpow.pop %v2524
  %v2526 = vmul.f32 %v2509, 1.442695
  %v2527 = vpow.pop %v2526
  %v2528 = vmul.f32 %v2510, 1.442695
  %v2529 = vpow.pop %v2528
  %v2530 = vmul.f32 %v2511, 1.442695
  %v2531 = vpow.pop %v2530
  %v2532 = vmul.f32 %v2512, 1.442695
  %v2533 = vpow.pop %v2532
  %v2534 = vmul.f32 %v2513, 1.442695
  %v2535 = vpow.pop %v2534
  %v2536 = vmul.f32 %v2514, 1.442695
  %v2537 = vpow.pop %v2536
  %v2538 = vmul.f32 %v2515, 1.442695
  %v2539 = vpow.pop %v2538
  %v2540 = vmul.f32 %v2516, 1.442695
  %v2541 = vpow.pop %v2540
  %v2542 = vmul.f32 %v2517, 1.442695
  %v2543 = vpow.pop %v2542
  %v2544 = vmul.f32 %v2518, 1.442695
  %v2545 = vpow.pop %v2544
  %v2546 = vmul.f32 %v2519, 1.442695
  %v2547 = vpow.pop %v2546
  %v2548 = vmul.f32 %v2520, 1.442695
  %v2549 = vpow.pop %v2548
  %v2550 = vmul.f32 %v2521, 1.442695
  %v2551 = vpow.pop %v2550
  %v2552 = vmul.f32 %v2522, 1.442695
  %v2553 = vpow.pop %v2552
  %v2554 = vmul.f32 %v2523, 1.442695
  %v2555 = vpow.pop %v2554
  %v2556 = vadd.f32 %v2525, 1.0
  %v2557 = vadd.f32 %v2527, 1.0
  %v2558 = vadd.f32 %v2529, 1.0
  %v2559 = vadd.f32 %v2531, 1.0
  %v2560 = vadd.f32 %v2533, 1.0
  %v2561 = vadd.f32 %v2535, 1.0
  %v2562 = vadd.f32 %v2537, 1.0
  %v2563 = vadd.f32 %v2539, 1.0
  %v2564 = vadd.f32 %v2541, 1.0
  %v2565 = vadd.f32 %v2543, 1.0
  %v2566 = vadd.f32 %v2545, 1.0
  %v2567 = vadd.f32 %v2547, 1.0
  %v2568 = vadd.f32 %v2549, 1.0
  %v2569 = vadd.f32 %v2551, 1.0
  %v2570 = vadd.f32 %v2553, 1.0
  %v2571 = vadd.f32 %v2555, 1.0
  %v2572 = vrcp.pop %v2556
  %v2573 = vmul.f32 1.0, %v2572
  %v2574 = vrcp.pop %v2557
  %v2575 = vmul.f32 1.0, %v2574
  %v2576 = vrcp.pop %v2558
  %v2577 = vmul.f32 1.0, %v2576
  %v2578 = vrcp.pop %v2559
  %v2579 = vmul.f32 1.0, %v2578
  %v2580 = vrcp.pop %v2560
  %v2581 = vmul.f32 1.0, %v2580
  %v2582 = vrcp.pop %v2561
  %v2583 = vmul.f32 1.0, %v2582
  %v2584 = vrcp.pop %v2562
  %v2585 = vmul.f32 1.0, %v2584
  %v2586 = vrcp.pop %v2563
  %v2587 = vmul.f32 1.0, %v2586
  %v2588 = vrcp.pop %v2564
  %v2589 = vmul.f32 1.0, %v2588
  %v2590 = vrcp.pop %v2565
  %v2591 = vmul.f32 1.0, %v2590
  %v2592 = vrcp.pop %v2566
  %v2593 = vmul.f32 1.0, %v2592
  %v2594 = vrcp.pop %v2567
  %v2595 = vmul.f32 1.0, %v2594
  %v2596 = vrcp.pop %v2568
  %v2597 = vmul.f32 1.0, %v2596
  %v2598 = vrcp.pop %v2569
  %v2599 = vmul.f32 1.0, %v2598
  %v2600 = vrcp.pop %v2570
  %v2601 = vmul.f32 1.0, %v2600
  %v2602 = vrcp.pop %v2571
  %v2603 = vmul.f32 1.0, %v2602
  %v2604 = vld [vmem:[%s9] sm:$0x1]
  %2606 = vset.pattern.permute.xlu0 0
  %2607 = vperm.xlu0 %2606, %v2573
  %v2608 = vpop.permute.xlu0 %2607
  %2611 = vset.pattern.permute.xlu0 0
  %2612 = vperm.xlu0 %2611, %v2575
  %v2613 = vpop.permute.xlu0 %2612
  %2616 = vset.pattern.permute.xlu0 0
  %2617 = vperm.xlu0 %2616, %v2577
  %v2618 = vpop.permute.xlu0 %2617
  %2621 = vset.pattern.permute.xlu0 0
  %2622 = vperm.xlu0 %2621, %v2579
  %v2623 = vpop.permute.xlu0 %2622
  %2626 = vset.pattern.permute.xlu0 0
  %2627 = vperm.xlu0 %2626, %v2581
  %v2628 = vpop.permute.xlu0 %2627
  %2631 = vset.pattern.permute.xlu0 0
  %2632 = vperm.xlu0 %2631, %v2583
  %v2633 = vpop.permute.xlu0 %2632
  %2636 = vset.pattern.permute.xlu0 0
  %2637 = vperm.xlu0 %2636, %v2585
  %v2638 = vpop.permute.xlu0 %2637
  %2641 = vset.pattern.permute.xlu0 0
  %2642 = vperm.xlu0 %2641, %v2587
  %v2643 = vpop.permute.xlu0 %2642
  %2646 = vset.pattern.permute.xlu0 0
  %2647 = vperm.xlu0 %2646, %v2589
  %v2648 = vpop.permute.xlu0 %2647
  %2651 = vset.pattern.permute.xlu0 0
  %2652 = vperm.xlu0 %2651, %v2591
  %v2653 = vpop.permute.xlu0 %2652
  %2656 = vset.pattern.permute.xlu0 0
  %2657 = vperm.xlu0 %2656, %v2593
  %v2658 = vpop.permute.xlu0 %2657
  %2661 = vset.pattern.permute.xlu0 0
  %2662 = vperm.xlu0 %2661, %v2595
  %v2663 = vpop.permute.xlu0 %2662
  %2666 = vset.pattern.permute.xlu0 0
  %2667 = vperm.xlu0 %2666, %v2597
  %v2668 = vpop.permute.xlu0 %2667
  %2671 = vset.pattern.permute.xlu0 0
  %2672 = vperm.xlu0 %2671, %v2599
  %v2673 = vpop.permute.xlu0 %2672
  %2676 = vset.pattern.permute.xlu0 0
  %2677 = vperm.xlu0 %2676, %v2601
  %v2678 = vpop.permute.xlu0 %2677
  %2681 = vset.pattern.permute.xlu0 0
  %2682 = vperm.xlu0 %2681, %v2603
  %v2683 = vpop.permute.xlu0 %2682
  %v2686 = vlaneseq
  %v2687 = vshrl.u32 %v2686, 7
  %v2688 = vsub.s32 0, %v2687
  %v2689 = vrot.slane %v2604, %v2688
  %v2691 = vmul.f32 %v2608, %v2689
  %v2692 = vmul.f32 %v2613, %v2689
  %v2693 = vmul.f32 %v2618, %v2689
  %v2694 = vmul.f32 %v2623, %v2689
  %v2695 = vmul.f32 %v2628, %v2689
  %v2696 = vmul.f32 %v2633, %v2689
  %v2697 = vmul.f32 %v2638, %v2689
  %v2698 = vmul.f32 %v2643, %v2689
  %v2699 = vmul.f32 %v2648, %v2689
  %v2700 = vmul.f32 %v2653, %v2689
  %v2701 = vmul.f32 %v2658, %v2689
  %v2702 = vmul.f32 %v2663, %v2689
  %v2703 = vmul.f32 %v2668, %v2689
  %v2704 = vmul.f32 %v2673, %v2689
  %v2705 = vmul.f32 %v2678, %v2689
  %v2706 = vmul.f32 %v2683, %v2689
  %v2707 = vadd.f32 %v2430, %v2691
  %v2708 = vadd.f32 %v2433, %v2692
  %v2709 = vadd.f32 %v2438, %v2693
  %v2710 = vadd.f32 %v2441, %v2694
  %v2711 = vadd.f32 %v2446, %v2695
  %v2712 = vadd.f32 %v2449, %v2696
  %v2713 = vadd.f32 %v2454, %v2697
  %v2714 = vadd.f32 %v2457, %v2698
  %v2715 = vadd.f32 %v2462, %v2699
  %v2716 = vadd.f32 %v2465, %v2700
  %v2717 = vadd.f32 %v2470, %v2701
  %v2718 = vadd.f32 %v2473, %v2702
  %v2719 = vadd.f32 %v2478, %v2703
  %v2720 = vadd.f32 %v2481, %v2704
  %v2721 = vadd.f32 %v2486, %v2705
  %v2722 = vadd.f32 %v2489, %v2706
  %v2725 = vcombine.high %v1520, %v1520
  %v2727 = vunpack.c.l.s4 1966171168
  %v2728 = vunpack.c.0.s8 %v2727
  %v2729 = vlaneseq
  %v2730 = vshrl.u32 %v2729, 7
  %v2731 = vsub.s32 %v2728, %v2730
  %v2732 = vrot.slane %v1520, %v2731
  %v2734 = vunpack.c.l.s4 1966171168
  %v2735 = vunpack.c.0.s8 %v2734
  %v2736 = vlaneseq
  %v2737 = vshrl.u32 %v2736, 7
  %v2738 = vsub.s32 %v2735, %v2737
  %v2739 = vrot.slane %v2725, %v2738
  %v2740 = vcombine.high %v2732, %v2732
  %v2741 = vcombine.high %v2739, %v2739
  %v2743 = vunpack.c.l.s4 1966171168
  %v2744 = vunpack.c.0.s8 %v2743
  %v2745 = vlaneseq
  %v2746 = vshrl.u32 %v2745, 7
  %v2747 = vsub.s32 %v2744, %v2746
  %v2748 = vrot.slane %v2732, %v2747
  %v2750 = vunpack.c.l.s4 1966171168
  %v2751 = vunpack.c.0.s8 %v2750
  %v2752 = vlaneseq
  %v2753 = vshrl.u32 %v2752, 7
  %v2754 = vsub.s32 %v2751, %v2753
  %v2755 = vrot.slane %v2739, %v2754
  %v2757 = vunpack.c.l.s4 1966171168
  %v2758 = vunpack.c.0.s8 %v2757
  %v2759 = vlaneseq
  %v2760 = vshrl.u32 %v2759, 7
  %v2761 = vsub.s32 %v2758, %v2760
  %v2762 = vrot.slane %v2740, %v2761
  %v2764 = vunpack.c.l.s4 1966171168
  %v2765 = vunpack.c.0.s8 %v2764
  %v2766 = vlaneseq
  %v2767 = vshrl.u32 %v2766, 7
  %v2768 = vsub.s32 %v2765, %v2767
  %v2769 = vrot.slane %v2741, %v2768
  %v2770 = vcombine.high %v2748, %v2748
  %v2771 = vcombine.high %v2755, %v2755
  %v2772 = vcombine.high %v2762, %v2762
  %v2773 = vcombine.high %v2769, %v2769
  %v2774 = vcombine.high %v1521, %v1521
  %v2776 = vunpack.c.l.s4 1966171168
  %v2777 = vunpack.c.0.s8 %v2776
  %v2778 = vlaneseq
  %v2779 = vshrl.u32 %v2778, 7
  %v2780 = vsub.s32 %v2777, %v2779
  %v2781 = vrot.slane %v1521, %v2780
  %v2783 = vunpack.c.l.s4 1966171168
  %v2784 = vunpack.c.0.s8 %v2783
  %v2785 = vlaneseq
  %v2786 = vshrl.u32 %v2785, 7
  %v2787 = vsub.s32 %v2784, %v2786
  %v2788 = vrot.slane %v2774, %v2787
  %v2789 = vcombine.high %v2781, %v2781
  %v2790 = vcombine.high %v2788, %v2788
  %v2792 = vunpack.c.l.s4 1966171168
  %v2793 = vunpack.c.0.s8 %v2792
  %v2794 = vlaneseq
  %v2795 = vshrl.u32 %v2794, 7
  %v2796 = vsub.s32 %v2793, %v2795
  %v2797 = vrot.slane %v2781, %v2796
  %v2799 = vunpack.c.l.s4 1966171168
  %v2800 = vunpack.c.0.s8 %v2799
  %v2801 = vlaneseq
  %v2802 = vshrl.u32 %v2801, 7
  %v2803 = vsub.s32 %v2800, %v2802
  %v2804 = vrot.slane %v2788, %v2803
  %v2806 = vunpack.c.l.s4 1966171168
  %v2807 = vunpack.c.0.s8 %v2806
  %v2808 = vlaneseq
  %v2809 = vshrl.u32 %v2808, 7
  %v2810 = vsub.s32 %v2807, %v2809
  %v2811 = vrot.slane %v2789, %v2810
  %v2813 = vunpack.c.l.s4 1966171168
  %v2814 = vunpack.c.0.s8 %v2813
  %v2815 = vlaneseq
  %v2816 = vshrl.u32 %v2815, 7
  %v2817 = vsub.s32 %v2814, %v2816
  %v2818 = vrot.slane %v2790, %v2817
  %v2819 = vcombine.high %v2797, %v2797
  %v2820 = vcombine.high %v2804, %v2804
  %v2821 = vcombine.high %v2811, %v2811
  %v2822 = vcombine.high %v2818, %v2818
  %v2823 = vlaneseq
  %v2824 = vshrl.u32 %v2823, 7
  %v2825 = vsub.s32 0, %v2824
  %v2826 = vrot.slane %v2748, %v2825
  %v2827 = vlaneseq
  %v2828 = vshrl.u32 %v2827, 7
  %v2829 = vsub.s32 0, %v2828
  %v2830 = vrot.slane %v2762, %v2829
  %v2831 = vlaneseq
  %v2832 = vshrl.u32 %v2831, 7
  %v2833 = vsub.s32 0, %v2832
  %v2834 = vrot.slane %v2770, %v2833
  %v2835 = vlaneseq
  %v2836 = vshrl.u32 %v2835, 7
  %v2837 = vsub.s32 0, %v2836
  %v2838 = vrot.slane %v2772, %v2837
  %v2839 = vlaneseq
  %v2840 = vshrl.u32 %v2839, 7
  %v2841 = vsub.s32 0, %v2840
  %v2842 = vrot.slane %v2755, %v2841
  %v2843 = vlaneseq
  %v2844 = vshrl.u32 %v2843, 7
  %v2845 = vsub.s32 0, %v2844
  %v2846 = vrot.slane %v2769, %v2845
  %v2847 = vlaneseq
  %v2848 = vshrl.u32 %v2847, 7
  %v2849 = vsub.s32 0, %v2848
  %v2850 = vrot.slane %v2771, %v2849
  %v2851 = vlaneseq
  %v2852 = vshrl.u32 %v2851, 7
  %v2853 = vsub.s32 0, %v2852
  %v2854 = vrot.slane %v2773, %v2853
  %v2855 = vlaneseq
  %v2856 = vshrl.u32 %v2855, 7
  %v2857 = vsub.s32 0, %v2856
  %v2858 = vrot.slane %v2797, %v2857
  %v2859 = vlaneseq
  %v2860 = vshrl.u32 %v2859, 7
  %v2861 = vsub.s32 0, %v2860
  %v2862 = vrot.slane %v2811, %v2861
  %v2863 = vlaneseq
  %v2864 = vshrl.u32 %v2863, 7
  %v2865 = vsub.s32 0, %v2864
  %v2866 = vrot.slane %v2819, %v2865
  %v2867 = vlaneseq
  %v2868 = vshrl.u32 %v2867, 7
  %v2869 = vsub.s32 0, %v2868
  %v2870 = vrot.slane %v2821, %v2869
  %v2871 = vlaneseq
  %v2872 = vshrl.u32 %v2871, 7
  %v2873 = vsub.s32 0, %v2872
  %v2874 = vrot.slane %v2804, %v2873
  %v2875 = vlaneseq
  %v2876 = vshrl.u32 %v2875, 7
  %v2877 = vsub.s32 0, %v2876
  %v2878 = vrot.slane %v2818, %v2877
  %v2879 = vlaneseq
  %v2880 = vshrl.u32 %v2879, 7
  %v2881 = vsub.s32 0, %v2880
  %v2882 = vrot.slane %v2820, %v2881
  %v2883 = vlaneseq
  %v2884 = vshrl.u32 %v2883, 7
  %v2885 = vsub.s32 0, %v2884
  %v2886 = vrot.slane %v2822, %v2885
  %v2903 = vmul.f32 %v2707, %v2826
  %v2904 = vmul.f32 %v2708, %v2830
  %v2905 = vmul.f32 %v2709, %v2834
  %v2906 = vmul.f32 %v2710, %v2838
  %v2907 = vmul.f32 %v2711, %v2842
  %v2908 = vmul.f32 %v2712, %v2846
  %v2909 = vmul.f32 %v2713, %v2850
  %v2910 = vmul.f32 %v2714, %v2854
  %v2911 = vmul.f32 %v2715, %v2858
  %v2912 = vmul.f32 %v2716, %v2862
  %v2913 = vmul.f32 %v2717, %v2866
  %v2914 = vmul.f32 %v2718, %v2870
  %v2915 = vmul.f32 %v2719, %v2874
  %v2916 = vmul.f32 %v2720, %v2878
  %v2917 = vmul.f32 %v2721, %v2882
  %v2918 = vmul.f32 %v2722, %v2886
  %v2919 = vsel %vm40, %v2903, 0.0
  %2920 = vadd.xlane.f32.xlu0 %v2919
  %v2921 = vpop.xlane.xlu0 %2920
  %v2922 = vsel %vm40, %v2904, 0.0
  %2923 = vadd.xlane.f32.xlu0 %v2922
  %v2924 = vpop.xlane.xlu0 %2923
  %v2925 = vsel %vm40, %v2905, 0.0
  %2926 = vadd.xlane.f32.xlu0 %v2925
  %v2927 = vpop.xlane.xlu0 %2926
  %v2928 = vsel %vm40, %v2906, 0.0
  %2929 = vadd.xlane.f32.xlu0 %v2928
  %v2930 = vpop.xlane.xlu0 %2929
  %v2931 = vsel %vm40, %v2907, 0.0
  %2932 = vadd.xlane.f32.xlu0 %v2931
  %v2933 = vpop.xlane.xlu0 %2932
  %v2934 = vsel %vm40, %v2908, 0.0
  %2935 = vadd.xlane.f32.xlu0 %v2934
  %v2936 = vpop.xlane.xlu0 %2935
  %v2937 = vsel %vm40, %v2909, 0.0
  %2938 = vadd.xlane.f32.xlu0 %v2937
  %v2939 = vpop.xlane.xlu0 %2938
  %v2940 = vsel %vm40, %v2910, 0.0
  %2941 = vadd.xlane.f32.xlu0 %v2940
  %v2942 = vpop.xlane.xlu0 %2941
  %v2943 = vsel %vm40, %v2911, 0.0
  %2944 = vadd.xlane.f32.xlu0 %v2943
  %v2945 = vpop.xlane.xlu0 %2944
  %v2946 = vsel %vm40, %v2912, 0.0
  %2947 = vadd.xlane.f32.xlu0 %v2946
  %v2948 = vpop.xlane.xlu0 %2947
  %v2949 = vsel %vm40, %v2913, 0.0
  %2950 = vadd.xlane.f32.xlu0 %v2949
  %v2951 = vpop.xlane.xlu0 %2950
  %v2952 = vsel %vm40, %v2914, 0.0
  %2953 = vadd.xlane.f32.xlu0 %v2952
  %v2954 = vpop.xlane.xlu0 %2953
  %v2955 = vsel %vm40, %v2915, 0.0
  %2956 = vadd.xlane.f32.xlu0 %v2955
  %v2957 = vpop.xlane.xlu0 %2956
  %v2958 = vsel %vm40, %v2916, 0.0
  %2959 = vadd.xlane.f32.xlu0 %v2958
  %v2960 = vpop.xlane.xlu0 %2959
  %v2961 = vsel %vm40, %v2917, 0.0
  %2962 = vadd.xlane.f32.xlu0 %v2961
  %v2963 = vpop.xlane.xlu0 %2962
  %v2964 = vsel %vm40, %v2918, 0.0
  %2965 = vadd.xlane.f32.xlu0 %v2964
  %v2966 = vpop.xlane.xlu0 %2965
  %v2967 = vld [vmem:[%s6] sm:$0xff]
  %v2968 = vld [vmem:[%s6 + $0x8] sm:$0xff]
  %v2971 = vlaneseq
  %v2972 = vshrl.u32 %v2971, 7
  %v2973 = vsub.s32 0, %v2972
  %v2974 = vrot.slane %v2967, %v2973
  %2976 = vbcast.lane.b32.xlu0 %v2974, 256
  %v2977 = vpop.permute.xlu0 %2976
  %v2978 = vlaneseq
  %v2979 = vshrl.u32 %v2978, 7
  %v2980 = vsub.s32 1, %v2979
  %v2981 = vrot.slane %v2967, %v2980
  %2983 = vbcast.lane.b32.xlu0 %v2981, 256
  %v2984 = vpop.permute.xlu0 %2983
  %v2985 = vlaneseq
  %v2986 = vshrl.u32 %v2985, 7
  %v2987 = vsub.s32 2, %v2986
  %v2988 = vrot.slane %v2967, %v2987
  %2990 = vbcast.lane.b32.xlu0 %v2988, 256
  %v2991 = vpop.permute.xlu0 %2990
  %v2992 = vlaneseq
  %v2993 = vshrl.u32 %v2992, 7
  %v2994 = vsub.s32 3, %v2993
  %v2995 = vrot.slane %v2967, %v2994
  %2997 = vbcast.lane.b32.xlu0 %v2995, 256
  %v2998 = vpop.permute.xlu0 %2997
  %v2999 = vlaneseq
  %v3000 = vshrl.u32 %v2999, 7
  %v3001 = vsub.s32 4, %v3000
  %v3002 = vrot.slane %v2967, %v3001
  %3004 = vbcast.lane.b32.xlu0 %v3002, 256
  %v3005 = vpop.permute.xlu0 %3004
  %v3006 = vlaneseq
  %v3007 = vshrl.u32 %v3006, 7
  %v3008 = vsub.s32 5, %v3007
  %v3009 = vrot.slane %v2967, %v3008
  %3011 = vbcast.lane.b32.xlu0 %v3009, 256
  %v3012 = vpop.permute.xlu0 %3011
  %v3013 = vlaneseq
  %v3014 = vshrl.u32 %v3013, 7
  %v3015 = vsub.s32 6, %v3014
  %v3016 = vrot.slane %v2967, %v3015
  %3018 = vbcast.lane.b32.xlu0 %v3016, 256
  %v3019 = vpop.permute.xlu0 %3018
  %v3020 = vlaneseq
  %v3021 = vshrl.u32 %v3020, 7
  %v3022 = vsub.s32 7, %v3021
  %v3023 = vrot.slane %v2967, %v3022
  %3025 = vbcast.lane.b32.xlu0 %v3023, 256
  %v3026 = vpop.permute.xlu0 %3025
  %v3027 = vlaneseq
  %v3028 = vshrl.u32 %v3027, 7
  %v3029 = vsub.s32 0, %v3028
  %v3030 = vrot.slane %v2968, %v3029
  %3032 = vbcast.lane.b32.xlu0 %v3030, 256
  %v3033 = vpop.permute.xlu0 %3032
  %v3034 = vlaneseq
  %v3035 = vshrl.u32 %v3034, 7
  %v3036 = vsub.s32 1, %v3035
  %v3037 = vrot.slane %v2968, %v3036
  %3039 = vbcast.lane.b32.xlu0 %v3037, 256
  %v3040 = vpop.permute.xlu0 %3039
  %v3041 = vlaneseq
  %v3042 = vshrl.u32 %v3041, 7
  %v3043 = vsub.s32 2, %v3042
  %v3044 = vrot.slane %v2968, %v3043
  %3046 = vbcast.lane.b32.xlu0 %v3044, 256
  %v3047 = vpop.permute.xlu0 %3046
  %v3048 = vlaneseq
  %v3049 = vshrl.u32 %v3048, 7
  %v3050 = vsub.s32 3, %v3049
  %v3051 = vrot.slane %v2968, %v3050
  %3053 = vbcast.lane.b32.xlu0 %v3051, 256
  %v3054 = vpop.permute.xlu0 %3053
  %v3055 = vlaneseq
  %v3056 = vshrl.u32 %v3055, 7
  %v3057 = vsub.s32 4, %v3056
  %v3058 = vrot.slane %v2968, %v3057
  %3060 = vbcast.lane.b32.xlu0 %v3058, 256
  %v3061 = vpop.permute.xlu0 %3060
  %v3062 = vlaneseq
  %v3063 = vshrl.u32 %v3062, 7
  %v3064 = vsub.s32 5, %v3063
  %v3065 = vrot.slane %v2968, %v3064
  %3067 = vbcast.lane.b32.xlu0 %v3065, 256
  %v3068 = vpop.permute.xlu0 %3067
  %v3069 = vlaneseq
  %v3070 = vshrl.u32 %v3069, 7
  %v3071 = vsub.s32 6, %v3070
  %v3072 = vrot.slane %v2968, %v3071
  %3074 = vbcast.lane.b32.xlu0 %v3072, 256
  %v3075 = vpop.permute.xlu0 %3074
  %v3076 = vlaneseq
  %v3077 = vshrl.u32 %v3076, 7
  %v3078 = vsub.s32 7, %v3077
  %v3079 = vrot.slane %v2968, %v3078
  %3081 = vbcast.lane.b32.xlu0 %v3079, 256
  %v3082 = vpop.permute.xlu0 %3081
  %v3099 = vmul.f32 %v2921, %v2977
  %v3100 = vmul.f32 %v2924, %v2984
  %v3101 = vmul.f32 %v2927, %v2991
  %v3102 = vmul.f32 %v2930, %v2998
  %v3103 = vmul.f32 %v2933, %v3005
  %v3104 = vmul.f32 %v2936, %v3012
  %v3105 = vmul.f32 %v2939, %v3019
  %v3106 = vmul.f32 %v2942, %v3026
  %v3107 = vmul.f32 %v2945, %v3033
  %v3108 = vmul.f32 %v2948, %v3040
  %v3109 = vmul.f32 %v2951, %v3047
  %v3110 = vmul.f32 %v2954, %v3054
  %v3111 = vmul.f32 %v2957, %v3061
  %v3112 = vmul.f32 %v2960, %v3068
  %v3113 = vmul.f32 %v2963, %v3075
  %v3114 = vmul.f32 %v2966, %v3082
  %v3115 = vlaneseq
  %v3116 = vand.u32 %v3115, 127
  %vm3117 = vcmp.lt.s32.totalorder %v3116, 6
  %v3118 = vsel %vm3117, 0.0, -1e+30
  %3121 = vbcast.lane.b32.xlu0 %v3118, 256
  %v3122 = vpop.permute.xlu0 %3121
  %v3124 = vadd.f32 %v3099, %v3122
  %v3125 = vadd.f32 %v3100, %v3122
  %v3126 = vadd.f32 %v3101, %v3122
  %v3127 = vadd.f32 %v3102, %v3122
  %v3128 = vadd.f32 %v3103, %v3122
  %v3129 = vadd.f32 %v3104, %v3122
  %v3130 = vadd.f32 %v3105, %v3122
  %v3131 = vadd.f32 %v3106, %v3122
  %v3132 = vadd.f32 %v3107, %v3122
  %v3133 = vadd.f32 %v3108, %v3122
  %v3134 = vadd.f32 %v3109, %v3122
  %v3135 = vadd.f32 %v3110, %v3122
  %v3136 = vadd.f32 %v3111, %v3122
  %v3137 = vadd.f32 %v3112, %v3122
  %v3138 = vadd.f32 %v3113, %v3122
  %v3139 = vadd.f32 %v3114, %v3122
  %3156 = vset.pattern.permute.xlu0 0
  %3157 = vperm.xlu0 %3156, %v3124
  %v3158 = vpop.permute.xlu0 %3157
  %3159 = vset.pattern.permute.xlu0 0
  %3160 = vperm.xlu0 %3159, %v3125
  %v3161 = vpop.permute.xlu0 %3160
  %3162 = vset.pattern.permute.xlu0 0
  %3163 = vperm.xlu0 %3162, %v3126
  %v3164 = vpop.permute.xlu0 %3163
  %3165 = vset.pattern.permute.xlu0 0
  %3166 = vperm.xlu0 %3165, %v3127
  %v3167 = vpop.permute.xlu0 %3166
  %3168 = vset.pattern.permute.xlu0 0
  %3169 = vperm.xlu0 %3168, %v3128
  %v3170 = vpop.permute.xlu0 %3169
  %3171 = vset.pattern.permute.xlu0 0
  %3172 = vperm.xlu0 %3171, %v3129
  %v3173 = vpop.permute.xlu0 %3172
  %3174 = vset.pattern.permute.xlu0 0
  %3175 = vperm.xlu0 %3174, %v3130
  %v3176 = vpop.permute.xlu0 %3175
  %3177 = vset.pattern.permute.xlu0 0
  %3178 = vperm.xlu0 %3177, %v3131
  %v3179 = vpop.permute.xlu0 %3178
  %3180 = vset.pattern.permute.xlu0 0
  %3181 = vperm.xlu0 %3180, %v3132
  %v3182 = vpop.permute.xlu0 %3181
  %3183 = vset.pattern.permute.xlu0 0
  %3184 = vperm.xlu0 %3183, %v3133
  %v3185 = vpop.permute.xlu0 %3184
  %3186 = vset.pattern.permute.xlu0 0
  %3187 = vperm.xlu0 %3186, %v3134
  %v3188 = vpop.permute.xlu0 %3187
  %3189 = vset.pattern.permute.xlu0 0
  %3190 = vperm.xlu0 %3189, %v3135
  %v3191 = vpop.permute.xlu0 %3190
  %3192 = vset.pattern.permute.xlu0 0
  %3193 = vperm.xlu0 %3192, %v3136
  %v3194 = vpop.permute.xlu0 %3193
  %3195 = vset.pattern.permute.xlu0 0
  %3196 = vperm.xlu0 %3195, %v3137
  %v3197 = vpop.permute.xlu0 %3196
  %3198 = vset.pattern.permute.xlu0 0
  %3199 = vperm.xlu0 %3198, %v3138
  %v3200 = vpop.permute.xlu0 %3199
  %3201 = vset.pattern.permute.xlu0 0
  %3202 = vperm.xlu0 %3201, %v3139
  %v3203 = vpop.permute.xlu0 %3202
  %v3204 = vlaneseq
  %v3205 = vshrl.u32 %v3204, 7
  %v3206 = vsub.s32 %v3116, %v3205
  %v3207 = vrot.slane %v3158, %v3206
  %v3208 = vlaneseq
  %v3209 = vshrl.u32 %v3208, 7
  %v3210 = vsub.s32 %v3116, %v3209
  %v3211 = vrot.slane %v3161, %v3210
  %v3212 = vlaneseq
  %v3213 = vshrl.u32 %v3212, 7
  %v3214 = vsub.s32 %v3116, %v3213
  %v3215 = vrot.slane %v3164, %v3214
  %v3216 = vlaneseq
  %v3217 = vshrl.u32 %v3216, 7
  %v3218 = vsub.s32 %v3116, %v3217
  %v3219 = vrot.slane %v3167, %v3218
  %v3220 = vlaneseq
  %v3221 = vshrl.u32 %v3220, 7
  %v3222 = vsub.s32 %v3116, %v3221
  %v3223 = vrot.slane %v3170, %v3222
  %v3224 = vlaneseq
  %v3225 = vshrl.u32 %v3224, 7
  %v3226 = vsub.s32 %v3116, %v3225
  %v3227 = vrot.slane %v3173, %v3226
  %v3228 = vlaneseq
  %v3229 = vshrl.u32 %v3228, 7
  %v3230 = vsub.s32 %v3116, %v3229
  %v3231 = vrot.slane %v3176, %v3230
  %v3232 = vlaneseq
  %v3233 = vshrl.u32 %v3232, 7
  %v3234 = vsub.s32 %v3116, %v3233
  %v3235 = vrot.slane %v3179, %v3234
  %v3236 = vlaneseq
  %v3237 = vshrl.u32 %v3236, 7
  %v3238 = vsub.s32 %v3116, %v3237
  %v3239 = vrot.slane %v3182, %v3238
  %v3240 = vlaneseq
  %v3241 = vshrl.u32 %v3240, 7
  %v3242 = vsub.s32 %v3116, %v3241
  %v3243 = vrot.slane %v3185, %v3242
  %v3244 = vlaneseq
  %v3245 = vshrl.u32 %v3244, 7
  %v3246 = vsub.s32 %v3116, %v3245
  %v3247 = vrot.slane %v3188, %v3246
  %v3248 = vlaneseq
  %v3249 = vshrl.u32 %v3248, 7
  %v3250 = vsub.s32 %v3116, %v3249
  %v3251 = vrot.slane %v3191, %v3250
  %v3252 = vlaneseq
  %v3253 = vshrl.u32 %v3252, 7
  %v3254 = vsub.s32 %v3116, %v3253
  %v3255 = vrot.slane %v3194, %v3254
  %v3256 = vlaneseq
  %v3257 = vshrl.u32 %v3256, 7
  %v3258 = vsub.s32 %v3116, %v3257
  %v3259 = vrot.slane %v3197, %v3258
  %v3260 = vlaneseq
  %v3261 = vshrl.u32 %v3260, 7
  %v3262 = vsub.s32 %v3116, %v3261
  %v3263 = vrot.slane %v3200, %v3262
  %v3264 = vlaneseq
  %v3265 = vshrl.u32 %v3264, 7
  %v3266 = vsub.s32 %v3116, %v3265
  %v3267 = vrot.slane %v3203, %v3266
  %vm3268 = vcmask 1041409
  %v3269 = vsel %vm3268, %v3211, %v3207
  %vm3270 = vcmask 1042434
  %v3271 = vsel %vm3270, %v3215, %v3269
  %vm3272 = vcmask 1043459
  %v3273 = vsel %vm3272, %v3219, %v3271
  %vm3274 = vcmask 1044484
  %v3275 = vsel %vm3274, %v3223, %v3273
  %vm3276 = vcmask 1045509
  %v3277 = vsel %vm3276, %v3227, %v3275
  %vm3278 = vcmask 1046534
  %v3279 = vsel %vm3278, %v3231, %v3277
  %vm3280 = vcmask 1047559
  %v3281 = vsel %vm3280, %v3235, %v3279
  %v3282 = vsel %vm3268, %v3243, %v3239
  %v3283 = vsel %vm3270, %v3247, %v3282
  %v3284 = vsel %vm3272, %v3251, %v3283
  %v3285 = vsel %vm3274, %v3255, %v3284
  %v3286 = vsel %vm3276, %v3259, %v3285
  %v3287 = vsel %vm3278, %v3263, %v3286
  %v3288 = vsel %vm3280, %v3267, %v3287
  %vm3291 = vcmask 64512
  %v3292 = vsel %vm3291, %v3281, -inf
  %3293 = vmax.xlane.f32.xlu0 %v3292
  %v3294 = vpop.xlane.xlu0 %3293
  %v3295 = vsel %vm3291, %v3288, -inf
  %3296 = vmax.xlane.f32.xlu0 %v3295
  %v3297 = vpop.xlane.xlu0 %3296
  %v3300 = vlaneseq
  %v3301 = vshrl.u32 %v3300, 7
  %v3302 = vsub.s32 0, %v3301
  %v3303 = vrot.slane %v3294, %v3302
  %v3304 = vlaneseq
  %v3305 = vshrl.u32 %v3304, 7
  %v3306 = vsub.s32 1, %v3305
  %v3307 = vrot.slane %v3294, %v3306
  %v3308 = vlaneseq
  %v3309 = vshrl.u32 %v3308, 7
  %v3310 = vsub.s32 2, %v3309
  %v3311 = vrot.slane %v3294, %v3310
  %v3312 = vlaneseq
  %v3313 = vshrl.u32 %v3312, 7
  %v3314 = vsub.s32 3, %v3313
  %v3315 = vrot.slane %v3294, %v3314
  %v3316 = vlaneseq
  %v3317 = vshrl.u32 %v3316, 7
  %v3318 = vsub.s32 4, %v3317
  %v3319 = vrot.slane %v3294, %v3318
  %v3320 = vlaneseq
  %v3321 = vshrl.u32 %v3320, 7
  %v3322 = vsub.s32 5, %v3321
  %v3323 = vrot.slane %v3294, %v3322
  %v3324 = vlaneseq
  %v3325 = vshrl.u32 %v3324, 7
  %v3326 = vsub.s32 6, %v3325
  %v3327 = vrot.slane %v3294, %v3326
  %v3328 = vlaneseq
  %v3329 = vshrl.u32 %v3328, 7
  %v3330 = vsub.s32 7, %v3329
  %v3331 = vrot.slane %v3294, %v3330
  %v3332 = vlaneseq
  %v3333 = vshrl.u32 %v3332, 7
  %v3334 = vsub.s32 0, %v3333
  %v3335 = vrot.slane %v3297, %v3334
  %v3336 = vlaneseq
  %v3337 = vshrl.u32 %v3336, 7
  %v3338 = vsub.s32 1, %v3337
  %v3339 = vrot.slane %v3297, %v3338
  %v3340 = vlaneseq
  %v3341 = vshrl.u32 %v3340, 7
  %v3342 = vsub.s32 2, %v3341
  %v3343 = vrot.slane %v3297, %v3342
  %v3344 = vlaneseq
  %v3345 = vshrl.u32 %v3344, 7
  %v3346 = vsub.s32 3, %v3345
  %v3347 = vrot.slane %v3297, %v3346
  %v3348 = vlaneseq
  %v3349 = vshrl.u32 %v3348, 7
  %v3350 = vsub.s32 4, %v3349
  %v3351 = vrot.slane %v3297, %v3350
  %v3352 = vlaneseq
  %v3353 = vshrl.u32 %v3352, 7
  %v3354 = vsub.s32 5, %v3353
  %v3355 = vrot.slane %v3297, %v3354
  %v3356 = vlaneseq
  %v3357 = vshrl.u32 %v3356, 7
  %v3358 = vsub.s32 6, %v3357
  %v3359 = vrot.slane %v3297, %v3358
  %v3360 = vlaneseq
  %v3361 = vshrl.u32 %v3360, 7
  %v3362 = vsub.s32 7, %v3361
  %v3363 = vrot.slane %v3297, %v3362
  %v3380 = vsub.f32 %v3124, %v3303
  %v3381 = vsub.f32 %v3125, %v3307
  %v3382 = vsub.f32 %v3126, %v3311
  %v3383 = vsub.f32 %v3127, %v3315
  %v3384 = vsub.f32 %v3128, %v3319
  %v3385 = vsub.f32 %v3129, %v3323
  %v3386 = vsub.f32 %v3130, %v3327
  %v3387 = vsub.f32 %v3131, %v3331
  %v3388 = vsub.f32 %v3132, %v3335
  %v3389 = vsub.f32 %v3133, %v3339
  %v3390 = vsub.f32 %v3134, %v3343
  %v3391 = vsub.f32 %v3135, %v3347
  %v3392 = vsub.f32 %v3136, %v3351
  %v3393 = vsub.f32 %v3137, %v3355
  %v3394 = vsub.f32 %v3138, %v3359
  %v3395 = vsub.f32 %v3139, %v3363
  %v3396 = vmul.f32 %v3380, 1.442695
  %v3397 = vpow.pop %v3396
  %v3398 = vmul.f32 %v3381, 1.442695
  %v3399 = vpow.pop %v3398
  %v3400 = vmul.f32 %v3382, 1.442695
  %v3401 = vpow.pop %v3400
  %v3402 = vmul.f32 %v3383, 1.442695
  %v3403 = vpow.pop %v3402
  %v3404 = vmul.f32 %v3384, 1.442695
  %v3405 = vpow.pop %v3404
  %v3406 = vmul.f32 %v3385, 1.442695
  %v3407 = vpow.pop %v3406
  %v3408 = vmul.f32 %v3386, 1.442695
  %v3409 = vpow.pop %v3408
  %v3410 = vmul.f32 %v3387, 1.442695
  %v3411 = vpow.pop %v3410
  %v3412 = vmul.f32 %v3388, 1.442695
  %v3413 = vpow.pop %v3412
  %v3414 = vmul.f32 %v3389, 1.442695
  %v3415 = vpow.pop %v3414
  %v3416 = vmul.f32 %v3390, 1.442695
  %v3417 = vpow.pop %v3416
  %v3418 = vmul.f32 %v3391, 1.442695
  %v3419 = vpow.pop %v3418
  %v3420 = vmul.f32 %v3392, 1.442695
  %v3421 = vpow.pop %v3420
  %v3422 = vmul.f32 %v3393, 1.442695
  %v3423 = vpow.pop %v3422
  %v3424 = vmul.f32 %v3394, 1.442695
  %v3425 = vpow.pop %v3424
  %v3426 = vmul.f32 %v3395, 1.442695
  %v3427 = vpow.pop %v3426
  %3444 = vset.pattern.permute.xlu0 0
  %3445 = vperm.xlu0 %3444, %v3397
  %v3446 = vpop.permute.xlu0 %3445
  %3447 = vset.pattern.permute.xlu0 0
  %3448 = vperm.xlu0 %3447, %v3399
  %v3449 = vpop.permute.xlu0 %3448
  %3450 = vset.pattern.permute.xlu0 0
  %3451 = vperm.xlu0 %3450, %v3401
  %v3452 = vpop.permute.xlu0 %3451
  %3453 = vset.pattern.permute.xlu0 0
  %3454 = vperm.xlu0 %3453, %v3403
  %v3455 = vpop.permute.xlu0 %3454
  %3456 = vset.pattern.permute.xlu0 0
  %3457 = vperm.xlu0 %3456, %v3405
  %v3458 = vpop.permute.xlu0 %3457
  %3459 = vset.pattern.permute.xlu0 0
  %3460 = vperm.xlu0 %3459, %v3407
  %v3461 = vpop.permute.xlu0 %3460
  %3462 = vset.pattern.permute.xlu0 0
  %3463 = vperm.xlu0 %3462, %v3409
  %v3464 = vpop.permute.xlu0 %3463
  %3465 = vset.pattern.permute.xlu0 0
  %3466 = vperm.xlu0 %3465, %v3411
  %v3467 = vpop.permute.xlu0 %3466
  %3468 = vset.pattern.permute.xlu0 0
  %3469 = vperm.xlu0 %3468, %v3413
  %v3470 = vpop.permute.xlu0 %3469
  %3471 = vset.pattern.permute.xlu0 0
  %3472 = vperm.xlu0 %3471, %v3415
  %v3473 = vpop.permute.xlu0 %3472
  %3474 = vset.pattern.permute.xlu0 0
  %3475 = vperm.xlu0 %3474, %v3417
  %v3476 = vpop.permute.xlu0 %3475
  %3477 = vset.pattern.permute.xlu0 0
  %3478 = vperm.xlu0 %3477, %v3419
  %v3479 = vpop.permute.xlu0 %3478
  %3480 = vset.pattern.permute.xlu0 0
  %3481 = vperm.xlu0 %3480, %v3421
  %v3482 = vpop.permute.xlu0 %3481
  %3483 = vset.pattern.permute.xlu0 0
  %3484 = vperm.xlu0 %3483, %v3423
  %v3485 = vpop.permute.xlu0 %3484
  %3486 = vset.pattern.permute.xlu0 0
  %3487 = vperm.xlu0 %3486, %v3425
  %v3488 = vpop.permute.xlu0 %3487
  %3489 = vset.pattern.permute.xlu0 0
  %3490 = vperm.xlu0 %3489, %v3427
  %v3491 = vpop.permute.xlu0 %3490
  %v3492 = vlaneseq
  %v3493 = vshrl.u32 %v3492, 7
  %v3494 = vsub.s32 %v3116, %v3493
  %v3495 = vrot.slane %v3446, %v3494
  %v3496 = vlaneseq
  %v3497 = vshrl.u32 %v3496, 7
  %v3498 = vsub.s32 %v3116, %v3497
  %v3499 = vrot.slane %v3449, %v3498
  %v3500 = vlaneseq
  %v3501 = vshrl.u32 %v3500, 7
  %v3502 = vsub.s32 %v3116, %v3501
  %v3503 = vrot.slane %v3452, %v3502
  %v3504 = vlaneseq
  %v3505 = vshrl.u32 %v3504, 7
  %v3506 = vsub.s32 %v3116, %v3505
  %v3507 = vrot.slane %v3455, %v3506
  %v3508 = vlaneseq
  %v3509 = vshrl.u32 %v3508, 7
  %v3510 = vsub.s32 %v3116, %v3509
  %v3511 = vrot.slane %v3458, %v3510
  %v3512 = vlaneseq
  %v3513 = vshrl.u32 %v3512, 7
  %v3514 = vsub.s32 %v3116, %v3513
  %v3515 = vrot.slane %v3461, %v3514
  %v3516 = vlaneseq
  %v3517 = vshrl.u32 %v3516, 7
  %v3518 = vsub.s32 %v3116, %v3517
  %v3519 = vrot.slane %v3464, %v3518
  %v3520 = vlaneseq
  %v3521 = vshrl.u32 %v3520, 7
  %v3522 = vsub.s32 %v3116, %v3521
  %v3523 = vrot.slane %v3467, %v3522
  %v3524 = vlaneseq
  %v3525 = vshrl.u32 %v3524, 7
  %v3526 = vsub.s32 %v3116, %v3525
  %v3527 = vrot.slane %v3470, %v3526
  %v3528 = vlaneseq
  %v3529 = vshrl.u32 %v3528, 7
  %v3530 = vsub.s32 %v3116, %v3529
  %v3531 = vrot.slane %v3473, %v3530
  %v3532 = vlaneseq
  %v3533 = vshrl.u32 %v3532, 7
  %v3534 = vsub.s32 %v3116, %v3533
  %v3535 = vrot.slane %v3476, %v3534
  %v3536 = vlaneseq
  %v3537 = vshrl.u32 %v3536, 7
  %v3538 = vsub.s32 %v3116, %v3537
  %v3539 = vrot.slane %v3479, %v3538
  %v3540 = vlaneseq
  %v3541 = vshrl.u32 %v3540, 7
  %v3542 = vsub.s32 %v3116, %v3541
  %v3543 = vrot.slane %v3482, %v3542
  %v3544 = vlaneseq
  %v3545 = vshrl.u32 %v3544, 7
  %v3546 = vsub.s32 %v3116, %v3545
  %v3547 = vrot.slane %v3485, %v3546
  %v3548 = vlaneseq
  %v3549 = vshrl.u32 %v3548, 7
  %v3550 = vsub.s32 %v3116, %v3549
  %v3551 = vrot.slane %v3488, %v3550
  %v3552 = vlaneseq
  %v3553 = vshrl.u32 %v3552, 7
  %v3554 = vsub.s32 %v3116, %v3553
  %v3555 = vrot.slane %v3491, %v3554
  %v3556 = vsel %vm3268, %v3499, %v3495
  %v3557 = vsel %vm3270, %v3503, %v3556
  %v3558 = vsel %vm3272, %v3507, %v3557
  %v3559 = vsel %vm3274, %v3511, %v3558
  %v3560 = vsel %vm3276, %v3515, %v3559
  %v3561 = vsel %vm3278, %v3519, %v3560
  %v3562 = vsel %vm3280, %v3523, %v3561
  %v3563 = vsel %vm3268, %v3531, %v3527
  %v3564 = vsel %vm3270, %v3535, %v3563
  %v3565 = vsel %vm3272, %v3539, %v3564
  %v3566 = vsel %vm3274, %v3543, %v3565
  %v3567 = vsel %vm3276, %v3547, %v3566
  %v3568 = vsel %vm3278, %v3551, %v3567
  %v3569 = vsel %vm3280, %v3555, %v3568
  %v3572 = vsel %vm3291, %v3562, 0.0
  %3573 = vadd.xlane.f32.xlu0 %v3572
  %v3574 = vpop.xlane.xlu0 %3573
  %v3575 = vsel %vm3291, %v3569, 0.0
  %3576 = vadd.xlane.f32.xlu0 %v3575
  %v3577 = vpop.xlane.xlu0 %3576
  %v3580 = vlaneseq
  %v3581 = vshrl.u32 %v3580, 7
  %v3582 = vsub.s32 0, %v3581
  %v3583 = vrot.slane %v3574, %v3582
  %v3584 = vlaneseq
  %v3585 = vshrl.u32 %v3584, 7
  %v3586 = vsub.s32 1, %v3585
  %v3587 = vrot.slane %v3574, %v3586
  %v3588 = vlaneseq
  %v3589 = vshrl.u32 %v3588, 7
  %v3590 = vsub.s32 2, %v3589
  %v3591 = vrot.slane %v3574, %v3590
  %v3592 = vlaneseq
  %v3593 = vshrl.u32 %v3592, 7
  %v3594 = vsub.s32 3, %v3593
  %v3595 = vrot.slane %v3574, %v3594
  %v3596 = vlaneseq
  %v3597 = vshrl.u32 %v3596, 7
  %v3598 = vsub.s32 4, %v3597
  %v3599 = vrot.slane %v3574, %v3598
  %v3600 = vlaneseq
  %v3601 = vshrl.u32 %v3600, 7
  %v3602 = vsub.s32 5, %v3601
  %v3603 = vrot.slane %v3574, %v3602
  %v3604 = vlaneseq
  %v3605 = vshrl.u32 %v3604, 7
  %v3606 = vsub.s32 6, %v3605
  %v3607 = vrot.slane %v3574, %v3606
  %v3608 = vlaneseq
  %v3609 = vshrl.u32 %v3608, 7
  %v3610 = vsub.s32 7, %v3609
  %v3611 = vrot.slane %v3574, %v3610
  %v3612 = vlaneseq
  %v3613 = vshrl.u32 %v3612, 7
  %v3614 = vsub.s32 0, %v3613
  %v3615 = vrot.slane %v3577, %v3614
  %v3616 = vlaneseq
  %v3617 = vshrl.u32 %v3616, 7
  %v3618 = vsub.s32 1, %v3617
  %v3619 = vrot.slane %v3577, %v3618
  %v3620 = vlaneseq
  %v3621 = vshrl.u32 %v3620, 7
  %v3622 = vsub.s32 2, %v3621
  %v3623 = vrot.slane %v3577, %v3622
  %v3624 = vlaneseq
  %v3625 = vshrl.u32 %v3624, 7
  %v3626 = vsub.s32 3, %v3625
  %v3627 = vrot.slane %v3577, %v3626
  %v3628 = vlaneseq
  %v3629 = vshrl.u32 %v3628, 7
  %v3630 = vsub.s32 4, %v3629
  %v3631 = vrot.slane %v3577, %v3630
  %v3632 = vlaneseq
  %v3633 = vshrl.u32 %v3632, 7
  %v3634 = vsub.s32 5, %v3633
  %v3635 = vrot.slane %v3577, %v3634
  %v3636 = vlaneseq
  %v3637 = vshrl.u32 %v3636, 7
  %v3638 = vsub.s32 6, %v3637
  %v3639 = vrot.slane %v3577, %v3638
  %v3640 = vlaneseq
  %v3641 = vshrl.u32 %v3640, 7
  %v3642 = vsub.s32 7, %v3641
  %v3643 = vrot.slane %v3577, %v3642
  %v3660 = vrcp.pop %v3583
  %v3661 = vmul.f32 %v3397, %v3660
  %v3662 = vrcp.pop %v3587
  %v3663 = vmul.f32 %v3399, %v3662
  %v3664 = vrcp.pop %v3591
  %v3665 = vmul.f32 %v3401, %v3664
  %v3666 = vrcp.pop %v3595
  %v3667 = vmul.f32 %v3403, %v3666
  %v3668 = vrcp.pop %v3599
  %v3669 = vmul.f32 %v3405, %v3668
  %v3670 = vrcp.pop %v3603
  %v3671 = vmul.f32 %v3407, %v3670
  %v3672 = vrcp.pop %v3607
  %v3673 = vmul.f32 %v3409, %v3672
  %v3674 = vrcp.pop %v3611
  %v3675 = vmul.f32 %v3411, %v3674
  %v3676 = vrcp.pop %v3615
  %v3677 = vmul.f32 %v3413, %v3676
  %v3678 = vrcp.pop %v3619
  %v3679 = vmul.f32 %v3415, %v3678
  %v3680 = vrcp.pop %v3623
  %v3681 = vmul.f32 %v3417, %v3680
  %v3682 = vrcp.pop %v3627
  %v3683 = vmul.f32 %v3419, %v3682
  %v3684 = vrcp.pop %v3631
  %v3685 = vmul.f32 %v3421, %v3684
  %v3686 = vrcp.pop %v3635
  %v3687 = vmul.f32 %v3423, %v3686
  %v3688 = vrcp.pop %v3639
  %v3689 = vmul.f32 %v3425, %v3688
  %v3690 = vrcp.pop %v3643
  %v3691 = vmul.f32 %v3427, %v3690
  %3693 = vset.pattern.permute.xlu0 0
  %3694 = vperm.xlu0 %3693, %v3661
  %v3695 = vpop.permute.xlu0 %3694
  %3698 = vset.pattern.permute.xlu0 0
  %3699 = vperm.xlu0 %3698, %v3663
  %v3700 = vpop.permute.xlu0 %3699
  %3703 = vset.pattern.permute.xlu0 0
  %3704 = vperm.xlu0 %3703, %v3665
  %v3705 = vpop.permute.xlu0 %3704
  %3708 = vset.pattern.permute.xlu0 0
  %3709 = vperm.xlu0 %3708, %v3667
  %v3710 = vpop.permute.xlu0 %3709
  %3713 = vset.pattern.permute.xlu0 0
  %3714 = vperm.xlu0 %3713, %v3669
  %v3715 = vpop.permute.xlu0 %3714
  %3718 = vset.pattern.permute.xlu0 0
  %3719 = vperm.xlu0 %3718, %v3671
  %v3720 = vpop.permute.xlu0 %3719
  %3723 = vset.pattern.permute.xlu0 0
  %3724 = vperm.xlu0 %3723, %v3673
  %v3725 = vpop.permute.xlu0 %3724
  %3728 = vset.pattern.permute.xlu0 0
  %3729 = vperm.xlu0 %3728, %v3675
  %v3730 = vpop.permute.xlu0 %3729
  %3733 = vset.pattern.permute.xlu0 0
  %3734 = vperm.xlu0 %3733, %v3677
  %v3735 = vpop.permute.xlu0 %3734
  %3738 = vset.pattern.permute.xlu0 0
  %3739 = vperm.xlu0 %3738, %v3679
  %v3740 = vpop.permute.xlu0 %3739
  %3743 = vset.pattern.permute.xlu0 0
  %3744 = vperm.xlu0 %3743, %v3681
  %v3745 = vpop.permute.xlu0 %3744
  %3748 = vset.pattern.permute.xlu0 0
  %3749 = vperm.xlu0 %3748, %v3683
  %v3750 = vpop.permute.xlu0 %3749
  %3753 = vset.pattern.permute.xlu0 0
  %3754 = vperm.xlu0 %3753, %v3685
  %v3755 = vpop.permute.xlu0 %3754
  %3758 = vset.pattern.permute.xlu0 0
  %3759 = vperm.xlu0 %3758, %v3687
  %v3760 = vpop.permute.xlu0 %3759
  %3763 = vset.pattern.permute.xlu0 0
  %3764 = vperm.xlu0 %3763, %v3689
  %v3765 = vpop.permute.xlu0 %3764
  %3768 = vset.pattern.permute.xlu0 0
  %3769 = vperm.xlu0 %3768, %v3691
  %v3770 = vpop.permute.xlu0 %3769
  %v3772 = vmul.f32 %v3695, %v2707
  %v3773 = vmul.f32 %v3700, %v2708
  %v3774 = vmul.f32 %v3705, %v2709
  %v3775 = vmul.f32 %v3710, %v2710
  %v3776 = vmul.f32 %v3715, %v2711
  %v3777 = vmul.f32 %v3720, %v2712
  %v3778 = vmul.f32 %v3725, %v2713
  %v3779 = vmul.f32 %v3730, %v2714
  %v3780 = vmul.f32 %v3735, %v2715
  %v3781 = vmul.f32 %v3740, %v2716
  %v3782 = vmul.f32 %v3745, %v2717
  %v3783 = vmul.f32 %v3750, %v2718
  %v3784 = vmul.f32 %v3755, %v2719
  %v3785 = vmul.f32 %v3760, %v2720
  %v3786 = vmul.f32 %v3765, %v2721
  %v3787 = vmul.f32 %v3770, %v2722
  %v3788 = vsel %vm40, %v3772, 0.0
  %v3789 = vrot.slane %v3788, 4
  %v3790 = vadd.f32 %v3788, %v3789
  %v3791 = vrot.slane %v3790, 2
  %v3792 = vadd.f32 %v3790, %v3791
  %v3793 = vrot.slane %v3792, 1
  %v3794 = vadd.f32 %v3792, %v3793
  %v3795 = vsel %vm40, %v3773, 0.0
  %v3796 = vrot.slane %v3795, 4
  %v3797 = vadd.f32 %v3795, %v3796
  %v3798 = vrot.slane %v3797, 2
  %v3799 = vadd.f32 %v3797, %v3798
  %v3800 = vrot.slane %v3799, 1
  %v3801 = vadd.f32 %v3799, %v3800
  %v3802 = vsel %vm40, %v3774, 0.0
  %v3803 = vrot.slane %v3802, 4
  %v3804 = vadd.f32 %v3802, %v3803
  %v3805 = vrot.slane %v3804, 2
  %v3806 = vadd.f32 %v3804, %v3805
  %v3807 = vrot.slane %v3806, 1
  %v3808 = vadd.f32 %v3806, %v3807
  %v3809 = vsel %vm40, %v3775, 0.0
  %v3810 = vrot.slane %v3809, 4
  %v3811 = vadd.f32 %v3809, %v3810
  %v3812 = vrot.slane %v3811, 2
  %v3813 = vadd.f32 %v3811, %v3812
  %v3814 = vrot.slane %v3813, 1
  %v3815 = vadd.f32 %v3813, %v3814
  %v3816 = vsel %vm40, %v3776, 0.0
  %v3817 = vrot.slane %v3816, 4
  %v3818 = vadd.f32 %v3816, %v3817
  %v3819 = vrot.slane %v3818, 2
  %v3820 = vadd.f32 %v3818, %v3819
  %v3821 = vrot.slane %v3820, 1
  %v3822 = vadd.f32 %v3820, %v3821
  %v3823 = vsel %vm40, %v3777, 0.0
  %v3824 = vrot.slane %v3823, 4
  %v3825 = vadd.f32 %v3823, %v3824
  %v3826 = vrot.slane %v3825, 2
  %v3827 = vadd.f32 %v3825, %v3826
  %v3828 = vrot.slane %v3827, 1
  %v3829 = vadd.f32 %v3827, %v3828
  %v3830 = vsel %vm40, %v3778, 0.0
  %v3831 = vrot.slane %v3830, 4
  %v3832 = vadd.f32 %v3830, %v3831
  %v3833 = vrot.slane %v3832, 2
  %v3834 = vadd.f32 %v3832, %v3833
  %v3835 = vrot.slane %v3834, 1
  %v3836 = vadd.f32 %v3834, %v3835
  %v3837 = vsel %vm40, %v3779, 0.0
  %v3838 = vrot.slane %v3837, 4
  %v3839 = vadd.f32 %v3837, %v3838
  %v3840 = vrot.slane %v3839, 2
  %v3841 = vadd.f32 %v3839, %v3840
  %v3842 = vrot.slane %v3841, 1
  %v3843 = vadd.f32 %v3841, %v3842
  %v3844 = vsel %vm40, %v3780, 0.0
  %v3845 = vrot.slane %v3844, 4
  %v3846 = vadd.f32 %v3844, %v3845
  %v3847 = vrot.slane %v3846, 2
  %v3848 = vadd.f32 %v3846, %v3847
  %v3849 = vrot.slane %v3848, 1
  %v3850 = vadd.f32 %v3848, %v3849
  %v3851 = vsel %vm40, %v3781, 0.0
  %v3852 = vrot.slane %v3851, 4
  %v3853 = vadd.f32 %v3851, %v3852
  %v3854 = vrot.slane %v3853, 2
  %v3855 = vadd.f32 %v3853, %v3854
  %v3856 = vrot.slane %v3855, 1
  %v3857 = vadd.f32 %v3855, %v3856
  %v3858 = vsel %vm40, %v3782, 0.0
  %v3859 = vrot.slane %v3858, 4
  %v3860 = vadd.f32 %v3858, %v3859
  %v3861 = vrot.slane %v3860, 2
  %v3862 = vadd.f32 %v3860, %v3861
  %v3863 = vrot.slane %v3862, 1
  %v3864 = vadd.f32 %v3862, %v3863
  %v3865 = vsel %vm40, %v3783, 0.0
  %v3866 = vrot.slane %v3865, 4
  %v3867 = vadd.f32 %v3865, %v3866
  %v3868 = vrot.slane %v3867, 2
  %v3869 = vadd.f32 %v3867, %v3868
  %v3870 = vrot.slane %v3869, 1
  %v3871 = vadd.f32 %v3869, %v3870
  %v3872 = vsel %vm40, %v3784, 0.0
  %v3873 = vrot.slane %v3872, 4
  %v3874 = vadd.f32 %v3872, %v3873
  %v3875 = vrot.slane %v3874, 2
  %v3876 = vadd.f32 %v3874, %v3875
  %v3877 = vrot.slane %v3876, 1
  %v3878 = vadd.f32 %v3876, %v3877
  %v3879 = vsel %vm40, %v3785, 0.0
  %v3880 = vrot.slane %v3879, 4
  %v3881 = vadd.f32 %v3879, %v3880
  %v3882 = vrot.slane %v3881, 2
  %v3883 = vadd.f32 %v3881, %v3882
  %v3884 = vrot.slane %v3883, 1
  %v3885 = vadd.f32 %v3883, %v3884
  %v3886 = vsel %vm40, %v3786, 0.0
  %v3887 = vrot.slane %v3886, 4
  %v3888 = vadd.f32 %v3886, %v3887
  %v3889 = vrot.slane %v3888, 2
  %v3890 = vadd.f32 %v3888, %v3889
  %v3891 = vrot.slane %v3890, 1
  %v3892 = vadd.f32 %v3890, %v3891
  %v3893 = vsel %vm40, %v3787, 0.0
  %v3894 = vrot.slane %v3893, 4
  %v3895 = vadd.f32 %v3893, %v3894
  %v3896 = vrot.slane %v3895, 2
  %v3897 = vadd.f32 %v3895, %v3896
  %v3898 = vrot.slane %v3897, 1
  %v3899 = vadd.f32 %v3897, %v3898
  %v3901 = vsel %vm40, %v51, 0
  %v3904 = vsel %vm40, %v52, 0
  %3906 = vmatprep.subr.mxu0 0.0
  %3907 = vmatpush1.xpose.msra.mxu0 %v3904
  %3908 = vmatprep.subr.mxu0 0.0
  %3909 = vmatpush1.xpose.msra.mxu0 0.0
  %3910 = vmatprep.subr.mxu0 0.0
  %3911 = vmatpush1.xpose.msra.mxu0 0.0
  %3912 = vmatprep.subr.mxu0 0.0
  %3913 = vmatpush1.xpose.msra.mxu0 0.0
  %3914 = vmatprep.subr.mxu0 0.0
  %3915 = vmatpush1.xpose.msra.mxu0 0.0
  %3916 = vmatprep.subr.mxu0 0.0
  %3917 = vmatpush1.xpose.msra.mxu0 0.0
  %3918 = vmatprep.subr.mxu0 0.0
  %3919 = vmatpush1.xpose.msra.mxu0 0.0
  %3920 = vmatprep.subr.mxu0 0.0
  %3921 = vmatpush1.xpose.msra.mxu0 0.0
  %3922 = vmatprep.subr.mxu0 0.0
  %3923 = vmatpush1.xpose.msra.mxu0 0.0
  %3924 = vmatprep.subr.mxu0 0.0
  %3925 = vmatpush1.xpose.msra.mxu0 0.0
  %3926 = vmatprep.subr.mxu0 0.0
  %3927 = vmatpush1.xpose.msra.mxu0 0.0
  %3928 = vmatprep.subr.mxu0 0.0
  %3929 = vmatpush1.xpose.msra.mxu0 0.0
  %3930 = vmatprep.subr.mxu0 0.0
  %3931 = vmatpush1.xpose.msra.mxu0 0.0
  %3932 = vmatprep.subr.mxu0 0.0
  %3933 = vmatpush1.xpose.msra.mxu0 0.0
  %3934 = vmatprep.subr.mxu0 0.0
  %3935 = vmatpush1.xpose.msra.mxu0 0.0
  %3936 = vmatprep.subr.mxu0 0.0
  %3937 = vmatpush1.xpose.msra.mxu0 0.0
  %3938 = vmatprep.subr.mxu0 0.0
  %3939 = vmatpush1.xpose.msra.mxu0 0.0
  %3940 = vmatprep.subr.mxu0 0.0
  %3941 = vmatpush1.xpose.msra.mxu0 0.0
  %3942 = vmatprep.subr.mxu0 0.0
  %3943 = vmatpush1.xpose.msra.mxu0 0.0
  %3944 = vmatprep.subr.mxu0 0.0
  %3945 = vmatpush1.xpose.msra.mxu0 0.0
  %3946 = vmatprep.subr.mxu0 0.0
  %3947 = vmatpush1.xpose.msra.mxu0 0.0
  %3948 = vmatprep.subr.mxu0 0.0
  %3949 = vmatpush1.xpose.msra.mxu0 0.0
  %3950 = vmatprep.subr.mxu0 0.0
  %3951 = vmatpush1.xpose.msra.mxu0 0.0
  %3952 = vmatprep.subr.mxu0 0.0
  %3953 = vmatpush1.xpose.msra.mxu0 0.0
  %3954 = vmatprep.subr.mxu0 0.0
  %3955 = vmatpush1.xpose.msra.mxu0 0.0
  %3956 = vmatprep.subr.mxu0 0.0
  %3957 = vmatpush1.xpose.msra.mxu0 0.0
  %3958 = vmatprep.subr.mxu0 0.0
  %3959 = vmatpush1.xpose.msra.mxu0 0.0
  %3960 = vmatprep.subr.mxu0 0.0
  %3961 = vmatpush1.xpose.msra.mxu0 0.0
  %3962 = vmatprep.subr.mxu0 0.0
  %3963 = vmatpush1.xpose.msra.mxu0 0.0
  %3964 = vmatprep.subr.mxu0 0.0
  %3965 = vmatpush1.xpose.msra.mxu0 0.0
  %3966 = vmatprep.subr.mxu0 0.0
  %3967 = vmatpush1.xpose.msra.mxu0 0.0
  %3968 = vmatprep.subr.mxu0 0.0
  %3969 = vmatpush1.xpose.msra.mxu0 0.0
  %3970 = vmatprep.mubr.f32.mxu0 0.0
  %3971 = vmatmul.mubr.f32.gmra.mrb[0].mxu0 %v3901
  %v3972 = vpop.f32.mrb[0].mxu0
  %v3973 = vadd.f32 0.0, %v3972
  %v3974 = vpop.f32.mrb[0].mxu0
  %3975 = vdwg.mxu0
  %v3984 = vsel %vm3268, %v3801, %v3794
  %v3985 = vsel %vm3270, %v3808, %v3984
  %v3986 = vsel %vm3272, %v3815, %v3985
  %v3987 = vsel %vm3274, %v3822, %v3986
  %v3988 = vsel %vm3276, %v3829, %v3987
  %v3989 = vsel %vm3278, %v3836, %v3988
  %v3990 = vsel %vm3280, %v3843, %v3989
  %v3999 = vsel %vm3268, %v3857, %v3850
  %v4000 = vsel %vm3270, %v3864, %v3999
  %v4001 = vsel %vm3272, %v3871, %v4000
  %v4002 = vsel %vm3274, %v3878, %v4001
  %v4003 = vsel %vm3276, %v3885, %v4002
  %v4004 = vsel %vm3278, %v3892, %v4003
  %v4005 = vsel %vm3280, %v3899, %v4004
  %v4006 = vsel %vm40, %v3990, 0
  %v4008 = vsel %vm40, %v4005, 0
  %4010 = vmatprep.subr.mxu0 0.0
  %4011 = vmatpush1.xpose.msra.mxu0 %v4008
  %4012 = vmatprep.subr.mxu0 0.0
  %4013 = vmatpush1.xpose.msra.mxu0 0.0
  %4014 = vmatprep.subr.mxu0 0.0
  %4015 = vmatpush1.xpose.msra.mxu0 0.0
  %4016 = vmatprep.subr.mxu0 0.0
  %4017 = vmatpush1.xpose.msra.mxu0 0.0
  %4018 = vmatprep.subr.mxu0 0.0
  %4019 = vmatpush1.xpose.msra.mxu0 0.0
  %4020 = vmatprep.subr.mxu0 0.0
  %4021 = vmatpush1.xpose.msra.mxu0 0.0
  %4022 = vmatprep.subr.mxu0 0.0
  %4023 = vmatpush1.xpose.msra.mxu0 0.0
  %4024 = vmatprep.subr.mxu0 0.0
  %4025 = vmatpush1.xpose.msra.mxu0 0.0
  %4026 = vmatprep.subr.mxu0 0.0
  %4027 = vmatpush1.xpose.msra.mxu0 0.0
  %4028 = vmatprep.subr.mxu0 0.0
  %4029 = vmatpush1.xpose.msra.mxu0 0.0
  %4030 = vmatprep.subr.mxu0 0.0
  %4031 = vmatpush1.xpose.msra.mxu0 0.0
  %4032 = vmatprep.subr.mxu0 0.0
  %4033 = vmatpush1.xpose.msra.mxu0 0.0
  %4034 = vmatprep.subr.mxu0 0.0
  %4035 = vmatpush1.xpose.msra.mxu0 0.0
  %4036 = vmatprep.subr.mxu0 0.0
  %4037 = vmatpush1.xpose.msra.mxu0 0.0
  %4038 = vmatprep.subr.mxu0 0.0
  %4039 = vmatpush1.xpose.msra.mxu0 0.0
  %4040 = vmatprep.subr.mxu0 0.0
  %4041 = vmatpush1.xpose.msra.mxu0 0.0
  %4042 = vmatprep.subr.mxu0 0.0
  %4043 = vmatpush1.xpose.msra.mxu0 0.0
  %4044 = vmatprep.subr.mxu0 0.0
  %4045 = vmatpush1.xpose.msra.mxu0 0.0
  %4046 = vmatprep.subr.mxu0 0.0
  %4047 = vmatpush1.xpose.msra.mxu0 0.0
  %4048 = vmatprep.subr.mxu0 0.0
  %4049 = vmatpush1.xpose.msra.mxu0 0.0
  %4050 = vmatprep.subr.mxu0 0.0
  %4051 = vmatpush1.xpose.msra.mxu0 0.0
  %4052 = vmatprep.subr.mxu0 0.0
  %4053 = vmatpush1.xpose.msra.mxu0 0.0
  %4054 = vmatprep.subr.mxu0 0.0
  %4055 = vmatpush1.xpose.msra.mxu0 0.0
  %4056 = vmatprep.subr.mxu0 0.0
  %4057 = vmatpush1.xpose.msra.mxu0 0.0
  %4058 = vmatprep.subr.mxu0 0.0
  %4059 = vmatpush1.xpose.msra.mxu0 0.0
  %4060 = vmatprep.subr.mxu0 0.0
  %4061 = vmatpush1.xpose.msra.mxu0 0.0
  %4062 = vmatprep.subr.mxu0 0.0
  %4063 = vmatpush1.xpose.msra.mxu0 0.0
  %4064 = vmatprep.subr.mxu0 0.0
  %4065 = vmatpush1.xpose.msra.mxu0 0.0
  %4066 = vmatprep.subr.mxu0 0.0
  %4067 = vmatpush1.xpose.msra.mxu0 0.0
  %4068 = vmatprep.subr.mxu0 0.0
  %4069 = vmatpush1.xpose.msra.mxu0 0.0
  %4070 = vmatprep.subr.mxu0 0.0
  %4071 = vmatpush1.xpose.msra.mxu0 0.0
  %4072 = vmatprep.subr.mxu0 0.0
  %4073 = vmatpush1.xpose.msra.mxu0 0.0
  %4074 = vmatprep.mubr.f32.mxu0 0.0
  %4075 = vmatmul.mubr.f32.gmra.mrb[0].mxu0 %v4006
  %v4076 = vpop.f32.mrb[0].mxu0
  %v4077 = vadd.f32 0.0, %v4076
  %v4078 = vpop.f32.mrb[0].mxu0
  %4079 = vdwg.mxu0
  %v4080 = vsel %vm40, %v1520, 0
  %v4082 = vsel %vm40, %v1521, 0
  %4084 = vmatprep.subr.mxu0 0.0
  %4085 = vmatpush1.xpose.msra.mxu0 %v4082
  %4086 = vmatprep.subr.mxu0 0.0
  %4087 = vmatpush1.xpose.msra.mxu0 0.0
  %4088 = vmatprep.subr.mxu0 0.0
  %4089 = vmatpush1.xpose.msra.mxu0 0.0
  %4090 = vmatprep.subr.mxu0 0.0
  %4091 = vmatpush1.xpose.msra.mxu0 0.0
  %4092 = vmatprep.subr.mxu0 0.0
  %4093 = vmatpush1.xpose.msra.mxu0 0.0
  %4094 = vmatprep.subr.mxu0 0.0
  %4095 = vmatpush1.xpose.msra.mxu0 0.0
  %4096 = vmatprep.subr.mxu0 0.0
  %4097 = vmatpush1.xpose.msra.mxu0 0.0
  %4098 = vmatprep.subr.mxu0 0.0
  %4099 = vmatpush1.xpose.msra.mxu0 0.0
  %4100 = vmatprep.subr.mxu0 0.0
  %4101 = vmatpush1.xpose.msra.mxu0 0.0
  %4102 = vmatprep.subr.mxu0 0.0
  %4103 = vmatpush1.xpose.msra.mxu0 0.0
  %4104 = vmatprep.subr.mxu0 0.0
  %4105 = vmatpush1.xpose.msra.mxu0 0.0
  %4106 = vmatprep.subr.mxu0 0.0
  %4107 = vmatpush1.xpose.msra.mxu0 0.0
  %4108 = vmatprep.subr.mxu0 0.0
  %4109 = vmatpush1.xpose.msra.mxu0 0.0
  %4110 = vmatprep.subr.mxu0 0.0
  %4111 = vmatpush1.xpose.msra.mxu0 0.0
  %4112 = vmatprep.subr.mxu0 0.0
  %4113 = vmatpush1.xpose.msra.mxu0 0.0
  %4114 = vmatprep.subr.mxu0 0.0
  %4115 = vmatpush1.xpose.msra.mxu0 0.0
  %4116 = vmatprep.subr.mxu0 0.0
  %4117 = vmatpush1.xpose.msra.mxu0 0.0
  %4118 = vmatprep.subr.mxu0 0.0
  %4119 = vmatpush1.xpose.msra.mxu0 0.0
  %4120 = vmatprep.subr.mxu0 0.0
  %4121 = vmatpush1.xpose.msra.mxu0 0.0
  %4122 = vmatprep.subr.mxu0 0.0
  %4123 = vmatpush1.xpose.msra.mxu0 0.0
  %4124 = vmatprep.subr.mxu0 0.0
  %4125 = vmatpush1.xpose.msra.mxu0 0.0
  %4126 = vmatprep.subr.mxu0 0.0
  %4127 = vmatpush1.xpose.msra.mxu0 0.0
  %4128 = vmatprep.subr.mxu0 0.0
  %4129 = vmatpush1.xpose.msra.mxu0 0.0
  %4130 = vmatprep.subr.mxu0 0.0
  %4131 = vmatpush1.xpose.msra.mxu0 0.0
  %4132 = vmatprep.subr.mxu0 0.0
  %4133 = vmatpush1.xpose.msra.mxu0 0.0
  %4134 = vmatprep.subr.mxu0 0.0
  %4135 = vmatpush1.xpose.msra.mxu0 0.0
  %4136 = vmatprep.subr.mxu0 0.0
  %4137 = vmatpush1.xpose.msra.mxu0 0.0
  %4138 = vmatprep.subr.mxu0 0.0
  %4139 = vmatpush1.xpose.msra.mxu0 0.0
  %4140 = vmatprep.subr.mxu0 0.0
  %4141 = vmatpush1.xpose.msra.mxu0 0.0
  %4142 = vmatprep.subr.mxu0 0.0
  %4143 = vmatpush1.xpose.msra.mxu0 0.0
  %4144 = vmatprep.subr.mxu0 0.0
  %4145 = vmatpush1.xpose.msra.mxu0 0.0
  %4146 = vmatprep.subr.mxu0 0.0
  %4147 = vmatpush1.xpose.msra.mxu0 0.0
  %4148 = vmatprep.mubr.f32.mxu0 0.0
  %4149 = vmatmul.mubr.f32.gmra.mrb[0].mxu0 %v4080
  %v4150 = vpop.f32.mrb[0].mxu0
  %v4151 = vadd.f32 0.0, %v4150
  %v4152 = vpop.f32.mrb[0].mxu0
  %4153 = vdwg.mxu0
  %v4154 = vmul.f32 %v51, %v51
  %v4155 = vsel %vm40, %v4154, 0.0
  %4156 = vadd.xlane.f32.xlu0 %v4155
  %v4157 = vpop.xlane.xlu0 %4156
  %v4158 = vmul.f32 %v1520, %v1520
  %v4159 = vsel %vm40, %v4158, 0.0
  %4160 = vadd.xlane.f32.xlu0 %v4159
  %v4161 = vpop.xlane.xlu0 %4160
  %v4162 = vadd.f32 %v4157, %v4161
  %v4163 = vmul.f32 %v3794, %v3794
  %v4164 = vmul.f32 %v3801, %v3801
  %v4165 = vmul.f32 %v3808, %v3808
  %v4166 = vmul.f32 %v3815, %v3815
  %v4167 = vmul.f32 %v3822, %v3822
  %v4168 = vmul.f32 %v3829, %v3829
  %v4169 = vmul.f32 %v3836, %v3836
  %v4170 = vmul.f32 %v3843, %v3843
  %v4179 = vsel %vm3268, %v4164, %v4163
  %v4180 = vsel %vm3270, %v4165, %v4179
  %v4181 = vsel %vm3272, %v4166, %v4180
  %v4182 = vsel %vm3274, %v4167, %v4181
  %v4183 = vsel %vm3276, %v4168, %v4182
  %v4184 = vsel %vm3278, %v4169, %v4183
  %v4185 = vsel %vm3280, %v4170, %v4184
  %v4187 = vsel %vm40, %v4185, 0.0
  %4188 = vadd.xlane.f32.xlu0 %v4187
  %v4189 = vpop.xlane.xlu0 %4188
  %v4190 = vadd.f32 %v4162, %v4189
  %v4191 = vmul.f32 %v52, %v52
  %v4192 = vsel %vm40, %v4191, 0.0
  %4193 = vadd.xlane.f32.xlu0 %v4192
  %v4194 = vpop.xlane.xlu0 %4193
  %v4195 = vmul.f32 %v1521, %v1521
  %v4196 = vsel %vm40, %v4195, 0.0
  %4197 = vadd.xlane.f32.xlu0 %v4196
  %v4198 = vpop.xlane.xlu0 %4197
  %v4199 = vadd.f32 %v4194, %v4198
  %v4200 = vmul.f32 %v3850, %v3850
  %v4201 = vmul.f32 %v3857, %v3857
  %v4202 = vmul.f32 %v3864, %v3864
  %v4203 = vmul.f32 %v3871, %v3871
  %v4204 = vmul.f32 %v3878, %v3878
  %v4205 = vmul.f32 %v3885, %v3885
  %v4206 = vmul.f32 %v3892, %v3892
  %v4207 = vmul.f32 %v3899, %v3899
  %v4216 = vsel %vm3268, %v4201, %v4200
  %v4217 = vsel %vm3270, %v4202, %v4216
  %v4218 = vsel %vm3272, %v4203, %v4217
  %v4219 = vsel %vm3274, %v4204, %v4218
  %v4220 = vsel %vm3276, %v4205, %v4219
  %v4221 = vsel %vm3278, %v4206, %v4220
  %v4222 = vsel %vm3280, %v4207, %v4221
  %v4224 = vsel %vm40, %v4222, 0.0
  %4225 = vadd.xlane.f32.xlu0 %v4224
  %v4226 = vpop.xlane.xlu0 %4225
  %v4227 = vadd.f32 %v4199, %v4226
  %v4228 = vmax.f32 %v4190, 1e-24
  %v4229 = vrsqrt.pop %v4228
  %v4230 = vmax.f32 %v4227, 1e-24
  %v4231 = vrsqrt.pop %v4230
  %vm4232 = vcmask 7168
  %v4234 = vsel %vm4232, %v4229, 0
  %v4237 = vsel %vm4232, %v4231, 0
  %4239 = vmatprep.subr.mxu0 0.0
  %4240 = vmatpush1.xpose.msra.mxu0 %v4237
  %4241 = vmatprep.subr.mxu0 0.0
  %4242 = vmatpush1.xpose.msra.mxu0 0.0
  %4243 = vmatprep.subr.mxu0 0.0
  %4244 = vmatpush1.xpose.msra.mxu0 0.0
  %4245 = vmatprep.subr.mxu0 0.0
  %4246 = vmatpush1.xpose.msra.mxu0 0.0
  %4247 = vmatprep.subr.mxu0 0.0
  %4248 = vmatpush1.xpose.msra.mxu0 0.0
  %4249 = vmatprep.subr.mxu0 0.0
  %4250 = vmatpush1.xpose.msra.mxu0 0.0
  %4251 = vmatprep.subr.mxu0 0.0
  %4252 = vmatpush1.xpose.msra.mxu0 0.0
  %4253 = vmatprep.subr.mxu0 0.0
  %4254 = vmatpush1.xpose.msra.mxu0 0.0
  %4255 = vmatprep.subr.mxu0 0.0
  %4256 = vmatpush1.xpose.msra.mxu0 0.0
  %4257 = vmatprep.subr.mxu0 0.0
  %4258 = vmatpush1.xpose.msra.mxu0 0.0
  %4259 = vmatprep.subr.mxu0 0.0
  %4260 = vmatpush1.xpose.msra.mxu0 0.0
  %4261 = vmatprep.subr.mxu0 0.0
  %4262 = vmatpush1.xpose.msra.mxu0 0.0
  %4263 = vmatprep.subr.mxu0 0.0
  %4264 = vmatpush1.xpose.msra.mxu0 0.0
  %4265 = vmatprep.subr.mxu0 0.0
  %4266 = vmatpush1.xpose.msra.mxu0 0.0
  %4267 = vmatprep.subr.mxu0 0.0
  %4268 = vmatpush1.xpose.msra.mxu0 0.0
  %4269 = vmatprep.subr.mxu0 0.0
  %4270 = vmatpush1.xpose.msra.mxu0 0.0
  %4271 = vmatprep.subr.mxu0 0.0
  %4272 = vmatpush1.xpose.msra.mxu0 0.0
  %4273 = vmatprep.subr.mxu0 0.0
  %4274 = vmatpush1.xpose.msra.mxu0 0.0
  %4275 = vmatprep.subr.mxu0 0.0
  %4276 = vmatpush1.xpose.msra.mxu0 0.0
  %4277 = vmatprep.subr.mxu0 0.0
  %4278 = vmatpush1.xpose.msra.mxu0 0.0
  %4279 = vmatprep.subr.mxu0 0.0
  %4280 = vmatpush1.xpose.msra.mxu0 0.0
  %4281 = vmatprep.subr.mxu0 0.0
  %4282 = vmatpush1.xpose.msra.mxu0 0.0
  %4283 = vmatprep.subr.mxu0 0.0
  %4284 = vmatpush1.xpose.msra.mxu0 0.0
  %4285 = vmatprep.subr.mxu0 0.0
  %4286 = vmatpush1.xpose.msra.mxu0 0.0
  %4287 = vmatprep.subr.mxu0 0.0
  %4288 = vmatpush1.xpose.msra.mxu0 0.0
  %4289 = vmatprep.subr.mxu0 0.0
  %4290 = vmatpush1.xpose.msra.mxu0 0.0
  %4291 = vmatprep.subr.mxu0 0.0
  %4292 = vmatpush1.xpose.msra.mxu0 0.0
  %4293 = vmatprep.subr.mxu0 0.0
  %4294 = vmatpush1.xpose.msra.mxu0 0.0
  %4295 = vmatprep.subr.mxu0 0.0
  %4296 = vmatpush1.xpose.msra.mxu0 0.0
  %4297 = vmatprep.subr.mxu0 0.0
  %4298 = vmatpush1.xpose.msra.mxu0 0.0
  %4299 = vmatprep.subr.mxu0 0.0
  %4300 = vmatpush1.xpose.msra.mxu0 0.0
  %4301 = vmatprep.subr.mxu0 0.0
  %4302 = vmatpush1.xpose.msra.mxu0 0.0
  %4303 = vmatprep.mubr.f32.mxu0 0.0
  %4304 = vmatmul.mubr.f32.gmra.mrb[0].mxu0 %v4234
  %v4305 = vpop.f32.mrb[0].mxu0
  %v4306 = vadd.f32 0.0, %v4305
  %v4307 = vpop.f32.mrb[0].mxu0
  %4308 = vdwg.mxu0
  %v4309 = vadd.f32 %v3973, %v4151
  %v4310 = vadd.f32 %v4309, %v4077
  %v4311 = vmul.f32 %v4310, %v4306
  %4312 = vst.msk [vmem:[%s10] sm:$0xff] %vm3291, %v3973
  %4314 = vrot.lane.b32.xlu0 %v4077, 8
  %v4315 = vpop.permute.xlu0 %4314
  %vm4317 = vcmask 130112
  %4318 = vst.msk [vmem:[%s10] sm:$0xff] %vm4317, %v4315
  %4320 = vrot.lane.b32.xlu0 %v4151, 16
  %v4321 = vpop.permute.xlu0 %4320
  %vm4323 = vcmask 195712
  %4324 = vst.msk [vmem:[%s10] sm:$0xff] %vm4323, %v4321
  %4326 = vrot.lane.b32.xlu0 %v4311, 24
  %v4327 = vpop.permute.xlu0 %4326
  %vm4329 = vcmask 261312
  %4330 = vst.msk [vmem:[%s10] sm:$0xff] %vm4329, %v4327
  // Predicated region
  $region42: #{msnea_forward.3} parent=0 // pred_check
    _
  $region43: #{msnea_forward.3} parent=0 // pred_check_branch
    %4332 = sbr.rel (0) target = $region45
  $region44: #{msnea_forward.3} parent=0 // pred_region
    _
  $region45: #{msnea_forward.3} parent=0 // pred_fallthru
    _
  // Predicated region
  $region46: #{msnea_forward.3} parent=0 // pred_check
    _
  $region47: #{msnea_forward.3} parent=0 // pred_check_branch
    %4334 = sbr.rel (0) target = $region49
  $region48: #{msnea_forward.3} parent=0 // pred_region
    _
  $region49: #{msnea_forward.3} parent=0 // pred_fallthru
    _

</llo_original>
